<compile_context>
chip_gen: v7x
topology: tpu7x:2x2x1
jax: 0.10.0
libtpu: 0.0.40
codegen_flags: <defaults>
</compile_context>

<pallas_src>
import math
import numpy as np
import jax
import jax.numpy as jnp
from jax.experimental import pallas as pl
from jax.experimental.pallas import tpu as pltpu


BF16 = jnp.bfloat16
F32 = jnp.float32


def _mm(a, b):
    # bf16-in / f32-accumulate MXU matmul
    return jnp.dot(a, b, preferred_element_type=F32)


def gamenet_uq_kernel(x_ref, a_mean_ref, a_w_ref, pblk_ref, q_ref,
                      w_in_ref, w_sage_l_ref, w_sage_r_ref, w_tagv_ref,
                      w_o_ref, w_linb_ref, out_ref):
    ib, n_pad, _ = a_mean_ref.shape
    dim = w_in_ref.shape[1]
    num_conv = w_sage_l_ref.shape[0]
    num_hops = w_tagv_ref.shape[0]          # K + 1 TAG hops

    relu = lambda v: jnp.maximum(v, 0.0)

    # input_layer + ReLU over the IB-stacked node axis (M = IB*Np fills MXU).
    # num_linear == 0 -> lin_block is empty.
    h = relu(_mm(x_ref[...], w_in_ref[...])).astype(BF16)      # (IB*Np, dim)

    # SAGEConv blocks: h <- ReLU(mean_aggr @ W_l.T + h @ W_r.T).
    # No lane concat; per-instance aggregation is a short unrolled loop whose
    # results are stacked along the sublane axis only.
    for l in range(num_conv):
        aggr = jnp.concatenate(
            [_mm(a_mean_ref[i], h[i * n_pad:(i + 1) * n_pad, :])
             for i in range(ib)], axis=0).astype(BF16)         # (IB*Np, dim)
        h = relu(_mm(aggr, w_sage_l_ref[l])
                 + _mm(h, w_sage_r_ref[l])).astype(BF16)

    # TAGConv(K=3, normalize=False, edge weights) + lin_a + layer_v + sum-pool,
    # reassociated:  pooled = q + sum_k (P @ hop_k) @ w_tagv[k]
    # (PMA attention over the size-1 seed axis is identically 1, layer_v has no
    #  bias and padded dense rows are zero, so layer_k/mask/softmax are dead.)
    p_blk = pblk_ref[...]                                      # (IB*B, IB*Np) bf16
    xk = h
    pooled = jnp.zeros((p_blk.shape[0], dim), F32)
    for k in range(num_hops):
        if k > 0:
            xk = jnp.concatenate(
                [_mm(a_w_ref[i], xk[i * n_pad:(i + 1) * n_pad, :])
                 for i in range(ib)], axis=0).astype(BF16)
        pxk = _mm(p_blk, xk)                                   # (IB*B, dim) f32
        pooled = pooled + _mm(pxk.astype(BF16), w_tagv_ref[k])
    pooled = q_ref[...] + pooled                               # broadcast seed q
    pooled = pooled + relu(_mm(pooled.astype(BF16), w_o_ref[...]))

    # lin_b -> (IB*B, 2); lane 0 = mu, lane 1 = softplus -> sigma.
    yb = _mm(pooled.astype(BF16), w_linb_ref[...])
    lane = jax.lax.broadcasted_iota(jnp.int32, yb.shape, 1)
    out_ref[...] = jnp.where(lane == 1, jax.nn.softplus(yb), yb)


def prepare_params(params):
    """Host-side weight pre-transposition / fusion (all stored (in, out))."""
    hp = jax.lax.Precision.HIGHEST
    # PMA simplification (attention == 1, layer_k/mask/softmax dead) requires
    # num_seeds == 1, num_heads == 1 and bias-free layers; this param layout
    # (single full-dim W_q/W_k/W_v, S of shape (1, dim), no biases) implies it.
    assert params["s"].shape[0] == 1, "PMA reduction requires num_seeds == 1"
    num_conv = params["w_sage_l"].shape[0]
    w_sage_l = jnp.stack([params["w_sage_l"][l].T for l in range(num_conv)])
    w_sage_r = jnp.stack([params["w_sage_r"][l].T for l in range(num_conv)])
    # Fold hop weight, lin_a and layer_v into one (dim, dim) block per hop.
    w_lv = jnp.dot(params["w_lina"].T, params["w_v"].T, precision=hp)
    w_tagv = jnp.stack([
        jnp.dot(params["w_tag"][k].T, w_lv, precision=hp)
        for k in range(params["w_tag"].shape[0])])             # (K+1, dim, dim)
    q = jnp.dot(params["s"], params["w_q"].T, precision=hp)    # (1, dim)
    return {
        "w_in": params["w_in"].T.astype(BF16),
        "w_sage_l": w_sage_l.astype(BF16),
        "w_sage_r": w_sage_r.astype(BF16),
        "w_tagv": w_tagv.astype(BF16),
        "q": q.astype(F32),
        "w_o": params["w_o"].T.astype(BF16),
        "w_linb": params["w_linb"].T.astype(BF16),
    }


def gamenet_uq_forward(x, a_mean, a_w, p, prepped, ib=4):
    """x: (I, Np, F), a_mean/a_w: (I, Np, Np), p: (I, B, Np) -- f32, zero-padded."""
    num_inst, n_pad, feat = x.shape
    b = p.shape[1]
    assert num_inst % ib == 0
    num_steps = num_inst // ib     # keep >= 2 so v7x's two TCs both get work

    x_stacked = x.reshape(num_inst * n_pad, feat).astype(BF16)
    a_mean = a_mean.astype(BF16)
    a_w = a_w.astype(BF16)

    # Per-step block-diagonal membership matrix: one M=IB*B matmul applies the
    # PMA sum-pool for all IB instances at once (off-diagonal blocks are zero).
    p_host = np.asarray(p, np.float32)
    p_np = np.zeros((num_steps, ib * b, ib * n_pad), np.float32)
    for s in range(num_steps):
        for j in range(ib):
            p_np[s, j * b:(j + 1) * b, j * n_pad:(j + 1) * n_pad] = \
                p_host[s * ib + j]
    p_block = jnp.asarray(p_np).astype(BF16)

    def const_spec(arr):
        nd = arr.ndim
        return pl.BlockSpec(arr.shape, lambda i, _nd=nd: (0,) * _nd)

    in_specs = [
        pl.BlockSpec((ib * n_pad, feat), lambda i: (i, 0)),          # x (stacked)
        pl.BlockSpec((ib, n_pad, n_pad), lambda i: (i, 0, 0)),       # a_mean
        pl.BlockSpec((ib, n_pad, n_pad), lambda i: (i, 0, 0)),       # a_w
        pl.BlockSpec((None, ib * b, ib * n_pad), lambda i: (i, 0, 0)),  # P block-diag
        const_spec(prepped["q"]),
        const_spec(prepped["w_in"]),
        const_spec(prepped["w_sage_l"]),
        const_spec(prepped["w_sage_r"]),
        const_spec(prepped["w_tagv"]),
        const_spec(prepped["w_o"]),
        const_spec(prepped["w_linb"]),
    ]
    out = pl.pallas_call(
        gamenet_uq_kernel,
        out_shape=jax.ShapeDtypeStruct((num_steps, ib * b, 2), F32),
        grid=(num_steps,),
        in_specs=in_specs,
        out_specs=pl.BlockSpec((None, ib * b, 2), lambda i: (i, 0, 0)),
        compiler_params=pltpu.CompilerParams(
            dimension_semantics=("parallel",),       # shard steps over v7x TCs
            vmem_limit_bytes=32 * 1024 * 1024),
    )(x_stacked, a_mean, a_w, p_block, prepped["q"], prepped["w_in"],
      prepped["w_sage_l"], prepped["w_sage_r"], prepped["w_tagv"],
      prepped["w_o"], prepped["w_linb"])
    out = out.reshape(num_inst, b, 2)
    return out[..., 0], out[..., 1]   # (mu, sigma) of the Normal distribution


def init_params(key, node_features, dim, num_conv=3, k_tag=3, out_dim=2):
    ks = jax.random.split(key, 11)

    def lin(k, out_f, in_f):       # torch Linear weight layout: (out, in)
        bound = 1.0 / math.sqrt(in_f)
        return jax.random.uniform(k, (out_f, in_f), F32, -bound, bound)

    def stack(k, n, out_f, in_f):
        return jnp.stack([lin(kk, out_f, in_f) for kk in jax.random.split(k, n)])

    xav = math.sqrt(6.0 / (1 + dim))   # xavier_uniform for S (1, 1, dim)
    return {
        "w_in":     lin(ks[0], dim, node_features),
        "w_sage_l": stack(ks[1], num_conv, dim, dim),   # neighbor weights
        "w_sage_r": stack(ks[2], num_conv, dim, dim),   # root weights
        "w_tag":    stack(ks[3], k_tag + 1, dim, dim),
        "w_lina":   lin(ks[4], dim, dim),
        "s":        jax.random.uniform(ks[5], (1, dim), F32, -xav, xav),
        "w_q":      lin(ks[6], dim, dim),
        "w_k":      lin(ks[7], dim, dim),
        "w_v":      lin(ks[8], dim, dim),
        "w_o":      lin(ks[9], dim, dim),
        "w_linb":   lin(ks[10], out_dim, dim),
    }


def reference_forward(x, a_mean, a_w, nodes_per_graph, b, params,
                      max_num_nodes=500):
    """Plain-JAX f32 mirror of the torch forward (incl. 500-slot dense batch)."""
    hp = jax.lax.Precision.HIGHEST
    dot = lambda u, w: jnp.dot(u, w, precision=hp)
    relu = lambda v: jnp.maximum(v, 0.0)

    h = relu(dot(x, params["w_in"].T))
    for l in range(params["w_sage_l"].shape[0]):
        h = relu(dot(dot(a_mean, h), params["w_sage_l"][l].T)
                 + dot(h, params["w_sage_r"][l].T))
    out = dot(h, params["w_tag"][0].T)
    xk = h
    for k in range(1, params["w_tag"].shape[0]):
        xk = dot(a_w, xk)
        out = out + dot(xk, params["w_tag"][k].T)
    out = dot(out, params["w_lina"].T)

    n, d = out.shape
    dense = jnp.zeros((b, max_num_nodes, d), F32)
    dense = dense.at[:, :nodes_per_graph, :].set(out.reshape(b, nodes_per_graph, d))
    mask_bool = jnp.zeros((b, max_num_nodes), bool).at[:, :nodes_per_graph].set(True)
    mask = (~mask_bool)[:, None, :].astype(F32) * -1e9

    q = jnp.broadcast_to(dot(params["s"], params["w_q"].T), (b, 1, d))
    kd = dot(dense, params["w_k"].T)
    vd = dot(dense, params["w_v"].T)
    scores = jnp.einsum("bqd,bkd->bqk", q, kd, precision=hp) / math.sqrt(d)
    a = jax.nn.softmax(mask + scores, axis=1)          # softmax over seed axis (size 1)
    o = q + jnp.einsum("bqk,bkd->bqd", a, vd, precision=hp)
    o = o + relu(dot(o, params["w_o"].T))
    yb = dot(o[:, 0, :], params["w_linb"].T)
    return yb[:, 0], jax.nn.softplus(yb[:, 1])


if __name__ == "__main__":
    key = jax.random.PRNGKey(0)
    node_features, dim = 8, 32
    num_graphs, nodes_per_graph = 2, 12
    n_nodes = num_graphs * nodes_per_graph
    n_pad = 128                      # pad node axis to a full 128-lane tile
    num_instances = 8                # batched behind the grid
    inst_per_step = 4                # IB: 2 grid steps -> both v7x cores busy

    k_param, k_data = jax.random.split(key)
    params = init_params(k_param, node_features, dim)
    prepped = prepare_params(params)

    # shared topology: bidirectional ring within each sub-graph
    src, dst = [], []
    for g in range(num_graphs):
        base = g * nodes_per_graph
        for i in range(nodes_per_graph):
            a, c = base + i, base + (i + 1) % nodes_per_graph
            src += [a, c]
            dst += [c, a]
    src = jnp.array(src, jnp.int32)
    dst = jnp.array(dst, jnp.int32)
    batch = jnp.repeat(jnp.arange(num_graphs, dtype=jnp.int32), nodes_per_graph)
    p_small = jax.nn.one_hot(batch, num_graphs, dtype=F32).T          # (B, N)

    xs, ams, aws = [], [], []
    for dk in jax.random.split(k_data, num_instances):
        kx, ke = jax.random.split(dk)
        x_i = jax.random.normal(kx, (n_nodes, node_features), F32)
        ew = jax.random.uniform(ke, (src.shape[0],), F32, 0.1, 1.0)
        adj = jnp.zeros((n_nodes, n_nodes), F32).at[dst, src].add(1.0)
        deg = jnp.clip(adj.sum(axis=1, keepdims=True), 1.0, None)
        xs.append(x_i)
        ams.append(adj / deg)                                         # SAGE mean aggr
        aws.append(jnp.zeros((n_nodes, n_nodes), F32).at[dst, src].add(ew))

    x_all = jnp.stack(xs)            # (I, N, F)
    am_all = jnp.stack(ams)          # (I, N, N)
    aw_all = jnp.stack(aws)          # (I, N, N)

    # zero-pad node axis; padded nodes are isolated and not in any graph of P
    pad_n = n_pad - n_nodes
    x_pad = jnp.pad(x_all, ((0, 0), (0, pad_n), (0, 0)))
    am_pad = jnp.pad(am_all, ((0, 0), (0, pad_n), (0, pad_n)))
    aw_pad = jnp.pad(aw_all, ((0, 0), (0, pad_n), (0, pad_n)))
    p_pad = jnp.tile(jnp.pad(p_small, ((0, 0), (0, pad_n)))[None],
                     (num_instances, 1, 1))                           # (I, B, Np)

    mu, sigma = gamenet_uq_forward(x_pad, am_pad, aw_pad, p_pad, prepped,
                                   ib=inst_per_step)
    jax.block_until_ready((mu, sigma))

    mu_refs, sg_refs = [], []
    for i in range(num_instances):
        m, s = reference_forward(x_all[i], am_all[i], aw_all[i],
                                 nodes_per_graph, num_graphs, params)
        mu_refs.append(m)
        sg_refs.append(s)
    mu_ref = jnp.stack(mu_refs)
    sg_ref = jnp.stack(sg_refs)

    # tolerance reflects bf16 matmul operands (f32 accumulation) in the kernel
    np.testing.assert_allclose(np.asarray(mu), np.asarray(mu_ref),
                               rtol=5e-2, atol=5e-2)
    np.testing.assert_allclose(np.asarray(sigma), np.asarray(sg_ref),
                               rtol=5e-2, atol=5e-2)
    # TODO(synk): torch.distributions.Normal object is returned as (mu, sigma) arrays.
    print("KERNEL_OK")
</pallas_src>

<mosaic_0001>
module attributes {stable_mosaic.version = 11 : i64} {
  func.func @gamenet_uq_kernel(%arg0: i32, %arg1: memref<512x8xbf16, #tpu.memory_space<vmem>>, %arg2: memref<4x128x128xbf16, #tpu.memory_space<vmem>>, %arg3: memref<4x128x128xbf16, #tpu.memory_space<vmem>>, %arg4: memref<1x8x512xbf16, #tpu.memory_space<vmem>>, %arg5: memref<1x32xf32, #tpu.memory_space<vmem>>, %arg6: memref<8x32xbf16, #tpu.memory_space<vmem>>, %arg7: memref<3x32x32xbf16, #tpu.memory_space<vmem>>, %arg8: memref<3x32x32xbf16, #tpu.memory_space<vmem>>, %arg9: memref<4x32x32xbf16, #tpu.memory_space<vmem>>, %arg10: memref<32x32xbf16, #tpu.memory_space<vmem>>, %arg11: memref<32x2xbf16, #tpu.memory_space<vmem>>, %arg12: memref<1x8x2xf32, #tpu.memory_space<vmem>>) attributes {dimension_semantics = [#tpu.dimension_semantics<parallel>], iteration_bounds = array<i64: 2>, scalar_prefetch = 0 : i64, scratch_operands = 0 : i64, tpu.core_type = #tpu.core_type<tc>, window_params = [{transform_indices = @transform_0, window_bounds = array<i64: 512, 8>}, {transform_indices = @transform_1, window_bounds = array<i64: 4, 128, 128>}, {transform_indices = @transform_2, window_bounds = array<i64: 4, 128, 128>}, {transform_indices = @transform_3, window_bounds = array<i64: 1, 8, 512>}, {pipeline_mode = #tpu.pipeline_mode<synchronous>, transform_indices = @transform_4, window_bounds = array<i64: 1, 32>}, {pipeline_mode = #tpu.pipeline_mode<synchronous>, transform_indices = @transform_5, window_bounds = array<i64: 8, 32>}, {pipeline_mode = #tpu.pipeline_mode<synchronous>, transform_indices = @transform_6, window_bounds = array<i64: 3, 32, 32>}, {pipeline_mode = #tpu.pipeline_mode<synchronous>, transform_indices = @transform_7, window_bounds = array<i64: 3, 32, 32>}, {pipeline_mode = #tpu.pipeline_mode<synchronous>, transform_indices = @transform_8, window_bounds = array<i64: 4, 32, 32>}, {pipeline_mode = #tpu.pipeline_mode<synchronous>, transform_indices = @transform_9, window_bounds = array<i64: 32, 32>}, {pipeline_mode = #tpu.pipeline_mode<synchronous>, transform_indices = @transform_10, window_bounds = array<i64: 32, 2>}, {transform_indices = @transform_11, window_bounds = array<i64: 1, 8, 2>}]} {
    %c0 = arith.constant 0 : index
    %c0_0 = arith.constant 0 : index
    %0 = vector.load %arg1[%c0, %c0_0] : memref<512x8xbf16, #tpu.memory_space<vmem>>, vector<512x8xbf16>
    %c0_1 = arith.constant 0 : index
    %c0_2 = arith.constant 0 : index
    %1 = vector.load %arg6[%c0_1, %c0_2] : memref<8x32xbf16, #tpu.memory_space<vmem>>, vector<8x32xbf16>
    %cst = arith.constant dense<0.000000e+00> : vector<512x32xf32>
    %2 = tpu.matmul %0, %1, %cst {dimension_numbers = #tpu.dot_dimension_numbers<[1], [0], [0], [1], [0, 0, 1, 1], [], []>} : vector<512x8xbf16>, vector<8x32xbf16>, vector<512x32xf32> -> vector<512x32xf32>
    %cst_3 = arith.constant 0.000000e+00 : f32
    %3 = vector.broadcast %cst_3 : f32 to vector<512x32xf32>
    %4 = arith.maximumf %2, %3 : vector<512x32xf32>
    %5 = arith.truncf %4 : vector<512x32xf32> to vector<512x32xbf16>
    %c0_4 = arith.constant 0 : index
    %c0_5 = arith.constant 0 : index
    %c0_6 = arith.constant 0 : index
    %6 = vector.load %arg2[%c0_4, %c0_5, %c0_6] : memref<4x128x128xbf16, #tpu.memory_space<vmem>>, vector<1x128x128xbf16>
    %7 = vector.shape_cast %6 : vector<1x128x128xbf16> to vector<128x128xbf16>
    %8 = vector.extract_strided_slice %5 {offsets = [0, 0], sizes = [128, 32], strides = [1, 1]} : vector<512x32xbf16> to vector<128x32xbf16>
    %cst_7 = arith.constant dense<0.000000e+00> : vector<128x32xf32>
    %9 = tpu.matmul %7, %8, %cst_7 {dimension_numbers = #tpu.dot_dimension_numbers<[1], [0], [0], [1], [0, 0, 1, 1], [], []>} : vector<128x128xbf16>, vector<128x32xbf16>, vector<128x32xf32> -> vector<128x32xf32>
    %c1 = arith.constant 1 : index
    %c0_8 = arith.constant 0 : index
    %c0_9 = arith.constant 0 : index
    %10 = vector.load %arg2[%c1, %c0_8, %c0_9] : memref<4x128x128xbf16, #tpu.memory_space<vmem>>, vector<1x128x128xbf16>
    %11 = vector.shape_cast %10 : vector<1x128x128xbf16> to vector<128x128xbf16>
    %12 = vector.extract_strided_slice %5 {offsets = [128, 0], sizes = [128, 32], strides = [1, 1]} : vector<512x32xbf16> to vector<128x32xbf16>
    %cst_10 = arith.constant dense<0.000000e+00> : vector<128x32xf32>
    %13 = tpu.matmul %11, %12, %cst_10 {dimension_numbers = #tpu.dot_dimension_numbers<[1], [0], [0], [1], [0, 0, 1, 1], [], []>} : vector<128x128xbf16>, vector<128x32xbf16>, vector<128x32xf32> -> vector<128x32xf32>
    %c2 = arith.constant 2 : index
    %c0_11 = arith.constant 0 : index
    %c0_12 = arith.constant 0 : index
    %14 = vector.load %arg2[%c2, %c0_11, %c0_12] : memref<4x128x128xbf16, #tpu.memory_space<vmem>>, vector<1x128x128xbf16>
    %15 = vector.shape_cast %14 : vector<1x128x128xbf16> to vector<128x128xbf16>
    %16 = vector.extract_strided_slice %5 {offsets = [256, 0], sizes = [128, 32], strides = [1, 1]} : vector<512x32xbf16> to vector<128x32xbf16>
    %cst_13 = arith.constant dense<0.000000e+00> : vector<128x32xf32>
    %17 = tpu.matmul %15, %16, %cst_13 {dimension_numbers = #tpu.dot_dimension_numbers<[1], [0], [0], [1], [0, 0, 1, 1], [], []>} : vector<128x128xbf16>, vector<128x32xbf16>, vector<128x32xf32> -> vector<128x32xf32>
    %c3 = arith.constant 3 : index
    %c0_14 = arith.constant 0 : index
    %c0_15 = arith.constant 0 : index
    %18 = vector.load %arg2[%c3, %c0_14, %c0_15] : memref<4x128x128xbf16, #tpu.memory_space<vmem>>, vector<1x128x128xbf16>
    %19 = vector.shape_cast %18 : vector<1x128x128xbf16> to vector<128x128xbf16>
    %20 = vector.extract_strided_slice %5 {offsets = [384, 0], sizes = [128, 32], strides = [1, 1]} : vector<512x32xbf16> to vector<128x32xbf16>
    %cst_16 = arith.constant dense<0.000000e+00> : vector<128x32xf32>
    %21 = tpu.matmul %19, %20, %cst_16 {dimension_numbers = #tpu.dot_dimension_numbers<[1], [0], [0], [1], [0, 0, 1, 1], [], []>} : vector<128x128xbf16>, vector<128x32xbf16>, vector<128x32xf32> -> vector<128x32xf32>
    %22 = tpu.concatenate %9, %13, %17, %21 in 0 : vector<128x32xf32>, vector<128x32xf32>, vector<128x32xf32>, vector<128x32xf32> -> vector<512x32xf32>
    %23 = arith.truncf %22 : vector<512x32xf32> to vector<512x32xbf16>
    %c0_17 = arith.constant 0 : index
    %c0_18 = arith.constant 0 : index
    %c0_19 = arith.constant 0 : index
    %24 = vector.load %arg7[%c0_17, %c0_18, %c0_19] : memref<3x32x32xbf16, #tpu.memory_space<vmem>>, vector<1x32x32xbf16>
    %25 = vector.shape_cast %24 : vector<1x32x32xbf16> to vector<32x32xbf16>
    %cst_20 = arith.constant dense<0.000000e+00> : vector<512x32xf32>
    %26 = tpu.matmul %23, %25, %cst_20 {dimension_numbers = #tpu.dot_dimension_numbers<[1], [0], [0], [1], [0, 0, 1, 1], [], []>} : vector<512x32xbf16>, vector<32x32xbf16>, vector<512x32xf32> -> vector<512x32xf32>
    %c0_21 = arith.constant 0 : index
    %c0_22 = arith.constant 0 : index
    %c0_23 = arith.constant 0 : index
    %27 = vector.load %arg8[%c0_21, %c0_22, %c0_23] : memref<3x32x32xbf16, #tpu.memory_space<vmem>>, vector<1x32x32xbf16>
    %28 = vector.shape_cast %27 : vector<1x32x32xbf16> to vector<32x32xbf16>
    %cst_24 = arith.constant dense<0.000000e+00> : vector<512x32xf32>
    %29 = tpu.matmul %5, %28, %cst_24 {dimension_numbers = #tpu.dot_dimension_numbers<[1], [0], [0], [1], [0, 0, 1, 1], [], []>} : vector<512x32xbf16>, vector<32x32xbf16>, vector<512x32xf32> -> vector<512x32xf32>
    %30 = arith.addf %26, %29 : vector<512x32xf32>
    %cst_25 = arith.constant 0.000000e+00 : f32
    %31 = vector.broadcast %cst_25 : f32 to vector<512x32xf32>
    %32 = arith.maximumf %30, %31 : vector<512x32xf32>
    %33 = arith.truncf %32 : vector<512x32xf32> to vector<512x32xbf16>
    %c0_26 = arith.constant 0 : index
    %c0_27 = arith.constant 0 : index
    %c0_28 = arith.constant 0 : index
    %34 = vector.load %arg2[%c0_26, %c0_27, %c0_28] : memref<4x128x128xbf16, #tpu.memory_space<vmem>>, vector<1x128x128xbf16>
    %35 = vector.shape_cast %34 : vector<1x128x128xbf16> to vector<128x128xbf16>
    %36 = vector.extract_strided_slice %33 {offsets = [0, 0], sizes = [128, 32], strides = [1, 1]} : vector<512x32xbf16> to vector<128x32xbf16>
    %cst_29 = arith.constant dense<0.000000e+00> : vector<128x32xf32>
    %37 = tpu.matmul %35, %36, %cst_29 {dimension_numbers = #tpu.dot_dimension_numbers<[1], [0], [0], [1], [0, 0, 1, 1], [], []>} : vector<128x128xbf16>, vector<128x32xbf16>, vector<128x32xf32> -> vector<128x32xf32>
    %c1_30 = arith.constant 1 : index
    %c0_31 = arith.constant 0 : index
    %c0_32 = arith.constant 0 : index
    %38 = vector.load %arg2[%c1_30, %c0_31, %c0_32] : memref<4x128x128xbf16, #tpu.memory_space<vmem>>, vector<1x128x128xbf16>
    %39 = vector.shape_cast %38 : vector<1x128x128xbf16> to vector<128x128xbf16>
    %40 = vector.extract_strided_slice %33 {offsets = [128, 0], sizes = [128, 32], strides = [1, 1]} : vector<512x32xbf16> to vector<128x32xbf16>
    %cst_33 = arith.constant dense<0.000000e+00> : vector<128x32xf32>
    %41 = tpu.matmul %39, %40, %cst_33 {dimension_numbers = #tpu.dot_dimension_numbers<[1], [0], [0], [1], [0, 0, 1, 1], [], []>} : vector<128x128xbf16>, vector<128x32xbf16>, vector<128x32xf32> -> vector<128x32xf32>
    %c2_34 = arith.constant 2 : index
    %c0_35 = arith.constant 0 : index
    %c0_36 = arith.constant 0 : index
    %42 = vector.load %arg2[%c2_34, %c0_35, %c0_36] : memref<4x128x128xbf16, #tpu.memory_space<vmem>>, vector<1x128x128xbf16>
    %43 = vector.shape_cast %42 : vector<1x128x128xbf16> to vector<128x128xbf16>
    %44 = vector.extract_strided_slice %33 {offsets = [256, 0], sizes = [128, 32], strides = [1, 1]} : vector<512x32xbf16> to vector<128x32xbf16>
    %cst_37 = arith.constant dense<0.000000e+00> : vector<128x32xf32>
    %45 = tpu.matmul %43, %44, %cst_37 {dimension_numbers = #tpu.dot_dimension_numbers<[1], [0], [0], [1], [0, 0, 1, 1], [], []>} : vector<128x128xbf16>, vector<128x32xbf16>, vector<128x32xf32> -> vector<128x32xf32>
    %c3_38 = arith.constant 3 : index
    %c0_39 = arith.constant 0 : index
    %c0_40 = arith.constant 0 : index
    %46 = vector.load %arg2[%c3_38, %c0_39, %c0_40] : memref<4x128x128xbf16, #tpu.memory_space<vmem>>, vector<1x128x128xbf16>
    %47 = vector.shape_cast %46 : vector<1x128x128xbf16> to vector<128x128xbf16>
    %48 = vector.extract_strided_slice %33 {offsets = [384, 0], sizes = [128, 32], strides = [1, 1]} : vector<512x32xbf16> to vector<128x32xbf16>
    %cst_41 = arith.constant dense<0.000000e+00> : vector<128x32xf32>
    %49 = tpu.matmul %47, %48, %cst_41 {dimension_numbers = #tpu.dot_dimension_numbers<[1], [0], [0], [1], [0, 0, 1, 1], [], []>} : vector<128x128xbf16>, vector<128x32xbf16>, vector<128x32xf32> -> vector<128x32xf32>
    %50 = tpu.concatenate %37, %41, %45, %49 in 0 : vector<128x32xf32>, vector<128x32xf32>, vector<128x32xf32>, vector<128x32xf32> -> vector<512x32xf32>
    %51 = arith.truncf %50 : vector<512x32xf32> to vector<512x32xbf16>
    %c1_42 = arith.constant 1 : index
    %c0_43 = arith.constant 0 : index
    %c0_44 = arith.constant 0 : index
    %52 = vector.load %arg7[%c1_42, %c0_43, %c0_44] : memref<3x32x32xbf16, #tpu.memory_space<vmem>>, vector<1x32x32xbf16>
    %53 = vector.shape_cast %52 : vector<1x32x32xbf16> to vector<32x32xbf16>
    %cst_45 = arith.constant dense<0.000000e+00> : vector<512x32xf32>
    %54 = tpu.matmul %51, %53, %cst_45 {dimension_numbers = #tpu.dot_dimension_numbers<[1], [0], [0], [1], [0, 0, 1, 1], [], []>} : vector<512x32xbf16>, vector<32x32xbf16>, vector<512x32xf32> -> vector<512x32xf32>
    %c1_46 = arith.constant 1 : index
    %c0_47 = arith.constant 0 : index
    %c0_48 = arith.constant 0 : index
    %55 = vector.load %arg8[%c1_46, %c0_47, %c0_48] : memref<3x32x32xbf16, #tpu.memory_space<vmem>>, vector<1x32x32xbf16>
    %56 = vector.shape_cast %55 : vector<1x32x32xbf16> to vector<32x32xbf16>
    %cst_49 = arith.constant dense<0.000000e+00> : vector<512x32xf32>
    %57 = tpu.matmul %33, %56, %cst_49 {dimension_numbers = #tpu.dot_dimension_numbers<[1], [0], [0], [1], [0, 0, 1, 1], [], []>} : vector<512x32xbf16>, vector<32x32xbf16>, vector<512x32xf32> -> vector<512x32xf32>
    %58 = arith.addf %54, %57 : vector<512x32xf32>
    %cst_50 = arith.constant 0.000000e+00 : f32
    %59 = vector.broadcast %cst_50 : f32 to vector<512x32xf32>
    %60 = arith.maximumf %58, %59 : vector<512x32xf32>
    %61 = arith.truncf %60 : vector<512x32xf32> to vector<512x32xbf16>
    %c0_51 = arith.constant 0 : index
    %c0_52 = arith.constant 0 : index
    %c0_53 = arith.constant 0 : index
    %62 = vector.load %arg2[%c0_51, %c0_52, %c0_53] : memref<4x128x128xbf16, #tpu.memory_space<vmem>>, vector<1x128x128xbf16>
    %63 = vector.shape_cast %62 : vector<1x128x128xbf16> to vector<128x128xbf16>
    %64 = vector.extract_strided_slice %61 {offsets = [0, 0], sizes = [128, 32], strides = [1, 1]} : vector<512x32xbf16> to vector<128x32xbf16>
    %cst_54 = arith.constant dense<0.000000e+00> : vector<128x32xf32>
    %65 = tpu.matmul %63, %64, %cst_54 {dimension_numbers = #tpu.dot_dimension_numbers<[1], [0], [0], [1], [0, 0, 1, 1], [], []>} : vector<128x128xbf16>, vector<128x32xbf16>, vector<128x32xf32> -> vector<128x32xf32>
    %c1_55 = arith.constant 1 : index
    %c0_56 = arith.constant 0 : index
    %c0_57 = arith.constant 0 : index
    %66 = vector.load %arg2[%c1_55, %c0_56, %c0_57] : memref<4x128x128xbf16, #tpu.memory_space<vmem>>, vector<1x128x128xbf16>
    %67 = vector.shape_cast %66 : vector<1x128x128xbf16> to vector<128x128xbf16>
    %68 = vector.extract_strided_slice %61 {offsets = [128, 0], sizes = [128, 32], strides = [1, 1]} : vector<512x32xbf16> to vector<128x32xbf16>
    %cst_58 = arith.constant dense<0.000000e+00> : vector<128x32xf32>
    %69 = tpu.matmul %67, %68, %cst_58 {dimension_numbers = #tpu.dot_dimension_numbers<[1], [0], [0], [1], [0, 0, 1, 1], [], []>} : vector<128x128xbf16>, vector<128x32xbf16>, vector<128x32xf32> -> vector<128x32xf32>
    %c2_59 = arith.constant 2 : index
    %c0_60 = arith.constant 0 : index
    %c0_61 = arith.constant 0 : index
    %70 = vector.load %arg2[%c2_59, %c0_60, %c0_61] : memref<4x128x128xbf16, #tpu.memory_space<vmem>>, vector<1x128x128xbf16>
    %71 = vector.shape_cast %70 : vector<1x128x128xbf16> to vector<128x128xbf16>
    %72 = vector.extract_strided_slice %61 {offsets = [256, 0], sizes = [128, 32], strides = [1, 1]} : vector<512x32xbf16> to vector<128x32xbf16>
    %cst_62 = arith.constant dense<0.000000e+00> : vector<128x32xf32>
    %73 = tpu.matmul %71, %72, %cst_62 {dimension_numbers = #tpu.dot_dimension_numbers<[1], [0], [0], [1], [0, 0, 1, 1], [], []>} : vector<128x128xbf16>, vector<128x32xbf16>, vector<128x32xf32> -> vector<128x32xf32>
    %c3_63 = arith.constant 3 : index
    %c0_64 = arith.constant 0 : index
    %c0_65 = arith.constant 0 : index
    %74 = vector.load %arg2[%c3_63, %c0_64, %c0_65] : memref<4x128x128xbf16, #tpu.memory_space<vmem>>, vector<1x128x128xbf16>
    %75 = vector.shape_cast %74 : vector<1x128x128xbf16> to vector<128x128xbf16>
    %76 = vector.extract_strided_slice %61 {offsets = [384, 0], sizes = [128, 32], strides = [1, 1]} : vector<512x32xbf16> to vector<128x32xbf16>
    %cst_66 = arith.constant dense<0.000000e+00> : vector<128x32xf32>
    %77 = tpu.matmul %75, %76, %cst_66 {dimension_numbers = #tpu.dot_dimension_numbers<[1], [0], [0], [1], [0, 0, 1, 1], [], []>} : vector<128x128xbf16>, vector<128x32xbf16>, vector<128x32xf32> -> vector<128x32xf32>
    %78 = tpu.concatenate %65, %69, %73, %77 in 0 : vector<128x32xf32>, vector<128x32xf32>, vector<128x32xf32>, vector<128x32xf32> -> vector<512x32xf32>
    %79 = arith.truncf %78 : vector<512x32xf32> to vector<512x32xbf16>
    %c2_67 = arith.constant 2 : index
    %c0_68 = arith.constant 0 : index
    %c0_69 = arith.constant 0 : index
    %80 = vector.load %arg7[%c2_67, %c0_68, %c0_69] : memref<3x32x32xbf16, #tpu.memory_space<vmem>>, vector<1x32x32xbf16>
    %81 = vector.shape_cast %80 : vector<1x32x32xbf16> to vector<32x32xbf16>
    %cst_70 = arith.constant dense<0.000000e+00> : vector<512x32xf32>
    %82 = tpu.matmul %79, %81, %cst_70 {dimension_numbers = #tpu.dot_dimension_numbers<[1], [0], [0], [1], [0, 0, 1, 1], [], []>} : vector<512x32xbf16>, vector<32x32xbf16>, vector<512x32xf32> -> vector<512x32xf32>
    %c2_71 = arith.constant 2 : index
    %c0_72 = arith.constant 0 : index
    %c0_73 = arith.constant 0 : index
    %83 = vector.load %arg8[%c2_71, %c0_72, %c0_73] : memref<3x32x32xbf16, #tpu.memory_space<vmem>>, vector<1x32x32xbf16>
    %84 = vector.shape_cast %83 : vector<1x32x32xbf16> to vector<32x32xbf16>
    %cst_74 = arith.constant dense<0.000000e+00> : vector<512x32xf32>
    %85 = tpu.matmul %61, %84, %cst_74 {dimension_numbers = #tpu.dot_dimension_numbers<[1], [0], [0], [1], [0, 0, 1, 1], [], []>} : vector<512x32xbf16>, vector<32x32xbf16>, vector<512x32xf32> -> vector<512x32xf32>
    %86 = arith.addf %82, %85 : vector<512x32xf32>
    %cst_75 = arith.constant 0.000000e+00 : f32
    %87 = vector.broadcast %cst_75 : f32 to vector<512x32xf32>
    %88 = arith.maximumf %86, %87 : vector<512x32xf32>
    %89 = arith.truncf %88 : vector<512x32xf32> to vector<512x32xbf16>
    %c0_76 = arith.constant 0 : index
    %c0_77 = arith.constant 0 : index
    %c0_78 = arith.constant 0 : index
    %90 = vector.load %arg4[%c0_76, %c0_77, %c0_78] : memref<1x8x512xbf16, #tpu.memory_space<vmem>>, vector<1x8x512xbf16>
    %91 = vector.shape_cast %90 : vector<1x8x512xbf16> to vector<8x512xbf16>
    %cst_79 = arith.constant 0.000000e+00 : f32
    %92 = vector.broadcast %cst_79 : f32 to vector<8x32xf32>
    %cst_80 = arith.constant dense<0.000000e+00> : vector<8x32xf32>
    %93 = tpu.matmul %91, %89, %cst_80 {dimension_numbers = #tpu.dot_dimension_numbers<[1], [0], [0], [1], [0, 0, 1, 1], [], []>} : vector<8x512xbf16>, vector<512x32xbf16>, vector<8x32xf32> -> vector<8x32xf32>
    %94 = arith.truncf %93 : vector<8x32xf32> to vector<8x32xbf16>
    %c0_81 = arith.constant 0 : index
    %c0_82 = arith.constant 0 : index
    %c0_83 = arith.constant 0 : index
    %95 = vector.load %arg9[%c0_81, %c0_82, %c0_83] : memref<4x32x32xbf16, #tpu.memory_space<vmem>>, vector<1x32x32xbf16>
    %96 = vector.shape_cast %95 : vector<1x32x32xbf16> to vector<32x32xbf16>
    %cst_84 = arith.constant dense<0.000000e+00> : vector<8x32xf32>
    %97 = tpu.matmul %94, %96, %cst_84 {dimension_numbers = #tpu.dot_dimension_numbers<[1], [0], [0], [1], [0, 0, 1, 1], [], []>} : vector<8x32xbf16>, vector<32x32xbf16>, vector<8x32xf32> -> vector<8x32xf32>
    %98 = arith.addf %92, %97 : vector<8x32xf32>
    %c0_85 = arith.constant 0 : index
    %c0_86 = arith.constant 0 : index
    %c0_87 = arith.constant 0 : index
    %99 = vector.load %arg3[%c0_85, %c0_86, %c0_87] : memref<4x128x128xbf16, #tpu.memory_space<vmem>>, vector<1x128x128xbf16>
    %100 = vector.shape_cast %99 : vector<1x128x128xbf16> to vector<128x128xbf16>
    %101 = vector.extract_strided_slice %89 {offsets = [0, 0], sizes = [128, 32], strides = [1, 1]} : vector<512x32xbf16> to vector<128x32xbf16>
    %cst_88 = arith.constant dense<0.000000e+00> : vector<128x32xf32>
    %102 = tpu.matmul %100, %101, %cst_88 {dimension_numbers = #tpu.dot_dimension_numbers<[1], [0], [0], [1], [0, 0, 1, 1], [], []>} : vector<128x128xbf16>, vector<128x32xbf16>, vector<128x32xf32> -> vector<128x32xf32>
    %c1_89 = arith.constant 1 : index
    %c0_90 = arith.constant 0 : index
    %c0_91 = arith.constant 0 : index
    %103 = vector.load %arg3[%c1_89, %c0_90, %c0_91] : memref<4x128x128xbf16, #tpu.memory_space<vmem>>, vector<1x128x128xbf16>
    %104 = vector.shape_cast %103 : vector<1x128x128xbf16> to vector<128x128xbf16>
    %105 = vector.extract_strided_slice %89 {offsets = [128, 0], sizes = [128, 32], strides = [1, 1]} : vector<512x32xbf16> to vector<128x32xbf16>
    %cst_92 = arith.constant dense<0.000000e+00> : vector<128x32xf32>
    %106 = tpu.matmul %104, %105, %cst_92 {dimension_numbers = #tpu.dot_dimension_numbers<[1], [0], [0], [1], [0, 0, 1, 1], [], []>} : vector<128x128xbf16>, vector<128x32xbf16>, vector<128x32xf32> -> vector<128x32xf32>
    %c2_93 = arith.constant 2 : index
    %c0_94 = arith.constant 0 : index
    %c0_95 = arith.constant 0 : index
    %107 = vector.load %arg3[%c2_93, %c0_94, %c0_95] : memref<4x128x128xbf16, #tpu.memory_space<vmem>>, vector<1x128x128xbf16>
    %108 = vector.shape_cast %107 : vector<1x128x128xbf16> to vector<128x128xbf16>
    %109 = vector.extract_strided_slice %89 {offsets = [256, 0], sizes = [128, 32], strides = [1, 1]} : vector<512x32xbf16> to vector<128x32xbf16>
    %cst_96 = arith.constant dense<0.000000e+00> : vector<128x32xf32>
    %110 = tpu.matmul %108, %109, %cst_96 {dimension_numbers = #tpu.dot_dimension_numbers<[1], [0], [0], [1], [0, 0, 1, 1], [], []>} : vector<128x128xbf16>, vector<128x32xbf16>, vector<128x32xf32> -> vector<128x32xf32>
    %c3_97 = arith.constant 3 : index
    %c0_98 = arith.constant 0 : index
    %c0_99 = arith.constant 0 : index
    %111 = vector.load %arg3[%c3_97, %c0_98, %c0_99] : memref<4x128x128xbf16, #tpu.memory_space<vmem>>, vector<1x128x128xbf16>
    %112 = vector.shape_cast %111 : vector<1x128x128xbf16> to vector<128x128xbf16>
    %113 = vector.extract_strided_slice %89 {offsets = [384, 0], sizes = [128, 32], strides = [1, 1]} : vector<512x32xbf16> to vector<128x32xbf16>
    %cst_100 = arith.constant dense<0.000000e+00> : vector<128x32xf32>
    %114 = tpu.matmul %112, %113, %cst_100 {dimension_numbers = #tpu.dot_dimension_numbers<[1], [0], [0], [1], [0, 0, 1, 1], [], []>} : vector<128x128xbf16>, vector<128x32xbf16>, vector<128x32xf32> -> vector<128x32xf32>
    %115 = tpu.concatenate %102, %106, %110, %114 in 0 : vector<128x32xf32>, vector<128x32xf32>, vector<128x32xf32>, vector<128x32xf32> -> vector<512x32xf32>
    %116 = arith.truncf %115 : vector<512x32xf32> to vector<512x32xbf16>
    %cst_101 = arith.constant dense<0.000000e+00> : vector<8x32xf32>
    %117 = tpu.matmul %91, %116, %cst_101 {dimension_numbers = #tpu.dot_dimension_numbers<[1], [0], [0], [1], [0, 0, 1, 1], [], []>} : vector<8x512xbf16>, vector<512x32xbf16>, vector<8x32xf32> -> vector<8x32xf32>
    %118 = arith.truncf %117 : vector<8x32xf32> to vector<8x32xbf16>
    %c1_102 = arith.constant 1 : index
    %c0_103 = arith.constant 0 : index
    %c0_104 = arith.constant 0 : index
    %119 = vector.load %arg9[%c1_102, %c0_103, %c0_104] : memref<4x32x32xbf16, #tpu.memory_space<vmem>>, vector<1x32x32xbf16>
    %120 = vector.shape_cast %119 : vector<1x32x32xbf16> to vector<32x32xbf16>
    %cst_105 = arith.constant dense<0.000000e+00> : vector<8x32xf32>
    %121 = tpu.matmul %118, %120, %cst_105 {dimension_numbers = #tpu.dot_dimension_numbers<[1], [0], [0], [1], [0, 0, 1, 1], [], []>} : vector<8x32xbf16>, vector<32x32xbf16>, vector<8x32xf32> -> vector<8x32xf32>
    %122 = arith.addf %98, %121 : vector<8x32xf32>
    %c0_106 = arith.constant 0 : index
    %c0_107 = arith.constant 0 : index
    %c0_108 = arith.constant 0 : index
    %123 = vector.load %arg3[%c0_106, %c0_107, %c0_108] : memref<4x128x128xbf16, #tpu.memory_space<vmem>>, vector<1x128x128xbf16>
    %124 = vector.shape_cast %123 : vector<1x128x128xbf16> to vector<128x128xbf16>
    %125 = vector.extract_strided_slice %116 {offsets = [0, 0], sizes = [128, 32], strides = [1, 1]} : vector<512x32xbf16> to vector<128x32xbf16>
    %cst_109 = arith.constant dense<0.000000e+00> : vector<128x32xf32>
    %126 = tpu.matmul %124, %125, %cst_109 {dimension_numbers = #tpu.dot_dimension_numbers<[1], [0], [0], [1], [0, 0, 1, 1], [], []>} : vector<128x128xbf16>, vector<128x32xbf16>, vector<128x32xf32> -> vector<128x32xf32>
    %c1_110 = arith.constant 1 : index
    %c0_111 = arith.constant 0 : index
    %c0_112 = arith.constant 0 : index
    %127 = vector.load %arg3[%c1_110, %c0_111, %c0_112] : memref<4x128x128xbf16, #tpu.memory_space<vmem>>, vector<1x128x128xbf16>
    %128 = vector.shape_cast %127 : vector<1x128x128xbf16> to vector<128x128xbf16>
    %129 = vector.extract_strided_slice %116 {offsets = [128, 0], sizes = [128, 32], strides = [1, 1]} : vector<512x32xbf16> to vector<128x32xbf16>
    %cst_113 = arith.constant dense<0.000000e+00> : vector<128x32xf32>
    %130 = tpu.matmul %128, %129, %cst_113 {dimension_numbers = #tpu.dot_dimension_numbers<[1], [0], [0], [1], [0, 0, 1, 1], [], []>} : vector<128x128xbf16>, vector<128x32xbf16>, vector<128x32xf32> -> vector<128x32xf32>
    %c2_114 = arith.constant 2 : index
    %c0_115 = arith.constant 0 : index
    %c0_116 = arith.constant 0 : index
    %131 = vector.load %arg3[%c2_114, %c0_115, %c0_116] : memref<4x128x128xbf16, #tpu.memory_space<vmem>>, vector<1x128x128xbf16>
    %132 = vector.shape_cast %131 : vector<1x128x128xbf16> to vector<128x128xbf16>
    %133 = vector.extract_strided_slice %116 {offsets = [256, 0], sizes = [128, 32], strides = [1, 1]} : vector<512x32xbf16> to vector<128x32xbf16>
    %cst_117 = arith.constant dense<0.000000e+00> : vector<128x32xf32>
    %134 = tpu.matmul %132, %133, %cst_117 {dimension_numbers = #tpu.dot_dimension_numbers<[1], [0], [0], [1], [0, 0, 1, 1], [], []>} : vector<128x128xbf16>, vector<128x32xbf16>, vector<128x32xf32> -> vector<128x32xf32>
    %c3_118 = arith.constant 3 : index
    %c0_119 = arith.constant 0 : index
    %c0_120 = arith.constant 0 : index
    %135 = vector.load %arg3[%c3_118, %c0_119, %c0_120] : memref<4x128x128xbf16, #tpu.memory_space<vmem>>, vector<1x128x128xbf16>
    %136 = vector.shape_cast %135 : vector<1x128x128xbf16> to vector<128x128xbf16>
    %137 = vector.extract_strided_slice %116 {offsets = [384, 0], sizes = [128, 32], strides = [1, 1]} : vector<512x32xbf16> to vector<128x32xbf16>
    %cst_121 = arith.constant dense<0.000000e+00> : vector<128x32xf32>
    %138 = tpu.matmul %136, %137, %cst_121 {dimension_numbers = #tpu.dot_dimension_numbers<[1], [0], [0], [1], [0, 0, 1, 1], [], []>} : vector<128x128xbf16>, vector<128x32xbf16>, vector<128x32xf32> -> vector<128x32xf32>
    %139 = tpu.concatenate %126, %130, %134, %138 in 0 : vector<128x32xf32>, vector<128x32xf32>, vector<128x32xf32>, vector<128x32xf32> -> vector<512x32xf32>
    %140 = arith.truncf %139 : vector<512x32xf32> to vector<512x32xbf16>
    %cst_122 = arith.constant dense<0.000000e+00> : vector<8x32xf32>
    %141 = tpu.matmul %91, %140, %cst_122 {dimension_numbers = #tpu.dot_dimension_numbers<[1], [0], [0], [1], [0, 0, 1, 1], [], []>} : vector<8x512xbf16>, vector<512x32xbf16>, vector<8x32xf32> -> vector<8x32xf32>
    %142 = arith.truncf %141 : vector<8x32xf32> to vector<8x32xbf16>
    %c2_123 = arith.constant 2 : index
    %c0_124 = arith.constant 0 : index
    %c0_125 = arith.constant 0 : index
    %143 = vector.load %arg9[%c2_123, %c0_124, %c0_125] : memref<4x32x32xbf16, #tpu.memory_space<vmem>>, vector<1x32x32xbf16>
    %144 = vector.shape_cast %143 : vector<1x32x32xbf16> to vector<32x32xbf16>
    %cst_126 = arith.constant dense<0.000000e+00> : vector<8x32xf32>
    %145 = tpu.matmul %142, %144, %cst_126 {dimension_numbers = #tpu.dot_dimension_numbers<[1], [0], [0], [1], [0, 0, 1, 1], [], []>} : vector<8x32xbf16>, vector<32x32xbf16>, vector<8x32xf32> -> vector<8x32xf32>
    %146 = arith.addf %122, %145 : vector<8x32xf32>
    %c0_127 = arith.constant 0 : index
    %c0_128 = arith.constant 0 : index
    %c0_129 = arith.constant 0 : index
    %147 = vector.load %arg3[%c0_127, %c0_128, %c0_129] : memref<4x128x128xbf16, #tpu.memory_space<vmem>>, vector<1x128x128xbf16>
    %148 = vector.shape_cast %147 : vector<1x128x128xbf16> to vector<128x128xbf16>
    %149 = vector.extract_strided_slice %140 {offsets = [0, 0], sizes = [128, 32], strides = [1, 1]} : vector<512x32xbf16> to vector<128x32xbf16>
    %cst_130 = arith.constant dense<0.000000e+00> : vector<128x32xf32>
    %150 = tpu.matmul %148, %149, %cst_130 {dimension_numbers = #tpu.dot_dimension_numbers<[1], [0], [0], [1], [0, 0, 1, 1], [], []>} : vector<128x128xbf16>, vector<128x32xbf16>, vector<128x32xf32> -> vector<128x32xf32>
    %c1_131 = arith.constant 1 : index
    %c0_132 = arith.constant 0 : index
    %c0_133 = arith.constant 0 : index
    %151 = vector.load %arg3[%c1_131, %c0_132, %c0_133] : memref<4x128x128xbf16, #tpu.memory_space<vmem>>, vector<1x128x128xbf16>
    %152 = vector.shape_cast %151 : vector<1x128x128xbf16> to vector<128x128xbf16>
    %153 = vector.extract_strided_slice %140 {offsets = [128, 0], sizes = [128, 32], strides = [1, 1]} : vector<512x32xbf16> to vector<128x32xbf16>
    %cst_134 = arith.constant dense<0.000000e+00> : vector<128x32xf32>
    %154 = tpu.matmul %152, %153, %cst_134 {dimension_numbers = #tpu.dot_dimension_numbers<[1], [0], [0], [1], [0, 0, 1, 1], [], []>} : vector<128x128xbf16>, vector<128x32xbf16>, vector<128x32xf32> -> vector<128x32xf32>
    %c2_135 = arith.constant 2 : index
    %c0_136 = arith.constant 0 : index
    %c0_137 = arith.constant 0 : index
    %155 = vector.load %arg3[%c2_135, %c0_136, %c0_137] : memref<4x128x128xbf16, #tpu.memory_space<vmem>>, vector<1x128x128xbf16>
    %156 = vector.shape_cast %155 : vector<1x128x128xbf16> to vector<128x128xbf16>
    %157 = vector.extract_strided_slice %140 {offsets = [256, 0], sizes = [128, 32], strides = [1, 1]} : vector<512x32xbf16> to vector<128x32xbf16>
    %cst_138 = arith.constant dense<0.000000e+00> : vector<128x32xf32>
    %158 = tpu.matmul %156, %157, %cst_138 {dimension_numbers = #tpu.dot_dimension_numbers<[1], [0], [0], [1], [0, 0, 1, 1], [], []>} : vector<128x128xbf16>, vector<128x32xbf16>, vector<128x32xf32> -> vector<128x32xf32>
    %c3_139 = arith.constant 3 : index
    %c0_140 = arith.constant 0 : index
    %c0_141 = arith.constant 0 : index
    %159 = vector.load %arg3[%c3_139, %c0_140, %c0_141] : memref<4x128x128xbf16, #tpu.memory_space<vmem>>, vector<1x128x128xbf16>
    %160 = vector.shape_cast %159 : vector<1x128x128xbf16> to vector<128x128xbf16>
    %161 = vector.extract_strided_slice %140 {offsets = [384, 0], sizes = [128, 32], strides = [1, 1]} : vector<512x32xbf16> to vector<128x32xbf16>
    %cst_142 = arith.constant dense<0.000000e+00> : vector<128x32xf32>
    %162 = tpu.matmul %160, %161, %cst_142 {dimension_numbers = #tpu.dot_dimension_numbers<[1], [0], [0], [1], [0, 0, 1, 1], [], []>} : vector<128x128xbf16>, vector<128x32xbf16>, vector<128x32xf32> -> vector<128x32xf32>
    %163 = tpu.concatenate %150, %154, %158, %162 in 0 : vector<128x32xf32>, vector<128x32xf32>, vector<128x32xf32>, vector<128x32xf32> -> vector<512x32xf32>
    %164 = arith.truncf %163 : vector<512x32xf32> to vector<512x32xbf16>
    %cst_143 = arith.constant dense<0.000000e+00> : vector<8x32xf32>
    %165 = tpu.matmul %91, %164, %cst_143 {dimension_numbers = #tpu.dot_dimension_numbers<[1], [0], [0], [1], [0, 0, 1, 1], [], []>} : vector<8x512xbf16>, vector<512x32xbf16>, vector<8x32xf32> -> vector<8x32xf32>
    %166 = arith.truncf %165 : vector<8x32xf32> to vector<8x32xbf16>
    %c3_144 = arith.constant 3 : index
    %c0_145 = arith.constant 0 : index
    %c0_146 = arith.constant 0 : index
    %167 = vector.load %arg9[%c3_144, %c0_145, %c0_146] : memref<4x32x32xbf16, #tpu.memory_space<vmem>>, vector<1x32x32xbf16>
    %168 = vector.shape_cast %167 : vector<1x32x32xbf16> to vector<32x32xbf16>
    %cst_147 = arith.constant dense<0.000000e+00> : vector<8x32xf32>
    %169 = tpu.matmul %166, %168, %cst_147 {dimension_numbers = #tpu.dot_dimension_numbers<[1], [0], [0], [1], [0, 0, 1, 1], [], []>} : vector<8x32xbf16>, vector<32x32xbf16>, vector<8x32xf32> -> vector<8x32xf32>
    %170 = arith.addf %146, %169 : vector<8x32xf32>
    %c0_148 = arith.constant 0 : index
    %c0_149 = arith.constant 0 : index
    %171 = vector.load %arg5[%c0_148, %c0_149] : memref<1x32xf32, #tpu.memory_space<vmem>>, vector<1x32xf32>
    %172 = vector.broadcast %171 : vector<1x32xf32> to vector<8x32xf32>
    %173 = arith.addf %172, %170 : vector<8x32xf32>
    %174 = arith.truncf %173 : vector<8x32xf32> to vector<8x32xbf16>
    %c0_150 = arith.constant 0 : index
    %c0_151 = arith.constant 0 : index
    %175 = vector.load %arg10[%c0_150, %c0_151] : memref<32x32xbf16, #tpu.memory_space<vmem>>, vector<32x32xbf16>
    %cst_152 = arith.constant dense<0.000000e+00> : vector<8x32xf32>
    %176 = tpu.matmul %174, %175, %cst_152 {dimension_numbers = #tpu.dot_dimension_numbers<[1], [0], [0], [1], [0, 0, 1, 1], [], []>} : vector<8x32xbf16>, vector<32x32xbf16>, vector<8x32xf32> -> vector<8x32xf32>
    %cst_153 = arith.constant 0.000000e+00 : f32
    %177 = vector.broadcast %cst_153 : f32 to vector<8x32xf32>
    %178 = arith.maximumf %176, %177 : vector<8x32xf32>
    %179 = arith.addf %173, %178 : vector<8x32xf32>
    %180 = arith.truncf %179 : vector<8x32xf32> to vector<8x32xbf16>
    %c0_154 = arith.constant 0 : index
    %c0_155 = arith.constant 0 : index
    %181 = vector.load %arg11[%c0_154, %c0_155] : memref<32x2xbf16, #tpu.memory_space<vmem>>, vector<32x2xbf16>
    %cst_156 = arith.constant dense<0.000000e+00> : vector<8x2xf32>
    %182 = tpu.matmul %180, %181, %cst_156 {dimension_numbers = #tpu.dot_dimension_numbers<[1], [0], [0], [1], [0, 0, 1, 1], [], []>} : vector<8x32xbf16>, vector<32x2xbf16>, vector<8x2xf32> -> vector<8x2xf32>
    %183 = tpu.iota {dimensions = array<i32: 1>} : vector<8x2xi32>
    %c1_i32 = arith.constant 1 : i32
    %184 = vector.broadcast %c1_i32 : i32 to vector<8x2xi32>
    %185 = arith.cmpi eq, %183, %184 : vector<8x2xi32>
    %cst_157 = arith.constant 0.000000e+00 : f32
    %186 = vector.broadcast %cst_157 : f32 to vector<8x2xf32>
    %187 = arith.maximumf %182, %186 : vector<8x2xf32>
    %188 = vector.broadcast %cst_157 : f32 to vector<8x2xf32>
    %189 = arith.subf %182, %188 : vector<8x2xf32>
    %190 = arith.cmpf one, %189, %189 : vector<8x2xf32>
    %191 = vector.broadcast %cst_157 : f32 to vector<8x2xf32>
    %192 = arith.addf %182, %191 : vector<8x2xf32>
    %193 = math.absf %189 : vector<8x2xf32>
    %cst_158 = arith.constant 0.000000e+00 : f32
    %194 = vector.broadcast %cst_158 : f32 to vector<8x2xf32>
    %195 = arith.subf %194, %193 : vector<8x2xf32>
    %196 = math.exp %195 : vector<8x2xf32>
    %197 = math.log1p %196 : vector<8x2xf32>
    %198 = arith.addf %187, %197 : vector<8x2xf32>
    %199 = arith.select %190, %192, %198 : vector<8x2xi1>, vector<8x2xf32>
    %200 = arith.select %185, %199, %182 : vector<8x2xi1>, vector<8x2xf32>
    %c0_159 = arith.constant 0 : index
    %c0_160 = arith.constant 0 : index
    %c0_161 = arith.constant 0 : index
    %201 = vector.load %arg12[%c0_159, %c0_160, %c0_161] : memref<1x8x2xf32, #tpu.memory_space<vmem>>, vector<1x8x2xf32>
    %202 = vector.shape_cast %201 : vector<1x8x2xf32> to vector<8x2xf32>
    %203 = vector.shape_cast %200 : vector<8x2xf32> to vector<1x8x2xf32>
    tpu.vector_store %arg12[%c0_159, %c0_160, %c0_161], %203 {strides = array<i32>} : memref<1x8x2xf32, #tpu.memory_space<vmem>>, vector<1x8x2xf32>,
    return
  }
  func.func @transform_0(%arg0: i32) -> (i32, i32) {
    %c0_i32 = arith.constant 0 : i32
    %c0_i32_0 = arith.constant 0 : i32
    return %arg0, %c0_i32 : i32, i32
  }
  func.func @transform_1(%arg0: i32) -> (i32, i32, i32) {
    %c0_i32 = arith.constant 0 : i32
    %c0_i32_0 = arith.constant 0 : i32
    %c0_i32_1 = arith.constant 0 : i32
    return %arg0, %c0_i32, %c0_i32_0 : i32, i32, i32
  }
  func.func @transform_2(%arg0: i32) -> (i32, i32, i32) {
    %c0_i32 = arith.constant 0 : i32
    %c0_i32_0 = arith.constant 0 : i32
    %c0_i32_1 = arith.constant 0 : i32
    return %arg0, %c0_i32, %c0_i32_0 : i32, i32, i32
  }
  func.func @transform_3(%arg0: i32) -> (i32, i32, i32) {
    %c0_i32 = arith.constant 0 : i32
    %c0_i32_0 = arith.constant 0 : i32
    %c0_i32_1 = arith.constant 0 : i32
    return %arg0, %c0_i32, %c0_i32_0 : i32, i32, i32
  }
  func.func @transform_4(%arg0: i32) -> (i32, i32) {
    %c0_i32 = arith.constant 0 : i32
    %c0_i32_0 = arith.constant 0 : i32
    %c0_i32_1 = arith.constant 0 : i32
    return %c0_i32, %c0_i32_0 : i32, i32
  }
  func.func @transform_5(%arg0: i32) -> (i32, i32) {
    %c0_i32 = arith.constant 0 : i32
    %c0_i32_0 = arith.constant 0 : i32
    %c0_i32_1 = arith.constant 0 : i32
    return %c0_i32, %c0_i32_0 : i32, i32
  }
  func.func @transform_6(%arg0: i32) -> (i32, i32, i32) {
    %c0_i32 = arith.constant 0 : i32
    %c0_i32_0 = arith.constant 0 : i32
    %c0_i32_1 = arith.constant 0 : i32
    %c0_i32_2 = arith.constant 0 : i32
    return %c0_i32, %c0_i32_0, %c0_i32_1 : i32, i32, i32
  }
  func.func @transform_7(%arg0: i32) -> (i32, i32, i32) {
    %c0_i32 = arith.constant 0 : i32
    %c0_i32_0 = arith.constant 0 : i32
    %c0_i32_1 = arith.constant 0 : i32
    %c0_i32_2 = arith.constant 0 : i32
    return %c0_i32, %c0_i32_0, %c0_i32_1 : i32, i32, i32
  }
  func.func @transform_8(%arg0: i32) -> (i32, i32, i32) {
    %c0_i32 = arith.constant 0 : i32
    %c0_i32_0 = arith.constant 0 : i32
    %c0_i32_1 = arith.constant 0 : i32
    %c0_i32_2 = arith.constant 0 : i32
    return %c0_i32, %c0_i32_0, %c0_i32_1 : i32, i32, i32
  }
  func.func @transform_9(%arg0: i32) -> (i32, i32) {
    %c0_i32 = arith.constant 0 : i32
    %c0_i32_0 = arith.constant 0 : i32
    %c0_i32_1 = arith.constant 0 : i32
    return %c0_i32, %c0_i32_0 : i32, i32
  }
  func.func @transform_10(%arg0: i32) -> (i32, i32) {
    %c0_i32 = arith.constant 0 : i32
    %c0_i32_0 = arith.constant 0 : i32
    %c0_i32_1 = arith.constant 0 : i32
    return %c0_i32, %c0_i32_0 : i32, i32
  }
  func.func @transform_11(%arg0: i32) -> (i32, i32, i32) {
    %c0_i32 = arith.constant 0 : i32
    %c0_i32_0 = arith.constant 0 : i32
    %c0_i32_1 = arith.constant 0 : i32
    return %arg0, %c0_i32, %c0_i32_0 : i32, i32, i32
  }
}

</mosaic_0001>

<llo_original>
// kernel: tpu_custom_call.1
$region0: #{tpu_custom_call.1}
  #allocation0 [shape = 'u32[]', space=smem, size = 0x4, offset = 0x4, fixed_abs, tag = 'smem constant byte address 0x4 - core index']
  #allocation1 [shape = 'u32[144,128]{1,0:T(1,128)}', space=vmem, size = 0x12000, scoped, tag = 'internal scratch']
  %s0 = inlined_call_operand.vmem [shape: bf16[1024,8], index: 0, kind: input, shape index: {}]
  %s1 = inlined_call_operand.vmem [shape: bf16[8,128,128], index: 1, kind: input, shape index: {}]
  %s2 = inlined_call_operand.hbm [shape: bf16[8,128,128], index: 2, kind: input, shape index: {}]
  %s3 = inlined_call_operand.hbm [shape: bf16[2,8,512], index: 3, kind: input, shape index: {}]
  %s4 = inlined_call_operand.hbm [shape: f32[1,32], index: 4, kind: input, shape index: {}]
  %s5 = inlined_call_operand.hbm [shape: bf16[8,32], index: 5, kind: input, shape index: {}]
  %s6 = inlined_call_operand.hbm [shape: bf16[3,32,32], index: 6, kind: input, shape index: {}]
  %s7 = inlined_call_operand.hbm [shape: bf16[3,32,32], index: 7, kind: input, shape index: {}]
  %s8 = inlined_call_operand.vmem [shape: bf16[4,32,32], index: 8, kind: input, shape index: {}]
  %s9 = inlined_call_operand.hbm [shape: bf16[32,32], index: 9, kind: input, shape index: {}]
  %s10 = inlined_call_operand.vmem [shape: bf16[32,2], index: 10, kind: input, shape index: {}]
  %s11 = inlined_call_operand.vmem [shape: f32[2,8,2], index: 11, kind: output, shape index: {}]
  %s12 = sld [smem:[#allocation0]]
  $region105: #{tpu_custom_call.1} parent=0
    _
  %s14 = ssub.s32 1, %s12
  %s15 = scalar_select 0, %s14, %s12
  $region1: #{tpu_custom_call.1} parent=0
    #allocation2 [shape = 'u8[262144]{0}', space=vmem, size = 0x40000, scoped, tag = 'input window, operand 2']
    #allocation3 [shape = 's32[2]{0}', space=sflag, size = 0x8, scoped, tag = 'scoped memory for tpu_custom_call.1']
    #allocation4 [shape = 'u8[16384]{0}', space=vmem, size = 0x4000, scoped, tag = 'input window, operand 3']
    #allocation5 [shape = 's32[2]{0}', space=sflag, size = 0x8, scoped, tag = 'scoped memory for tpu_custom_call.1']
    #allocation6 [shape = 'u8[512]{0}', space=vmem, size = 0x400, scoped, tag = 'input window, operand 4, single buffered']
    #allocation7 [shape = 'u8[2048]{0}', space=vmem, size = 0x800, scoped, tag = 'input window, operand 5, single buffered']
    #allocation8 [shape = 's32[1]{0}', space=sflag, size = 0x4, scoped, tag = 'scoped memory for tpu_custom_call.1']
    #allocation9 [shape = 'u8[24576]{0}', space=vmem, size = 0x6000, scoped, tag = 'input window, operand 6, single buffered']
    #allocation10 [shape = 'u8[24576]{0}', space=vmem, size = 0x6000, scoped, tag = 'input window, operand 7, single buffered']
    #allocation11 [shape = 's32[1]{0}', space=sflag, size = 0x4, scoped, tag = 'scoped memory for tpu_custom_call.1']
    #allocation12 [shape = 'u8[8192]{0}', space=vmem, size = 0x2000, scoped, tag = 'input window, operand 9, single buffered']
    %16 = vsyncpa [#allocation3], 0
    %s17 = scalar_lea.sflag [#allocation3], 1
    %18 = vsyncpa %s17, 0
    %19 = vsyncpa [#allocation5], 0
    %s20 = scalar_lea.sflag [#allocation5], 1
    %21 = vsyncpa %s20, 0
    %22 = vsyncpa [#allocation8], 0
    %23 = vsyncpa [#allocation11], 0
    loop: start=0, step=1, limit=4
    $region2: #{tpu_custom_call.1} parent=1 // loop_pre_header
      _
    $region3: #{tpu_custom_call.1} parent=1 // loop_header
      %s25 = sphi 0, %s29
      %p26 = scmp.ge.s32.totalorder %s25, 4
      %s35 = sphi 0, %s37
      %s38 = sphi 0, %s35
      %s39 = sphi 0, %s38
      %s55 = sphi 0, %s39
      %s61 = sphi 0, %s63
      %s64 = sphi 0, %s61
      %s65 = sphi 0, %s64
      %s81 = sphi 0, %s65
      %s87 = sphi 0, %s89
      %s90 = sphi 0, %s87
      %s91 = sphi 0, %s90
      %s107 = sphi 0, %s91
      %s113 = sphi 0, %s115
      %s116 = sphi 0, %s113
      %s117 = sphi 0, %s116
      %s133 = sphi 0, %s117
      %s137 = sphi 0, %s137
      %s139 = sphi 0, %s137
      %s140 = sphi 0, %s139
      %s154 = sphi 0, %s140
      %s158 = sphi 0, %s158
      %s160 = sphi 0, %s158
      %s161 = sphi 0, %s160
      %s175 = sphi 0, %s161
      %s179 = sphi 0, %s179
      %s181 = sphi 0, %s179
      %s182 = sphi 0, %s181
      %s196 = sphi 0, %s182
      %s200 = sphi 0, %s200
      %s202 = sphi 0, %s200
      %s203 = sphi 0, %s202
      %s217 = sphi 0, %s203
      %s221 = sphi 0, %s221
      %s223 = sphi 0, %s221
      %s224 = sphi 0, %s223
      %s238 = sphi 0, %s224
      %s242 = sphi 0, %s242
      %s244 = sphi 0, %s242
      %s245 = sphi 0, %s244
      %s259 = sphi 0, %s245
      %s263 = sphi 0, %s263
      %s265 = sphi 0, %s263
      %s266 = sphi 0, %s265
      %s280 = sphi 0, %s266
      %s286 = sphi 0, %s288
      %s289 = sphi 0, %s286
      %s290 = sphi 0, %s289
      %s306 = sphi 0, %s290
    $region4: #{tpu_custom_call.1} parent=1 // loop_header_branch
      %28 = sbr.rel (%p26) target = $region8
    $region5: #{tpu_custom_call.1} parent=1 // loop_body
      %s30 = ssub.s32 %s25, 1
      %s31 = ssub.s32 %s25, 2
      %s32 = sadd.s32 %s25, 1
      %s33 = ssub.s32 %s25, %s32
      %p34 = scmp.eq.s32.totalorder %s33, 0
      %s36 = sadd.s32 %s35, 1
      %s37 = scalar_select %p34, %s35, %s36
      %p40 = pneg %p34
      %p41 = scmp.eq.s32.totalorder %s25, 1
      %p42 = por %p40, %p41
      %p43 = scmp.ne.s32.totalorder %s35, %s38
      %p44 = scmp.eq.s32.totalorder %s25, 0
      %p45 = por %p43, %p44
      %p46 = scmp.ne.s32.totalorder %s35, %s38
      %p47 = scmp.eq.s32.totalorder %s30, 1
      %p48 = por %p46, %p47
      %p49 = scmp.ne.s32.totalorder %s38, %s39
      %p50 = scmp.eq.s32.totalorder %s30, 0
      %p51 = por %p49, %p50
      %p52 = scmp.ne.s32.totalorder %s38, %s39
      %p53 = scmp.eq.s32.totalorder %s31, 1
      %p54 = por %p52, %p53
      %p56 = scmp.ne.s32.totalorder %s39, %s55
      %p57 = scmp.eq.s32.totalorder %s31, 0
      %p58 = por %p56, %p57
      %s59 = ssub.s32 %s25, %s32
      %p60 = scmp.eq.s32.totalorder %s59, 0
      %s62 = sadd.s32 %s61, 1
      %s63 = scalar_select %p60, %s61, %s62
      %p66 = pneg %p60
      %p67 = scmp.eq.s32.totalorder %s25, 1
      %p68 = por %p66, %p67
      %p69 = scmp.ne.s32.totalorder %s61, %s64
      %p70 = scmp.eq.s32.totalorder %s25, 0
      %p71 = por %p69, %p70
      %p72 = scmp.ne.s32.totalorder %s61, %s64
      %p73 = scmp.eq.s32.totalorder %s30, 1
      %p74 = por %p72, %p73
      %p75 = scmp.ne.s32.totalorder %s64, %s65
      %p76 = scmp.eq.s32.totalorder %s30, 0
      %p77 = por %p75, %p76
      %p78 = scmp.ne.s32.totalorder %s64, %s65
      %p79 = scmp.eq.s32.totalorder %s31, 1
      %p80 = por %p78, %p79
      %p82 = scmp.ne.s32.totalorder %s65, %s81
      %p83 = scmp.eq.s32.totalorder %s31, 0
      %p84 = por %p82, %p83
      %s85 = ssub.s32 %s25, %s32
      %p86 = scmp.eq.s32.totalorder %s85, 0
      %s88 = sadd.s32 %s87, 1
      %s89 = scalar_select %p86, %s87, %s88
      %p92 = pneg %p86
      %p93 = scmp.eq.s32.totalorder %s25, 1
      %p94 = por %p92, %p93
      %p95 = scmp.ne.s32.totalorder %s87, %s90
      %p96 = scmp.eq.s32.totalorder %s25, 0
      %p97 = por %p95, %p96
      %p98 = scmp.ne.s32.totalorder %s87, %s90
      %p99 = scmp.eq.s32.totalorder %s30, 1
      %p100 = por %p98, %p99
      %p101 = scmp.ne.s32.totalorder %s90, %s91
      %p102 = scmp.eq.s32.totalorder %s30, 0
      %p103 = por %p101, %p102
      %p104 = scmp.ne.s32.totalorder %s90, %s91
      %p105 = scmp.eq.s32.totalorder %s31, 1
      %p106 = por %p104, %p105
      %p108 = scmp.ne.s32.totalorder %s91, %s107
      %p109 = scmp.eq.s32.totalorder %s31, 0
      %p110 = por %p108, %p109
      %s111 = ssub.s32 %s25, %s32
      %p112 = scmp.eq.s32.totalorder %s111, 0
      %s114 = sadd.s32 %s113, 1
      %s115 = scalar_select %p112, %s113, %s114
      %p118 = pneg %p112
      %p119 = scmp.eq.s32.totalorder %s25, 1
      %p120 = por %p118, %p119
      %p121 = scmp.ne.s32.totalorder %s113, %s116
      %p122 = scmp.eq.s32.totalorder %s25, 0
      %p123 = por %p121, %p122
      %p124 = scmp.ne.s32.totalorder %s113, %s116
      %p125 = scmp.eq.s32.totalorder %s30, 1
      %p126 = por %p124, %p125
      %p127 = scmp.ne.s32.totalorder %s116, %s117
      %p128 = scmp.eq.s32.totalorder %s30, 0
      %p129 = por %p127, %p128
      %p130 = scmp.ne.s32.totalorder %s116, %s117
      %p131 = scmp.eq.s32.totalorder %s31, 1
      %p132 = por %p130, %p131
      %p134 = scmp.ne.s32.totalorder %s117, %s133
      %p135 = scmp.eq.s32.totalorder %s31, 0
      %p136 = por %p134, %p135
      %s138 = sadd.s32 %s137, 1
      %p141 = scmp.eq.s32.totalorder %s25, 1
      %p142 = scmp.ne.s32.totalorder %s137, %s139
      %p143 = scmp.eq.s32.totalorder %s25, 0
      %p144 = por %p142, %p143
      %p145 = scmp.ne.s32.totalorder %s137, %s139
      %p146 = scmp.eq.s32.totalorder %s30, 1
      %p147 = por %p145, %p146
      %p148 = scmp.ne.s32.totalorder %s139, %s140
      %p149 = scmp.eq.s32.totalorder %s30, 0
      %p150 = por %p148, %p149
      %p151 = scmp.ne.s32.totalorder %s139, %s140
      %p152 = scmp.eq.s32.totalorder %s31, 1
      %p153 = por %p151, %p152
      %p155 = scmp.ne.s32.totalorder %s140, %s154
      %p156 = scmp.eq.s32.totalorder %s31, 0
      %p157 = por %p155, %p156
      %s159 = sadd.s32 %s158, 1
      %p162 = scmp.eq.s32.totalorder %s25, 1
      %p163 = scmp.ne.s32.totalorder %s158, %s160
      %p164 = scmp.eq.s32.totalorder %s25, 0
      %p165 = por %p163, %p164
      %p166 = scmp.ne.s32.totalorder %s158, %s160
      %p167 = scmp.eq.s32.totalorder %s30, 1
      %p168 = por %p166, %p167
      %p169 = scmp.ne.s32.totalorder %s160, %s161
      %p170 = scmp.eq.s32.totalorder %s30, 0
      %p171 = por %p169, %p170
      %p172 = scmp.ne.s32.totalorder %s160, %s161
      %p173 = scmp.eq.s32.totalorder %s31, 1
      %p174 = por %p172, %p173
      %p176 = scmp.ne.s32.totalorder %s161, %s175
      %p177 = scmp.eq.s32.totalorder %s31, 0
      %p178 = por %p176, %p177
      %s180 = sadd.s32 %s179, 1
      %p183 = scmp.eq.s32.totalorder %s25, 1
      %p184 = scmp.ne.s32.totalorder %s179, %s181
      %p185 = scmp.eq.s32.totalorder %s25, 0
      %p186 = por %p184, %p185
      %p187 = scmp.ne.s32.totalorder %s179, %s181
      %p188 = scmp.eq.s32.totalorder %s30, 1
      %p189 = por %p187, %p188
      %p190 = scmp.ne.s32.totalorder %s181, %s182
      %p191 = scmp.eq.s32.totalorder %s30, 0
      %p192 = por %p190, %p191
      %p193 = scmp.ne.s32.totalorder %s181, %s182
      %p194 = scmp.eq.s32.totalorder %s31, 1
      %p195 = por %p193, %p194
      %p197 = scmp.ne.s32.totalorder %s182, %s196
      %p198 = scmp.eq.s32.totalorder %s31, 0
      %p199 = por %p197, %p198
      %s201 = sadd.s32 %s200, 1
      %p204 = scmp.eq.s32.totalorder %s25, 1
      %p205 = scmp.ne.s32.totalorder %s200, %s202
      %p206 = scmp.eq.s32.totalorder %s25, 0
      %p207 = por %p205, %p206
      %p208 = scmp.ne.s32.totalorder %s200, %s202
      %p209 = scmp.eq.s32.totalorder %s30, 1
      %p210 = por %p208, %p209
      %p211 = scmp.ne.s32.totalorder %s202, %s203
      %p212 = scmp.eq.s32.totalorder %s30, 0
      %p213 = por %p211, %p212
      %p214 = scmp.ne.s32.totalorder %s202, %s203
      %p215 = scmp.eq.s32.totalorder %s31, 1
      %p216 = por %p214, %p215
      %p218 = scmp.ne.s32.totalorder %s203, %s217
      %p219 = scmp.eq.s32.totalorder %s31, 0
      %p220 = por %p218, %p219
      %s222 = sadd.s32 %s221, 1
      %p225 = scmp.eq.s32.totalorder %s25, 1
      %p226 = scmp.ne.s32.totalorder %s221, %s223
      %p227 = scmp.eq.s32.totalorder %s25, 0
      %p228 = por %p226, %p227
      %p229 = scmp.ne.s32.totalorder %s221, %s223
      %p230 = scmp.eq.s32.totalorder %s30, 1
      %p231 = por %p229, %p230
      %p232 = scmp.ne.s32.totalorder %s223, %s224
      %p233 = scmp.eq.s32.totalorder %s30, 0
      %p234 = por %p232, %p233
      %p235 = scmp.ne.s32.totalorder %s223, %s224
      %p236 = scmp.eq.s32.totalorder %s31, 1
      %p237 = por %p235, %p236
      %p239 = scmp.ne.s32.totalorder %s224, %s238
      %p240 = scmp.eq.s32.totalorder %s31, 0
      %p241 = por %p239, %p240
      %s243 = sadd.s32 %s242, 1
      %p246 = scmp.eq.s32.totalorder %s25, 1
      %p247 = scmp.ne.s32.totalorder %s242, %s244
      %p248 = scmp.eq.s32.totalorder %s25, 0
      %p249 = por %p247, %p248
      %p250 = scmp.ne.s32.totalorder %s242, %s244
      %p251 = scmp.eq.s32.totalorder %s30, 1
      %p252 = por %p250, %p251
      %p253 = scmp.ne.s32.totalorder %s244, %s245
      %p254 = scmp.eq.s32.totalorder %s30, 0
      %p255 = por %p253, %p254
      %p256 = scmp.ne.s32.totalorder %s244, %s245
      %p257 = scmp.eq.s32.totalorder %s31, 1
      %p258 = por %p256, %p257
      %p260 = scmp.ne.s32.totalorder %s245, %s259
      %p261 = scmp.eq.s32.totalorder %s31, 0
      %p262 = por %p260, %p261
      %s264 = sadd.s32 %s263, 1
      %p267 = scmp.eq.s32.totalorder %s25, 1
      %p268 = scmp.ne.s32.totalorder %s263, %s265
      %p269 = scmp.eq.s32.totalorder %s25, 0
      %p270 = por %p268, %p269
      %p271 = scmp.ne.s32.totalorder %s263, %s265
      %p272 = scmp.eq.s32.totalorder %s30, 1
      %p273 = por %p271, %p272
      %p274 = scmp.ne.s32.totalorder %s265, %s266
      %p275 = scmp.eq.s32.totalorder %s30, 0
      %p276 = por %p274, %p275
      %p277 = scmp.ne.s32.totalorder %s265, %s266
      %p278 = scmp.eq.s32.totalorder %s31, 1
      %p279 = por %p277, %p278
      %p281 = scmp.ne.s32.totalorder %s266, %s280
      %p282 = scmp.eq.s32.totalorder %s31, 0
      %p283 = por %p281, %p282
      %s284 = ssub.s32 %s25, %s32
      %p285 = scmp.eq.s32.totalorder %s284, 0
      %s287 = sadd.s32 %s286, 1
      %s288 = scalar_select %p285, %s286, %s287
      %p291 = pneg %p285
      %p292 = scmp.eq.s32.totalorder %s25, 1
      %p293 = por %p291, %p292
      %p294 = scmp.ne.s32.totalorder %s286, %s289
      %p295 = scmp.eq.s32.totalorder %s25, 0
      %p296 = por %p294, %p295
      %p297 = scmp.ne.s32.totalorder %s286, %s289
      %p298 = scmp.eq.s32.totalorder %s30, 1
      %p299 = por %p297, %p298
      %p300 = scmp.ne.s32.totalorder %s289, %s290
      %p301 = scmp.eq.s32.totalorder %s30, 0
      %p302 = por %p300, %p301
      %p303 = scmp.ne.s32.totalorder %s289, %s290
      %p304 = scmp.eq.s32.totalorder %s31, 1
      %p305 = por %p303, %p304
      %p307 = scmp.ne.s32.totalorder %s290, %s306
      %p308 = scmp.eq.s32.totalorder %s31, 0
      %p309 = por %p307, %p308
      %p310 = scmp.le.s32.totalorder 1, %s25
      %p311 = scmp.lt.s32.totalorder %s25, 3
      %p312 = pnand %p310, %p311
      %p313 = pneg %p312
      // Predicated region
      $region9: #{tpu_custom_call.1} parent=5 // pred_check
        _
      $region10: #{tpu_custom_call.1} parent=5 // pred_check_branch
        %315 = sbr.rel (%p312) target = $region12
      $region11: #{tpu_custom_call.1} parent=5 // pred_region
        %s316 = ssub.s32 %s25, 1
        // Predicated region
        $region13: #{tpu_custom_call.1} parent=11 // pred_check
          %p317 = pneg %p150
        $region14: #{tpu_custom_call.1} parent=11 // pred_check_branch
          %319 = sbr.rel (%p317) target = $region16
        $region15: #{tpu_custom_call.1} parent=11 // pred_region
          %s321 = ssub.s32 16, 16
          %322 = vsyncadd [#allocation5], %s321
          %s324 = sshll.u32 [#allocation6], 4
          %s325 = int_to_ptr.vmem [resolvable:$true] %s324
          %327 = dma.hbm_to_vmem [thread:$0]  %s4, 16, %s325, [#allocation5]
        $region16: #{tpu_custom_call.1} parent=11 // pred_fallthru
          _
        // Predicated region
        $region17: #{tpu_custom_call.1} parent=11 // pred_check
          %p328 = pneg %p171
        $region18: #{tpu_custom_call.1} parent=11 // pred_check_branch
          %330 = sbr.rel (%p328) target = $region20
        $region19: #{tpu_custom_call.1} parent=11 // pred_region
          %s332 = ssub.s32 64, 64
          %333 = vsyncadd [#allocation8], %s332
          %s335 = sshll.u32 [#allocation7], 4
          %s336 = int_to_ptr.vmem [resolvable:$true] %s335
          %338 = dma.hbm_to_vmem [thread:$0]  %s5, 64, %s336, [#allocation8]
        $region20: #{tpu_custom_call.1} parent=11 // pred_fallthru
          _
        // Predicated region
        $region21: #{tpu_custom_call.1} parent=11 // pred_check
          %p339 = pneg %p192
        $region22: #{tpu_custom_call.1} parent=11 // pred_check_branch
          %341 = sbr.rel (%p339) target = $region24
        $region23: #{tpu_custom_call.1} parent=11 // pred_region
          %s343 = ssub.s32 768, 768
          %344 = vsyncadd [#allocation8], %s343
          %s345 = sshll.u32 [#allocation9], 4
          %s346 = int_to_ptr.vmem [resolvable:$true] %s345
          %351 = dma.hbm_to_vmem [thread:$0]  %s6, 768, %s346, [#allocation8], 64, 64, 4
        $region24: #{tpu_custom_call.1} parent=11 // pred_fallthru
          _
        // Predicated region
        $region25: #{tpu_custom_call.1} parent=11 // pred_check
          %p352 = pneg %p213
        $region26: #{tpu_custom_call.1} parent=11 // pred_check_branch
          %354 = sbr.rel (%p352) target = $region28
        $region27: #{tpu_custom_call.1} parent=11 // pred_region
          %s356 = ssub.s32 768, 768
          %357 = vsyncadd [#allocation11], %s356
          %s358 = sshll.u32 [#allocation10], 4
          %s359 = int_to_ptr.vmem [resolvable:$true] %s358
          %364 = dma.hbm_to_vmem [thread:$0]  %s7, 768, %s359, [#allocation11], 64, 64, 4
        $region28: #{tpu_custom_call.1} parent=11 // pred_fallthru
          _
        // Predicated region
        $region29: #{tpu_custom_call.1} parent=11 // pred_check
          %p365 = pneg %p234
        $region30: #{tpu_custom_call.1} parent=11 // pred_check_branch
          %367 = sbr.rel (%p365) target = $region32
        $region31: #{tpu_custom_call.1} parent=11 // pred_region
          _
        $region32: #{tpu_custom_call.1} parent=11 // pred_fallthru
          _
        // Predicated region
        $region33: #{tpu_custom_call.1} parent=11 // pred_check
          %p368 = pneg %p255
        $region34: #{tpu_custom_call.1} parent=11 // pred_check_branch
          %370 = sbr.rel (%p368) target = $region36
        $region35: #{tpu_custom_call.1} parent=11 // pred_region
          %s372 = ssub.s32 256, 256
          %373 = vsyncadd [#allocation11], %s372
          %s374 = sshll.u32 [#allocation12], 4
          %s375 = int_to_ptr.vmem [resolvable:$true] %s374
          %380 = dma.hbm_to_vmem [thread:$0]  %s9, 256, %s375, [#allocation11], 64, 64, 4
        $region36: #{tpu_custom_call.1} parent=11 // pred_fallthru
          _
        // Predicated region
        $region37: #{tpu_custom_call.1} parent=11 // pred_check
          %p381 = pneg %p276
        $region38: #{tpu_custom_call.1} parent=11 // pred_check_branch
          %383 = sbr.rel (%p381) target = $region40
        $region39: #{tpu_custom_call.1} parent=11 // pred_region
          _
        $region40: #{tpu_custom_call.1} parent=11 // pred_fallthru
          _
      $region12: #{tpu_custom_call.1} parent=5 // pred_fallthru
        _
      %p384 = scmp.lt.s32.totalorder %s25, 2
      // Predicated region
      $region41: #{tpu_custom_call.1} parent=5 // pred_check
        %p385 = pneg %p384
      $region42: #{tpu_custom_call.1} parent=5 // pred_check_branch
        %387 = sbr.rel (%p385) target = $region44
      $region43: #{tpu_custom_call.1} parent=5 // pred_region
        // Predicated region
        $region45: #{tpu_custom_call.1} parent=43 // pred_check
          %p388 = pneg %p45
        $region46: #{tpu_custom_call.1} parent=43 // pred_check_branch
          %390 = sbr.rel (%p388) target = $region48
        $region47: #{tpu_custom_call.1} parent=43 // pred_region
          %s391 = smul.u32 64, %s25
          %p392 = scmp.lt.s32.totalorder %s391, 127
          %s393 = scalar_select %p392, %s391, 127
          %s394 = smul.addr %s393, 4
          %s395 = scalar_lea.vmem %s0, %s394
          %s396 = smul.u32 64, %s25
        $region48: #{tpu_custom_call.1} parent=43 // pred_fallthru
          _
        // Predicated region
        $region49: #{tpu_custom_call.1} parent=43 // pred_check
          %p397 = pneg %p71
        $region50: #{tpu_custom_call.1} parent=43 // pred_check_branch
          %399 = sbr.rel (%p397) target = $region52
        $region51: #{tpu_custom_call.1} parent=43 // pred_region
          %s400 = smul.u32 4, %s25
          %p401 = scmp.lt.s32.totalorder %s400, 7
          %s402 = scalar_select %p401, %s400, 7
          %s403 = smul.addr %s402, 16
          %s404 = smul.addr %s403, 4
          %s405 = scalar_lea.vmem %s1, %s404
          %s406 = smul.u32 4, %s25
        $region52: #{tpu_custom_call.1} parent=43 // pred_fallthru
          _
        // Predicated region
        $region53: #{tpu_custom_call.1} parent=43 // pred_check
          %p407 = pneg %p97
        $region54: #{tpu_custom_call.1} parent=43 // pred_check_branch
          %409 = sbr.rel (%p407) target = $region56
        $region55: #{tpu_custom_call.1} parent=43 // pred_region
          %s410 = sand.u32 %s87, 1
          %s411 = scalar_lea.sflag [#allocation3], %s410
          %s412 = sand.u32 %s87, 1
          %s413 = smul.addr %s412, 256
          %s414 = scalar_lea.vmem [#allocation2], %s413
          %s415 = smul.u32 4, %s25
          %s417 = ssub.s32 4096, 4096
          %418 = vsyncadd %s411, %s417
          %s419 = smul.addr %s415, 16
          %s420 = smul.addr %s419, 64
          %s421 = scalar_lea.hbm %s2, %s420
          %s422 = sshll.u32 %s414, 4
          %s423 = int_to_ptr.vmem [resolvable:$true] %s422
          %428 = dma.hbm_to_vmem [thread:$0]  %s421, 4096, %s423, %s411, 64, 64, 4
        $region56: #{tpu_custom_call.1} parent=43 // pred_fallthru
          _
        // Predicated region
        $region57: #{tpu_custom_call.1} parent=43 // pred_check
          %p429 = pneg %p123
        $region58: #{tpu_custom_call.1} parent=43 // pred_check_branch
          %431 = sbr.rel (%p429) target = $region60
        $region59: #{tpu_custom_call.1} parent=43 // pred_region
          %s432 = sand.u32 %s25, 1
          %s433 = scalar_lea.sflag [#allocation5], %s432
          %s434 = sand.u32 %s113, 1
          %s435 = smul.addr %s434, 16
          %s436 = scalar_lea.vmem [#allocation4], %s435
          %s438 = ssub.s32 256, 256
          %439 = vsyncadd %s433, %s438
          %s440 = smul.addr %s25, 4
          %s441 = smul.addr %s440, 64
          %s442 = scalar_lea.hbm %s3, %s441
          %s444 = sshll.u32 %s436, 4
          %s445 = int_to_ptr.vmem [resolvable:$true] %s444
          %447 = dma.hbm_to_vmem [thread:$0]  %s442, 256, %s445, %s433
        $region60: #{tpu_custom_call.1} parent=43 // pred_fallthru
          _
      $region44: #{tpu_custom_call.1} parent=5 // pred_fallthru
        _
      %p448 = scmp.le.s32.totalorder 1, %s25
      %p449 = scmp.lt.s32.totalorder %s25, 3
      %p450 = pnand %p448, %p449
      %p451 = pneg %p450
      // Predicated region
      $region61: #{tpu_custom_call.1} parent=5 // pred_check
        _
      $region62: #{tpu_custom_call.1} parent=5 // pred_check_branch
        %453 = sbr.rel (%p450) target = $region64
      $region63: #{tpu_custom_call.1} parent=5 // pred_region
        %s454 = ssub.s32 %s25, 1
        %s455 = sand.u32 %s90, 1
        %s456 = scalar_lea.sflag [#allocation3], %s455
        %s457 = sand.u32 %s90, 1
        %s458 = smul.addr %s457, 256
        %s459 = scalar_lea.vmem [#allocation2], %s458
        // Predicated region
        $region65: #{tpu_custom_call.1} parent=63 // pred_check
          %p460 = pneg %p103
        $region66: #{tpu_custom_call.1} parent=63 // pred_check_branch
          %462 = sbr.rel (%p460) target = $region68
        $region67: #{tpu_custom_call.1} parent=63 // pred_region
          %463 = dma.done %s456, 4096
        $region68: #{tpu_custom_call.1} parent=63 // pred_fallthru
          _
        %s464 = sand.u32 %s30, 1
        %s465 = scalar_lea.sflag [#allocation5], %s464
        %s466 = sand.u32 %s116, 1
        %s467 = smul.addr %s466, 16
        %s468 = scalar_lea.vmem [#allocation4], %s467
        // Predicated region
        $region69: #{tpu_custom_call.1} parent=63 // pred_check
          %p469 = pneg %p129
        $region70: #{tpu_custom_call.1} parent=63 // pred_check_branch
          %471 = sbr.rel (%p469) target = $region72
        $region71: #{tpu_custom_call.1} parent=63 // pred_region
          %472 = dma.done %s465, 256
        $region72: #{tpu_custom_call.1} parent=63 // pred_fallthru
          _
        // Predicated region
        $region73: #{tpu_custom_call.1} parent=63 // pred_check
          %p473 = pneg %p150
        $region74: #{tpu_custom_call.1} parent=63 // pred_check_branch
          %475 = sbr.rel (%p473) target = $region76
        $region75: #{tpu_custom_call.1} parent=63 // pred_region
          %476 = dma.done [#allocation5], 16
        $region76: #{tpu_custom_call.1} parent=63 // pred_fallthru
          _
        // Predicated region
        $region77: #{tpu_custom_call.1} parent=63 // pred_check
          %p477 = pneg %p171
        $region78: #{tpu_custom_call.1} parent=63 // pred_check_branch
          %479 = sbr.rel (%p477) target = $region80
        $region79: #{tpu_custom_call.1} parent=63 // pred_region
          %480 = dma.done [#allocation8], 64
        $region80: #{tpu_custom_call.1} parent=63 // pred_fallthru
          _
        // Predicated region
        $region81: #{tpu_custom_call.1} parent=63 // pred_check
          %p481 = pneg %p192
        $region82: #{tpu_custom_call.1} parent=63 // pred_check_branch
          %483 = sbr.rel (%p481) target = $region84
        $region83: #{tpu_custom_call.1} parent=63 // pred_region
          %484 = dma.done [#allocation8], 768
        $region84: #{tpu_custom_call.1} parent=63 // pred_fallthru
          _
        // Predicated region
        $region85: #{tpu_custom_call.1} parent=63 // pred_check
          %p485 = pneg %p213
        $region86: #{tpu_custom_call.1} parent=63 // pred_check_branch
          %487 = sbr.rel (%p485) target = $region88
        $region87: #{tpu_custom_call.1} parent=63 // pred_region
          %488 = dma.done [#allocation11], 768
        $region88: #{tpu_custom_call.1} parent=63 // pred_fallthru
          _
        // Predicated region
        $region89: #{tpu_custom_call.1} parent=63 // pred_check
          %p489 = pneg %p255
        $region90: #{tpu_custom_call.1} parent=63 // pred_check_branch
          %491 = sbr.rel (%p489) target = $region92
        $region91: #{tpu_custom_call.1} parent=63 // pred_region
          %492 = dma.done [#allocation11], 256
        $region92: #{tpu_custom_call.1} parent=63 // pred_fallthru
          _
        %s493 = smul.u32 64, %s30
        %p494 = scmp.lt.s32.totalorder %s493, 127
        %s495 = scalar_select %p494, %s493, 127
        %s496 = smul.addr %s495, 4
        %s497 = scalar_lea.vmem %s0, %s496
        %p498 = pneg %p51
        %p499 = pneg %p48
        %s500 = smul.u32 4, %s30
        %p501 = scmp.lt.s32.totalorder %s500, 7
        %s502 = scalar_select %p501, %s500, 7
        %s503 = smul.addr %s502, 16
        %s504 = smul.addr %s503, 4
        %s505 = scalar_lea.vmem %s1, %s504
        %p506 = pneg %p77
        %p507 = pneg %p74
        %s508 = sand.u32 %s90, 1
        %s509 = scalar_lea.sflag [#allocation3], %s508
        %s510 = sand.u32 %s90, 1
        %s511 = smul.addr %s510, 256
        %s512 = scalar_lea.vmem [#allocation2], %s511
        %p513 = pneg %p103
        %p514 = pneg %p100
        %s515 = sand.u32 %s30, 1
        %s516 = scalar_lea.sflag [#allocation5], %s515
        %s517 = sand.u32 %s116, 1
        %s518 = smul.addr %s517, 16
        %s519 = scalar_lea.vmem [#allocation4], %s518
        %p520 = pneg %p129
        %p521 = pneg %p126
        %p522 = pneg %p150
        %p523 = pneg %p147
        %p524 = pneg %p171
        %p525 = pneg %p168
        %p526 = pneg %p192
        %p527 = pneg %p189
        %p528 = pneg %p213
        %p529 = pneg %p210
        %p530 = pneg %p234
        %p531 = pneg %p231
        %p532 = pneg %p255
        %p533 = pneg %p252
        %p534 = pneg %p276
        %p535 = pneg %p273
        %p536 = pneg %p302
        %p537 = pneg %p299
        %p538 = scmp.lt.s32.totalorder %s30, 1
        %s539 = scalar_select %p538, %s30, 1
        %s540 = smul.addr %s539, 8
        %s541 = scalar_lea.vmem %s11, %s540
        %s542 = smul.u32 64, %s30
        %p543 = scmp.lt.s32.totalorder %s542, 127
        %s544 = scalar_select %p543, %s542, 127
        %s545 = smul.addr %s544, 4
        %s546 = scalar_lea.vmem %s0, %s545
        %s547 = smul.u32 64, %s30
        %s548 = smul.u32 4, %s30
        %p549 = scmp.lt.s32.totalorder %s548, 7
        %s550 = scalar_select %p549, %s548, 7
        %s551 = smul.addr %s550, 16
        %s552 = smul.addr %s551, 4
        %s553 = scalar_lea.vmem %s1, %s552
        %s554 = smul.u32 4, %s30
        %s555 = smul.u32 4, %s30
        %p556 = scmp.lt.s32.totalorder %s30, 1
        %s557 = scalar_select %p556, %s30, 1
        %s558 = smul.addr %s557, 8
        %s559 = scalar_lea.vmem %s11, %s558
        %v561 = vld [vmem:[%s546] sm:$0xf]
        %v562 = vld [vmem:[%s546 + $0x4] sm:$0xf]
        %v563 = vld [vmem:[%s546 + $0x8] sm:$0xf]
        %v564 = vld [vmem:[%s546 + $0xc] sm:$0xf]
        %v565 = vld [vmem:[%s546 + $0x10] sm:$0xf]
        %v566 = vld [vmem:[%s546 + $0x14] sm:$0xf]
        %v567 = vld [vmem:[%s546 + $0x18] sm:$0xf]
        %v568 = vld [vmem:[%s546 + $0x1c] sm:$0xf]
        %v569 = vld [vmem:[%s546 + $0x20] sm:$0xf]
        %v570 = vld [vmem:[%s546 + $0x24] sm:$0xf]
        %v571 = vld [vmem:[%s546 + $0x28] sm:$0xf]
        %v572 = vld [vmem:[%s546 + $0x2c] sm:$0xf]
        %v573 = vld [vmem:[%s546 + $0x30] sm:$0xf]
        %v574 = vld [vmem:[%s546 + $0x34] sm:$0xf]
        %v575 = vld [vmem:[%s546 + $0x38] sm:$0xf]
        %v576 = vld [vmem:[%s546 + $0x3c] sm:$0xf]
        %v577 = vld [vmem:[%s546 + $0x40] sm:$0xf]
        %v578 = vld [vmem:[%s546 + $0x44] sm:$0xf]
        %v579 = vld [vmem:[%s546 + $0x48] sm:$0xf]
        %v580 = vld [vmem:[%s546 + $0x4c] sm:$0xf]
        %v581 = vld [vmem:[%s546 + $0x50] sm:$0xf]
        %v582 = vld [vmem:[%s546 + $0x54] sm:$0xf]
        %v583 = vld [vmem:[%s546 + $0x58] sm:$0xf]
        %v584 = vld [vmem:[%s546 + $0x5c] sm:$0xf]
        %v585 = vld [vmem:[%s546 + $0x60] sm:$0xf]
        %v586 = vld [vmem:[%s546 + $0x64] sm:$0xf]
        %v587 = vld [vmem:[%s546 + $0x68] sm:$0xf]
        %v588 = vld [vmem:[%s546 + $0x6c] sm:$0xf]
        %v589 = vld [vmem:[%s546 + $0x70] sm:$0xf]
        %v590 = vld [vmem:[%s546 + $0x74] sm:$0xf]
        %v591 = vld [vmem:[%s546 + $0x78] sm:$0xf]
        %v592 = vld [vmem:[%s546 + $0x7c] sm:$0xf]
        %v593 = vld [vmem:[%s546 + $0x80] sm:$0xf]
        %v594 = vld [vmem:[%s546 + $0x84] sm:$0xf]
        %v595 = vld [vmem:[%s546 + $0x88] sm:$0xf]
        %v596 = vld [vmem:[%s546 + $0x8c] sm:$0xf]
        %v597 = vld [vmem:[%s546 + $0x90] sm:$0xf]
        %v598 = vld [vmem:[%s546 + $0x94] sm:$0xf]
        %v599 = vld [vmem:[%s546 + $0x98] sm:$0xf]
        %v600 = vld [vmem:[%s546 + $0x9c] sm:$0xf]
        %v601 = vld [vmem:[%s546 + $0xa0] sm:$0xf]
        %v602 = vld [vmem:[%s546 + $0xa4] sm:$0xf]
        %v603 = vld [vmem:[%s546 + $0xa8] sm:$0xf]
        %v604 = vld [vmem:[%s546 + $0xac] sm:$0xf]
        %v605 = vld [vmem:[%s546 + $0xb0] sm:$0xf]
        %v606 = vld [vmem:[%s546 + $0xb4] sm:$0xf]
        %v607 = vld [vmem:[%s546 + $0xb8] sm:$0xf]
        %v608 = vld [vmem:[%s546 + $0xbc] sm:$0xf]
        %v609 = vld [vmem:[%s546 + $0xc0] sm:$0xf]
        %v610 = vld [vmem:[%s546 + $0xc4] sm:$0xf]
        %v611 = vld [vmem:[%s546 + $0xc8] sm:$0xf]
        %v612 = vld [vmem:[%s546 + $0xcc] sm:$0xf]
        %v613 = vld [vmem:[%s546 + $0xd0] sm:$0xf]
        %v614 = vld [vmem:[%s546 + $0xd4] sm:$0xf]
        %v615 = vld [vmem:[%s546 + $0xd8] sm:$0xf]
        %v616 = vld [vmem:[%s546 + $0xdc] sm:$0xf]
        %v617 = vld [vmem:[%s546 + $0xe0] sm:$0xf]
        %v618 = vld [vmem:[%s546 + $0xe4] sm:$0xf]
        %v619 = vld [vmem:[%s546 + $0xe8] sm:$0xf]
        %v620 = vld [vmem:[%s546 + $0xec] sm:$0xf]
        %v621 = vld [vmem:[%s546 + $0xf0] sm:$0xf]
        %v622 = vld [vmem:[%s546 + $0xf4] sm:$0xf]
        %v623 = vld [vmem:[%s546 + $0xf8] sm:$0xf]
        %v624 = vld [vmem:[%s546 + $0xfc] sm:$0xf]
        %v625 = vld [vmem:[#allocation7] sm:$0xf]
        %v690 = vunpack.c.l.b16 %v561
        %v691 = vunpack.c.l.b16 %v562
        %v692 = vunpack.c.l.b16 %v563
        %v693 = vunpack.c.l.b16 %v564
        %v694 = vunpack.c.l.b16 %v565
        %v695 = vunpack.c.l.b16 %v566
        %v696 = vunpack.c.l.b16 %v567
        %v697 = vunpack.c.l.b16 %v568
        %v698 = vunpack.c.l.b16 %v569
        %v699 = vunpack.c.l.b16 %v570
        %v700 = vunpack.c.l.b16 %v571
        %v701 = vunpack.c.l.b16 %v572
        %v702 = vunpack.c.l.b16 %v573
        %v703 = vunpack.c.l.b16 %v574
        %v704 = vunpack.c.l.b16 %v575
        %v705 = vunpack.c.l.b16 %v576
        %v706 = vunpack.c.l.b16 %v577
        %v707 = vunpack.c.l.b16 %v578
        %v708 = vunpack.c.l.b16 %v579
        %v709 = vunpack.c.l.b16 %v580
        %v710 = vunpack.c.l.b16 %v581
        %v711 = vunpack.c.l.b16 %v582
        %v712 = vunpack.c.l.b16 %v583
        %v713 = vunpack.c.l.b16 %v584
        %v714 = vunpack.c.l.b16 %v585
        %v715 = vunpack.c.l.b16 %v586
        %v716 = vunpack.c.l.b16 %v587
        %v717 = vunpack.c.l.b16 %v588
        %v718 = vunpack.c.l.b16 %v589
        %v719 = vunpack.c.l.b16 %v590
        %v720 = vunpack.c.l.b16 %v591
        %v721 = vunpack.c.l.b16 %v592
        %v722 = vunpack.c.l.b16 %v593
        %v723 = vunpack.c.l.b16 %v594
        %v724 = vunpack.c.l.b16 %v595
        %v725 = vunpack.c.l.b16 %v596
        %v726 = vunpack.c.l.b16 %v597
        %v727 = vunpack.c.l.b16 %v598
        %v728 = vunpack.c.l.b16 %v599
        %v729 = vunpack.c.l.b16 %v600
        %v730 = vunpack.c.l.b16 %v601
        %v731 = vunpack.c.l.b16 %v602
        %v732 = vunpack.c.l.b16 %v603
        %v733 = vunpack.c.l.b16 %v604
        %v734 = vunpack.c.l.b16 %v605
        %v735 = vunpack.c.l.b16 %v606
        %v736 = vunpack.c.l.b16 %v607
        %v737 = vunpack.c.l.b16 %v608
        %v738 = vunpack.c.l.b16 %v609
        %v739 = vunpack.c.l.b16 %v610
        %v740 = vunpack.c.l.b16 %v611
        %v741 = vunpack.c.l.b16 %v612
        %v742 = vunpack.c.l.b16 %v613
        %v743 = vunpack.c.l.b16 %v614
        %v744 = vunpack.c.l.b16 %v615
        %v745 = vunpack.c.l.b16 %v616
        %v746 = vunpack.c.l.b16 %v617
        %v747 = vunpack.c.l.b16 %v618
        %v748 = vunpack.c.l.b16 %v619
        %v749 = vunpack.c.l.b16 %v620
        %v750 = vunpack.c.l.b16 %v621
        %v751 = vunpack.c.l.b16 %v622
        %v752 = vunpack.c.l.b16 %v623
        %v753 = vunpack.c.l.b16 %v624
        %v754 = vpack.c.b16 %v691, %v690
        %v755 = vpack.c.b16 %v693, %v692
        %v756 = vpack.c.b16 %v695, %v694
        %v757 = vpack.c.b16 %v697, %v696
        %v758 = vpack.c.b16 %v699, %v698
        %v759 = vpack.c.b16 %v701, %v700
        %v760 = vpack.c.b16 %v703, %v702
        %v761 = vpack.c.b16 %v705, %v704
        %v762 = vpack.c.b16 %v707, %v706
        %v763 = vpack.c.b16 %v709, %v708
        %v764 = vpack.c.b16 %v711, %v710
        %v765 = vpack.c.b16 %v713, %v712
        %v766 = vpack.c.b16 %v715, %v714
        %v767 = vpack.c.b16 %v717, %v716
        %v768 = vpack.c.b16 %v719, %v718
        %v769 = vpack.c.b16 %v721, %v720
        %v770 = vpack.c.b16 %v723, %v722
        %v771 = vpack.c.b16 %v725, %v724
        %v772 = vpack.c.b16 %v727, %v726
        %v773 = vpack.c.b16 %v729, %v728
        %v774 = vpack.c.b16 %v731, %v730
        %v775 = vpack.c.b16 %v733, %v732
        %v776 = vpack.c.b16 %v735, %v734
        %v777 = vpack.c.b16 %v737, %v736
        %v778 = vpack.c.b16 %v739, %v738
        %v779 = vpack.c.b16 %v741, %v740
        %v780 = vpack.c.b16 %v743, %v742
        %v781 = vpack.c.b16 %v745, %v744
        %v782 = vpack.c.b16 %v747, %v746
        %v783 = vpack.c.b16 %v749, %v748
        %v784 = vpack.c.b16 %v751, %v750
        %v785 = vpack.c.b16 %v753, %v752
        %vm786 = vcmask 64512
        %v788 = vsel %vm786, %v754, 0
        %v791 = vsel %vm786, %v755, 0
        %v794 = vsel %vm786, %v756, 0
        %v797 = vsel %vm786, %v757, 0
        %v800 = vsel %vm786, %v758, 0
        %v803 = vsel %vm786, %v759, 0
        %v806 = vsel %vm786, %v760, 0
        %v809 = vsel %vm786, %v761, 0
        %v812 = vsel %vm786, %v762, 0
        %v815 = vsel %vm786, %v763, 0
        %v818 = vsel %vm786, %v764, 0
        %v821 = vsel %vm786, %v765, 0
        %v824 = vsel %vm786, %v766, 0
        %v827 = vsel %vm786, %v767, 0
        %v830 = vsel %vm786, %v768, 0
        %v833 = vsel %vm786, %v769, 0
        %v836 = vsel %vm786, %v770, 0
        %v839 = vsel %vm786, %v771, 0
        %v842 = vsel %vm786, %v772, 0
        %v845 = vsel %vm786, %v773, 0
        %v848 = vsel %vm786, %v774, 0
        %v851 = vsel %vm786, %v775, 0
        %v854 = vsel %vm786, %v776, 0
        %v857 = vsel %vm786, %v777, 0
        %v860 = vsel %vm786, %v778, 0
        %v863 = vsel %vm786, %v779, 0
        %v866 = vsel %vm786, %v780, 0
        %v869 = vsel %vm786, %v781, 0
        %v872 = vsel %vm786, %v782, 0
        %v875 = vsel %vm786, %v783, 0
        %v878 = vsel %vm786, %v784, 0
        %v881 = vsel %vm786, %v785, 0
        %vm883 = vcmask 1043456
        %v885 = vsel %vm883, %v625, 0
        %887 = vmatprep.subr.bf16.mxu0 0
        %888 = vmatpush1.bf16.msra.mxu0 %v885
        %889 = vmatprep.subr.bf16.mxu0 0
        %890 = vmatpush1.bf16.msra.mxu0 0
        %891 = vmatprep.subr.bf16.mxu0 0
        %892 = vmatpush1.bf16.msra.mxu0 0
        %893 = vmatprep.subr.bf16.mxu0 0
        %894 = vmatpush1.bf16.msra.mxu0 0
        %895 = vmatprep.subr.bf16.mxu0 0
        %896 = vmatpush1.bf16.msra.mxu0 0
        %897 = vmatprep.subr.bf16.mxu0 0
        %898 = vmatpush1.bf16.msra.mxu0 0
        %899 = vmatprep.subr.bf16.mxu0 0
        %900 = vmatpush1.bf16.msra.mxu0 0
        %901 = vmatprep.subr.bf16.mxu0 0
        %902 = vmatpush1.bf16.msra.mxu0 0
        %903 = vmatprep.subr.bf16.mxu0 0
        %904 = vmatpush1.bf16.msra.mxu0 0
        %905 = vmatprep.subr.bf16.mxu0 0
        %906 = vmatpush1.bf16.msra.mxu0 0
        %907 = vmatprep.subr.bf16.mxu0 0
        %908 = vmatpush1.bf16.msra.mxu0 0
        %909 = vmatprep.subr.bf16.mxu0 0
        %910 = vmatpush1.bf16.msra.mxu0 0
        %911 = vmatprep.subr.bf16.mxu0 0
        %912 = vmatpush1.bf16.msra.mxu0 0
        %913 = vmatprep.subr.bf16.mxu0 0
        %914 = vmatpush1.bf16.msra.mxu0 0
        %915 = vmatprep.subr.bf16.mxu0 0
        %916 = vmatpush1.bf16.msra.mxu0 0
        %917 = vmatprep.subr.bf16.mxu0 0
        %918 = vmatpush1.bf16.msra.mxu0 0
        %919 = vmatprep.mubr.bf16.mxu0 0
        %920 = vmatmul.mubr.bf16.gmra.mrb[0].mxu0 %v788
        %v921 = vpop.f32.mrb[0].mxu0
        %v922 = vadd.f32 0.0, %v921
        %v923 = vpop.f32.mrb[0].mxu0
        %v924 = vpop.f32.mrb[0].mxu0
        %v925 = vadd.f32 0.0, %v924
        %v926 = vpop.f32.mrb[0].mxu0
        %927 = vmatprep.mubr.bf16.mxu0 0
        %928 = vmatmul.mubr.bf16.gmra.mrb[0].mxu0 %v791
        %v929 = vpop.f32.mrb[0].mxu0
        %v930 = vadd.f32 0.0, %v929
        %v931 = vpop.f32.mrb[0].mxu0
        %v932 = vpop.f32.mrb[0].mxu0
        %v933 = vadd.f32 0.0, %v932
        %v934 = vpop.f32.mrb[0].mxu0
        %935 = vmatprep.mubr.bf16.mxu0 0
        %936 = vmatmul.mubr.bf16.gmra.mrb[0].mxu0 %v794
        %v937 = vpop.f32.mrb[0].mxu0
        %v938 = vadd.f32 0.0, %v937
        %v939 = vpop.f32.mrb[0].mxu0
        %v940 = vpop.f32.mrb[0].mxu0
        %v941 = vadd.f32 0.0, %v940
        %v942 = vpop.f32.mrb[0].mxu0
        %943 = vmatprep.mubr.bf16.mxu0 0
        %944 = vmatmul.mubr.bf16.gmra.mrb[0].mxu0 %v797
        %v945 = vpop.f32.mrb[0].mxu0
        %v946 = vadd.f32 0.0, %v945
        %v947 = vpop.f32.mrb[0].mxu0
        %v948 = vpop.f32.mrb[0].mxu0
        %v949 = vadd.f32 0.0, %v948
        %v950 = vpop.f32.mrb[0].mxu0
        %951 = vmatprep.mubr.bf16.mxu0 0
        %952 = vmatmul.mubr.bf16.gmra.mrb[0].mxu0 %v800
        %v953 = vpop.f32.mrb[0].mxu0
        %v954 = vadd.f32 0.0, %v953
        %v955 = vpop.f32.mrb[0].mxu0
        %v956 = vpop.f32.mrb[0].mxu0
        %v957 = vadd.f32 0.0, %v956
        %v958 = vpop.f32.mrb[0].mxu0
        %959 = vmatprep.mubr.bf16.mxu0 0
        %960 = vmatmul.mubr.bf16.gmra.mrb[0].mxu0 %v803
        %v961 = vpop.f32.mrb[0].mxu0
        %v962 = vadd.f32 0.0, %v961
        %v963 = vpop.f32.mrb[0].mxu0
        %v964 = vpop.f32.mrb[0].mxu0
        %v965 = vadd.f32 0.0, %v964
        %v966 = vpop.f32.mrb[0].mxu0
        %967 = vmatprep.mubr.bf16.mxu0 0
        %968 = vmatmul.mubr.bf16.gmra.mrb[0].mxu0 %v806
        %v969 = vpop.f32.mrb[0].mxu0
        %v970 = vadd.f32 0.0, %v969
        %v971 = vpop.f32.mrb[0].mxu0
        %v972 = vpop.f32.mrb[0].mxu0
        %v973 = vadd.f32 0.0, %v972
        %v974 = vpop.f32.mrb[0].mxu0
        %975 = vmatprep.mubr.bf16.mxu0 0
        %976 = vmatmul.mubr.bf16.gmra.mrb[0].mxu0 %v809
        %v977 = vpop.f32.mrb[0].mxu0
        %v978 = vadd.f32 0.0, %v977
        %v979 = vpop.f32.mrb[0].mxu0
        %v980 = vpop.f32.mrb[0].mxu0
        %v981 = vadd.f32 0.0, %v980
        %v982 = vpop.f32.mrb[0].mxu0
        %983 = vmatprep.mubr.bf16.mxu0 0
        %984 = vmatmul.mubr.bf16.gmra.mrb[0].mxu0 %v812
        %v985 = vpop.f32.mrb[0].mxu0
        %v986 = vadd.f32 0.0, %v985
        %v987 = vpop.f32.mrb[0].mxu0
        %v988 = vpop.f32.mrb[0].mxu0
        %v989 = vadd.f32 0.0, %v988
        %v990 = vpop.f32.mrb[0].mxu0
        %991 = vmatprep.mubr.bf16.mxu0 0
        %992 = vmatmul.mubr.bf16.gmra.mrb[0].mxu0 %v815
        %v993 = vpop.f32.mrb[0].mxu0
        %v994 = vadd.f32 0.0, %v993
        %v995 = vpop.f32.mrb[0].mxu0
        %v996 = vpop.f32.mrb[0].mxu0
        %v997 = vadd.f32 0.0, %v996
        %v998 = vpop.f32.mrb[0].mxu0
        %999 = vmatprep.mubr.bf16.mxu0 0
        %1000 = vmatmul.mubr.bf16.gmra.mrb[0].mxu0 %v818
        %v1001 = vpop.f32.mrb[0].mxu0
        %v1002 = vadd.f32 0.0, %v1001
        %v1003 = vpop.f32.mrb[0].mxu0
        %v1004 = vpop.f32.mrb[0].mxu0
        %v1005 = vadd.f32 0.0, %v1004
        %v1006 = vpop.f32.mrb[0].mxu0
        %1007 = vmatprep.mubr.bf16.mxu0 0
        %1008 = vmatmul.mubr.bf16.gmra.mrb[0].mxu0 %v821
        %v1009 = vpop.f32.mrb[0].mxu0
        %v1010 = vadd.f32 0.0, %v1009
        %v1011 = vpop.f32.mrb[0].mxu0
        %v1012 = vpop.f32.mrb[0].mxu0
        %v1013 = vadd.f32 0.0, %v1012
        %v1014 = vpop.f32.mrb[0].mxu0
        %1015 = vmatprep.mubr.bf16.mxu0 0
        %1016 = vmatmul.mubr.bf16.gmra.mrb[0].mxu0 %v824
        %v1017 = vpop.f32.mrb[0].mxu0
        %v1018 = vadd.f32 0.0, %v1017
        %v1019 = vpop.f32.mrb[0].mxu0
        %v1020 = vpop.f32.mrb[0].mxu0
        %v1021 = vadd.f32 0.0, %v1020
        %v1022 = vpop.f32.mrb[0].mxu0
        %1023 = vmatprep.mubr.bf16.mxu0 0
        %1024 = vmatmul.mubr.bf16.gmra.mrb[0].mxu0 %v827
        %v1025 = vpop.f32.mrb[0].mxu0
        %v1026 = vadd.f32 0.0, %v1025
        %v1027 = vpop.f32.mrb[0].mxu0
        %v1028 = vpop.f32.mrb[0].mxu0
        %v1029 = vadd.f32 0.0, %v1028
        %v1030 = vpop.f32.mrb[0].mxu0
        %1031 = vmatprep.mubr.bf16.mxu0 0
        %1032 = vmatmul.mubr.bf16.gmra.mrb[0].mxu0 %v830
        %v1033 = vpop.f32.mrb[0].mxu0
        %v1034 = vadd.f32 0.0, %v1033
        %v1035 = vpop.f32.mrb[0].mxu0
        %v1036 = vpop.f32.mrb[0].mxu0
        %v1037 = vadd.f32 0.0, %v1036
        %v1038 = vpop.f32.mrb[0].mxu0
        %1039 = vmatprep.mubr.bf16.mxu0 0
        %1040 = vmatmul.mubr.bf16.gmra.mrb[0].mxu0 %v833
        %v1041 = vpop.f32.mrb[0].mxu0
        %v1042 = vadd.f32 0.0, %v1041
        %v1043 = vpop.f32.mrb[0].mxu0
        %v1044 = vpop.f32.mrb[0].mxu0
        %v1045 = vadd.f32 0.0, %v1044
        %v1046 = vpop.f32.mrb[0].mxu0
        %1047 = vmatprep.mubr.bf16.mxu0 0
        %1048 = vmatmul.mubr.bf16.gmra.mrb[0].mxu0 %v836
        %v1049 = vpop.f32.mrb[0].mxu0
        %v1050 = vadd.f32 0.0, %v1049
        %v1051 = vpop.f32.mrb[0].mxu0
        %v1052 = vpop.f32.mrb[0].mxu0
        %v1053 = vadd.f32 0.0, %v1052
        %v1054 = vpop.f32.mrb[0].mxu0
        %1055 = vmatprep.mubr.bf16.mxu0 0
        %1056 = vmatmul.mubr.bf16.gmra.mrb[0].mxu0 %v839
        %v1057 = vpop.f32.mrb[0].mxu0
        %v1058 = vadd.f32 0.0, %v1057
        %v1059 = vpop.f32.mrb[0].mxu0
        %v1060 = vpop.f32.mrb[0].mxu0
        %v1061 = vadd.f32 0.0, %v1060
        %v1062 = vpop.f32.mrb[0].mxu0
        %1063 = vmatprep.mubr.bf16.mxu0 0
        %1064 = vmatmul.mubr.bf16.gmra.mrb[0].mxu0 %v842
        %v1065 = vpop.f32.mrb[0].mxu0
        %v1066 = vadd.f32 0.0, %v1065
        %v1067 = vpop.f32.mrb[0].mxu0
        %v1068 = vpop.f32.mrb[0].mxu0
        %v1069 = vadd.f32 0.0, %v1068
        %v1070 = vpop.f32.mrb[0].mxu0
        %1071 = vmatprep.mubr.bf16.mxu0 0
        %1072 = vmatmul.mubr.bf16.gmra.mrb[0].mxu0 %v845
        %v1073 = vpop.f32.mrb[0].mxu0
        %v1074 = vadd.f32 0.0, %v1073
        %v1075 = vpop.f32.mrb[0].mxu0
        %v1076 = vpop.f32.mrb[0].mxu0
        %v1077 = vadd.f32 0.0, %v1076
        %v1078 = vpop.f32.mrb[0].mxu0
        %1079 = vmatprep.mubr.bf16.mxu0 0
        %1080 = vmatmul.mubr.bf16.gmra.mrb[0].mxu0 %v848
        %v1081 = vpop.f32.mrb[0].mxu0
        %v1082 = vadd.f32 0.0, %v1081
        %v1083 = vpop.f32.mrb[0].mxu0
        %v1084 = vpop.f32.mrb[0].mxu0
        %v1085 = vadd.f32 0.0, %v1084
        %v1086 = vpop.f32.mrb[0].mxu0
        %1087 = vmatprep.mubr.bf16.mxu0 0
        %1088 = vmatmul.mubr.bf16.gmra.mrb[0].mxu0 %v851
        %v1089 = vpop.f32.mrb[0].mxu0
        %v1090 = vadd.f32 0.0, %v1089
        %v1091 = vpop.f32.mrb[0].mxu0
        %v1092 = vpop.f32.mrb[0].mxu0
        %v1093 = vadd.f32 0.0, %v1092
        %v1094 = vpop.f32.mrb[0].mxu0
        %1095 = vmatprep.mubr.bf16.mxu0 0
        %1096 = vmatmul.mubr.bf16.gmra.mrb[0].mxu0 %v854
        %v1097 = vpop.f32.mrb[0].mxu0
        %v1098 = vadd.f32 0.0, %v1097
        %v1099 = vpop.f32.mrb[0].mxu0
        %v1100 = vpop.f32.mrb[0].mxu0
        %v1101 = vadd.f32 0.0, %v1100
        %v1102 = vpop.f32.mrb[0].mxu0
        %1103 = vmatprep.mubr.bf16.mxu0 0
        %1104 = vmatmul.mubr.bf16.gmra.mrb[0].mxu0 %v857
        %v1105 = vpop.f32.mrb[0].mxu0
        %v1106 = vadd.f32 0.0, %v1105
        %v1107 = vpop.f32.mrb[0].mxu0
        %v1108 = vpop.f32.mrb[0].mxu0
        %v1109 = vadd.f32 0.0, %v1108
        %v1110 = vpop.f32.mrb[0].mxu0
        %1111 = vmatprep.mubr.bf16.mxu0 0
        %1112 = vmatmul.mubr.bf16.gmra.mrb[0].mxu0 %v860
        %v1113 = vpop.f32.mrb[0].mxu0
        %v1114 = vadd.f32 0.0, %v1113
        %v1115 = vpop.f32.mrb[0].mxu0
        %v1116 = vpop.f32.mrb[0].mxu0
        %v1117 = vadd.f32 0.0, %v1116
        %v1118 = vpop.f32.mrb[0].mxu0
        %1119 = vmatprep.mubr.bf16.mxu0 0
        %1120 = vmatmul.mubr.bf16.gmra.mrb[0].mxu0 %v863
        %v1121 = vpop.f32.mrb[0].mxu0
        %v1122 = vadd.f32 0.0, %v1121
        %v1123 = vpop.f32.mrb[0].mxu0
        %v1124 = vpop.f32.mrb[0].mxu0
        %v1125 = vadd.f32 0.0, %v1124
        %v1126 = vpop.f32.mrb[0].mxu0
        %1127 = vmatprep.mubr.bf16.mxu0 0
        %1128 = vmatmul.mubr.bf16.gmra.mrb[0].mxu0 %v866
        %v1129 = vpop.f32.mrb[0].mxu0
        %v1130 = vadd.f32 0.0, %v1129
        %v1131 = vpop.f32.mrb[0].mxu0
        %v1132 = vpop.f32.mrb[0].mxu0
        %v1133 = vadd.f32 0.0, %v1132
        %v1134 = vpop.f32.mrb[0].mxu0
        %1135 = vmatprep.mubr.bf16.mxu0 0
        %1136 = vmatmul.mubr.bf16.gmra.mrb[0].mxu0 %v869
        %v1137 = vpop.f32.mrb[0].mxu0
        %v1138 = vadd.f32 0.0, %v1137
        %v1139 = vpop.f32.mrb[0].mxu0
        %v1140 = vpop.f32.mrb[0].mxu0
        %v1141 = vadd.f32 0.0, %v1140
        %v1142 = vpop.f32.mrb[0].mxu0
        %1143 = vmatprep.mubr.bf16.mxu0 0
        %1144 = vmatmul.mubr.bf16.gmra.mrb[0].mxu0 %v872
        %v1145 = vpop.f32.mrb[0].mxu0
        %v1146 = vadd.f32 0.0, %v1145
        %v1147 = vpop.f32.mrb[0].mxu0
        %v1148 = vpop.f32.mrb[0].mxu0
        %v1149 = vadd.f32 0.0, %v1148
        %v1150 = vpop.f32.mrb[0].mxu0
        %1151 = vmatprep.mubr.bf16.mxu0 0
        %1152 = vmatmul.mubr.bf16.gmra.mrb[0].mxu0 %v875
        %v1153 = vpop.f32.mrb[0].mxu0
        %v1154 = vadd.f32 0.0, %v1153
        %v1155 = vpop.f32.mrb[0].mxu0
        %v1156 = vpop.f32.mrb[0].mxu0
        %v1157 = vadd.f32 0.0, %v1156
        %v1158 = vpop.f32.mrb[0].mxu0
        %1159 = vmatprep.mubr.bf16.mxu0 0
        %1160 = vmatmul.mubr.bf16.gmra.mrb[0].mxu0 %v878
        %v1161 = vpop.f32.mrb[0].mxu0
        %v1162 = vadd.f32 0.0, %v1161
        %v1163 = vpop.f32.mrb[0].mxu0
        %v1164 = vpop.f32.mrb[0].mxu0
        %v1165 = vadd.f32 0.0, %v1164
        %v1166 = vpop.f32.mrb[0].mxu0
        %1167 = vmatprep.mubr.bf16.mxu0 0
        %1168 = vmatmul.mubr.bf16.gmra.mrb[0].mxu0 %v881
        %v1169 = vpop.f32.mrb[0].mxu0
        %v1170 = vadd.f32 0.0, %v1169
        %v1171 = vpop.f32.mrb[0].mxu0
        %v1172 = vpop.f32.mrb[0].mxu0
        %v1173 = vadd.f32 0.0, %v1172
        %v1174 = vpop.f32.mrb[0].mxu0
        %1175 = vdwg.mxu0
        %v1176 = vmax.f32 %v922, 0.0
        %v1177 = vmax.f32 %v925, 0.0
        %v1178 = vmax.f32 %v930, 0.0
        %v1179 = vmax.f32 %v933, 0.0
        %v1180 = vmax.f32 %v938, 0.0
        %v1181 = vmax.f32 %v941, 0.0
        %v1182 = vmax.f32 %v946, 0.0
        %v1183 = vmax.f32 %v949, 0.0
        %v1184 = vmax.f32 %v954, 0.0
        %v1185 = vmax.f32 %v957, 0.0
        %v1186 = vmax.f32 %v962, 0.0
        %v1187 = vmax.f32 %v965, 0.0
        %v1188 = vmax.f32 %v970, 0.0
        %v1189 = vmax.f32 %v973, 0.0
        %v1190 = vmax.f32 %v978, 0.0
        %v1191 = vmax.f32 %v981, 0.0
        %v1192 = vmax.f32 %v986, 0.0
        %v1193 = vmax.f32 %v989, 0.0
        %v1194 = vmax.f32 %v994, 0.0
        %v1195 = vmax.f32 %v997, 0.0
        %v1196 = vmax.f32 %v1002, 0.0
        %v1197 = vmax.f32 %v1005, 0.0
        %v1198 = vmax.f32 %v1010, 0.0
        %v1199 = vmax.f32 %v1013, 0.0
        %v1200 = vmax.f32 %v1018, 0.0
        %v1201 = vmax.f32 %v1021, 0.0
        %v1202 = vmax.f32 %v1026, 0.0
        %v1203 = vmax.f32 %v1029, 0.0
        %v1204 = vmax.f32 %v1034, 0.0
        %v1205 = vmax.f32 %v1037, 0.0
        %v1206 = vmax.f32 %v1042, 0.0
        %v1207 = vmax.f32 %v1045, 0.0
        %v1208 = vmax.f32 %v1050, 0.0
        %v1209 = vmax.f32 %v1053, 0.0
        %v1210 = vmax.f32 %v1058, 0.0
        %v1211 = vmax.f32 %v1061, 0.0
        %v1212 = vmax.f32 %v1066, 0.0
        %v1213 = vmax.f32 %v1069, 0.0
        %v1214 = vmax.f32 %v1074, 0.0
        %v1215 = vmax.f32 %v1077, 0.0
        %v1216 = vmax.f32 %v1082, 0.0
        %v1217 = vmax.f32 %v1085, 0.0
        %v1218 = vmax.f32 %v1090, 0.0
        %v1219 = vmax.f32 %v1093, 0.0
        %v1220 = vmax.f32 %v1098, 0.0
        %v1221 = vmax.f32 %v1101, 0.0
        %v1222 = vmax.f32 %v1106, 0.0
        %v1223 = vmax.f32 %v1109, 0.0
        %v1224 = vmax.f32 %v1114, 0.0
        %v1225 = vmax.f32 %v1117, 0.0
        %v1226 = vmax.f32 %v1122, 0.0
        %v1227 = vmax.f32 %v1125, 0.0
        %v1228 = vmax.f32 %v1130, 0.0
        %v1229 = vmax.f32 %v1133, 0.0
        %v1230 = vmax.f32 %v1138, 0.0
        %v1231 = vmax.f32 %v1141, 0.0
        %v1232 = vmax.f32 %v1146, 0.0
        %v1233 = vmax.f32 %v1149, 0.0
        %v1234 = vmax.f32 %v1154, 0.0
        %v1235 = vmax.f32 %v1157, 0.0
        %v1236 = vmax.f32 %v1162, 0.0
        %v1237 = vmax.f32 %v1165, 0.0
        %v1238 = vmax.f32 %v1170, 0.0
        %v1239 = vmax.f32 %v1173, 0.0
        %v1240 = vpack.c.bf16 %v1177, %v1176
        %v1241 = vpack.c.bf16 %v1179, %v1178
        %v1242 = vpack.c.bf16 %v1181, %v1180
        %v1243 = vpack.c.bf16 %v1183, %v1182
        %v1244 = vpack.c.bf16 %v1185, %v1184
        %v1245 = vpack.c.bf16 %v1187, %v1186
        %v1246 = vpack.c.bf16 %v1189, %v1188
        %v1247 = vpack.c.bf16 %v1191, %v1190
        %v1248 = vpack.c.bf16 %v1193, %v1192
        %v1249 = vpack.c.bf16 %v1195, %v1194
        %v1250 = vpack.c.bf16 %v1197, %v1196
        %v1251 = vpack.c.bf16 %v1199, %v1198
        %v1252 = vpack.c.bf16 %v1201, %v1200
        %v1253 = vpack.c.bf16 %v1203, %v1202
        %v1254 = vpack.c.bf16 %v1205, %v1204
        %v1255 = vpack.c.bf16 %v1207, %v1206
        %v1256 = vpack.c.bf16 %v1209, %v1208
        %v1257 = vpack.c.bf16 %v1211, %v1210
        %v1258 = vpack.c.bf16 %v1213, %v1212
        %v1259 = vpack.c.bf16 %v1215, %v1214
        %v1260 = vpack.c.bf16 %v1217, %v1216
        %v1261 = vpack.c.bf16 %v1219, %v1218
        %v1262 = vpack.c.bf16 %v1221, %v1220
        %v1263 = vpack.c.bf16 %v1223, %v1222
        %v1264 = vpack.c.bf16 %v1225, %v1224
        %v1265 = vpack.c.bf16 %v1227, %v1226
        %v1266 = vpack.c.bf16 %v1229, %v1228
        %v1267 = vpack.c.bf16 %v1231, %v1230
        %v1268 = vpack.c.bf16 %v1233, %v1232
        %v1269 = vpack.c.bf16 %v1235, %v1234
        %v1270 = vpack.c.bf16 %v1237, %v1236
        %v1271 = vpack.c.bf16 %v1239, %v1238
        %v1272 = vld [vmem:[%s553] sm:$0xf]
        %v1273 = vld [vmem:[%s553 + $0x4] sm:$0xf]
        %v1274 = vld [vmem:[%s553 + $0x8] sm:$0xf]
        %v1275 = vld [vmem:[%s553 + $0xc] sm:$0xf]
        %v1276 = vld [vmem:[%s553 + $0x10] sm:$0xf]
        %v1277 = vld [vmem:[%s553 + $0x14] sm:$0xf]
        %v1278 = vld [vmem:[%s553 + $0x18] sm:$0xf]
        %v1279 = vld [vmem:[%s553 + $0x1c] sm:$0xf]
        %v1280 = vld [vmem:[%s553 + $0x20] sm:$0xf]
        %v1281 = vld [vmem:[%s553 + $0x24] sm:$0xf]
        %v1282 = vld [vmem:[%s553 + $0x28] sm:$0xf]
        %v1283 = vld [vmem:[%s553 + $0x2c] sm:$0xf]
        %v1284 = vld [vmem:[%s553 + $0x30] sm:$0xf]
        %v1285 = vld [vmem:[%s553 + $0x34] sm:$0xf]
        %v1286 = vld [vmem:[%s553 + $0x38] sm:$0xf]
        %v1287 = vld [vmem:[%s553 + $0x3c] sm:$0xf]
        %v1304 = vunpack.c.l.b16 %v1272
        %v1305 = vunpack.c.l.b16 %v1273
        %v1306 = vunpack.c.l.b16 %v1274
        %v1307 = vunpack.c.l.b16 %v1275
        %v1308 = vunpack.c.l.b16 %v1276
        %v1309 = vunpack.c.l.b16 %v1277
        %v1310 = vunpack.c.l.b16 %v1278
        %v1311 = vunpack.c.l.b16 %v1279
        %v1312 = vunpack.c.l.b16 %v1280
        %v1313 = vunpack.c.l.b16 %v1281
        %v1314 = vunpack.c.l.b16 %v1282
        %v1315 = vunpack.c.l.b16 %v1283
        %v1316 = vunpack.c.l.b16 %v1284
        %v1317 = vunpack.c.l.b16 %v1285
        %v1318 = vunpack.c.l.b16 %v1286
        %v1319 = vunpack.c.l.b16 %v1287
        %v1320 = vpack.c.b16 %v1305, %v1304
        %v1321 = vpack.c.b16 %v1307, %v1306
        %v1322 = vpack.c.b16 %v1309, %v1308
        %v1323 = vpack.c.b16 %v1311, %v1310
        %v1324 = vpack.c.b16 %v1313, %v1312
        %v1325 = vpack.c.b16 %v1315, %v1314
        %v1326 = vpack.c.b16 %v1317, %v1316
        %v1327 = vpack.c.b16 %v1319, %v1318
        %1336 = vmatprep.subr.bf16.mxu0 0
        %1337 = vmatpush1.bf16.msra.mxu0 %v1240
        %1338 = vmatprep.subr.bf16.mxu0 0
        %1339 = vmatpush1.bf16.msra.mxu0 %v1241
        %1340 = vmatprep.subr.bf16.mxu0 0
        %1341 = vmatpush1.bf16.msra.mxu0 %v1242
        %1342 = vmatprep.subr.bf16.mxu0 0
        %1343 = vmatpush1.bf16.msra.mxu0 %v1243
        %1344 = vmatprep.subr.bf16.mxu0 0
        %1345 = vmatpush1.bf16.msra.mxu0 %v1244
        %1346 = vmatprep.subr.bf16.mxu0 0
        %1347 = vmatpush1.bf16.msra.mxu0 %v1245
        %1348 = vmatprep.subr.bf16.mxu0 0
        %1349 = vmatpush1.bf16.msra.mxu0 %v1246
        %1350 = vmatprep.subr.bf16.mxu0 0
        %1351 = vmatpush1.bf16.msra.mxu0 %v1247
        %1352 = vmatprep.subr.bf16.mxu0 0
        %1353 = vmatpush1.bf16.msra.mxu0 0
        %1354 = vmatprep.subr.bf16.mxu0 0
        %1355 = vmatpush1.bf16.msra.mxu0 0
        %1356 = vmatprep.subr.bf16.mxu0 0
        %1357 = vmatpush1.bf16.msra.mxu0 0
        %1358 = vmatprep.subr.bf16.mxu0 0
        %1359 = vmatpush1.bf16.msra.mxu0 0
        %1360 = vmatprep.subr.bf16.mxu0 0
        %1361 = vmatpush1.bf16.msra.mxu0 0
        %1362 = vmatprep.subr.bf16.mxu0 0
        %1363 = vmatpush1.bf16.msra.mxu0 0
        %1364 = vmatprep.subr.bf16.mxu0 0
        %1365 = vmatpush1.bf16.msra.mxu0 0
        %1366 = vmatprep.subr.bf16.mxu0 0
        %1367 = vmatpush1.bf16.msra.mxu0 0
        %1368 = vmatprep.mubr.bf16.mxu0 0
        %1369 = vmatmul.mubr.bf16.gmra.mrb[0].mxu0 %v1320
        %v1370 = vpop.f32.mrb[0].mxu0
        %v1371 = vadd.f32 0.0, %v1370
        %v1372 = vpop.f32.mrb[0].mxu0
        %v1373 = vpop.f32.mrb[0].mxu0
        %v1374 = vadd.f32 0.0, %v1373
        %v1375 = vpop.f32.mrb[0].mxu0
        %1376 = vmatprep.mubr.bf16.mxu0 0
        %1377 = vmatmul.mubr.bf16.gmra.mrb[0].mxu0 %v1321
        %v1378 = vpop.f32.mrb[0].mxu0
        %v1379 = vadd.f32 0.0, %v1378
        %v1380 = vpop.f32.mrb[0].mxu0
        %v1381 = vpop.f32.mrb[0].mxu0
        %v1382 = vadd.f32 0.0, %v1381
        %v1383 = vpop.f32.mrb[0].mxu0
        %1384 = vmatprep.mubr.bf16.mxu0 0
        %1385 = vmatmul.mubr.bf16.gmra.mrb[0].mxu0 %v1322
        %v1386 = vpop.f32.mrb[0].mxu0
        %v1387 = vadd.f32 0.0, %v1386
        %v1388 = vpop.f32.mrb[0].mxu0
        %v1389 = vpop.f32.mrb[0].mxu0
        %v1390 = vadd.f32 0.0, %v1389
        %v1391 = vpop.f32.mrb[0].mxu0
        %1392 = vmatprep.mubr.bf16.mxu0 0
        %1393 = vmatmul.mubr.bf16.gmra.mrb[0].mxu0 %v1323
        %v1394 = vpop.f32.mrb[0].mxu0
        %v1395 = vadd.f32 0.0, %v1394
        %v1396 = vpop.f32.mrb[0].mxu0
        %v1397 = vpop.f32.mrb[0].mxu0
        %v1398 = vadd.f32 0.0, %v1397
        %v1399 = vpop.f32.mrb[0].mxu0
        %1400 = vmatprep.mubr.bf16.mxu0 0
        %1401 = vmatmul.mubr.bf16.gmra.mrb[0].mxu0 %v1324
        %v1402 = vpop.f32.mrb[0].mxu0
        %v1403 = vadd.f32 0.0, %v1402
        %v1404 = vpop.f32.mrb[0].mxu0
        %v1405 = vpop.f32.mrb[0].mxu0
        %v1406 = vadd.f32 0.0, %v1405
        %v1407 = vpop.f32.mrb[0].mxu0
        %1408 = vmatprep.mubr.bf16.mxu0 0
        %1409 = vmatmul.mubr.bf16.gmra.mrb[0].mxu0 %v1325
        %v1410 = vpop.f32.mrb[0].mxu0
        %v1411 = vadd.f32 0.0, %v1410
        %v1412 = vpop.f32.mrb[0].mxu0
        %v1413 = vpop.f32.mrb[0].mxu0
        %v1414 = vadd.f32 0.0, %v1413
        %v1415 = vpop.f32.mrb[0].mxu0
        %1416 = vmatprep.mubr.bf16.mxu0 0
        %1417 = vmatmul.mubr.bf16.gmra.mrb[0].mxu0 %v1326
        %v1418 = vpop.f32.mrb[0].mxu0
        %v1419 = vadd.f32 0.0, %v1418
        %v1420 = vpop.f32.mrb[0].mxu0
        %v1421 = vpop.f32.mrb[0].mxu0
        %v1422 = vadd.f32 0.0, %v1421
        %v1423 = vpop.f32.mrb[0].mxu0
        %1424 = vmatprep.mubr.bf16.mxu0 0
        %1425 = vmatmul.mubr.bf16.gmra.mrb[0].mxu0 %v1327
        %v1426 = vpop.f32.mrb[0].mxu0
        %v1427 = vadd.f32 0.0, %v1426
        %v1428 = vpop.f32.mrb[0].mxu0
        %v1429 = vpop.f32.mrb[0].mxu0
        %v1430 = vadd.f32 0.0, %v1429
        %v1431 = vpop.f32.mrb[0].mxu0
        %1432 = vdwg.mxu0
        %s1433 = scalar_lea.vmem %s553, 64
        %v1434 = vld [vmem:[%s1433] sm:$0xf]
        %v1435 = vld [vmem:[%s1433 + $0x4] sm:$0xf]
        %v1436 = vld [vmem:[%s1433 + $0x8] sm:$0xf]
        %v1437 = vld [vmem:[%s1433 + $0xc] sm:$0xf]
        %v1438 = vld [vmem:[%s1433 + $0x10] sm:$0xf]
        %v1439 = vld [vmem:[%s1433 + $0x14] sm:$0xf]
        %v1440 = vld [vmem:[%s1433 + $0x18] sm:$0xf]
        %v1441 = vld [vmem:[%s1433 + $0x1c] sm:$0xf]
        %v1442 = vld [vmem:[%s1433 + $0x20] sm:$0xf]
        %v1443 = vld [vmem:[%s1433 + $0x24] sm:$0xf]
        %v1444 = vld [vmem:[%s1433 + $0x28] sm:$0xf]
        %v1445 = vld [vmem:[%s1433 + $0x2c] sm:$0xf]
        %v1446 = vld [vmem:[%s1433 + $0x30] sm:$0xf]
        %v1447 = vld [vmem:[%s1433 + $0x34] sm:$0xf]
        %v1448 = vld [vmem:[%s1433 + $0x38] sm:$0xf]
        %v1449 = vld [vmem:[%s1433 + $0x3c] sm:$0xf]
        %v1466 = vunpack.c.l.b16 %v1434
        %v1467 = vunpack.c.l.b16 %v1435
        %v1468 = vunpack.c.l.b16 %v1436
        %v1469 = vunpack.c.l.b16 %v1437
        %v1470 = vunpack.c.l.b16 %v1438
        %v1471 = vunpack.c.l.b16 %v1439
        %v1472 = vunpack.c.l.b16 %v1440
        %v1473 = vunpack.c.l.b16 %v1441
        %v1474 = vunpack.c.l.b16 %v1442
        %v1475 = vunpack.c.l.b16 %v1443
        %v1476 = vunpack.c.l.b16 %v1444
        %v1477 = vunpack.c.l.b16 %v1445
        %v1478 = vunpack.c.l.b16 %v1446
        %v1479 = vunpack.c.l.b16 %v1447
        %v1480 = vunpack.c.l.b16 %v1448
        %v1481 = vunpack.c.l.b16 %v1449
        %v1482 = vpack.c.b16 %v1467, %v1466
        %v1483 = vpack.c.b16 %v1469, %v1468
        %v1484 = vpack.c.b16 %v1471, %v1470
        %v1485 = vpack.c.b16 %v1473, %v1472
        %v1486 = vpack.c.b16 %v1475, %v1474
        %v1487 = vpack.c.b16 %v1477, %v1476
        %v1488 = vpack.c.b16 %v1479, %v1478
        %v1489 = vpack.c.b16 %v1481, %v1480
        %1498 = vmatprep.subr.bf16.mxu0 0
        %1499 = vmatpush1.bf16.msra.mxu0 %v1248
        %1500 = vmatprep.subr.bf16.mxu0 0
        %1501 = vmatpush1.bf16.msra.mxu0 %v1249
        %1502 = vmatprep.subr.bf16.mxu0 0
        %1503 = vmatpush1.bf16.msra.mxu0 %v1250
        %1504 = vmatprep.subr.bf16.mxu0 0
        %1505 = vmatpush1.bf16.msra.mxu0 %v1251
        %1506 = vmatprep.subr.bf16.mxu0 0
        %1507 = vmatpush1.bf16.msra.mxu0 %v1252
        %1508 = vmatprep.subr.bf16.mxu0 0
        %1509 = vmatpush1.bf16.msra.mxu0 %v1253
        %1510 = vmatprep.subr.bf16.mxu0 0
        %1511 = vmatpush1.bf16.msra.mxu0 %v1254
        %1512 = vmatprep.subr.bf16.mxu0 0
        %1513 = vmatpush1.bf16.msra.mxu0 %v1255
        %1514 = vmatprep.subr.bf16.mxu0 0
        %1515 = vmatpush1.bf16.msra.mxu0 0
        %1516 = vmatprep.subr.bf16.mxu0 0
        %1517 = vmatpush1.bf16.msra.mxu0 0
        %1518 = vmatprep.subr.bf16.mxu0 0
        %1519 = vmatpush1.bf16.msra.mxu0 0
        %1520 = vmatprep.subr.bf16.mxu0 0
        %1521 = vmatpush1.bf16.msra.mxu0 0
        %1522 = vmatprep.subr.bf16.mxu0 0
        %1523 = vmatpush1.bf16.msra.mxu0 0
        %1524 = vmatprep.subr.bf16.mxu0 0
        %1525 = vmatpush1.bf16.msra.mxu0 0
        %1526 = vmatprep.subr.bf16.mxu0 0
        %1527 = vmatpush1.bf16.msra.mxu0 0
        %1528 = vmatprep.subr.bf16.mxu0 0
        %1529 = vmatpush1.bf16.msra.mxu0 0
        %1530 = vmatprep.mubr.bf16.mxu0 0
        %1531 = vmatmul.mubr.bf16.gmra.mrb[0].mxu0 %v1482
        %v1532 = vpop.f32.mrb[0].mxu0
        %v1533 = vadd.f32 0.0, %v1532
        %v1534 = vpop.f32.mrb[0].mxu0
        %v1535 = vpop.f32.mrb[0].mxu0
        %v1536 = vadd.f32 0.0, %v1535
        %v1537 = vpop.f32.mrb[0].mxu0
        %1538 = vmatprep.mubr.bf16.mxu0 0
        %1539 = vmatmul.mubr.bf16.gmra.mrb[0].mxu0 %v1483
        %v1540 = vpop.f32.mrb[0].mxu0
        %v1541 = vadd.f32 0.0, %v1540
        %v1542 = vpop.f32.mrb[0].mxu0
        %v1543 = vpop.f32.mrb[0].mxu0
        %v1544 = vadd.f32 0.0, %v1543
        %v1545 = vpop.f32.mrb[0].mxu0
        %1546 = vmatprep.mubr.bf16.mxu0 0
        %1547 = vmatmul.mubr.bf16.gmra.mrb[0].mxu0 %v1484
        %v1548 = vpop.f32.mrb[0].mxu0
        %v1549 = vadd.f32 0.0, %v1548
        %v1550 = vpop.f32.mrb[0].mxu0
        %v1551 = vpop.f32.mrb[0].mxu0
        %v1552 = vadd.f32 0.0, %v1551
        %v1553 = vpop.f32.mrb[0].mxu0
        %1554 = vmatprep.mubr.bf16.mxu0 0
        %1555 = vmatmul.mubr.bf16.gmra.mrb[0].mxu0 %v1485
        %v1556 = vpop.f32.mrb[0].mxu0
        %v1557 = vadd.f32 0.0, %v1556
        %v1558 = vpop.f32.mrb[0].mxu0
        %v1559 = vpop.f32.mrb[0].mxu0
        %v1560 = vadd.f32 0.0, %v1559
        %v1561 = vpop.f32.mrb[0].mxu0
        %1562 = vmatprep.mubr.bf16.mxu0 0
        %1563 = vmatmul.mubr.bf16.gmra.mrb[0].mxu0 %v1486
        %v1564 = vpop.f32.mrb[0].mxu0
        %v1565 = vadd.f32 0.0, %v1564
        %v1566 = vpop.f32.mrb[0].mxu0
        %v1567 = vpop.f32.mrb[0].mxu0
        %v1568 = vadd.f32 0.0, %v1567
        %v1569 = vpop.f32.mrb[0].mxu0
        %1570 = vmatprep.mubr.bf16.mxu0 0
        %1571 = vmatmul.mubr.bf16.gmra.mrb[0].mxu0 %v1487
        %v1572 = vpop.f32.mrb[0].mxu0
        %v1573 = vadd.f32 0.0, %v1572
        %v1574 = vpop.f32.mrb[0].mxu0
        %v1575 = vpop.f32.mrb[0].mxu0
        %v1576 = vadd.f32 0.0, %v1575
        %v1577 = vpop.f32.mrb[0].mxu0
        %1578 = vmatprep.mubr.bf16.mxu0 0
        %1579 = vmatmul.mubr.bf16.gmra.mrb[0].mxu0 %v1488
        %v1580 = vpop.f32.mrb[0].mxu0
        %v1581 = vadd.f32 0.0, %v1580
        %v1582 = vpop.f32.mrb[0].mxu0
        %v1583 = vpop.f32.mrb[0].mxu0
        %v1584 = vadd.f32 0.0, %v1583
        %v1585 = vpop.f32.mrb[0].mxu0
        %1586 = vmatprep.mubr.bf16.mxu0 0
        %1587 = vmatmul.mubr.bf16.gmra.mrb[0].mxu0 %v1489
        %v1588 = vpop.f32.mrb[0].mxu0
        %v1589 = vadd.f32 0.0, %v1588
        %v1590 = vpop.f32.mrb[0].mxu0
        %v1591 = vpop.f32.mrb[0].mxu0
        %v1592 = vadd.f32 0.0, %v1591
        %v1593 = vpop.f32.mrb[0].mxu0
        %1594 = vdwg.mxu0
        %s1595 = scalar_lea.vmem %s553, 128
        %v1596 = vld [vmem:[%s1595] sm:$0xf]
        %v1597 = vld [vmem:[%s1595 + $0x4] sm:$0xf]
        %v1598 = vld [vmem:[%s1595 + $0x8] sm:$0xf]
        %v1599 = vld [vmem:[%s1595 + $0xc] sm:$0xf]
        %v1600 = vld [vmem:[%s1595 + $0x10] sm:$0xf]
        %v1601 = vld [vmem:[%s1595 + $0x14] sm:$0xf]
        %v1602 = vld [vmem:[%s1595 + $0x18] sm:$0xf]
        %v1603 = vld [vmem:[%s1595 + $0x1c] sm:$0xf]
        %v1604 = vld [vmem:[%s1595 + $0x20] sm:$0xf]
        %v1605 = vld [vmem:[%s1595 + $0x24] sm:$0xf]
        %v1606 = vld [vmem:[%s1595 + $0x28] sm:$0xf]
        %v1607 = vld [vmem:[%s1595 + $0x2c] sm:$0xf]
        %v1608 = vld [vmem:[%s1595 + $0x30] sm:$0xf]
        %v1609 = vld [vmem:[%s1595 + $0x34] sm:$0xf]
        %v1610 = vld [vmem:[%s1595 + $0x38] sm:$0xf]
        %v1611 = vld [vmem:[%s1595 + $0x3c] sm:$0xf]
        %v1628 = vunpack.c.l.b16 %v1596
        %v1629 = vunpack.c.l.b16 %v1597
        %v1630 = vunpack.c.l.b16 %v1598
        %v1631 = vunpack.c.l.b16 %v1599
        %v1632 = vunpack.c.l.b16 %v1600
        %v1633 = vunpack.c.l.b16 %v1601
        %v1634 = vunpack.c.l.b16 %v1602
        %v1635 = vunpack.c.l.b16 %v1603
        %v1636 = vunpack.c.l.b16 %v1604
        %v1637 = vunpack.c.l.b16 %v1605
        %v1638 = vunpack.c.l.b16 %v1606
        %v1639 = vunpack.c.l.b16 %v1607
        %v1640 = vunpack.c.l.b16 %v1608
        %v1641 = vunpack.c.l.b16 %v1609
        %v1642 = vunpack.c.l.b16 %v1610
        %v1643 = vunpack.c.l.b16 %v1611
        %v1644 = vpack.c.b16 %v1629, %v1628
        %v1645 = vpack.c.b16 %v1631, %v1630
        %v1646 = vpack.c.b16 %v1633, %v1632
        %v1647 = vpack.c.b16 %v1635, %v1634
        %v1648 = vpack.c.b16 %v1637, %v1636
        %v1649 = vpack.c.b16 %v1639, %v1638
        %v1650 = vpack.c.b16 %v1641, %v1640
        %v1651 = vpack.c.b16 %v1643, %v1642
        %1660 = vmatprep.subr.bf16.mxu0 0
        %1661 = vmatpush1.bf16.msra.mxu0 %v1256
        %1662 = vmatprep.subr.bf16.mxu0 0
        %1663 = vmatpush1.bf16.msra.mxu0 %v1257
        %1664 = vmatprep.subr.bf16.mxu0 0
        %1665 = vmatpush1.bf16.msra.mxu0 %v1258
        %1666 = vmatprep.subr.bf16.mxu0 0
        %1667 = vmatpush1.bf16.msra.mxu0 %v1259
        %1668 = vmatprep.subr.bf16.mxu0 0
        %1669 = vmatpush1.bf16.msra.mxu0 %v1260
        %1670 = vmatprep.subr.bf16.mxu0 0
        %1671 = vmatpush1.bf16.msra.mxu0 %v1261
        %1672 = vmatprep.subr.bf16.mxu0 0
        %1673 = vmatpush1.bf16.msra.mxu0 %v1262
        %1674 = vmatprep.subr.bf16.mxu0 0
        %1675 = vmatpush1.bf16.msra.mxu0 %v1263
        %1676 = vmatprep.subr.bf16.mxu0 0
        %1677 = vmatpush1.bf16.msra.mxu0 0
        %1678 = vmatprep.subr.bf16.mxu0 0
        %1679 = vmatpush1.bf16.msra.mxu0 0
        %1680 = vmatprep.subr.bf16.mxu0 0
        %1681 = vmatpush1.bf16.msra.mxu0 0
        %1682 = vmatprep.subr.bf16.mxu0 0
        %1683 = vmatpush1.bf16.msra.mxu0 0
        %1684 = vmatprep.subr.bf16.mxu0 0
        %1685 = vmatpush1.bf16.msra.mxu0 0
        %1686 = vmatprep.subr.bf16.mxu0 0
        %1687 = vmatpush1.bf16.msra.mxu0 0
        %1688 = vmatprep.subr.bf16.mxu0 0
        %1689 = vmatpush1.bf16.msra.mxu0 0
        %1690 = vmatprep.subr.bf16.mxu0 0
        %1691 = vmatpush1.bf16.msra.mxu0 0
        %1692 = vmatprep.mubr.bf16.mxu0 0
        %1693 = vmatmul.mubr.bf16.gmra.mrb[0].mxu0 %v1644
        %v1694 = vpop.f32.mrb[0].mxu0
        %v1695 = vadd.f32 0.0, %v1694
        %v1696 = vpop.f32.mrb[0].mxu0
        %v1697 = vpop.f32.mrb[0].mxu0
        %v1698 = vadd.f32 0.0, %v1697
        %v1699 = vpop.f32.mrb[0].mxu0
        %1700 = vmatprep.mubr.bf16.mxu0 0
        %1701 = vmatmul.mubr.bf16.gmra.mrb[0].mxu0 %v1645
        %v1702 = vpop.f32.mrb[0].mxu0
        %v1703 = vadd.f32 0.0, %v1702
        %v1704 = vpop.f32.mrb[0].mxu0
        %v1705 = vpop.f32.mrb[0].mxu0
        %v1706 = vadd.f32 0.0, %v1705
        %v1707 = vpop.f32.mrb[0].mxu0
        %1708 = vmatprep.mubr.bf16.mxu0 0
        %1709 = vmatmul.mubr.bf16.gmra.mrb[0].mxu0 %v1646
        %v1710 = vpop.f32.mrb[0].mxu0
        %v1711 = vadd.f32 0.0, %v1710
        %v1712 = vpop.f32.mrb[0].mxu0
        %v1713 = vpop.f32.mrb[0].mxu0
        %v1714 = vadd.f32 0.0, %v1713
        %v1715 = vpop.f32.mrb[0].mxu0
        %1716 = vmatprep.mubr.bf16.mxu0 0
        %1717 = vmatmul.mubr.bf16.gmra.mrb[0].mxu0 %v1647
        %v1718 = vpop.f32.mrb[0].mxu0
        %v1719 = vadd.f32 0.0, %v1718
        %v1720 = vpop.f32.mrb[0].mxu0
        %v1721 = vpop.f32.mrb[0].mxu0
        %v1722 = vadd.f32 0.0, %v1721
        %v1723 = vpop.f32.mrb[0].mxu0
        %1724 = vmatprep.mubr.bf16.mxu0 0
        %1725 = vmatmul.mubr.bf16.gmra.mrb[0].mxu0 %v1648
        %v1726 = vpop.f32.mrb[0].mxu0
        %v1727 = vadd.f32 0.0, %v1726
        %v1728 = vpop.f32.mrb[0].mxu0
        %v1729 = vpop.f32.mrb[0].mxu0
        %v1730 = vadd.f32 0.0, %v1729
        %v1731 = vpop.f32.mrb[0].mxu0
        %1732 = vmatprep.mubr.bf16.mxu0 0
        %1733 = vmatmul.mubr.bf16.gmra.mrb[0].mxu0 %v1649
        %v1734 = vpop.f32.mrb[0].mxu0
        %v1735 = vadd.f32 0.0, %v1734
        %v1736 = vpop.f32.mrb[0].mxu0
        %v1737 = vpop.f32.mrb[0].mxu0
        %v1738 = vadd.f32 0.0, %v1737
        %v1739 = vpop.f32.mrb[0].mxu0
        %1740 = vmatprep.mubr.bf16.mxu0 0
        %1741 = vmatmul.mubr.bf16.gmra.mrb[0].mxu0 %v1650
        %v1742 = vpop.f32.mrb[0].mxu0
        %v1743 = vadd.f32 0.0, %v1742
        %v1744 = vpop.f32.mrb[0].mxu0
        %v1745 = vpop.f32.mrb[0].mxu0
        %v1746 = vadd.f32 0.0, %v1745
        %v1747 = vpop.f32.mrb[0].mxu0
        %1748 = vmatprep.mubr.bf16.mxu0 0
        %1749 = vmatmul.mubr.bf16.gmra.mrb[0].mxu0 %v1651
        %v1750 = vpop.f32.mrb[0].mxu0
        %v1751 = vadd.f32 0.0, %v1750
        %v1752 = vpop.f32.mrb[0].mxu0
        %v1753 = vpop.f32.mrb[0].mxu0
        %v1754 = vadd.f32 0.0, %v1753
        %v1755 = vpop.f32.mrb[0].mxu0
        %1756 = vdwg.mxu0
        %s1757 = scalar_lea.vmem %s553, 192
        %v1758 = vld [vmem:[%s1757] sm:$0xf]
        %v1759 = vld [vmem:[%s1757 + $0x4] sm:$0xf]
        %v1760 = vld [vmem:[%s1757 + $0x8] sm:$0xf]
        %v1761 = vld [vmem:[%s1757 + $0xc] sm:$0xf]
        %v1762 = vld [vmem:[%s1757 + $0x10] sm:$0xf]
        %v1763 = vld [vmem:[%s1757 + $0x14] sm:$0xf]
        %v1764 = vld [vmem:[%s1757 + $0x18] sm:$0xf]
        %v1765 = vld [vmem:[%s1757 + $0x1c] sm:$0xf]
        %v1766 = vld [vmem:[%s1757 + $0x20] sm:$0xf]
        %v1767 = vld [vmem:[%s1757 + $0x24] sm:$0xf]
        %v1768 = vld [vmem:[%s1757 + $0x28] sm:$0xf]
        %v1769 = vld [vmem:[%s1757 + $0x2c] sm:$0xf]
        %v1770 = vld [vmem:[%s1757 + $0x30] sm:$0xf]
        %v1771 = vld [vmem:[%s1757 + $0x34] sm:$0xf]
        %v1772 = vld [vmem:[%s1757 + $0x38] sm:$0xf]
        %v1773 = vld [vmem:[%s1757 + $0x3c] sm:$0xf]
        %v1790 = vunpack.c.l.b16 %v1758
        %v1791 = vunpack.c.l.b16 %v1759
        %v1792 = vunpack.c.l.b16 %v1760
        %v1793 = vunpack.c.l.b16 %v1761
        %v1794 = vunpack.c.l.b16 %v1762
        %v1795 = vunpack.c.l.b16 %v1763
        %v1796 = vunpack.c.l.b16 %v1764
        %v1797 = vunpack.c.l.b16 %v1765
        %v1798 = vunpack.c.l.b16 %v1766
        %v1799 = vunpack.c.l.b16 %v1767
        %v1800 = vunpack.c.l.b16 %v1768
        %v1801 = vunpack.c.l.b16 %v1769
        %v1802 = vunpack.c.l.b16 %v1770
        %v1803 = vunpack.c.l.b16 %v1771
        %v1804 = vunpack.c.l.b16 %v1772
        %v1805 = vunpack.c.l.b16 %v1773
        %v1806 = vpack.c.b16 %v1791, %v1790
        %v1807 = vpack.c.b16 %v1793, %v1792
        %v1808 = vpack.c.b16 %v1795, %v1794
        %v1809 = vpack.c.b16 %v1797, %v1796
        %v1810 = vpack.c.b16 %v1799, %v1798
        %v1811 = vpack.c.b16 %v1801, %v1800
        %v1812 = vpack.c.b16 %v1803, %v1802
        %v1813 = vpack.c.b16 %v1805, %v1804
        %1822 = vmatprep.subr.bf16.mxu0 0
        %1823 = vmatpush1.bf16.msra.mxu0 %v1264
        %1824 = vmatprep.subr.bf16.mxu0 0
        %1825 = vmatpush1.bf16.msra.mxu0 %v1265
        %1826 = vmatprep.subr.bf16.mxu0 0
        %1827 = vmatpush1.bf16.msra.mxu0 %v1266
        %1828 = vmatprep.subr.bf16.mxu0 0
        %1829 = vmatpush1.bf16.msra.mxu0 %v1267
        %1830 = vmatprep.subr.bf16.mxu0 0
        %1831 = vmatpush1.bf16.msra.mxu0 %v1268
        %1832 = vmatprep.subr.bf16.mxu0 0
        %1833 = vmatpush1.bf16.msra.mxu0 %v1269
        %1834 = vmatprep.subr.bf16.mxu0 0
        %1835 = vmatpush1.bf16.msra.mxu0 %v1270
        %1836 = vmatprep.subr.bf16.mxu0 0
        %1837 = vmatpush1.bf16.msra.mxu0 %v1271
        %1838 = vmatprep.subr.bf16.mxu0 0
        %1839 = vmatpush1.bf16.msra.mxu0 0
        %1840 = vmatprep.subr.bf16.mxu0 0
        %1841 = vmatpush1.bf16.msra.mxu0 0
        %1842 = vmatprep.subr.bf16.mxu0 0
        %1843 = vmatpush1.bf16.msra.mxu0 0
        %1844 = vmatprep.subr.bf16.mxu0 0
        %1845 = vmatpush1.bf16.msra.mxu0 0
        %1846 = vmatprep.subr.bf16.mxu0 0
        %1847 = vmatpush1.bf16.msra.mxu0 0
        %1848 = vmatprep.subr.bf16.mxu0 0
        %1849 = vmatpush1.bf16.msra.mxu0 0
        %1850 = vmatprep.subr.bf16.mxu0 0
        %1851 = vmatpush1.bf16.msra.mxu0 0
        %1852 = vmatprep.subr.bf16.mxu0 0
        %1853 = vmatpush1.bf16.msra.mxu0 0
        %1854 = vmatprep.mubr.bf16.mxu0 0
        %1855 = vmatmul.mubr.bf16.gmra.mrb[0].mxu0 %v1806
        %v1856 = vpop.f32.mrb[0].mxu0
        %v1857 = vadd.f32 0.0, %v1856
        %v1858 = vpop.f32.mrb[0].mxu0
        %v1859 = vpop.f32.mrb[0].mxu0
        %v1860 = vadd.f32 0.0, %v1859
        %v1861 = vpop.f32.mrb[0].mxu0
        %1862 = vmatprep.mubr.bf16.mxu0 0
        %1863 = vmatmul.mubr.bf16.gmra.mrb[0].mxu0 %v1807
        %v1864 = vpop.f32.mrb[0].mxu0
        %v1865 = vadd.f32 0.0, %v1864
        %v1866 = vpop.f32.mrb[0].mxu0
        %v1867 = vpop.f32.mrb[0].mxu0
        %v1868 = vadd.f32 0.0, %v1867
        %v1869 = vpop.f32.mrb[0].mxu0
        %1870 = vmatprep.mubr.bf16.mxu0 0
        %1871 = vmatmul.mubr.bf16.gmra.mrb[0].mxu0 %v1808
        %v1872 = vpop.f32.mrb[0].mxu0
        %v1873 = vadd.f32 0.0, %v1872
        %v1874 = vpop.f32.mrb[0].mxu0
        %v1875 = vpop.f32.mrb[0].mxu0
        %v1876 = vadd.f32 0.0, %v1875
        %v1877 = vpop.f32.mrb[0].mxu0
        %1878 = vmatprep.mubr.bf16.mxu0 0
        %1879 = vmatmul.mubr.bf16.gmra.mrb[0].mxu0 %v1809
        %v1880 = vpop.f32.mrb[0].mxu0
        %v1881 = vadd.f32 0.0, %v1880
        %v1882 = vpop.f32.mrb[0].mxu0
        %v1883 = vpop.f32.mrb[0].mxu0
        %v1884 = vadd.f32 0.0, %v1883
        %v1885 = vpop.f32.mrb[0].mxu0
        %1886 = vmatprep.mubr.bf16.mxu0 0
        %1887 = vmatmul.mubr.bf16.gmra.mrb[0].mxu0 %v1810
        %v1888 = vpop.f32.mrb[0].mxu0
        %v1889 = vadd.f32 0.0, %v1888
        %v1890 = vpop.f32.mrb[0].mxu0
        %v1891 = vpop.f32.mrb[0].mxu0
        %v1892 = vadd.f32 0.0, %v1891
        %v1893 = vpop.f32.mrb[0].mxu0
        %1894 = vmatprep.mubr.bf16.mxu0 0
        %1895 = vmatmul.mubr.bf16.gmra.mrb[0].mxu0 %v1811
        %v1896 = vpop.f32.mrb[0].mxu0
        %v1897 = vadd.f32 0.0, %v1896
        %v1898 = vpop.f32.mrb[0].mxu0
        %v1899 = vpop.f32.mrb[0].mxu0
        %v1900 = vadd.f32 0.0, %v1899
        %v1901 = vpop.f32.mrb[0].mxu0
        %1902 = vmatprep.mubr.bf16.mxu0 0
        %1903 = vmatmul.mubr.bf16.gmra.mrb[0].mxu0 %v1812
        %v1904 = vpop.f32.mrb[0].mxu0
        %v1905 = vadd.f32 0.0, %v1904
        %v1906 = vpop.f32.mrb[0].mxu0
        %v1907 = vpop.f32.mrb[0].mxu0
        %v1908 = vadd.f32 0.0, %v1907
        %v1909 = vpop.f32.mrb[0].mxu0
        %1910 = vmatprep.mubr.bf16.mxu0 0
        %1911 = vmatmul.mubr.bf16.gmra.mrb[0].mxu0 %v1813
        %v1912 = vpop.f32.mrb[0].mxu0
        %v1913 = vadd.f32 0.0, %v1912
        %v1914 = vpop.f32.mrb[0].mxu0
        %v1915 = vpop.f32.mrb[0].mxu0
        %v1916 = vadd.f32 0.0, %v1915
        %v1917 = vpop.f32.mrb[0].mxu0
        %1918 = vdwg.mxu0
        %v1919 = vpack.c.bf16 %v1374, %v1371
        %v1920 = vpack.c.bf16 %v1382, %v1379
        %v1921 = vpack.c.bf16 %v1390, %v1387
        %v1922 = vpack.c.bf16 %v1398, %v1395
        %v1923 = vpack.c.bf16 %v1406, %v1403
        %v1924 = vpack.c.bf16 %v1414, %v1411
        %v1925 = vpack.c.bf16 %v1422, %v1419
        %v1926 = vpack.c.bf16 %v1430, %v1427
        %v1927 = vpack.c.bf16 %v1536, %v1533
        %v1928 = vpack.c.bf16 %v1544, %v1541
        %v1929 = vpack.c.bf16 %v1552, %v1549
        %v1930 = vpack.c.bf16 %v1560, %v1557
        %v1931 = vpack.c.bf16 %v1568, %v1565
        %v1932 = vpack.c.bf16 %v1576, %v1573
        %v1933 = vpack.c.bf16 %v1584, %v1581
        %v1934 = vpack.c.bf16 %v1592, %v1589
        %v1935 = vpack.c.bf16 %v1698, %v1695
        %v1936 = vpack.c.bf16 %v1706, %v1703
        %v1937 = vpack.c.bf16 %v1714, %v1711
        %v1938 = vpack.c.bf16 %v1722, %v1719
        %v1939 = vpack.c.bf16 %v1730, %v1727
        %v1940 = vpack.c.bf16 %v1738, %v1735
        %v1941 = vpack.c.bf16 %v1746, %v1743
        %v1942 = vpack.c.bf16 %v1754, %v1751
        %v1943 = vpack.c.bf16 %v1860, %v1857
        %v1944 = vpack.c.bf16 %v1868, %v1865
        %v1945 = vpack.c.bf16 %v1876, %v1873
        %v1946 = vpack.c.bf16 %v1884, %v1881
        %v1947 = vpack.c.bf16 %v1892, %v1889
        %v1948 = vpack.c.bf16 %v1900, %v1897
        %v1949 = vpack.c.bf16 %v1908, %v1905
        %v1950 = vpack.c.bf16 %v1916, %v1913
        %v1951 = vld [vmem:[#allocation9] sm:$0xf]
        %v1952 = vld [vmem:[#allocation9 + $0x4] sm:$0xf]
        %v1953 = vld [vmem:[#allocation9 + $0x8] sm:$0xf]
        %v1954 = vld [vmem:[#allocation9 + $0xc] sm:$0xf]
        %v1955 = vld [vmem:[#allocation10] sm:$0xf]
        %v1956 = vld [vmem:[#allocation10 + $0x4] sm:$0xf]
        %v1957 = vld [vmem:[#allocation10 + $0x8] sm:$0xf]
        %v1958 = vld [vmem:[#allocation10 + $0xc] sm:$0xf]
        %v1963 = vunpack.c.l.b16 %v1955
        %v1964 = vunpack.c.l.b16 %v1956
        %v1965 = vunpack.c.l.b16 %v1957
        %v1966 = vunpack.c.l.b16 %v1958
        %v1967 = vpack.c.b16 %v1964, %v1963
        %v1968 = vpack.c.b16 %v1966, %v1965
        %vm1971 = vcmask 261120
        %v1973 = vsel %vm1971, %v1240, 0
        %v1976 = vsel %vm1971, %v1241, 0
        %v1979 = vsel %vm1971, %v1242, 0
        %v1982 = vsel %vm1971, %v1243, 0
        %v1985 = vsel %vm1971, %v1244, 0
        %v1988 = vsel %vm1971, %v1245, 0
        %v1991 = vsel %vm1971, %v1246, 0
        %v1994 = vsel %vm1971, %v1247, 0
        %v1997 = vsel %vm1971, %v1248, 0
        %v2000 = vsel %vm1971, %v1249, 0
        %v2003 = vsel %vm1971, %v1250, 0
        %v2006 = vsel %vm1971, %v1251, 0
        %v2009 = vsel %vm1971, %v1252, 0
        %v2012 = vsel %vm1971, %v1253, 0
        %v2015 = vsel %vm1971, %v1254, 0
        %v2018 = vsel %vm1971, %v1255, 0
        %v2021 = vsel %vm1971, %v1256, 0
        %v2024 = vsel %vm1971, %v1257, 0
        %v2027 = vsel %vm1971, %v1258, 0
        %v2030 = vsel %vm1971, %v1259, 0
        %v2033 = vsel %vm1971, %v1260, 0
        %v2036 = vsel %vm1971, %v1261, 0
        %v2039 = vsel %vm1971, %v1262, 0
        %v2042 = vsel %vm1971, %v1263, 0
        %v2045 = vsel %vm1971, %v1264, 0
        %v2048 = vsel %vm1971, %v1265, 0
        %v2051 = vsel %vm1971, %v1266, 0
        %v2054 = vsel %vm1971, %v1267, 0
        %v2057 = vsel %vm1971, %v1268, 0
        %v2060 = vsel %vm1971, %v1269, 0
        %v2063 = vsel %vm1971, %v1270, 0
        %v2066 = vsel %vm1971, %v1271, 0
        %2068 = vmatprep.subr.bf16.mxu0 0
        %2069 = vmatpush1.bf16.msra.mxu0 %v1967
        %2070 = vmatprep.subr.bf16.mxu0 0
        %2071 = vmatpush1.bf16.msra.mxu0 %v1968
        %2072 = vmatprep.subr.bf16.mxu0 0
        %2073 = vmatpush1.bf16.msra.mxu0 0
        %2074 = vmatprep.subr.bf16.mxu0 0
        %2075 = vmatpush1.bf16.msra.mxu0 0
        %2076 = vmatprep.subr.bf16.mxu0 0
        %2077 = vmatpush1.bf16.msra.mxu0 0
        %2078 = vmatprep.subr.bf16.mxu0 0
        %2079 = vmatpush1.bf16.msra.mxu0 0
        %2080 = vmatprep.subr.bf16.mxu0 0
        %2081 = vmatpush1.bf16.msra.mxu0 0
        %2082 = vmatprep.subr.bf16.mxu0 0
        %2083 = vmatpush1.bf16.msra.mxu0 0
        %2084 = vmatprep.subr.bf16.mxu0 0
        %2085 = vmatpush1.bf16.msra.mxu0 0
        %2086 = vmatprep.subr.bf16.mxu0 0
        %2087 = vmatpush1.bf16.msra.mxu0 0
        %2088 = vmatprep.subr.bf16.mxu0 0
        %2089 = vmatpush1.bf16.msra.mxu0 0
        %2090 = vmatprep.subr.bf16.mxu0 0
        %2091 = vmatpush1.bf16.msra.mxu0 0
        %2092 = vmatprep.subr.bf16.mxu0 0
        %2093 = vmatpush1.bf16.msra.mxu0 0
        %2094 = vmatprep.subr.bf16.mxu0 0
        %2095 = vmatpush1.bf16.msra.mxu0 0
        %2096 = vmatprep.subr.bf16.mxu0 0
        %2097 = vmatpush1.bf16.msra.mxu0 0
        %2098 = vmatprep.subr.bf16.mxu0 0
        %2099 = vmatpush1.bf16.msra.mxu0 0
        %2100 = vmatprep.mubr.bf16.mxu0 0
        %2101 = vmatmul.mubr.bf16.gmra.mrb[0].mxu0 %v1973
        %v2102 = vpop.f32.mrb[0].mxu0
        %v2103 = vadd.f32 0.0, %v2102
        %v2104 = vpop.f32.mrb[0].mxu0
        %v2105 = vpop.f32.mrb[0].mxu0
        %v2106 = vadd.f32 0.0, %v2105
        %v2107 = vpop.f32.mrb[0].mxu0
        %2108 = vmatprep.mubr.bf16.mxu0 0
        %2109 = vmatmul.mubr.bf16.gmra.mrb[0].mxu0 %v1976
        %v2110 = vpop.f32.mrb[0].mxu0
        %v2111 = vadd.f32 0.0, %v2110
        %v2112 = vpop.f32.mrb[0].mxu0
        %v2113 = vpop.f32.mrb[0].mxu0
        %v2114 = vadd.f32 0.0, %v2113
        %v2115 = vpop.f32.mrb[0].mxu0
        %2116 = vmatprep.mubr.bf16.mxu0 0
        %2117 = vmatmul.mubr.bf16.gmra.mrb[0].mxu0 %v1979
        %v2118 = vpop.f32.mrb[0].mxu0
        %v2119 = vadd.f32 0.0, %v2118
        %v2120 = vpop.f32.mrb[0].mxu0
        %v2121 = vpop.f32.mrb[0].mxu0
        %v2122 = vadd.f32 0.0, %v2121
        %v2123 = vpop.f32.mrb[0].mxu0
        %2124 = vmatprep.mubr.bf16.mxu0 0
        %2125 = vmatmul.mubr.bf16.gmra.mrb[0].mxu0 %v1982
        %v2126 = vpop.f32.mrb[0].mxu0
        %v2127 = vadd.f32 0.0, %v2126
        %v2128 = vpop.f32.mrb[0].mxu0
        %v2129 = vpop.f32.mrb[0].mxu0
        %v2130 = vadd.f32 0.0, %v2129
        %v2131 = vpop.f32.mrb[0].mxu0
        %2132 = vmatprep.mubr.bf16.mxu0 0
        %2133 = vmatmul.mubr.bf16.gmra.mrb[0].mxu0 %v1985
        %v2134 = vpop.f32.mrb[0].mxu0
        %v2135 = vadd.f32 0.0, %v2134
        %v2136 = vpop.f32.mrb[0].mxu0
        %v2137 = vpop.f32.mrb[0].mxu0
        %v2138 = vadd.f32 0.0, %v2137
        %v2139 = vpop.f32.mrb[0].mxu0
        %2140 = vmatprep.mubr.bf16.mxu0 0
        %2141 = vmatmul.mubr.bf16.gmra.mrb[0].mxu0 %v1988
        %v2142 = vpop.f32.mrb[0].mxu0
        %v2143 = vadd.f32 0.0, %v2142
        %v2144 = vpop.f32.mrb[0].mxu0
        %v2145 = vpop.f32.mrb[0].mxu0
        %v2146 = vadd.f32 0.0, %v2145
        %v2147 = vpop.f32.mrb[0].mxu0
        %2148 = vmatprep.mubr.bf16.mxu0 0
        %2149 = vmatmul.mubr.bf16.gmra.mrb[0].mxu0 %v1991
        %v2150 = vpop.f32.mrb[0].mxu0
        %v2151 = vadd.f32 0.0, %v2150
        %v2152 = vpop.f32.mrb[0].mxu0
        %v2153 = vpop.f32.mrb[0].mxu0
        %v2154 = vadd.f32 0.0, %v2153
        %v2155 = vpop.f32.mrb[0].mxu0
        %2156 = vmatprep.mubr.bf16.mxu0 0
        %2157 = vmatmul.mubr.bf16.gmra.mrb[0].mxu0 %v1994
        %v2158 = vpop.f32.mrb[0].mxu0
        %v2159 = vadd.f32 0.0, %v2158
        %v2160 = vpop.f32.mrb[0].mxu0
        %v2161 = vpop.f32.mrb[0].mxu0
        %v2162 = vadd.f32 0.0, %v2161
        %v2163 = vpop.f32.mrb[0].mxu0
        %2164 = vmatprep.mubr.bf16.mxu0 0
        %2165 = vmatmul.mubr.bf16.gmra.mrb[0].mxu0 %v1997
        %v2166 = vpop.f32.mrb[0].mxu0
        %v2167 = vadd.f32 0.0, %v2166
        %v2168 = vpop.f32.mrb[0].mxu0
        %v2169 = vpop.f32.mrb[0].mxu0
        %v2170 = vadd.f32 0.0, %v2169
        %v2171 = vpop.f32.mrb[0].mxu0
        %2172 = vmatprep.mubr.bf16.mxu0 0
        %2173 = vmatmul.mubr.bf16.gmra.mrb[0].mxu0 %v2000
        %v2174 = vpop.f32.mrb[0].mxu0
        %v2175 = vadd.f32 0.0, %v2174
        %v2176 = vpop.f32.mrb[0].mxu0
        %v2177 = vpop.f32.mrb[0].mxu0
        %v2178 = vadd.f32 0.0, %v2177
        %v2179 = vpop.f32.mrb[0].mxu0
        %2180 = vmatprep.mubr.bf16.mxu0 0
        %2181 = vmatmul.mubr.bf16.gmra.mrb[0].mxu0 %v2003
        %v2182 = vpop.f32.mrb[0].mxu0
        %v2183 = vadd.f32 0.0, %v2182
        %v2184 = vpop.f32.mrb[0].mxu0
        %v2185 = vpop.f32.mrb[0].mxu0
        %v2186 = vadd.f32 0.0, %v2185
        %v2187 = vpop.f32.mrb[0].mxu0
        %2188 = vmatprep.mubr.bf16.mxu0 0
        %2189 = vmatmul.mubr.bf16.gmra.mrb[0].mxu0 %v2006
        %v2190 = vpop.f32.mrb[0].mxu0
        %v2191 = vadd.f32 0.0, %v2190
        %v2192 = vpop.f32.mrb[0].mxu0
        %v2193 = vpop.f32.mrb[0].mxu0
        %v2194 = vadd.f32 0.0, %v2193
        %v2195 = vpop.f32.mrb[0].mxu0
        %2196 = vmatprep.mubr.bf16.mxu0 0
        %2197 = vmatmul.mubr.bf16.gmra.mrb[0].mxu0 %v2009
        %v2198 = vpop.f32.mrb[0].mxu0
        %v2199 = vadd.f32 0.0, %v2198
        %v2200 = vpop.f32.mrb[0].mxu0
        %v2201 = vpop.f32.mrb[0].mxu0
        %v2202 = vadd.f32 0.0, %v2201
        %v2203 = vpop.f32.mrb[0].mxu0
        %2204 = vmatprep.mubr.bf16.mxu0 0
        %2205 = vmatmul.mubr.bf16.gmra.mrb[0].mxu0 %v2012
        %v2206 = vpop.f32.mrb[0].mxu0
        %v2207 = vadd.f32 0.0, %v2206
        %v2208 = vpop.f32.mrb[0].mxu0
        %v2209 = vpop.f32.mrb[0].mxu0
        %v2210 = vadd.f32 0.0, %v2209
        %v2211 = vpop.f32.mrb[0].mxu0
        %2212 = vmatprep.mubr.bf16.mxu0 0
        %2213 = vmatmul.mubr.bf16.gmra.mrb[0].mxu0 %v2015
        %v2214 = vpop.f32.mrb[0].mxu0
        %v2215 = vadd.f32 0.0, %v2214
        %v2216 = vpop.f32.mrb[0].mxu0
        %v2217 = vpop.f32.mrb[0].mxu0
        %v2218 = vadd.f32 0.0, %v2217
        %v2219 = vpop.f32.mrb[0].mxu0
        %2220 = vmatprep.mubr.bf16.mxu0 0
        %2221 = vmatmul.mubr.bf16.gmra.mrb[0].mxu0 %v2018
        %v2222 = vpop.f32.mrb[0].mxu0
        %v2223 = vadd.f32 0.0, %v2222
        %v2224 = vpop.f32.mrb[0].mxu0
        %v2225 = vpop.f32.mrb[0].mxu0
        %v2226 = vadd.f32 0.0, %v2225
        %v2227 = vpop.f32.mrb[0].mxu0
        %2228 = vmatprep.mubr.bf16.mxu0 0
        %2229 = vmatmul.mubr.bf16.gmra.mrb[0].mxu0 %v2021
        %v2230 = vpop.f32.mrb[0].mxu0
        %v2231 = vadd.f32 0.0, %v2230
        %v2232 = vpop.f32.mrb[0].mxu0
        %v2233 = vpop.f32.mrb[0].mxu0
        %v2234 = vadd.f32 0.0, %v2233
        %v2235 = vpop.f32.mrb[0].mxu0
        %2236 = vmatprep.mubr.bf16.mxu0 0
        %2237 = vmatmul.mubr.bf16.gmra.mrb[0].mxu0 %v2024
        %v2238 = vpop.f32.mrb[0].mxu0
        %v2239 = vadd.f32 0.0, %v2238
        %v2240 = vpop.f32.mrb[0].mxu0
        %v2241 = vpop.f32.mrb[0].mxu0
        %v2242 = vadd.f32 0.0, %v2241
        %v2243 = vpop.f32.mrb[0].mxu0
        %2244 = vmatprep.mubr.bf16.mxu0 0
        %2245 = vmatmul.mubr.bf16.gmra.mrb[0].mxu0 %v2027
        %v2246 = vpop.f32.mrb[0].mxu0
        %v2247 = vadd.f32 0.0, %v2246
        %v2248 = vpop.f32.mrb[0].mxu0
        %v2249 = vpop.f32.mrb[0].mxu0
        %v2250 = vadd.f32 0.0, %v2249
        %v2251 = vpop.f32.mrb[0].mxu0
        %2252 = vmatprep.mubr.bf16.mxu0 0
        %2253 = vmatmul.mubr.bf16.gmra.mrb[0].mxu0 %v2030
        %v2254 = vpop.f32.mrb[0].mxu0
        %v2255 = vadd.f32 0.0, %v2254
        %v2256 = vpop.f32.mrb[0].mxu0
        %v2257 = vpop.f32.mrb[0].mxu0
        %v2258 = vadd.f32 0.0, %v2257
        %v2259 = vpop.f32.mrb[0].mxu0
        %2260 = vmatprep.mubr.bf16.mxu0 0
        %2261 = vmatmul.mubr.bf16.gmra.mrb[0].mxu0 %v2033
        %v2262 = vpop.f32.mrb[0].mxu0
        %v2263 = vadd.f32 0.0, %v2262
        %v2264 = vpop.f32.mrb[0].mxu0
        %v2265 = vpop.f32.mrb[0].mxu0
        %v2266 = vadd.f32 0.0, %v2265
        %v2267 = vpop.f32.mrb[0].mxu0
        %2268 = vmatprep.mubr.bf16.mxu0 0
        %2269 = vmatmul.mubr.bf16.gmra.mrb[0].mxu0 %v2036
        %v2270 = vpop.f32.mrb[0].mxu0
        %v2271 = vadd.f32 0.0, %v2270
        %v2272 = vpop.f32.mrb[0].mxu0
        %v2273 = vpop.f32.mrb[0].mxu0
        %v2274 = vadd.f32 0.0, %v2273
        %v2275 = vpop.f32.mrb[0].mxu0
        %2276 = vmatprep.mubr.bf16.mxu0 0
        %2277 = vmatmul.mubr.bf16.gmra.mrb[0].mxu0 %v2039
        %v2278 = vpop.f32.mrb[0].mxu0
        %v2279 = vadd.f32 0.0, %v2278
        %v2280 = vpop.f32.mrb[0].mxu0
        %v2281 = vpop.f32.mrb[0].mxu0
        %v2282 = vadd.f32 0.0, %v2281
        %v2283 = vpop.f32.mrb[0].mxu0
        %2284 = vmatprep.mubr.bf16.mxu0 0
        %2285 = vmatmul.mubr.bf16.gmra.mrb[0].mxu0 %v2042
        %v2286 = vpop.f32.mrb[0].mxu0
        %v2287 = vadd.f32 0.0, %v2286
        %v2288 = vpop.f32.mrb[0].mxu0
        %v2289 = vpop.f32.mrb[0].mxu0
        %v2290 = vadd.f32 0.0, %v2289
        %v2291 = vpop.f32.mrb[0].mxu0
        %2292 = vmatprep.mubr.bf16.mxu0 0
        %2293 = vmatmul.mubr.bf16.gmra.mrb[0].mxu0 %v2045
        %v2294 = vpop.f32.mrb[0].mxu0
        %v2295 = vadd.f32 0.0, %v2294
        %v2296 = vpop.f32.mrb[0].mxu0
        %v2297 = vpop.f32.mrb[0].mxu0
        %v2298 = vadd.f32 0.0, %v2297
        %v2299 = vpop.f32.mrb[0].mxu0
        %2300 = vmatprep.mubr.bf16.mxu0 0
        %2301 = vmatmul.mubr.bf16.gmra.mrb[0].mxu0 %v2048
        %v2302 = vpop.f32.mrb[0].mxu0
        %v2303 = vadd.f32 0.0, %v2302
        %v2304 = vpop.f32.mrb[0].mxu0
        %v2305 = vpop.f32.mrb[0].mxu0
        %v2306 = vadd.f32 0.0, %v2305
        %v2307 = vpop.f32.mrb[0].mxu0
        %2308 = vmatprep.mubr.bf16.mxu0 0
        %2309 = vmatmul.mubr.bf16.gmra.mrb[0].mxu0 %v2051
        %v2310 = vpop.f32.mrb[0].mxu0
        %v2311 = vadd.f32 0.0, %v2310
        %v2312 = vpop.f32.mrb[0].mxu0
        %v2313 = vpop.f32.mrb[0].mxu0
        %v2314 = vadd.f32 0.0, %v2313
        %v2315 = vpop.f32.mrb[0].mxu0
        %2316 = vmatprep.mubr.bf16.mxu0 0
        %2317 = vmatmul.mubr.bf16.gmra.mrb[0].mxu0 %v2054
        %v2318 = vpop.f32.mrb[0].mxu0
        %v2319 = vadd.f32 0.0, %v2318
        %v2320 = vpop.f32.mrb[0].mxu0
        %v2321 = vpop.f32.mrb[0].mxu0
        %v2322 = vadd.f32 0.0, %v2321
        %v2323 = vpop.f32.mrb[0].mxu0
        %2324 = vmatprep.mubr.bf16.mxu0 0
        %2325 = vmatmul.mubr.bf16.gmra.mrb[0].mxu0 %v2057
        %v2326 = vpop.f32.mrb[0].mxu0
        %v2327 = vadd.f32 0.0, %v2326
        %v2328 = vpop.f32.mrb[0].mxu0
        %v2329 = vpop.f32.mrb[0].mxu0
        %v2330 = vadd.f32 0.0, %v2329
        %v2331 = vpop.f32.mrb[0].mxu0
        %2332 = vmatprep.mubr.bf16.mxu0 0
        %2333 = vmatmul.mubr.bf16.gmra.mrb[0].mxu0 %v2060
        %v2334 = vpop.f32.mrb[0].mxu0
        %v2335 = vadd.f32 0.0, %v2334
        %v2336 = vpop.f32.mrb[0].mxu0
        %v2337 = vpop.f32.mrb[0].mxu0
        %v2338 = vadd.f32 0.0, %v2337
        %v2339 = vpop.f32.mrb[0].mxu0
        %2340 = vmatprep.mubr.bf16.mxu0 0
        %2341 = vmatmul.mubr.bf16.gmra.mrb[0].mxu0 %v2063
        %v2342 = vpop.f32.mrb[0].mxu0
        %v2343 = vadd.f32 0.0, %v2342
        %v2344 = vpop.f32.mrb[0].mxu0
        %v2345 = vpop.f32.mrb[0].mxu0
        %v2346 = vadd.f32 0.0, %v2345
        %v2347 = vpop.f32.mrb[0].mxu0
        %2348 = vmatprep.mubr.bf16.mxu0 0
        %2349 = vmatmul.mubr.bf16.gmra.mrb[0].mxu0 %v2066
        %v2350 = vpop.f32.mrb[0].mxu0
        %v2351 = vadd.f32 0.0, %v2350
        %v2352 = vpop.f32.mrb[0].mxu0
        %v2353 = vpop.f32.mrb[0].mxu0
        %v2354 = vadd.f32 0.0, %v2353
        %v2355 = vpop.f32.mrb[0].mxu0
        %2356 = vdwg.mxu0
        %v2361 = vunpack.c.l.b16 %v1951
        %v2362 = vunpack.c.l.b16 %v1952
        %v2363 = vunpack.c.l.b16 %v1953
        %v2364 = vunpack.c.l.b16 %v1954
        %v2365 = vpack.c.b16 %v2362, %v2361
        %v2366 = vpack.c.b16 %v2364, %v2363
        %v2370 = vsel %vm1971, %v1919, 0
        %v2373 = vsel %vm1971, %v1920, 0
        %v2376 = vsel %vm1971, %v1921, 0
        %v2379 = vsel %vm1971, %v1922, 0
        %v2382 = vsel %vm1971, %v1923, 0
        %v2385 = vsel %vm1971, %v1924, 0
        %v2388 = vsel %vm1971, %v1925, 0
        %v2391 = vsel %vm1971, %v1926, 0
        %v2394 = vsel %vm1971, %v1927, 0
        %v2397 = vsel %vm1971, %v1928, 0
        %v2400 = vsel %vm1971, %v1929, 0
        %v2403 = vsel %vm1971, %v1930, 0
        %v2406 = vsel %vm1971, %v1931, 0
        %v2409 = vsel %vm1971, %v1932, 0
        %v2412 = vsel %vm1971, %v1933, 0
        %v2415 = vsel %vm1971, %v1934, 0
        %v2418 = vsel %vm1971, %v1935, 0
        %v2421 = vsel %vm1971, %v1936, 0
        %v2424 = vsel %vm1971, %v1937, 0
        %v2427 = vsel %vm1971, %v1938, 0
        %v2430 = vsel %vm1971, %v1939, 0
        %v2433 = vsel %vm1971, %v1940, 0
        %v2436 = vsel %vm1971, %v1941, 0
        %v2439 = vsel %vm1971, %v1942, 0
        %v2442 = vsel %vm1971, %v1943, 0
        %v2445 = vsel %vm1971, %v1944, 0
        %v2448 = vsel %vm1971, %v1945, 0
        %v2451 = vsel %vm1971, %v1946, 0
        %v2454 = vsel %vm1971, %v1947, 0
        %v2457 = vsel %vm1971, %v1948, 0
        %v2460 = vsel %vm1971, %v1949, 0
        %v2463 = vsel %vm1971, %v1950, 0
        %2465 = vmatprep.subr.bf16.mxu0 0
        %2466 = vmatpush1.bf16.msra.mxu0 %v2365
        %2467 = vmatprep.subr.bf16.mxu0 0
        %2468 = vmatpush1.bf16.msra.mxu0 %v2366
        %2469 = vmatprep.subr.bf16.mxu0 0
        %2470 = vmatpush1.bf16.msra.mxu0 0
        %2471 = vmatprep.subr.bf16.mxu0 0
        %2472 = vmatpush1.bf16.msra.mxu0 0
        %2473 = vmatprep.subr.bf16.mxu0 0
        %2474 = vmatpush1.bf16.msra.mxu0 0
        %2475 = vmatprep.subr.bf16.mxu0 0
        %2476 = vmatpush1.bf16.msra.mxu0 0
        %2477 = vmatprep.subr.bf16.mxu0 0
        %2478 = vmatpush1.bf16.msra.mxu0 0
        %2479 = vmatprep.subr.bf16.mxu0 0
        %2480 = vmatpush1.bf16.msra.mxu0 0
        %2481 = vmatprep.subr.bf16.mxu0 0
        %2482 = vmatpush1.bf16.msra.mxu0 0
        %2483 = vmatprep.subr.bf16.mxu0 0
        %2484 = vmatpush1.bf16.msra.mxu0 0
        %2485 = vmatprep.subr.bf16.mxu0 0
        %2486 = vmatpush1.bf16.msra.mxu0 0
        %2487 = vmatprep.subr.bf16.mxu0 0
        %2488 = vmatpush1.bf16.msra.mxu0 0
        %2489 = vmatprep.subr.bf16.mxu0 0
        %2490 = vmatpush1.bf16.msra.mxu0 0
        %2491 = vmatprep.subr.bf16.mxu0 0
        %2492 = vmatpush1.bf16.msra.mxu0 0
        %2493 = vmatprep.subr.bf16.mxu0 0
        %2494 = vmatpush1.bf16.msra.mxu0 0
        %2495 = vmatprep.subr.bf16.mxu0 0
        %2496 = vmatpush1.bf16.msra.mxu0 0
        %2497 = vmatprep.mubr.bf16.mxu0 0
        %2498 = vmatmul.mubr.bf16.gmra.mrb[0].mxu0 %v2370
        %v2499 = vpop.f32.mrb[0].mxu0
        %v2500 = vadd.f32 %v2103, %v2499
        %v2501 = vpop.f32.mrb[0].mxu0
        %v2502 = vpop.f32.mrb[0].mxu0
        %v2503 = vadd.f32 %v2106, %v2502
        %v2504 = vpop.f32.mrb[0].mxu0
        %2505 = vmatprep.mubr.bf16.mxu0 0
        %2506 = vmatmul.mubr.bf16.gmra.mrb[0].mxu0 %v2373
        %v2507 = vpop.f32.mrb[0].mxu0
        %v2508 = vadd.f32 %v2111, %v2507
        %v2509 = vpop.f32.mrb[0].mxu0
        %v2510 = vpop.f32.mrb[0].mxu0
        %v2511 = vadd.f32 %v2114, %v2510
        %v2512 = vpop.f32.mrb[0].mxu0
        %2513 = vmatprep.mubr.bf16.mxu0 0
        %2514 = vmatmul.mubr.bf16.gmra.mrb[0].mxu0 %v2376
        %v2515 = vpop.f32.mrb[0].mxu0
        %v2516 = vadd.f32 %v2119, %v2515
        %v2517 = vpop.f32.mrb[0].mxu0
        %v2518 = vpop.f32.mrb[0].mxu0
        %v2519 = vadd.f32 %v2122, %v2518
        %v2520 = vpop.f32.mrb[0].mxu0
        %2521 = vmatprep.mubr.bf16.mxu0 0
        %2522 = vmatmul.mubr.bf16.gmra.mrb[0].mxu0 %v2379
        %v2523 = vpop.f32.mrb[0].mxu0
        %v2524 = vadd.f32 %v2127, %v2523
        %v2525 = vpop.f32.mrb[0].mxu0
        %v2526 = vpop.f32.mrb[0].mxu0
        %v2527 = vadd.f32 %v2130, %v2526
        %v2528 = vpop.f32.mrb[0].mxu0
        %2529 = vmatprep.mubr.bf16.mxu0 0
        %2530 = vmatmul.mubr.bf16.gmra.mrb[0].mxu0 %v2382
        %v2531 = vpop.f32.mrb[0].mxu0
        %v2532 = vadd.f32 %v2135, %v2531
        %v2533 = vpop.f32.mrb[0].mxu0
        %v2534 = vpop.f32.mrb[0].mxu0
        %v2535 = vadd.f32 %v2138, %v2534
        %v2536 = vpop.f32.mrb[0].mxu0
        %2537 = vmatprep.mubr.bf16.mxu0 0
        %2538 = vmatmul.mubr.bf16.gmra.mrb[0].mxu0 %v2385
        %v2539 = vpop.f32.mrb[0].mxu0
        %v2540 = vadd.f32 %v2143, %v2539
        %v2541 = vpop.f32.mrb[0].mxu0
        %v2542 = vpop.f32.mrb[0].mxu0
        %v2543 = vadd.f32 %v2146, %v2542
        %v2544 = vpop.f32.mrb[0].mxu0
        %2545 = vmatprep.mubr.bf16.mxu0 0
        %2546 = vmatmul.mubr.bf16.gmra.mrb[0].mxu0 %v2388
        %v2547 = vpop.f32.mrb[0].mxu0
        %v2548 = vadd.f32 %v2151, %v2547
        %v2549 = vpop.f32.mrb[0].mxu0
        %v2550 = vpop.f32.mrb[0].mxu0
        %v2551 = vadd.f32 %v2154, %v2550
        %v2552 = vpop.f32.mrb[0].mxu0
        %2553 = vmatprep.mubr.bf16.mxu0 0
        %2554 = vmatmul.mubr.bf16.gmra.mrb[0].mxu0 %v2391
        %v2555 = vpop.f32.mrb[0].mxu0
        %v2556 = vadd.f32 %v2159, %v2555
        %v2557 = vpop.f32.mrb[0].mxu0
        %v2558 = vpop.f32.mrb[0].mxu0
        %v2559 = vadd.f32 %v2162, %v2558
        %v2560 = vpop.f32.mrb[0].mxu0
        %2561 = vmatprep.mubr.bf16.mxu0 0
        %2562 = vmatmul.mubr.bf16.gmra.mrb[0].mxu0 %v2394
        %v2563 = vpop.f32.mrb[0].mxu0
        %v2564 = vadd.f32 %v2167, %v2563
        %v2565 = vpop.f32.mrb[0].mxu0
        %v2566 = vpop.f32.mrb[0].mxu0
        %v2567 = vadd.f32 %v2170, %v2566
        %v2568 = vpop.f32.mrb[0].mxu0
        %2569 = vmatprep.mubr.bf16.mxu0 0
        %2570 = vmatmul.mubr.bf16.gmra.mrb[0].mxu0 %v2397
        %v2571 = vpop.f32.mrb[0].mxu0
        %v2572 = vadd.f32 %v2175, %v2571
        %v2573 = vpop.f32.mrb[0].mxu0
        %v2574 = vpop.f32.mrb[0].mxu0
        %v2575 = vadd.f32 %v2178, %v2574
        %v2576 = vpop.f32.mrb[0].mxu0
        %2577 = vmatprep.mubr.bf16.mxu0 0
        %2578 = vmatmul.mubr.bf16.gmra.mrb[0].mxu0 %v2400
        %v2579 = vpop.f32.mrb[0].mxu0
        %v2580 = vadd.f32 %v2183, %v2579
        %v2581 = vpop.f32.mrb[0].mxu0
        %v2582 = vpop.f32.mrb[0].mxu0
        %v2583 = vadd.f32 %v2186, %v2582
        %v2584 = vpop.f32.mrb[0].mxu0
        %2585 = vmatprep.mubr.bf16.mxu0 0
        %2586 = vmatmul.mubr.bf16.gmra.mrb[0].mxu0 %v2403
        %v2587 = vpop.f32.mrb[0].mxu0
        %v2588 = vadd.f32 %v2191, %v2587
        %v2589 = vpop.f32.mrb[0].mxu0
        %v2590 = vpop.f32.mrb[0].mxu0
        %v2591 = vadd.f32 %v2194, %v2590
        %v2592 = vpop.f32.mrb[0].mxu0
        %2593 = vmatprep.mubr.bf16.mxu0 0
        %2594 = vmatmul.mubr.bf16.gmra.mrb[0].mxu0 %v2406
        %v2595 = vpop.f32.mrb[0].mxu0
        %v2596 = vadd.f32 %v2199, %v2595
        %v2597 = vpop.f32.mrb[0].mxu0
        %v2598 = vpop.f32.mrb[0].mxu0
        %v2599 = vadd.f32 %v2202, %v2598
        %v2600 = vpop.f32.mrb[0].mxu0
        %2601 = vmatprep.mubr.bf16.mxu0 0
        %2602 = vmatmul.mubr.bf16.gmra.mrb[0].mxu0 %v2409
        %v2603 = vpop.f32.mrb[0].mxu0
        %v2604 = vadd.f32 %v2207, %v2603
        %v2605 = vpop.f32.mrb[0].mxu0
        %v2606 = vpop.f32.mrb[0].mxu0
        %v2607 = vadd.f32 %v2210, %v2606
        %v2608 = vpop.f32.mrb[0].mxu0
        %2609 = vmatprep.mubr.bf16.mxu0 0
        %2610 = vmatmul.mubr.bf16.gmra.mrb[0].mxu0 %v2412
        %v2611 = vpop.f32.mrb[0].mxu0
        %v2612 = vadd.f32 %v2215, %v2611
        %v2613 = vpop.f32.mrb[0].mxu0
        %v2614 = vpop.f32.mrb[0].mxu0
        %v2615 = vadd.f32 %v2218, %v2614
        %v2616 = vpop.f32.mrb[0].mxu0
        %2617 = vmatprep.mubr.bf16.mxu0 0
        %2618 = vmatmul.mubr.bf16.gmra.mrb[0].mxu0 %v2415
        %v2619 = vpop.f32.mrb[0].mxu0
        %v2620 = vadd.f32 %v2223, %v2619
        %v2621 = vpop.f32.mrb[0].mxu0
        %v2622 = vpop.f32.mrb[0].mxu0
        %v2623 = vadd.f32 %v2226, %v2622
        %v2624 = vpop.f32.mrb[0].mxu0
        %2625 = vmatprep.mubr.bf16.mxu0 0
        %2626 = vmatmul.mubr.bf16.gmra.mrb[0].mxu0 %v2418
        %v2627 = vpop.f32.mrb[0].mxu0
        %v2628 = vadd.f32 %v2231, %v2627
        %v2629 = vpop.f32.mrb[0].mxu0
        %v2630 = vpop.f32.mrb[0].mxu0
        %v2631 = vadd.f32 %v2234, %v2630
        %v2632 = vpop.f32.mrb[0].mxu0
        %2633 = vmatprep.mubr.bf16.mxu0 0
        %2634 = vmatmul.mubr.bf16.gmra.mrb[0].mxu0 %v2421
        %v2635 = vpop.f32.mrb[0].mxu0
        %v2636 = vadd.f32 %v2239, %v2635
        %v2637 = vpop.f32.mrb[0].mxu0
        %v2638 = vpop.f32.mrb[0].mxu0
        %v2639 = vadd.f32 %v2242, %v2638
        %v2640 = vpop.f32.mrb[0].mxu0
        %2641 = vmatprep.mubr.bf16.mxu0 0
        %2642 = vmatmul.mubr.bf16.gmra.mrb[0].mxu0 %v2424
        %v2643 = vpop.f32.mrb[0].mxu0
        %v2644 = vadd.f32 %v2247, %v2643
        %v2645 = vpop.f32.mrb[0].mxu0
        %v2646 = vpop.f32.mrb[0].mxu0
        %v2647 = vadd.f32 %v2250, %v2646
        %v2648 = vpop.f32.mrb[0].mxu0
        %2649 = vmatprep.mubr.bf16.mxu0 0
        %2650 = vmatmul.mubr.bf16.gmra.mrb[0].mxu0 %v2427
        %v2651 = vpop.f32.mrb[0].mxu0
        %v2652 = vadd.f32 %v2255, %v2651
        %v2653 = vpop.f32.mrb[0].mxu0
        %v2654 = vpop.f32.mrb[0].mxu0
        %v2655 = vadd.f32 %v2258, %v2654
        %v2656 = vpop.f32.mrb[0].mxu0
        %2657 = vmatprep.mubr.bf16.mxu0 0
        %2658 = vmatmul.mubr.bf16.gmra.mrb[0].mxu0 %v2430
        %v2659 = vpop.f32.mrb[0].mxu0
        %v2660 = vadd.f32 %v2263, %v2659
        %v2661 = vpop.f32.mrb[0].mxu0
        %v2662 = vpop.f32.mrb[0].mxu0
        %v2663 = vadd.f32 %v2266, %v2662
        %v2664 = vpop.f32.mrb[0].mxu0
        %2665 = vmatprep.mubr.bf16.mxu0 0
        %2666 = vmatmul.mubr.bf16.gmra.mrb[0].mxu0 %v2433
        %v2667 = vpop.f32.mrb[0].mxu0
        %v2668 = vadd.f32 %v2271, %v2667
        %v2669 = vpop.f32.mrb[0].mxu0
        %v2670 = vpop.f32.mrb[0].mxu0
        %v2671 = vadd.f32 %v2274, %v2670
        %v2672 = vpop.f32.mrb[0].mxu0
        %2673 = vmatprep.mubr.bf16.mxu0 0
        %2674 = vmatmul.mubr.bf16.gmra.mrb[0].mxu0 %v2436
        %v2675 = vpop.f32.mrb[0].mxu0
        %v2676 = vadd.f32 %v2279, %v2675
        %v2677 = vpop.f32.mrb[0].mxu0
        %v2678 = vpop.f32.mrb[0].mxu0
        %v2679 = vadd.f32 %v2282, %v2678
        %v2680 = vpop.f32.mrb[0].mxu0
        %2681 = vmatprep.mubr.bf16.mxu0 0
        %2682 = vmatmul.mubr.bf16.gmra.mrb[0].mxu0 %v2439
        %v2683 = vpop.f32.mrb[0].mxu0
        %v2684 = vadd.f32 %v2287, %v2683
        %v2685 = vpop.f32.mrb[0].mxu0
        %v2686 = vpop.f32.mrb[0].mxu0
        %v2687 = vadd.f32 %v2290, %v2686
        %v2688 = vpop.f32.mrb[0].mxu0
        %2689 = vmatprep.mubr.bf16.mxu0 0
        %2690 = vmatmul.mubr.bf16.gmra.mrb[0].mxu0 %v2442
        %v2691 = vpop.f32.mrb[0].mxu0
        %v2692 = vadd.f32 %v2295, %v2691
        %v2693 = vpop.f32.mrb[0].mxu0
        %v2694 = vpop.f32.mrb[0].mxu0
        %v2695 = vadd.f32 %v2298, %v2694
        %v2696 = vpop.f32.mrb[0].mxu0
        %2697 = vmatprep.mubr.bf16.mxu0 0
        %2698 = vmatmul.mubr.bf16.gmra.mrb[0].mxu0 %v2445
        %v2699 = vpop.f32.mrb[0].mxu0
        %v2700 = vadd.f32 %v2303, %v2699
        %v2701 = vpop.f32.mrb[0].mxu0
        %v2702 = vpop.f32.mrb[0].mxu0
        %v2703 = vadd.f32 %v2306, %v2702
        %v2704 = vpop.f32.mrb[0].mxu0
        %2705 = vmatprep.mubr.bf16.mxu0 0
        %2706 = vmatmul.mubr.bf16.gmra.mrb[0].mxu0 %v2448
        %v2707 = vpop.f32.mrb[0].mxu0
        %v2708 = vadd.f32 %v2311, %v2707
        %v2709 = vpop.f32.mrb[0].mxu0
        %v2710 = vpop.f32.mrb[0].mxu0
        %v2711 = vadd.f32 %v2314, %v2710
        %v2712 = vpop.f32.mrb[0].mxu0
        %2713 = vmatprep.mubr.bf16.mxu0 0
        %2714 = vmatmul.mubr.bf16.gmra.mrb[0].mxu0 %v2451
        %v2715 = vpop.f32.mrb[0].mxu0
        %v2716 = vadd.f32 %v2319, %v2715
        %v2717 = vpop.f32.mrb[0].mxu0
        %v2718 = vpop.f32.mrb[0].mxu0
        %v2719 = vadd.f32 %v2322, %v2718
        %v2720 = vpop.f32.mrb[0].mxu0
        %2721 = vmatprep.mubr.bf16.mxu0 0
        %2722 = vmatmul.mubr.bf16.gmra.mrb[0].mxu0 %v2454
        %v2723 = vpop.f32.mrb[0].mxu0
        %v2724 = vadd.f32 %v2327, %v2723
        %v2725 = vpop.f32.mrb[0].mxu0
        %v2726 = vpop.f32.mrb[0].mxu0
        %v2727 = vadd.f32 %v2330, %v2726
        %v2728 = vpop.f32.mrb[0].mxu0
        %2729 = vmatprep.mubr.bf16.mxu0 0
        %2730 = vmatmul.mubr.bf16.gmra.mrb[0].mxu0 %v2457
        %v2731 = vpop.f32.mrb[0].mxu0
        %v2732 = vadd.f32 %v2335, %v2731
        %v2733 = vpop.f32.mrb[0].mxu0
        %v2734 = vpop.f32.mrb[0].mxu0
        %v2735 = vadd.f32 %v2338, %v2734
        %v2736 = vpop.f32.mrb[0].mxu0
        %2737 = vmatprep.mubr.bf16.mxu0 0
        %2738 = vmatmul.mubr.bf16.gmra.mrb[0].mxu0 %v2460
        %v2739 = vpop.f32.mrb[0].mxu0
        %v2740 = vadd.f32 %v2343, %v2739
        %v2741 = vpop.f32.mrb[0].mxu0
        %v2742 = vpop.f32.mrb[0].mxu0
        %v2743 = vadd.f32 %v2346, %v2742
        %v2744 = vpop.f32.mrb[0].mxu0
        %2745 = vmatprep.mubr.bf16.mxu0 0
        %2746 = vmatmul.mubr.bf16.gmra.mrb[0].mxu0 %v2463
        %v2747 = vpop.f32.mrb[0].mxu0
        %v2748 = vadd.f32 %v2351, %v2747
        %v2749 = vpop.f32.mrb[0].mxu0
        %v2750 = vpop.f32.mrb[0].mxu0
        %v2751 = vadd.f32 %v2354, %v2750
        %v2752 = vpop.f32.mrb[0].mxu0
        %2753 = vdwg.mxu0
        %v2754 = vmax.f32 %v2500, 0.0
        %v2755 = vmax.f32 %v2503, 0.0
        %v2756 = vmax.f32 %v2508, 0.0
        %v2757 = vmax.f32 %v2511, 0.0
        %v2758 = vmax.f32 %v2516, 0.0
        %v2759 = vmax.f32 %v2519, 0.0
        %v2760 = vmax.f32 %v2524, 0.0
        %v2761 = vmax.f32 %v2527, 0.0
        %v2762 = vmax.f32 %v2532, 0.0
        %v2763 = vmax.f32 %v2535, 0.0
        %v2764 = vmax.f32 %v2540, 0.0
        %v2765 = vmax.f32 %v2543, 0.0
        %v2766 = vmax.f32 %v2548, 0.0
        %v2767 = vmax.f32 %v2551, 0.0
        %v2768 = vmax.f32 %v2556, 0.0
        %v2769 = vmax.f32 %v2559, 0.0
        %v2770 = vmax.f32 %v2564, 0.0
        %v2771 = vmax.f32 %v2567, 0.0
        %v2772 = vmax.f32 %v2572, 0.0
        %v2773 = vmax.f32 %v2575, 0.0
        %v2774 = vmax.f32 %v2580, 0.0
        %v2775 = vmax.f32 %v2583, 0.0
        %v2776 = vmax.f32 %v2588, 0.0
        %v2777 = vmax.f32 %v2591, 0.0
        %v2778 = vmax.f32 %v2596, 0.0
        %v2779 = vmax.f32 %v2599, 0.0
        %v2780 = vmax.f32 %v2604, 0.0
        %v2781 = vmax.f32 %v2607, 0.0
        %v2782 = vmax.f32 %v2612, 0.0
        %v2783 = vmax.f32 %v2615, 0.0
        %v2784 = vmax.f32 %v2620, 0.0
        %v2785 = vmax.f32 %v2623, 0.0
        %v2786 = vmax.f32 %v2628, 0.0
        %v2787 = vmax.f32 %v2631, 0.0
        %v2788 = vmax.f32 %v2636, 0.0
        %v2789 = vmax.f32 %v2639, 0.0
        %v2790 = vmax.f32 %v2644, 0.0
        %v2791 = vmax.f32 %v2647, 0.0
        %v2792 = vmax.f32 %v2652, 0.0
        %v2793 = vmax.f32 %v2655, 0.0
        %v2794 = vmax.f32 %v2660, 0.0
        %v2795 = vmax.f32 %v2663, 0.0
        %v2796 = vmax.f32 %v2668, 0.0
        %v2797 = vmax.f32 %v2671, 0.0
        %v2798 = vmax.f32 %v2676, 0.0
        %v2799 = vmax.f32 %v2679, 0.0
        %v2800 = vmax.f32 %v2684, 0.0
        %v2801 = vmax.f32 %v2687, 0.0
        %v2802 = vmax.f32 %v2692, 0.0
        %v2803 = vmax.f32 %v2695, 0.0
        %v2804 = vmax.f32 %v2700, 0.0
        %v2805 = vmax.f32 %v2703, 0.0
        %v2806 = vmax.f32 %v2708, 0.0
        %v2807 = vmax.f32 %v2711, 0.0
        %v2808 = vmax.f32 %v2716, 0.0
        %v2809 = vmax.f32 %v2719, 0.0
        %v2810 = vmax.f32 %v2724, 0.0
        %v2811 = vmax.f32 %v2727, 0.0
        %v2812 = vmax.f32 %v2732, 0.0
        %v2813 = vmax.f32 %v2735, 0.0
        %v2814 = vmax.f32 %v2740, 0.0
        %v2815 = vmax.f32 %v2743, 0.0
        %v2816 = vmax.f32 %v2748, 0.0
        %v2817 = vmax.f32 %v2751, 0.0
        %v2818 = vpack.c.bf16 %v2755, %v2754
        %v2819 = vpack.c.bf16 %v2757, %v2756
        %v2820 = vpack.c.bf16 %v2759, %v2758
        %v2821 = vpack.c.bf16 %v2761, %v2760
        %v2822 = vpack.c.bf16 %v2763, %v2762
        %v2823 = vpack.c.bf16 %v2765, %v2764
        %v2824 = vpack.c.bf16 %v2767, %v2766
        %v2825 = vpack.c.bf16 %v2769, %v2768
        %v2826 = vpack.c.bf16 %v2771, %v2770
        %v2827 = vpack.c.bf16 %v2773, %v2772
        %v2828 = vpack.c.bf16 %v2775, %v2774
        %v2829 = vpack.c.bf16 %v2777, %v2776
        %v2830 = vpack.c.bf16 %v2779, %v2778
        %v2831 = vpack.c.bf16 %v2781, %v2780
        %v2832 = vpack.c.bf16 %v2783, %v2782
        %v2833 = vpack.c.bf16 %v2785, %v2784
        %v2834 = vpack.c.bf16 %v2787, %v2786
        %v2835 = vpack.c.bf16 %v2789, %v2788
        %v2836 = vpack.c.bf16 %v2791, %v2790
        %v2837 = vpack.c.bf16 %v2793, %v2792
        %v2838 = vpack.c.bf16 %v2795, %v2794
        %v2839 = vpack.c.bf16 %v2797, %v2796
        %v2840 = vpack.c.bf16 %v2799, %v2798
        %v2841 = vpack.c.bf16 %v2801, %v2800
        %v2842 = vpack.c.bf16 %v2803, %v2802
        %v2843 = vpack.c.bf16 %v2805, %v2804
        %v2844 = vpack.c.bf16 %v2807, %v2806
        %v2845 = vpack.c.bf16 %v2809, %v2808
        %v2846 = vpack.c.bf16 %v2811, %v2810
        %v2847 = vpack.c.bf16 %v2813, %v2812
        %v2848 = vpack.c.bf16 %v2815, %v2814
        %v2849 = vpack.c.bf16 %v2817, %v2816
        %2850 = vmatprep.subr.bf16.mxu0 0
        %2851 = vmatpush1.bf16.msra.mxu0 %v2818
        %2852 = vmatprep.subr.bf16.mxu0 0
        %2853 = vmatpush1.bf16.msra.mxu0 %v2819
        %2854 = vmatprep.subr.bf16.mxu0 0
        %2855 = vmatpush1.bf16.msra.mxu0 %v2820
        %2856 = vmatprep.subr.bf16.mxu0 0
        %2857 = vmatpush1.bf16.msra.mxu0 %v2821
        %2858 = vmatprep.subr.bf16.mxu0 0
        %2859 = vmatpush1.bf16.msra.mxu0 %v2822
        %2860 = vmatprep.subr.bf16.mxu0 0
        %2861 = vmatpush1.bf16.msra.mxu0 %v2823
        %2862 = vmatprep.subr.bf16.mxu0 0
        %2863 = vmatpush1.bf16.msra.mxu0 %v2824
        %2864 = vmatprep.subr.bf16.mxu0 0
        %2865 = vmatpush1.bf16.msra.mxu0 %v2825
        %2866 = vmatprep.subr.bf16.mxu0 0
        %2867 = vmatpush1.bf16.msra.mxu0 0
        %2868 = vmatprep.subr.bf16.mxu0 0
        %2869 = vmatpush1.bf16.msra.mxu0 0
        %2870 = vmatprep.subr.bf16.mxu0 0
        %2871 = vmatpush1.bf16.msra.mxu0 0
        %2872 = vmatprep.subr.bf16.mxu0 0
        %2873 = vmatpush1.bf16.msra.mxu0 0
        %2874 = vmatprep.subr.bf16.mxu0 0
        %2875 = vmatpush1.bf16.msra.mxu0 0
        %2876 = vmatprep.subr.bf16.mxu0 0
        %2877 = vmatpush1.bf16.msra.mxu0 0
        %2878 = vmatprep.subr.bf16.mxu0 0
        %2879 = vmatpush1.bf16.msra.mxu0 0
        %2880 = vmatprep.subr.bf16.mxu0 0
        %2881 = vmatpush1.bf16.msra.mxu0 0
        %2882 = vmatprep.mubr.bf16.mxu0 0
        %2883 = vmatmul.mubr.bf16.gmra.mrb[0].mxu0 %v1320
        %v2884 = vpop.f32.mrb[0].mxu0
        %v2885 = vadd.f32 0.0, %v2884
        %v2886 = vpop.f32.mrb[0].mxu0
        %v2887 = vpop.f32.mrb[0].mxu0
        %v2888 = vadd.f32 0.0, %v2887
        %v2889 = vpop.f32.mrb[0].mxu0
        %2890 = vmatprep.mubr.bf16.mxu0 0
        %2891 = vmatmul.mubr.bf16.gmra.mrb[0].mxu0 %v1321
        %v2892 = vpop.f32.mrb[0].mxu0
        %v2893 = vadd.f32 0.0, %v2892
        %v2894 = vpop.f32.mrb[0].mxu0
        %v2895 = vpop.f32.mrb[0].mxu0
        %v2896 = vadd.f32 0.0, %v2895
        %v2897 = vpop.f32.mrb[0].mxu0
        %2898 = vmatprep.mubr.bf16.mxu0 0
        %2899 = vmatmul.mubr.bf16.gmra.mrb[0].mxu0 %v1322
        %v2900 = vpop.f32.mrb[0].mxu0
        %v2901 = vadd.f32 0.0, %v2900
        %v2902 = vpop.f32.mrb[0].mxu0
        %v2903 = vpop.f32.mrb[0].mxu0
        %v2904 = vadd.f32 0.0, %v2903
        %v2905 = vpop.f32.mrb[0].mxu0
        %2906 = vmatprep.mubr.bf16.mxu0 0
        %2907 = vmatmul.mubr.bf16.gmra.mrb[0].mxu0 %v1323
        %v2908 = vpop.f32.mrb[0].mxu0
        %v2909 = vadd.f32 0.0, %v2908
        %v2910 = vpop.f32.mrb[0].mxu0
        %v2911 = vpop.f32.mrb[0].mxu0
        %v2912 = vadd.f32 0.0, %v2911
        %v2913 = vpop.f32.mrb[0].mxu0
        %2914 = vmatprep.mubr.bf16.mxu0 0
        %2915 = vmatmul.mubr.bf16.gmra.mrb[0].mxu0 %v1324
        %v2916 = vpop.f32.mrb[0].mxu0
        %v2917 = vadd.f32 0.0, %v2916
        %v2918 = vpop.f32.mrb[0].mxu0
        %v2919 = vpop.f32.mrb[0].mxu0
        %v2920 = vadd.f32 0.0, %v2919
        %v2921 = vpop.f32.mrb[0].mxu0
        %2922 = vmatprep.mubr.bf16.mxu0 0
        %2923 = vmatmul.mubr.bf16.gmra.mrb[0].mxu0 %v1325
        %v2924 = vpop.f32.mrb[0].mxu0
        %v2925 = vadd.f32 0.0, %v2924
        %v2926 = vpop.f32.mrb[0].mxu0
        %v2927 = vpop.f32.mrb[0].mxu0
        %v2928 = vadd.f32 0.0, %v2927
        %v2929 = vpop.f32.mrb[0].mxu0
        %2930 = vmatprep.mubr.bf16.mxu0 0
        %2931 = vmatmul.mubr.bf16.gmra.mrb[0].mxu0 %v1326
        %v2932 = vpop.f32.mrb[0].mxu0
        %v2933 = vadd.f32 0.0, %v2932
        %v2934 = vpop.f32.mrb[0].mxu0
        %v2935 = vpop.f32.mrb[0].mxu0
        %v2936 = vadd.f32 0.0, %v2935
        %v2937 = vpop.f32.mrb[0].mxu0
        %2938 = vmatprep.mubr.bf16.mxu0 0
        %2939 = vmatmul.mubr.bf16.gmra.mrb[0].mxu0 %v1327
        %v2940 = vpop.f32.mrb[0].mxu0
        %v2941 = vadd.f32 0.0, %v2940
        %v2942 = vpop.f32.mrb[0].mxu0
        %v2943 = vpop.f32.mrb[0].mxu0
        %v2944 = vadd.f32 0.0, %v2943
        %v2945 = vpop.f32.mrb[0].mxu0
        %2946 = vdwg.mxu0
        %2947 = vmatprep.subr.bf16.mxu0 0
        %2948 = vmatpush1.bf16.msra.mxu0 %v2826
        %2949 = vmatprep.subr.bf16.mxu0 0
        %2950 = vmatpush1.bf16.msra.mxu0 %v2827
        %2951 = vmatprep.subr.bf16.mxu0 0
        %2952 = vmatpush1.bf16.msra.mxu0 %v2828
        %2953 = vmatprep.subr.bf16.mxu0 0
        %2954 = vmatpush1.bf16.msra.mxu0 %v2829
        %2955 = vmatprep.subr.bf16.mxu0 0
        %2956 = vmatpush1.bf16.msra.mxu0 %v2830
        %2957 = vmatprep.subr.bf16.mxu0 0
        %2958 = vmatpush1.bf16.msra.mxu0 %v2831
        %2959 = vmatprep.subr.bf16.mxu0 0
        %2960 = vmatpush1.bf16.msra.mxu0 %v2832
        %2961 = vmatprep.subr.bf16.mxu0 0
        %2962 = vmatpush1.bf16.msra.mxu0 %v2833
        %2963 = vmatprep.subr.bf16.mxu0 0
        %2964 = vmatpush1.bf16.msra.mxu0 0
        %2965 = vmatprep.subr.bf16.mxu0 0
        %2966 = vmatpush1.bf16.msra.mxu0 0
        %2967 = vmatprep.subr.bf16.mxu0 0
        %2968 = vmatpush1.bf16.msra.mxu0 0
        %2969 = vmatprep.subr.bf16.mxu0 0
        %2970 = vmatpush1.bf16.msra.mxu0 0
        %2971 = vmatprep.subr.bf16.mxu0 0
        %2972 = vmatpush1.bf16.msra.mxu0 0
        %2973 = vmatprep.subr.bf16.mxu0 0
        %2974 = vmatpush1.bf16.msra.mxu0 0
        %2975 = vmatprep.subr.bf16.mxu0 0
        %2976 = vmatpush1.bf16.msra.mxu0 0
        %2977 = vmatprep.subr.bf16.mxu0 0
        %2978 = vmatpush1.bf16.msra.mxu0 0
        %2979 = vmatprep.mubr.bf16.mxu0 0
        %2980 = vmatmul.mubr.bf16.gmra.mrb[0].mxu0 %v1482
        %v2981 = vpop.f32.mrb[0].mxu0
        %v2982 = vadd.f32 0.0, %v2981
        %v2983 = vpop.f32.mrb[0].mxu0
        %v2984 = vpop.f32.mrb[0].mxu0
        %v2985 = vadd.f32 0.0, %v2984
        %v2986 = vpop.f32.mrb[0].mxu0
        %2987 = vmatprep.mubr.bf16.mxu0 0
        %2988 = vmatmul.mubr.bf16.gmra.mrb[0].mxu0 %v1483
        %v2989 = vpop.f32.mrb[0].mxu0
        %v2990 = vadd.f32 0.0, %v2989
        %v2991 = vpop.f32.mrb[0].mxu0
        %v2992 = vpop.f32.mrb[0].mxu0
        %v2993 = vadd.f32 0.0, %v2992
        %v2994 = vpop.f32.mrb[0].mxu0
        %2995 = vmatprep.mubr.bf16.mxu0 0
        %2996 = vmatmul.mubr.bf16.gmra.mrb[0].mxu0 %v1484
        %v2997 = vpop.f32.mrb[0].mxu0
        %v2998 = vadd.f32 0.0, %v2997
        %v2999 = vpop.f32.mrb[0].mxu0
        %v3000 = vpop.f32.mrb[0].mxu0
        %v3001 = vadd.f32 0.0, %v3000
        %v3002 = vpop.f32.mrb[0].mxu0
        %3003 = vmatprep.mubr.bf16.mxu0 0
        %3004 = vmatmul.mubr.bf16.gmra.mrb[0].mxu0 %v1485
        %v3005 = vpop.f32.mrb[0].mxu0
        %v3006 = vadd.f32 0.0, %v3005
        %v3007 = vpop.f32.mrb[0].mxu0
        %v3008 = vpop.f32.mrb[0].mxu0
        %v3009 = vadd.f32 0.0, %v3008
        %v3010 = vpop.f32.mrb[0].mxu0
        %3011 = vmatprep.mubr.bf16.mxu0 0
        %3012 = vmatmul.mubr.bf16.gmra.mrb[0].mxu0 %v1486
        %v3013 = vpop.f32.mrb[0].mxu0
        %v3014 = vadd.f32 0.0, %v3013
        %v3015 = vpop.f32.mrb[0].mxu0
        %v3016 = vpop.f32.mrb[0].mxu0
        %v3017 = vadd.f32 0.0, %v3016
        %v3018 = vpop.f32.mrb[0].mxu0
        %3019 = vmatprep.mubr.bf16.mxu0 0
        %3020 = vmatmul.mubr.bf16.gmra.mrb[0].mxu0 %v1487
        %v3021 = vpop.f32.mrb[0].mxu0
        %v3022 = vadd.f32 0.0, %v3021
        %v3023 = vpop.f32.mrb[0].mxu0
        %v3024 = vpop.f32.mrb[0].mxu0
        %v3025 = vadd.f32 0.0, %v3024
        %v3026 = vpop.f32.mrb[0].mxu0
        %3027 = vmatprep.mubr.bf16.mxu0 0
        %3028 = vmatmul.mubr.bf16.gmra.mrb[0].mxu0 %v1488
        %v3029 = vpop.f32.mrb[0].mxu0
        %v3030 = vadd.f32 0.0, %v3029
        %v3031 = vpop.f32.mrb[0].mxu0
        %v3032 = vpop.f32.mrb[0].mxu0
        %v3033 = vadd.f32 0.0, %v3032
        %v3034 = vpop.f32.mrb[0].mxu0
        %3035 = vmatprep.mubr.bf16.mxu0 0
        %3036 = vmatmul.mubr.bf16.gmra.mrb[0].mxu0 %v1489
        %v3037 = vpop.f32.mrb[0].mxu0
        %v3038 = vadd.f32 0.0, %v3037
        %v3039 = vpop.f32.mrb[0].mxu0
        %v3040 = vpop.f32.mrb[0].mxu0
        %v3041 = vadd.f32 0.0, %v3040
        %v3042 = vpop.f32.mrb[0].mxu0
        %3043 = vdwg.mxu0
        %3044 = vmatprep.subr.bf16.mxu0 0
        %3045 = vmatpush1.bf16.msra.mxu0 %v2834
        %3046 = vmatprep.subr.bf16.mxu0 0
        %3047 = vmatpush1.bf16.msra.mxu0 %v2835
        %3048 = vmatprep.subr.bf16.mxu0 0
        %3049 = vmatpush1.bf16.msra.mxu0 %v2836
        %3050 = vmatprep.subr.bf16.mxu0 0
        %3051 = vmatpush1.bf16.msra.mxu0 %v2837
        %3052 = vmatprep.subr.bf16.mxu0 0
        %3053 = vmatpush1.bf16.msra.mxu0 %v2838
        %3054 = vmatprep.subr.bf16.mxu0 0
        %3055 = vmatpush1.bf16.msra.mxu0 %v2839
        %3056 = vmatprep.subr.bf16.mxu0 0
        %3057 = vmatpush1.bf16.msra.mxu0 %v2840
        %3058 = vmatprep.subr.bf16.mxu0 0
        %3059 = vmatpush1.bf16.msra.mxu0 %v2841
        %3060 = vmatprep.subr.bf16.mxu0 0
        %3061 = vmatpush1.bf16.msra.mxu0 0
        %3062 = vmatprep.subr.bf16.mxu0 0
        %3063 = vmatpush1.bf16.msra.mxu0 0
        %3064 = vmatprep.subr.bf16.mxu0 0
        %3065 = vmatpush1.bf16.msra.mxu0 0
        %3066 = vmatprep.subr.bf16.mxu0 0
        %3067 = vmatpush1.bf16.msra.mxu0 0
        %3068 = vmatprep.subr.bf16.mxu0 0
        %3069 = vmatpush1.bf16.msra.mxu0 0
        %3070 = vmatprep.subr.bf16.mxu0 0
        %3071 = vmatpush1.bf16.msra.mxu0 0
        %3072 = vmatprep.subr.bf16.mxu0 0
        %3073 = vmatpush1.bf16.msra.mxu0 0
        %3074 = vmatprep.subr.bf16.mxu0 0
        %3075 = vmatpush1.bf16.msra.mxu0 0
        %3076 = vmatprep.mubr.bf16.mxu0 0
        %3077 = vmatmul.mubr.bf16.gmra.mrb[0].mxu0 %v1644
        %v3078 = vpop.f32.mrb[0].mxu0
        %v3079 = vadd.f32 0.0, %v3078
        %v3080 = vpop.f32.mrb[0].mxu0
        %v3081 = vpop.f32.mrb[0].mxu0
        %v3082 = vadd.f32 0.0, %v3081
        %v3083 = vpop.f32.mrb[0].mxu0
        %3084 = vmatprep.mubr.bf16.mxu0 0
        %3085 = vmatmul.mubr.bf16.gmra.mrb[0].mxu0 %v1645
        %v3086 = vpop.f32.mrb[0].mxu0
        %v3087 = vadd.f32 0.0, %v3086
        %v3088 = vpop.f32.mrb[0].mxu0
        %v3089 = vpop.f32.mrb[0].mxu0
        %v3090 = vadd.f32 0.0, %v3089
        %v3091 = vpop.f32.mrb[0].mxu0
        %3092 = vmatprep.mubr.bf16.mxu0 0
        %3093 = vmatmul.mubr.bf16.gmra.mrb[0].mxu0 %v1646
        %v3094 = vpop.f32.mrb[0].mxu0
        %v3095 = vadd.f32 0.0, %v3094
        %v3096 = vpop.f32.mrb[0].mxu0
        %v3097 = vpop.f32.mrb[0].mxu0
        %v3098 = vadd.f32 0.0, %v3097
        %v3099 = vpop.f32.mrb[0].mxu0
        %3100 = vmatprep.mubr.bf16.mxu0 0
        %3101 = vmatmul.mubr.bf16.gmra.mrb[0].mxu0 %v1647
        %v3102 = vpop.f32.mrb[0].mxu0
        %v3103 = vadd.f32 0.0, %v3102
        %v3104 = vpop.f32.mrb[0].mxu0
        %v3105 = vpop.f32.mrb[0].mxu0
        %v3106 = vadd.f32 0.0, %v3105
        %v3107 = vpop.f32.mrb[0].mxu0
        %3108 = vmatprep.mubr.bf16.mxu0 0
        %3109 = vmatmul.mubr.bf16.gmra.mrb[0].mxu0 %v1648
        %v3110 = vpop.f32.mrb[0].mxu0
        %v3111 = vadd.f32 0.0, %v3110
        %v3112 = vpop.f32.mrb[0].mxu0
        %v3113 = vpop.f32.mrb[0].mxu0
        %v3114 = vadd.f32 0.0, %v3113
        %v3115 = vpop.f32.mrb[0].mxu0
        %3116 = vmatprep.mubr.bf16.mxu0 0
        %3117 = vmatmul.mubr.bf16.gmra.mrb[0].mxu0 %v1649
        %v3118 = vpop.f32.mrb[0].mxu0
        %v3119 = vadd.f32 0.0, %v3118
        %v3120 = vpop.f32.mrb[0].mxu0
        %v3121 = vpop.f32.mrb[0].mxu0
        %v3122 = vadd.f32 0.0, %v3121
        %v3123 = vpop.f32.mrb[0].mxu0
        %3124 = vmatprep.mubr.bf16.mxu0 0
        %3125 = vmatmul.mubr.bf16.gmra.mrb[0].mxu0 %v1650
        %v3126 = vpop.f32.mrb[0].mxu0
        %v3127 = vadd.f32 0.0, %v3126
        %v3128 = vpop.f32.mrb[0].mxu0
        %v3129 = vpop.f32.mrb[0].mxu0
        %v3130 = vadd.f32 0.0, %v3129
        %v3131 = vpop.f32.mrb[0].mxu0
        %3132 = vmatprep.mubr.bf16.mxu0 0
        %3133 = vmatmul.mubr.bf16.gmra.mrb[0].mxu0 %v1651
        %v3134 = vpop.f32.mrb[0].mxu0
        %v3135 = vadd.f32 0.0, %v3134
        %v3136 = vpop.f32.mrb[0].mxu0
        %v3137 = vpop.f32.mrb[0].mxu0
        %v3138 = vadd.f32 0.0, %v3137
        %v3139 = vpop.f32.mrb[0].mxu0
        %3140 = vdwg.mxu0
        %3141 = vmatprep.subr.bf16.mxu0 0
        %3142 = vmatpush1.bf16.msra.mxu0 %v2842
        %3143 = vmatprep.subr.bf16.mxu0 0
        %3144 = vmatpush1.bf16.msra.mxu0 %v2843
        %3145 = vmatprep.subr.bf16.mxu0 0
        %3146 = vmatpush1.bf16.msra.mxu0 %v2844
        %3147 = vmatprep.subr.bf16.mxu0 0
        %3148 = vmatpush1.bf16.msra.mxu0 %v2845
        %3149 = vmatprep.subr.bf16.mxu0 0
        %3150 = vmatpush1.bf16.msra.mxu0 %v2846
        %3151 = vmatprep.subr.bf16.mxu0 0
        %3152 = vmatpush1.bf16.msra.mxu0 %v2847
        %3153 = vmatprep.subr.bf16.mxu0 0
        %3154 = vmatpush1.bf16.msra.mxu0 %v2848
        %3155 = vmatprep.subr.bf16.mxu0 0
        %3156 = vmatpush1.bf16.msra.mxu0 %v2849
        %3157 = vmatprep.subr.bf16.mxu0 0
        %3158 = vmatpush1.bf16.msra.mxu0 0
        %3159 = vmatprep.subr.bf16.mxu0 0
        %3160 = vmatpush1.bf16.msra.mxu0 0
        %3161 = vmatprep.subr.bf16.mxu0 0
        %3162 = vmatpush1.bf16.msra.mxu0 0
        %3163 = vmatprep.subr.bf16.mxu0 0
        %3164 = vmatpush1.bf16.msra.mxu0 0
        %3165 = vmatprep.subr.bf16.mxu0 0
        %3166 = vmatpush1.bf16.msra.mxu0 0
        %3167 = vmatprep.subr.bf16.mxu0 0
        %3168 = vmatpush1.bf16.msra.mxu0 0
        %3169 = vmatprep.subr.bf16.mxu0 0
        %3170 = vmatpush1.bf16.msra.mxu0 0
        %3171 = vmatprep.subr.bf16.mxu0 0
        %3172 = vmatpush1.bf16.msra.mxu0 0
        %3173 = vmatprep.mubr.bf16.mxu0 0
        %3174 = vmatmul.mubr.bf16.gmra.mrb[0].mxu0 %v1806
        %v3175 = vpop.f32.mrb[0].mxu0
        %v3176 = vadd.f32 0.0, %v3175
        %v3177 = vpop.f32.mrb[0].mxu0
        %v3178 = vpop.f32.mrb[0].mxu0
        %v3179 = vadd.f32 0.0, %v3178
        %v3180 = vpop.f32.mrb[0].mxu0
        %3181 = vmatprep.mubr.bf16.mxu0 0
        %3182 = vmatmul.mubr.bf16.gmra.mrb[0].mxu0 %v1807
        %v3183 = vpop.f32.mrb[0].mxu0
        %v3184 = vadd.f32 0.0, %v3183
        %v3185 = vpop.f32.mrb[0].mxu0
        %v3186 = vpop.f32.mrb[0].mxu0
        %v3187 = vadd.f32 0.0, %v3186
        %v3188 = vpop.f32.mrb[0].mxu0
        %3189 = vmatprep.mubr.bf16.mxu0 0
        %3190 = vmatmul.mubr.bf16.gmra.mrb[0].mxu0 %v1808
        %v3191 = vpop.f32.mrb[0].mxu0
        %v3192 = vadd.f32 0.0, %v3191
        %v3193 = vpop.f32.mrb[0].mxu0
        %v3194 = vpop.f32.mrb[0].mxu0
        %v3195 = vadd.f32 0.0, %v3194
        %v3196 = vpop.f32.mrb[0].mxu0
        %3197 = vmatprep.mubr.bf16.mxu0 0
        %3198 = vmatmul.mubr.bf16.gmra.mrb[0].mxu0 %v1809
        %v3199 = vpop.f32.mrb[0].mxu0
        %v3200 = vadd.f32 0.0, %v3199
        %v3201 = vpop.f32.mrb[0].mxu0
        %v3202 = vpop.f32.mrb[0].mxu0
        %v3203 = vadd.f32 0.0, %v3202
        %v3204 = vpop.f32.mrb[0].mxu0
        %3205 = vmatprep.mubr.bf16.mxu0 0
        %3206 = vmatmul.mubr.bf16.gmra.mrb[0].mxu0 %v1810
        %v3207 = vpop.f32.mrb[0].mxu0
        %v3208 = vadd.f32 0.0, %v3207
        %v3209 = vpop.f32.mrb[0].mxu0
        %v3210 = vpop.f32.mrb[0].mxu0
        %v3211 = vadd.f32 0.0, %v3210
        %v3212 = vpop.f32.mrb[0].mxu0
        %3213 = vmatprep.mubr.bf16.mxu0 0
        %3214 = vmatmul.mubr.bf16.gmra.mrb[0].mxu0 %v1811
        %v3215 = vpop.f32.mrb[0].mxu0
        %v3216 = vadd.f32 0.0, %v3215
        %v3217 = vpop.f32.mrb[0].mxu0
        %v3218 = vpop.f32.mrb[0].mxu0
        %v3219 = vadd.f32 0.0, %v3218
        %v3220 = vpop.f32.mrb[0].mxu0
        %3221 = vmatprep.mubr.bf16.mxu0 0
        %3222 = vmatmul.mubr.bf16.gmra.mrb[0].mxu0 %v1812
        %v3223 = vpop.f32.mrb[0].mxu0
        %v3224 = vadd.f32 0.0, %v3223
        %v3225 = vpop.f32.mrb[0].mxu0
        %v3226 = vpop.f32.mrb[0].mxu0
        %v3227 = vadd.f32 0.0, %v3226
        %v3228 = vpop.f32.mrb[0].mxu0
        %3229 = vmatprep.mubr.bf16.mxu0 0
        %3230 = vmatmul.mubr.bf16.gmra.mrb[0].mxu0 %v1813
        %v3231 = vpop.f32.mrb[0].mxu0
        %v3232 = vadd.f32 0.0, %v3231
        %v3233 = vpop.f32.mrb[0].mxu0
        %v3234 = vpop.f32.mrb[0].mxu0
        %v3235 = vadd.f32 0.0, %v3234
        %v3236 = vpop.f32.mrb[0].mxu0
        %3237 = vdwg.mxu0
        %v3238 = vpack.c.bf16 %v2888, %v2885
        %v3239 = vpack.c.bf16 %v2896, %v2893
        %v3240 = vpack.c.bf16 %v2904, %v2901
        %v3241 = vpack.c.bf16 %v2912, %v2909
        %v3242 = vpack.c.bf16 %v2920, %v2917
        %v3243 = vpack.c.bf16 %v2928, %v2925
        %v3244 = vpack.c.bf16 %v2936, %v2933
        %v3245 = vpack.c.bf16 %v2944, %v2941
        %v3246 = vpack.c.bf16 %v2985, %v2982
        %v3247 = vpack.c.bf16 %v2993, %v2990
        %v3248 = vpack.c.bf16 %v3001, %v2998
        %v3249 = vpack.c.bf16 %v3009, %v3006
        %v3250 = vpack.c.bf16 %v3017, %v3014
        %v3251 = vpack.c.bf16 %v3025, %v3022
        %v3252 = vpack.c.bf16 %v3033, %v3030
        %v3253 = vpack.c.bf16 %v3041, %v3038
        %v3254 = vpack.c.bf16 %v3082, %v3079
        %v3255 = vpack.c.bf16 %v3090, %v3087
        %v3256 = vpack.c.bf16 %v3098, %v3095
        %v3257 = vpack.c.bf16 %v3106, %v3103
        %v3258 = vpack.c.bf16 %v3114, %v3111
        %v3259 = vpack.c.bf16 %v3122, %v3119
        %v3260 = vpack.c.bf16 %v3130, %v3127
        %v3261 = vpack.c.bf16 %v3138, %v3135
        %v3262 = vpack.c.bf16 %v3179, %v3176
        %v3263 = vpack.c.bf16 %v3187, %v3184
        %v3264 = vpack.c.bf16 %v3195, %v3192
        %v3265 = vpack.c.bf16 %v3203, %v3200
        %v3266 = vpack.c.bf16 %v3211, %v3208
        %v3267 = vpack.c.bf16 %v3219, %v3216
        %v3268 = vpack.c.bf16 %v3227, %v3224
        %v3269 = vpack.c.bf16 %v3235, %v3232
        %s3270 = scalar_lea.vmem [#allocation9], 16
        %v3271 = vld [vmem:[%s3270] sm:$0xf]
        %v3272 = vld [vmem:[%s3270 + $0x4] sm:$0xf]
        %v3273 = vld [vmem:[%s3270 + $0x8] sm:$0xf]
        %v3274 = vld [vmem:[%s3270 + $0xc] sm:$0xf]
        %s3275 = scalar_lea.vmem [#allocation10], 16
        %v3276 = vld [vmem:[%s3275] sm:$0xf]
        %v3277 = vld [vmem:[%s3275 + $0x4] sm:$0xf]
        %v3278 = vld [vmem:[%s3275 + $0x8] sm:$0xf]
        %v3279 = vld [vmem:[%s3275 + $0xc] sm:$0xf]
        %v3284 = vunpack.c.l.b16 %v3276
        %v3285 = vunpack.c.l.b16 %v3277
        %v3286 = vunpack.c.l.b16 %v3278
        %v3287 = vunpack.c.l.b16 %v3279
        %v3288 = vpack.c.b16 %v3285, %v3284
        %v3289 = vpack.c.b16 %v3287, %v3286
        %v3293 = vsel %vm1971, %v2818, 0
        %v3296 = vsel %vm1971, %v2819, 0
        %v3299 = vsel %vm1971, %v2820, 0
        %v3302 = vsel %vm1971, %v2821, 0
        %v3305 = vsel %vm1971, %v2822, 0
        %v3308 = vsel %vm1971, %v2823, 0
        %v3311 = vsel %vm1971, %v2824, 0
        %v3314 = vsel %vm1971, %v2825, 0
        %v3317 = vsel %vm1971, %v2826, 0
        %v3320 = vsel %vm1971, %v2827, 0
        %v3323 = vsel %vm1971, %v2828, 0
        %v3326 = vsel %vm1971, %v2829, 0
        %v3329 = vsel %vm1971, %v2830, 0
        %v3332 = vsel %vm1971, %v2831, 0
        %v3335 = vsel %vm1971, %v2832, 0
        %v3338 = vsel %vm1971, %v2833, 0
        %v3341 = vsel %vm1971, %v2834, 0
        %v3344 = vsel %vm1971, %v2835, 0
        %v3347 = vsel %vm1971, %v2836, 0
        %v3350 = vsel %vm1971, %v2837, 0
        %v3353 = vsel %vm1971, %v2838, 0
        %v3356 = vsel %vm1971, %v2839, 0
        %v3359 = vsel %vm1971, %v2840, 0
        %v3362 = vsel %vm1971, %v2841, 0
        %v3365 = vsel %vm1971, %v2842, 0
        %v3368 = vsel %vm1971, %v2843, 0
        %v3371 = vsel %vm1971, %v2844, 0
        %v3374 = vsel %vm1971, %v2845, 0
        %v3377 = vsel %vm1971, %v2846, 0
        %v3380 = vsel %vm1971, %v2847, 0
        %v3383 = vsel %vm1971, %v2848, 0
        %v3386 = vsel %vm1971, %v2849, 0
        %3388 = vmatprep.subr.bf16.mxu0 0
        %3389 = vmatpush1.bf16.msra.mxu0 %v3288
        %3390 = vmatprep.subr.bf16.mxu0 0
        %3391 = vmatpush1.bf16.msra.mxu0 %v3289
        %3392 = vmatprep.subr.bf16.mxu0 0
        %3393 = vmatpush1.bf16.msra.mxu0 0
        %3394 = vmatprep.subr.bf16.mxu0 0
        %3395 = vmatpush1.bf16.msra.mxu0 0
        %3396 = vmatprep.subr.bf16.mxu0 0
        %3397 = vmatpush1.bf16.msra.mxu0 0
        %3398 = vmatprep.subr.bf16.mxu0 0
        %3399 = vmatpush1.bf16.msra.mxu0 0
        %3400 = vmatprep.subr.bf16.mxu0 0
        %3401 = vmatpush1.bf16.msra.mxu0 0
        %3402 = vmatprep.subr.bf16.mxu0 0
        %3403 = vmatpush1.bf16.msra.mxu0 0
        %3404 = vmatprep.subr.bf16.mxu0 0
        %3405 = vmatpush1.bf16.msra.mxu0 0
        %3406 = vmatprep.subr.bf16.mxu0 0
        %3407 = vmatpush1.bf16.msra.mxu0 0
        %3408 = vmatprep.subr.bf16.mxu0 0
        %3409 = vmatpush1.bf16.msra.mxu0 0
        %3410 = vmatprep.subr.bf16.mxu0 0
        %3411 = vmatpush1.bf16.msra.mxu0 0
        %3412 = vmatprep.subr.bf16.mxu0 0
        %3413 = vmatpush1.bf16.msra.mxu0 0
        %3414 = vmatprep.subr.bf16.mxu0 0
        %3415 = vmatpush1.bf16.msra.mxu0 0
        %3416 = vmatprep.subr.bf16.mxu0 0
        %3417 = vmatpush1.bf16.msra.mxu0 0
        %3418 = vmatprep.subr.bf16.mxu0 0
        %3419 = vmatpush1.bf16.msra.mxu0 0
        %3420 = vmatprep.mubr.bf16.mxu0 0
        %3421 = vmatmul.mubr.bf16.gmra.mrb[0].mxu0 %v3293
        %v3422 = vpop.f32.mrb[0].mxu0
        %v3423 = vadd.f32 0.0, %v3422
        %v3424 = vpop.f32.mrb[0].mxu0
        %v3425 = vpop.f32.mrb[0].mxu0
        %v3426 = vadd.f32 0.0, %v3425
        %v3427 = vpop.f32.mrb[0].mxu0
        %3428 = vmatprep.mubr.bf16.mxu0 0
        %3429 = vmatmul.mubr.bf16.gmra.mrb[0].mxu0 %v3296
        %v3430 = vpop.f32.mrb[0].mxu0
        %v3431 = vadd.f32 0.0, %v3430
        %v3432 = vpop.f32.mrb[0].mxu0
        %v3433 = vpop.f32.mrb[0].mxu0
        %v3434 = vadd.f32 0.0, %v3433
        %v3435 = vpop.f32.mrb[0].mxu0
        %3436 = vmatprep.mubr.bf16.mxu0 0
        %3437 = vmatmul.mubr.bf16.gmra.mrb[0].mxu0 %v3299
        %v3438 = vpop.f32.mrb[0].mxu0
        %v3439 = vadd.f32 0.0, %v3438
        %v3440 = vpop.f32.mrb[0].mxu0
        %v3441 = vpop.f32.mrb[0].mxu0
        %v3442 = vadd.f32 0.0, %v3441
        %v3443 = vpop.f32.mrb[0].mxu0
        %3444 = vmatprep.mubr.bf16.mxu0 0
        %3445 = vmatmul.mubr.bf16.gmra.mrb[0].mxu0 %v3302
        %v3446 = vpop.f32.mrb[0].mxu0
        %v3447 = vadd.f32 0.0, %v3446
        %v3448 = vpop.f32.mrb[0].mxu0
        %v3449 = vpop.f32.mrb[0].mxu0
        %v3450 = vadd.f32 0.0, %v3449
        %v3451 = vpop.f32.mrb[0].mxu0
        %3452 = vmatprep.mubr.bf16.mxu0 0
        %3453 = vmatmul.mubr.bf16.gmra.mrb[0].mxu0 %v3305
        %v3454 = vpop.f32.mrb[0].mxu0
        %v3455 = vadd.f32 0.0, %v3454
        %v3456 = vpop.f32.mrb[0].mxu0
        %v3457 = vpop.f32.mrb[0].mxu0
        %v3458 = vadd.f32 0.0, %v3457
        %v3459 = vpop.f32.mrb[0].mxu0
        %3460 = vmatprep.mubr.bf16.mxu0 0
        %3461 = vmatmul.mubr.bf16.gmra.mrb[0].mxu0 %v3308
        %v3462 = vpop.f32.mrb[0].mxu0
        %v3463 = vadd.f32 0.0, %v3462
        %v3464 = vpop.f32.mrb[0].mxu0
        %v3465 = vpop.f32.mrb[0].mxu0
        %v3466 = vadd.f32 0.0, %v3465
        %v3467 = vpop.f32.mrb[0].mxu0
        %3468 = vmatprep.mubr.bf16.mxu0 0
        %3469 = vmatmul.mubr.bf16.gmra.mrb[0].mxu0 %v3311
        %v3470 = vpop.f32.mrb[0].mxu0
        %v3471 = vadd.f32 0.0, %v3470
        %v3472 = vpop.f32.mrb[0].mxu0
        %v3473 = vpop.f32.mrb[0].mxu0
        %v3474 = vadd.f32 0.0, %v3473
        %v3475 = vpop.f32.mrb[0].mxu0
        %3476 = vmatprep.mubr.bf16.mxu0 0
        %3477 = vmatmul.mubr.bf16.gmra.mrb[0].mxu0 %v3314
        %v3478 = vpop.f32.mrb[0].mxu0
        %v3479 = vadd.f32 0.0, %v3478
        %v3480 = vpop.f32.mrb[0].mxu0
        %v3481 = vpop.f32.mrb[0].mxu0
        %v3482 = vadd.f32 0.0, %v3481
        %v3483 = vpop.f32.mrb[0].mxu0
        %3484 = vmatprep.mubr.bf16.mxu0 0
        %3485 = vmatmul.mubr.bf16.gmra.mrb[0].mxu0 %v3317
        %v3486 = vpop.f32.mrb[0].mxu0
        %v3487 = vadd.f32 0.0, %v3486
        %v3488 = vpop.f32.mrb[0].mxu0
        %v3489 = vpop.f32.mrb[0].mxu0
        %v3490 = vadd.f32 0.0, %v3489
        %v3491 = vpop.f32.mrb[0].mxu0
        %3492 = vmatprep.mubr.bf16.mxu0 0
        %3493 = vmatmul.mubr.bf16.gmra.mrb[0].mxu0 %v3320
        %v3494 = vpop.f32.mrb[0].mxu0
        %v3495 = vadd.f32 0.0, %v3494
        %v3496 = vpop.f32.mrb[0].mxu0
        %v3497 = vpop.f32.mrb[0].mxu0
        %v3498 = vadd.f32 0.0, %v3497
        %v3499 = vpop.f32.mrb[0].mxu0
        %3500 = vmatprep.mubr.bf16.mxu0 0
        %3501 = vmatmul.mubr.bf16.gmra.mrb[0].mxu0 %v3323
        %v3502 = vpop.f32.mrb[0].mxu0
        %v3503 = vadd.f32 0.0, %v3502
        %v3504 = vpop.f32.mrb[0].mxu0
        %v3505 = vpop.f32.mrb[0].mxu0
        %v3506 = vadd.f32 0.0, %v3505
        %v3507 = vpop.f32.mrb[0].mxu0
        %3508 = vmatprep.mubr.bf16.mxu0 0
        %3509 = vmatmul.mubr.bf16.gmra.mrb[0].mxu0 %v3326
        %v3510 = vpop.f32.mrb[0].mxu0
        %v3511 = vadd.f32 0.0, %v3510
        %v3512 = vpop.f32.mrb[0].mxu0
        %v3513 = vpop.f32.mrb[0].mxu0
        %v3514 = vadd.f32 0.0, %v3513
        %v3515 = vpop.f32.mrb[0].mxu0
        %3516 = vmatprep.mubr.bf16.mxu0 0
        %3517 = vmatmul.mubr.bf16.gmra.mrb[0].mxu0 %v3329
        %v3518 = vpop.f32.mrb[0].mxu0
        %v3519 = vadd.f32 0.0, %v3518
        %v3520 = vpop.f32.mrb[0].mxu0
        %v3521 = vpop.f32.mrb[0].mxu0
        %v3522 = vadd.f32 0.0, %v3521
        %v3523 = vpop.f32.mrb[0].mxu0
        %3524 = vmatprep.mubr.bf16.mxu0 0
        %3525 = vmatmul.mubr.bf16.gmra.mrb[0].mxu0 %v3332
        %v3526 = vpop.f32.mrb[0].mxu0
        %v3527 = vadd.f32 0.0, %v3526
        %v3528 = vpop.f32.mrb[0].mxu0
        %v3529 = vpop.f32.mrb[0].mxu0
        %v3530 = vadd.f32 0.0, %v3529
        %v3531 = vpop.f32.mrb[0].mxu0
        %3532 = vmatprep.mubr.bf16.mxu0 0
        %3533 = vmatmul.mubr.bf16.gmra.mrb[0].mxu0 %v3335
        %v3534 = vpop.f32.mrb[0].mxu0
        %v3535 = vadd.f32 0.0, %v3534
        %v3536 = vpop.f32.mrb[0].mxu0
        %v3537 = vpop.f32.mrb[0].mxu0
        %v3538 = vadd.f32 0.0, %v3537
        %v3539 = vpop.f32.mrb[0].mxu0
        %3540 = vmatprep.mubr.bf16.mxu0 0
        %3541 = vmatmul.mubr.bf16.gmra.mrb[0].mxu0 %v3338
        %v3542 = vpop.f32.mrb[0].mxu0
        %v3543 = vadd.f32 0.0, %v3542
        %v3544 = vpop.f32.mrb[0].mxu0
        %v3545 = vpop.f32.mrb[0].mxu0
        %v3546 = vadd.f32 0.0, %v3545
        %v3547 = vpop.f32.mrb[0].mxu0
        %3548 = vmatprep.mubr.bf16.mxu0 0
        %3549 = vmatmul.mubr.bf16.gmra.mrb[0].mxu0 %v3341
        %v3550 = vpop.f32.mrb[0].mxu0
        %v3551 = vadd.f32 0.0, %v3550
        %v3552 = vpop.f32.mrb[0].mxu0
        %v3553 = vpop.f32.mrb[0].mxu0
        %v3554 = vadd.f32 0.0, %v3553
        %v3555 = vpop.f32.mrb[0].mxu0
        %3556 = vmatprep.mubr.bf16.mxu0 0
        %3557 = vmatmul.mubr.bf16.gmra.mrb[0].mxu0 %v3344
        %v3558 = vpop.f32.mrb[0].mxu0
        %v3559 = vadd.f32 0.0, %v3558
        %v3560 = vpop.f32.mrb[0].mxu0
        %v3561 = vpop.f32.mrb[0].mxu0
        %v3562 = vadd.f32 0.0, %v3561
        %v3563 = vpop.f32.mrb[0].mxu0
        %3564 = vmatprep.mubr.bf16.mxu0 0
        %3565 = vmatmul.mubr.bf16.gmra.mrb[0].mxu0 %v3347
        %v3566 = vpop.f32.mrb[0].mxu0
        %v3567 = vadd.f32 0.0, %v3566
        %v3568 = vpop.f32.mrb[0].mxu0
        %v3569 = vpop.f32.mrb[0].mxu0
        %v3570 = vadd.f32 0.0, %v3569
        %v3571 = vpop.f32.mrb[0].mxu0
        %3572 = vmatprep.mubr.bf16.mxu0 0
        %3573 = vmatmul.mubr.bf16.gmra.mrb[0].mxu0 %v3350
        %v3574 = vpop.f32.mrb[0].mxu0
        %v3575 = vadd.f32 0.0, %v3574
        %v3576 = vpop.f32.mrb[0].mxu0
        %v3577 = vpop.f32.mrb[0].mxu0
        %v3578 = vadd.f32 0.0, %v3577
        %v3579 = vpop.f32.mrb[0].mxu0
        %3580 = vmatprep.mubr.bf16.mxu0 0
        %3581 = vmatmul.mubr.bf16.gmra.mrb[0].mxu0 %v3353
        %v3582 = vpop.f32.mrb[0].mxu0
        %v3583 = vadd.f32 0.0, %v3582
        %v3584 = vpop.f32.mrb[0].mxu0
        %v3585 = vpop.f32.mrb[0].mxu0
        %v3586 = vadd.f32 0.0, %v3585
        %v3587 = vpop.f32.mrb[0].mxu0
        %3588 = vmatprep.mubr.bf16.mxu0 0
        %3589 = vmatmul.mubr.bf16.gmra.mrb[0].mxu0 %v3356
        %v3590 = vpop.f32.mrb[0].mxu0
        %v3591 = vadd.f32 0.0, %v3590
        %v3592 = vpop.f32.mrb[0].mxu0
        %v3593 = vpop.f32.mrb[0].mxu0
        %v3594 = vadd.f32 0.0, %v3593
        %v3595 = vpop.f32.mrb[0].mxu0
        %3596 = vmatprep.mubr.bf16.mxu0 0
        %3597 = vmatmul.mubr.bf16.gmra.mrb[0].mxu0 %v3359
        %v3598 = vpop.f32.mrb[0].mxu0
        %v3599 = vadd.f32 0.0, %v3598
        %v3600 = vpop.f32.mrb[0].mxu0
        %v3601 = vpop.f32.mrb[0].mxu0
        %v3602 = vadd.f32 0.0, %v3601
        %v3603 = vpop.f32.mrb[0].mxu0
        %3604 = vmatprep.mubr.bf16.mxu0 0
        %3605 = vmatmul.mubr.bf16.gmra.mrb[0].mxu0 %v3362
        %v3606 = vpop.f32.mrb[0].mxu0
        %v3607 = vadd.f32 0.0, %v3606
        %v3608 = vpop.f32.mrb[0].mxu0
        %v3609 = vpop.f32.mrb[0].mxu0
        %v3610 = vadd.f32 0.0, %v3609
        %v3611 = vpop.f32.mrb[0].mxu0
        %3612 = vmatprep.mubr.bf16.mxu0 0
        %3613 = vmatmul.mubr.bf16.gmra.mrb[0].mxu0 %v3365
        %v3614 = vpop.f32.mrb[0].mxu0
        %v3615 = vadd.f32 0.0, %v3614
        %v3616 = vpop.f32.mrb[0].mxu0
        %v3617 = vpop.f32.mrb[0].mxu0
        %v3618 = vadd.f32 0.0, %v3617
        %v3619 = vpop.f32.mrb[0].mxu0
        %3620 = vmatprep.mubr.bf16.mxu0 0
        %3621 = vmatmul.mubr.bf16.gmra.mrb[0].mxu0 %v3368
        %v3622 = vpop.f32.mrb[0].mxu0
        %v3623 = vadd.f32 0.0, %v3622
        %v3624 = vpop.f32.mrb[0].mxu0
        %v3625 = vpop.f32.mrb[0].mxu0
        %v3626 = vadd.f32 0.0, %v3625
        %v3627 = vpop.f32.mrb[0].mxu0
        %3628 = vmatprep.mubr.bf16.mxu0 0
        %3629 = vmatmul.mubr.bf16.gmra.mrb[0].mxu0 %v3371
        %v3630 = vpop.f32.mrb[0].mxu0
        %v3631 = vadd.f32 0.0, %v3630
        %v3632 = vpop.f32.mrb[0].mxu0
        %v3633 = vpop.f32.mrb[0].mxu0
        %v3634 = vadd.f32 0.0, %v3633
        %v3635 = vpop.f32.mrb[0].mxu0
        %3636 = vmatprep.mubr.bf16.mxu0 0
        %3637 = vmatmul.mubr.bf16.gmra.mrb[0].mxu0 %v3374
        %v3638 = vpop.f32.mrb[0].mxu0
        %v3639 = vadd.f32 0.0, %v3638
        %v3640 = vpop.f32.mrb[0].mxu0
        %v3641 = vpop.f32.mrb[0].mxu0
        %v3642 = vadd.f32 0.0, %v3641
        %v3643 = vpop.f32.mrb[0].mxu0
        %3644 = vmatprep.mubr.bf16.mxu0 0
        %3645 = vmatmul.mubr.bf16.gmra.mrb[0].mxu0 %v3377
        %v3646 = vpop.f32.mrb[0].mxu0
        %v3647 = vadd.f32 0.0, %v3646
        %v3648 = vpop.f32.mrb[0].mxu0
        %v3649 = vpop.f32.mrb[0].mxu0
        %v3650 = vadd.f32 0.0, %v3649
        %v3651 = vpop.f32.mrb[0].mxu0
        %3652 = vmatprep.mubr.bf16.mxu0 0
        %3653 = vmatmul.mubr.bf16.gmra.mrb[0].mxu0 %v3380
        %v3654 = vpop.f32.mrb[0].mxu0
        %v3655 = vadd.f32 0.0, %v3654
        %v3656 = vpop.f32.mrb[0].mxu0
        %v3657 = vpop.f32.mrb[0].mxu0
        %v3658 = vadd.f32 0.0, %v3657
        %v3659 = vpop.f32.mrb[0].mxu0
        %3660 = vmatprep.mubr.bf16.mxu0 0
        %3661 = vmatmul.mubr.bf16.gmra.mrb[0].mxu0 %v3383
        %v3662 = vpop.f32.mrb[0].mxu0
        %v3663 = vadd.f32 0.0, %v3662
        %v3664 = vpop.f32.mrb[0].mxu0
        %v3665 = vpop.f32.mrb[0].mxu0
        %v3666 = vadd.f32 0.0, %v3665
        %v3667 = vpop.f32.mrb[0].mxu0
        %3668 = vmatprep.mubr.bf16.mxu0 0
        %3669 = vmatmul.mubr.bf16.gmra.mrb[0].mxu0 %v3386
        %v3670 = vpop.f32.mrb[0].mxu0
        %v3671 = vadd.f32 0.0, %v3670
        %v3672 = vpop.f32.mrb[0].mxu0
        %v3673 = vpop.f32.mrb[0].mxu0
        %v3674 = vadd.f32 0.0, %v3673
        %v3675 = vpop.f32.mrb[0].mxu0
        %3676 = vdwg.mxu0
        %v3681 = vunpack.c.l.b16 %v3271
        %v3682 = vunpack.c.l.b16 %v3272
        %v3683 = vunpack.c.l.b16 %v3273
        %v3684 = vunpack.c.l.b16 %v3274
        %v3685 = vpack.c.b16 %v3682, %v3681
        %v3686 = vpack.c.b16 %v3684, %v3683
        %v3690 = vsel %vm1971, %v3238, 0
        %v3693 = vsel %vm1971, %v3239, 0
        %v3696 = vsel %vm1971, %v3240, 0
        %v3699 = vsel %vm1971, %v3241, 0
        %v3702 = vsel %vm1971, %v3242, 0
        %v3705 = vsel %vm1971, %v3243, 0
        %v3708 = vsel %vm1971, %v3244, 0
        %v3711 = vsel %vm1971, %v3245, 0
        %v3714 = vsel %vm1971, %v3246, 0
        %v3717 = vsel %vm1971, %v3247, 0
        %v3720 = vsel %vm1971, %v3248, 0
        %v3723 = vsel %vm1971, %v3249, 0
        %v3726 = vsel %vm1971, %v3250, 0
        %v3729 = vsel %vm1971, %v3251, 0
        %v3732 = vsel %vm1971, %v3252, 0
        %v3735 = vsel %vm1971, %v3253, 0
        %v3738 = vsel %vm1971, %v3254, 0
        %v3741 = vsel %vm1971, %v3255, 0
        %v3744 = vsel %vm1971, %v3256, 0
        %v3747 = vsel %vm1971, %v3257, 0
        %v3750 = vsel %vm1971, %v3258, 0
        %v3753 = vsel %vm1971, %v3259, 0
        %v3756 = vsel %vm1971, %v3260, 0
        %v3759 = vsel %vm1971, %v3261, 0
        %v3762 = vsel %vm1971, %v3262, 0
        %v3765 = vsel %vm1971, %v3263, 0
        %v3768 = vsel %vm1971, %v3264, 0
        %v3771 = vsel %vm1971, %v3265, 0
        %v3774 = vsel %vm1971, %v3266, 0
        %v3777 = vsel %vm1971, %v3267, 0
        %v3780 = vsel %vm1971, %v3268, 0
        %v3783 = vsel %vm1971, %v3269, 0
        %3785 = vmatprep.subr.bf16.mxu0 0
        %3786 = vmatpush1.bf16.msra.mxu0 %v3685
        %3787 = vmatprep.subr.bf16.mxu0 0
        %3788 = vmatpush1.bf16.msra.mxu0 %v3686
        %3789 = vmatprep.subr.bf16.mxu0 0
        %3790 = vmatpush1.bf16.msra.mxu0 0
        %3791 = vmatprep.subr.bf16.mxu0 0
        %3792 = vmatpush1.bf16.msra.mxu0 0
        %3793 = vmatprep.subr.bf16.mxu0 0
        %3794 = vmatpush1.bf16.msra.mxu0 0
        %3795 = vmatprep.subr.bf16.mxu0 0
        %3796 = vmatpush1.bf16.msra.mxu0 0
        %3797 = vmatprep.subr.bf16.mxu0 0
        %3798 = vmatpush1.bf16.msra.mxu0 0
        %3799 = vmatprep.subr.bf16.mxu0 0
        %3800 = vmatpush1.bf16.msra.mxu0 0
        %3801 = vmatprep.subr.bf16.mxu0 0
        %3802 = vmatpush1.bf16.msra.mxu0 0
        %3803 = vmatprep.subr.bf16.mxu0 0
        %3804 = vmatpush1.bf16.msra.mxu0 0
        %3805 = vmatprep.subr.bf16.mxu0 0
        %3806 = vmatpush1.bf16.msra.mxu0 0
        %3807 = vmatprep.subr.bf16.mxu0 0
        %3808 = vmatpush1.bf16.msra.mxu0 0
        %3809 = vmatprep.subr.bf16.mxu0 0
        %3810 = vmatpush1.bf16.msra.mxu0 0
        %3811 = vmatprep.subr.bf16.mxu0 0
        %3812 = vmatpush1.bf16.msra.mxu0 0
        %3813 = vmatprep.subr.bf16.mxu0 0
        %3814 = vmatpush1.bf16.msra.mxu0 0
        %3815 = vmatprep.subr.bf16.mxu0 0
        %3816 = vmatpush1.bf16.msra.mxu0 0
        %3817 = vmatprep.mubr.bf16.mxu0 0
        %3818 = vmatmul.mubr.bf16.gmra.mrb[0].mxu0 %v3690
        %v3819 = vpop.f32.mrb[0].mxu0
        %v3820 = vadd.f32 %v3423, %v3819
        %v3821 = vpop.f32.mrb[0].mxu0
        %v3822 = vpop.f32.mrb[0].mxu0
        %v3823 = vadd.f32 %v3426, %v3822
        %v3824 = vpop.f32.mrb[0].mxu0
        %3825 = vmatprep.mubr.bf16.mxu0 0
        %3826 = vmatmul.mubr.bf16.gmra.mrb[0].mxu0 %v3693
        %v3827 = vpop.f32.mrb[0].mxu0
        %v3828 = vadd.f32 %v3431, %v3827
        %v3829 = vpop.f32.mrb[0].mxu0
        %v3830 = vpop.f32.mrb[0].mxu0
        %v3831 = vadd.f32 %v3434, %v3830
        %v3832 = vpop.f32.mrb[0].mxu0
        %3833 = vmatprep.mubr.bf16.mxu0 0
        %3834 = vmatmul.mubr.bf16.gmra.mrb[0].mxu0 %v3696
        %v3835 = vpop.f32.mrb[0].mxu0
        %v3836 = vadd.f32 %v3439, %v3835
        %v3837 = vpop.f32.mrb[0].mxu0
        %v3838 = vpop.f32.mrb[0].mxu0
        %v3839 = vadd.f32 %v3442, %v3838
        %v3840 = vpop.f32.mrb[0].mxu0
        %3841 = vmatprep.mubr.bf16.mxu0 0
        %3842 = vmatmul.mubr.bf16.gmra.mrb[0].mxu0 %v3699
        %v3843 = vpop.f32.mrb[0].mxu0
        %v3844 = vadd.f32 %v3447, %v3843
        %v3845 = vpop.f32.mrb[0].mxu0
        %v3846 = vpop.f32.mrb[0].mxu0
        %v3847 = vadd.f32 %v3450, %v3846
        %v3848 = vpop.f32.mrb[0].mxu0
        %3849 = vmatprep.mubr.bf16.mxu0 0
        %3850 = vmatmul.mubr.bf16.gmra.mrb[0].mxu0 %v3702
        %v3851 = vpop.f32.mrb[0].mxu0
        %v3852 = vadd.f32 %v3455, %v3851
        %v3853 = vpop.f32.mrb[0].mxu0
        %v3854 = vpop.f32.mrb[0].mxu0
        %v3855 = vadd.f32 %v3458, %v3854
        %v3856 = vpop.f32.mrb[0].mxu0
        %3857 = vmatprep.mubr.bf16.mxu0 0
        %3858 = vmatmul.mubr.bf16.gmra.mrb[0].mxu0 %v3705
        %v3859 = vpop.f32.mrb[0].mxu0
        %v3860 = vadd.f32 %v3463, %v3859
        %v3861 = vpop.f32.mrb[0].mxu0
        %v3862 = vpop.f32.mrb[0].mxu0
        %v3863 = vadd.f32 %v3466, %v3862
        %v3864 = vpop.f32.mrb[0].mxu0
        %3865 = vmatprep.mubr.bf16.mxu0 0
        %3866 = vmatmul.mubr.bf16.gmra.mrb[0].mxu0 %v3708
        %v3867 = vpop.f32.mrb[0].mxu0
        %v3868 = vadd.f32 %v3471, %v3867
        %v3869 = vpop.f32.mrb[0].mxu0
        %v3870 = vpop.f32.mrb[0].mxu0
        %v3871 = vadd.f32 %v3474, %v3870
        %v3872 = vpop.f32.mrb[0].mxu0
        %3873 = vmatprep.mubr.bf16.mxu0 0
        %3874 = vmatmul.mubr.bf16.gmra.mrb[0].mxu0 %v3711
        %v3875 = vpop.f32.mrb[0].mxu0
        %v3876 = vadd.f32 %v3479, %v3875
        %v3877 = vpop.f32.mrb[0].mxu0
        %v3878 = vpop.f32.mrb[0].mxu0
        %v3879 = vadd.f32 %v3482, %v3878
        %v3880 = vpop.f32.mrb[0].mxu0
        %3881 = vmatprep.mubr.bf16.mxu0 0
        %3882 = vmatmul.mubr.bf16.gmra.mrb[0].mxu0 %v3714
        %v3883 = vpop.f32.mrb[0].mxu0
        %v3884 = vadd.f32 %v3487, %v3883
        %v3885 = vpop.f32.mrb[0].mxu0
        %v3886 = vpop.f32.mrb[0].mxu0
        %v3887 = vadd.f32 %v3490, %v3886
        %v3888 = vpop.f32.mrb[0].mxu0
        %3889 = vmatprep.mubr.bf16.mxu0 0
        %3890 = vmatmul.mubr.bf16.gmra.mrb[0].mxu0 %v3717
        %v3891 = vpop.f32.mrb[0].mxu0
        %v3892 = vadd.f32 %v3495, %v3891
        %v3893 = vpop.f32.mrb[0].mxu0
        %v3894 = vpop.f32.mrb[0].mxu0
        %v3895 = vadd.f32 %v3498, %v3894
        %v3896 = vpop.f32.mrb[0].mxu0
        %3897 = vmatprep.mubr.bf16.mxu0 0
        %3898 = vmatmul.mubr.bf16.gmra.mrb[0].mxu0 %v3720
        %v3899 = vpop.f32.mrb[0].mxu0
        %v3900 = vadd.f32 %v3503, %v3899
        %v3901 = vpop.f32.mrb[0].mxu0
        %v3902 = vpop.f32.mrb[0].mxu0
        %v3903 = vadd.f32 %v3506, %v3902
        %v3904 = vpop.f32.mrb[0].mxu0
        %3905 = vmatprep.mubr.bf16.mxu0 0
        %3906 = vmatmul.mubr.bf16.gmra.mrb[0].mxu0 %v3723
        %v3907 = vpop.f32.mrb[0].mxu0
        %v3908 = vadd.f32 %v3511, %v3907
        %v3909 = vpop.f32.mrb[0].mxu0
        %v3910 = vpop.f32.mrb[0].mxu0
        %v3911 = vadd.f32 %v3514, %v3910
        %v3912 = vpop.f32.mrb[0].mxu0
        %3913 = vmatprep.mubr.bf16.mxu0 0
        %3914 = vmatmul.mubr.bf16.gmra.mrb[0].mxu0 %v3726
        %v3915 = vpop.f32.mrb[0].mxu0
        %v3916 = vadd.f32 %v3519, %v3915
        %v3917 = vpop.f32.mrb[0].mxu0
        %v3918 = vpop.f32.mrb[0].mxu0
        %v3919 = vadd.f32 %v3522, %v3918
        %v3920 = vpop.f32.mrb[0].mxu0
        %3921 = vmatprep.mubr.bf16.mxu0 0
        %3922 = vmatmul.mubr.bf16.gmra.mrb[0].mxu0 %v3729
        %v3923 = vpop.f32.mrb[0].mxu0
        %v3924 = vadd.f32 %v3527, %v3923
        %v3925 = vpop.f32.mrb[0].mxu0
        %v3926 = vpop.f32.mrb[0].mxu0
        %v3927 = vadd.f32 %v3530, %v3926
        %v3928 = vpop.f32.mrb[0].mxu0
        %3929 = vmatprep.mubr.bf16.mxu0 0
        %3930 = vmatmul.mubr.bf16.gmra.mrb[0].mxu0 %v3732
        %v3931 = vpop.f32.mrb[0].mxu0
        %v3932 = vadd.f32 %v3535, %v3931
        %v3933 = vpop.f32.mrb[0].mxu0
        %v3934 = vpop.f32.mrb[0].mxu0
        %v3935 = vadd.f32 %v3538, %v3934
        %v3936 = vpop.f32.mrb[0].mxu0
        %3937 = vmatprep.mubr.bf16.mxu0 0
        %3938 = vmatmul.mubr.bf16.gmra.mrb[0].mxu0 %v3735
        %v3939 = vpop.f32.mrb[0].mxu0
        %v3940 = vadd.f32 %v3543, %v3939
        %v3941 = vpop.f32.mrb[0].mxu0
        %v3942 = vpop.f32.mrb[0].mxu0
        %v3943 = vadd.f32 %v3546, %v3942
        %v3944 = vpop.f32.mrb[0].mxu0
        %3945 = vmatprep.mubr.bf16.mxu0 0
        %3946 = vmatmul.mubr.bf16.gmra.mrb[0].mxu0 %v3738
        %v3947 = vpop.f32.mrb[0].mxu0
        %v3948 = vadd.f32 %v3551, %v3947
        %v3949 = vpop.f32.mrb[0].mxu0
        %v3950 = vpop.f32.mrb[0].mxu0
        %v3951 = vadd.f32 %v3554, %v3950
        %v3952 = vpop.f32.mrb[0].mxu0
        %3953 = vmatprep.mubr.bf16.mxu0 0
        %3954 = vmatmul.mubr.bf16.gmra.mrb[0].mxu0 %v3741
        %v3955 = vpop.f32.mrb[0].mxu0
        %v3956 = vadd.f32 %v3559, %v3955
        %v3957 = vpop.f32.mrb[0].mxu0
        %v3958 = vpop.f32.mrb[0].mxu0
        %v3959 = vadd.f32 %v3562, %v3958
        %v3960 = vpop.f32.mrb[0].mxu0
        %3961 = vmatprep.mubr.bf16.mxu0 0
        %3962 = vmatmul.mubr.bf16.gmra.mrb[0].mxu0 %v3744
        %v3963 = vpop.f32.mrb[0].mxu0
        %v3964 = vadd.f32 %v3567, %v3963
        %v3965 = vpop.f32.mrb[0].mxu0
        %v3966 = vpop.f32.mrb[0].mxu0
        %v3967 = vadd.f32 %v3570, %v3966
        %v3968 = vpop.f32.mrb[0].mxu0
        %3969 = vmatprep.mubr.bf16.mxu0 0
        %3970 = vmatmul.mubr.bf16.gmra.mrb[0].mxu0 %v3747
        %v3971 = vpop.f32.mrb[0].mxu0
        %v3972 = vadd.f32 %v3575, %v3971
        %v3973 = vpop.f32.mrb[0].mxu0
        %v3974 = vpop.f32.mrb[0].mxu0
        %v3975 = vadd.f32 %v3578, %v3974
        %v3976 = vpop.f32.mrb[0].mxu0
        %3977 = vmatprep.mubr.bf16.mxu0 0
        %3978 = vmatmul.mubr.bf16.gmra.mrb[0].mxu0 %v3750
        %v3979 = vpop.f32.mrb[0].mxu0
        %v3980 = vadd.f32 %v3583, %v3979
        %v3981 = vpop.f32.mrb[0].mxu0
        %v3982 = vpop.f32.mrb[0].mxu0
        %v3983 = vadd.f32 %v3586, %v3982
        %v3984 = vpop.f32.mrb[0].mxu0
        %3985 = vmatprep.mubr.bf16.mxu0 0
        %3986 = vmatmul.mubr.bf16.gmra.mrb[0].mxu0 %v3753
        %v3987 = vpop.f32.mrb[0].mxu0
        %v3988 = vadd.f32 %v3591, %v3987
        %v3989 = vpop.f32.mrb[0].mxu0
        %v3990 = vpop.f32.mrb[0].mxu0
        %v3991 = vadd.f32 %v3594, %v3990
        %v3992 = vpop.f32.mrb[0].mxu0
        %3993 = vmatprep.mubr.bf16.mxu0 0
        %3994 = vmatmul.mubr.bf16.gmra.mrb[0].mxu0 %v3756
        %v3995 = vpop.f32.mrb[0].mxu0
        %v3996 = vadd.f32 %v3599, %v3995
        %v3997 = vpop.f32.mrb[0].mxu0
        %v3998 = vpop.f32.mrb[0].mxu0
        %v3999 = vadd.f32 %v3602, %v3998
        %v4000 = vpop.f32.mrb[0].mxu0
        %4001 = vmatprep.mubr.bf16.mxu0 0
        %4002 = vmatmul.mubr.bf16.gmra.mrb[0].mxu0 %v3759
        %v4003 = vpop.f32.mrb[0].mxu0
        %v4004 = vadd.f32 %v3607, %v4003
        %v4005 = vpop.f32.mrb[0].mxu0
        %v4006 = vpop.f32.mrb[0].mxu0
        %v4007 = vadd.f32 %v3610, %v4006
        %v4008 = vpop.f32.mrb[0].mxu0
        %4009 = vmatprep.mubr.bf16.mxu0 0
        %4010 = vmatmul.mubr.bf16.gmra.mrb[0].mxu0 %v3762
        %v4011 = vpop.f32.mrb[0].mxu0
        %v4012 = vadd.f32 %v3615, %v4011
        %v4013 = vpop.f32.mrb[0].mxu0
        %v4014 = vpop.f32.mrb[0].mxu0
        %v4015 = vadd.f32 %v3618, %v4014
        %v4016 = vpop.f32.mrb[0].mxu0
        %4017 = vmatprep.mubr.bf16.mxu0 0
        %4018 = vmatmul.mubr.bf16.gmra.mrb[0].mxu0 %v3765
        %v4019 = vpop.f32.mrb[0].mxu0
        %v4020 = vadd.f32 %v3623, %v4019
        %v4021 = vpop.f32.mrb[0].mxu0
        %v4022 = vpop.f32.mrb[0].mxu0
        %v4023 = vadd.f32 %v3626, %v4022
        %v4024 = vpop.f32.mrb[0].mxu0
        %4025 = vmatprep.mubr.bf16.mxu0 0
        %4026 = vmatmul.mubr.bf16.gmra.mrb[0].mxu0 %v3768
        %v4027 = vpop.f32.mrb[0].mxu0
        %v4028 = vadd.f32 %v3631, %v4027
        %v4029 = vpop.f32.mrb[0].mxu0
        %v4030 = vpop.f32.mrb[0].mxu0
        %v4031 = vadd.f32 %v3634, %v4030
        %v4032 = vpop.f32.mrb[0].mxu0
        %4033 = vmatprep.mubr.bf16.mxu0 0
        %4034 = vmatmul.mubr.bf16.gmra.mrb[0].mxu0 %v3771
        %v4035 = vpop.f32.mrb[0].mxu0
        %v4036 = vadd.f32 %v3639, %v4035
        %v4037 = vpop.f32.mrb[0].mxu0
        %v4038 = vpop.f32.mrb[0].mxu0
        %v4039 = vadd.f32 %v3642, %v4038
        %v4040 = vpop.f32.mrb[0].mxu0
        %4041 = vmatprep.mubr.bf16.mxu0 0
        %4042 = vmatmul.mubr.bf16.gmra.mrb[0].mxu0 %v3774
        %v4043 = vpop.f32.mrb[0].mxu0
        %v4044 = vadd.f32 %v3647, %v4043
        %v4045 = vpop.f32.mrb[0].mxu0
        %v4046 = vpop.f32.mrb[0].mxu0
        %v4047 = vadd.f32 %v3650, %v4046
        %v4048 = vpop.f32.mrb[0].mxu0
        %4049 = vmatprep.mubr.bf16.mxu0 0
        %4050 = vmatmul.mubr.bf16.gmra.mrb[0].mxu0 %v3777
        %v4051 = vpop.f32.mrb[0].mxu0
        %v4052 = vadd.f32 %v3655, %v4051
        %v4053 = vpop.f32.mrb[0].mxu0
        %v4054 = vpop.f32.mrb[0].mxu0
        %v4055 = vadd.f32 %v3658, %v4054
        %v4056 = vpop.f32.mrb[0].mxu0
        %4057 = vmatprep.mubr.bf16.mxu0 0
        %4058 = vmatmul.mubr.bf16.gmra.mrb[0].mxu0 %v3780
        %v4059 = vpop.f32.mrb[0].mxu0
        %v4060 = vadd.f32 %v3663, %v4059
        %v4061 = vpop.f32.mrb[0].mxu0
        %v4062 = vpop.f32.mrb[0].mxu0
        %v4063 = vadd.f32 %v3666, %v4062
        %v4064 = vpop.f32.mrb[0].mxu0
        %4065 = vmatprep.mubr.bf16.mxu0 0
        %4066 = vmatmul.mubr.bf16.gmra.mrb[0].mxu0 %v3783
        %v4067 = vpop.f32.mrb[0].mxu0
        %v4068 = vadd.f32 %v3671, %v4067
        %v4069 = vpop.f32.mrb[0].mxu0
        %v4070 = vpop.f32.mrb[0].mxu0
        %v4071 = vadd.f32 %v3674, %v4070
        %v4072 = vpop.f32.mrb[0].mxu0
        %4073 = vdwg.mxu0
        %v4074 = vmax.f32 %v3820, 0.0
        %v4075 = vmax.f32 %v3823, 0.0
        %v4076 = vmax.f32 %v3828, 0.0
        %v4077 = vmax.f32 %v3831, 0.0
        %v4078 = vmax.f32 %v3836, 0.0
        %v4079 = vmax.f32 %v3839, 0.0
        %v4080 = vmax.f32 %v3844, 0.0
        %v4081 = vmax.f32 %v3847, 0.0
        %v4082 = vmax.f32 %v3852, 0.0
        %v4083 = vmax.f32 %v3855, 0.0
        %v4084 = vmax.f32 %v3860, 0.0
        %v4085 = vmax.f32 %v3863, 0.0
        %v4086 = vmax.f32 %v3868, 0.0
        %v4087 = vmax.f32 %v3871, 0.0
        %v4088 = vmax.f32 %v3876, 0.0
        %v4089 = vmax.f32 %v3879, 0.0
        %v4090 = vmax.f32 %v3884, 0.0
        %v4091 = vmax.f32 %v3887, 0.0
        %v4092 = vmax.f32 %v3892, 0.0
        %v4093 = vmax.f32 %v3895, 0.0
        %v4094 = vmax.f32 %v3900, 0.0
        %v4095 = vmax.f32 %v3903, 0.0
        %v4096 = vmax.f32 %v3908, 0.0
        %v4097 = vmax.f32 %v3911, 0.0
        %v4098 = vmax.f32 %v3916, 0.0
        %v4099 = vmax.f32 %v3919, 0.0
        %v4100 = vmax.f32 %v3924, 0.0
        %v4101 = vmax.f32 %v3927, 0.0
        %v4102 = vmax.f32 %v3932, 0.0
        %v4103 = vmax.f32 %v3935, 0.0
        %v4104 = vmax.f32 %v3940, 0.0
        %v4105 = vmax.f32 %v3943, 0.0
        %v4106 = vmax.f32 %v3948, 0.0
        %v4107 = vmax.f32 %v3951, 0.0
        %v4108 = vmax.f32 %v3956, 0.0
        %v4109 = vmax.f32 %v3959, 0.0
        %v4110 = vmax.f32 %v3964, 0.0
        %v4111 = vmax.f32 %v3967, 0.0
        %v4112 = vmax.f32 %v3972, 0.0
        %v4113 = vmax.f32 %v3975, 0.0
        %v4114 = vmax.f32 %v3980, 0.0
        %v4115 = vmax.f32 %v3983, 0.0
        %v4116 = vmax.f32 %v3988, 0.0
        %v4117 = vmax.f32 %v3991, 0.0
        %v4118 = vmax.f32 %v3996, 0.0
        %v4119 = vmax.f32 %v3999, 0.0
        %v4120 = vmax.f32 %v4004, 0.0
        %v4121 = vmax.f32 %v4007, 0.0
        %v4122 = vmax.f32 %v4012, 0.0
        %v4123 = vmax.f32 %v4015, 0.0
        %v4124 = vmax.f32 %v4020, 0.0
        %v4125 = vmax.f32 %v4023, 0.0
        %v4126 = vmax.f32 %v4028, 0.0
        %v4127 = vmax.f32 %v4031, 0.0
        %v4128 = vmax.f32 %v4036, 0.0
        %v4129 = vmax.f32 %v4039, 0.0
        %v4130 = vmax.f32 %v4044, 0.0
        %v4131 = vmax.f32 %v4047, 0.0
        %v4132 = vmax.f32 %v4052, 0.0
        %v4133 = vmax.f32 %v4055, 0.0
        %v4134 = vmax.f32 %v4060, 0.0
        %v4135 = vmax.f32 %v4063, 0.0
        %v4136 = vmax.f32 %v4068, 0.0
        %v4137 = vmax.f32 %v4071, 0.0
        %v4138 = vpack.c.bf16 %v4075, %v4074
        %v4139 = vpack.c.bf16 %v4077, %v4076
        %v4140 = vpack.c.bf16 %v4079, %v4078
        %v4141 = vpack.c.bf16 %v4081, %v4080
        %v4142 = vpack.c.bf16 %v4083, %v4082
        %v4143 = vpack.c.bf16 %v4085, %v4084
        %v4144 = vpack.c.bf16 %v4087, %v4086
        %v4145 = vpack.c.bf16 %v4089, %v4088
        %v4146 = vpack.c.bf16 %v4091, %v4090
        %v4147 = vpack.c.bf16 %v4093, %v4092
        %v4148 = vpack.c.bf16 %v4095, %v4094
        %v4149 = vpack.c.bf16 %v4097, %v4096
        %v4150 = vpack.c.bf16 %v4099, %v4098
        %v4151 = vpack.c.bf16 %v4101, %v4100
        %v4152 = vpack.c.bf16 %v4103, %v4102
        %v4153 = vpack.c.bf16 %v4105, %v4104
        %v4154 = vpack.c.bf16 %v4107, %v4106
        %v4155 = vpack.c.bf16 %v4109, %v4108
        %v4156 = vpack.c.bf16 %v4111, %v4110
        %v4157 = vpack.c.bf16 %v4113, %v4112
        %v4158 = vpack.c.bf16 %v4115, %v4114
        %v4159 = vpack.c.bf16 %v4117, %v4116
        %v4160 = vpack.c.bf16 %v4119, %v4118
        %v4161 = vpack.c.bf16 %v4121, %v4120
        %v4162 = vpack.c.bf16 %v4123, %v4122
        %v4163 = vpack.c.bf16 %v4125, %v4124
        %v4164 = vpack.c.bf16 %v4127, %v4126
        %v4165 = vpack.c.bf16 %v4129, %v4128
        %v4166 = vpack.c.bf16 %v4131, %v4130
        %v4167 = vpack.c.bf16 %v4133, %v4132
        %v4168 = vpack.c.bf16 %v4135, %v4134
        %v4169 = vpack.c.bf16 %v4137, %v4136
        %4170 = vmatprep.subr.bf16.mxu0 0
        %4171 = vmatpush1.bf16.msra.mxu0 %v4138
        %4172 = vmatprep.subr.bf16.mxu0 0
        %4173 = vmatpush1.bf16.msra.mxu0 %v4139
        %4174 = vmatprep.subr.bf16.mxu0 0
        %4175 = vmatpush1.bf16.msra.mxu0 %v4140
        %4176 = vmatprep.subr.bf16.mxu0 0
        %4177 = vmatpush1.bf16.msra.mxu0 %v4141
        %4178 = vmatprep.subr.bf16.mxu0 0
        %4179 = vmatpush1.bf16.msra.mxu0 %v4142
        %4180 = vmatprep.subr.bf16.mxu0 0
        %4181 = vmatpush1.bf16.msra.mxu0 %v4143
        %4182 = vmatprep.subr.bf16.mxu0 0
        %4183 = vmatpush1.bf16.msra.mxu0 %v4144
        %4184 = vmatprep.subr.bf16.mxu0 0
        %4185 = vmatpush1.bf16.msra.mxu0 %v4145
        %4186 = vmatprep.subr.bf16.mxu0 0
        %4187 = vmatpush1.bf16.msra.mxu0 0
        %4188 = vmatprep.subr.bf16.mxu0 0
        %4189 = vmatpush1.bf16.msra.mxu0 0
        %4190 = vmatprep.subr.bf16.mxu0 0
        %4191 = vmatpush1.bf16.msra.mxu0 0
        %4192 = vmatprep.subr.bf16.mxu0 0
        %4193 = vmatpush1.bf16.msra.mxu0 0
        %4194 = vmatprep.subr.bf16.mxu0 0
        %4195 = vmatpush1.bf16.msra.mxu0 0
        %4196 = vmatprep.subr.bf16.mxu0 0
        %4197 = vmatpush1.bf16.msra.mxu0 0
        %4198 = vmatprep.subr.bf16.mxu0 0
        %4199 = vmatpush1.bf16.msra.mxu0 0
        %4200 = vmatprep.subr.bf16.mxu0 0
        %4201 = vmatpush1.bf16.msra.mxu0 0
        %4202 = vmatprep.mubr.bf16.mxu0 0
        %4203 = vmatmul.mubr.bf16.gmra.mrb[0].mxu0 %v1320
        %v4204 = vpop.f32.mrb[0].mxu0
        %v4205 = vadd.f32 0.0, %v4204
        %v4206 = vpop.f32.mrb[0].mxu0
        %v4207 = vpop.f32.mrb[0].mxu0
        %v4208 = vadd.f32 0.0, %v4207
        %v4209 = vpop.f32.mrb[0].mxu0
        %4210 = vmatprep.mubr.bf16.mxu0 0
        %4211 = vmatmul.mubr.bf16.gmra.mrb[0].mxu0 %v1321
        %v4212 = vpop.f32.mrb[0].mxu0
        %v4213 = vadd.f32 0.0, %v4212
        %v4214 = vpop.f32.mrb[0].mxu0
        %v4215 = vpop.f32.mrb[0].mxu0
        %v4216 = vadd.f32 0.0, %v4215
        %v4217 = vpop.f32.mrb[0].mxu0
        %4218 = vmatprep.mubr.bf16.mxu0 0
        %4219 = vmatmul.mubr.bf16.gmra.mrb[0].mxu0 %v1322
        %v4220 = vpop.f32.mrb[0].mxu0
        %v4221 = vadd.f32 0.0, %v4220
        %v4222 = vpop.f32.mrb[0].mxu0
        %v4223 = vpop.f32.mrb[0].mxu0
        %v4224 = vadd.f32 0.0, %v4223
        %v4225 = vpop.f32.mrb[0].mxu0
        %4226 = vmatprep.mubr.bf16.mxu0 0
        %4227 = vmatmul.mubr.bf16.gmra.mrb[0].mxu0 %v1323
        %v4228 = vpop.f32.mrb[0].mxu0
        %v4229 = vadd.f32 0.0, %v4228
        %v4230 = vpop.f32.mrb[0].mxu0
        %v4231 = vpop.f32.mrb[0].mxu0
        %v4232 = vadd.f32 0.0, %v4231
        %v4233 = vpop.f32.mrb[0].mxu0
        %4234 = vmatprep.mubr.bf16.mxu0 0
        %4235 = vmatmul.mubr.bf16.gmra.mrb[0].mxu0 %v1324
        %v4236 = vpop.f32.mrb[0].mxu0
        %v4237 = vadd.f32 0.0, %v4236
        %v4238 = vpop.f32.mrb[0].mxu0
        %v4239 = vpop.f32.mrb[0].mxu0
        %v4240 = vadd.f32 0.0, %v4239
        %v4241 = vpop.f32.mrb[0].mxu0
        %4242 = vmatprep.mubr.bf16.mxu0 0
        %4243 = vmatmul.mubr.bf16.gmra.mrb[0].mxu0 %v1325
        %v4244 = vpop.f32.mrb[0].mxu0
        %v4245 = vadd.f32 0.0, %v4244
        %v4246 = vpop.f32.mrb[0].mxu0
        %v4247 = vpop.f32.mrb[0].mxu0
        %v4248 = vadd.f32 0.0, %v4247
        %v4249 = vpop.f32.mrb[0].mxu0
        %4250 = vmatprep.mubr.bf16.mxu0 0
        %4251 = vmatmul.mubr.bf16.gmra.mrb[0].mxu0 %v1326
        %v4252 = vpop.f32.mrb[0].mxu0
        %v4253 = vadd.f32 0.0, %v4252
        %v4254 = vpop.f32.mrb[0].mxu0
        %v4255 = vpop.f32.mrb[0].mxu0
        %v4256 = vadd.f32 0.0, %v4255
        %v4257 = vpop.f32.mrb[0].mxu0
        %4258 = vmatprep.mubr.bf16.mxu0 0
        %4259 = vmatmul.mubr.bf16.gmra.mrb[0].mxu0 %v1327
        %v4260 = vpop.f32.mrb[0].mxu0
        %v4261 = vadd.f32 0.0, %v4260
        %v4262 = vpop.f32.mrb[0].mxu0
        %v4263 = vpop.f32.mrb[0].mxu0
        %v4264 = vadd.f32 0.0, %v4263
        %v4265 = vpop.f32.mrb[0].mxu0
        %4266 = vdwg.mxu0
        %4267 = vmatprep.subr.bf16.mxu0 0
        %4268 = vmatpush1.bf16.msra.mxu0 %v4146
        %4269 = vmatprep.subr.bf16.mxu0 0
        %4270 = vmatpush1.bf16.msra.mxu0 %v4147
        %4271 = vmatprep.subr.bf16.mxu0 0
        %4272 = vmatpush1.bf16.msra.mxu0 %v4148
        %4273 = vmatprep.subr.bf16.mxu0 0
        %4274 = vmatpush1.bf16.msra.mxu0 %v4149
        %4275 = vmatprep.subr.bf16.mxu0 0
        %4276 = vmatpush1.bf16.msra.mxu0 %v4150
        %4277 = vmatprep.subr.bf16.mxu0 0
        %4278 = vmatpush1.bf16.msra.mxu0 %v4151
        %4279 = vmatprep.subr.bf16.mxu0 0
        %4280 = vmatpush1.bf16.msra.mxu0 %v4152
        %4281 = vmatprep.subr.bf16.mxu0 0
        %4282 = vmatpush1.bf16.msra.mxu0 %v4153
        %4283 = vmatprep.subr.bf16.mxu0 0
        %4284 = vmatpush1.bf16.msra.mxu0 0
        %4285 = vmatprep.subr.bf16.mxu0 0
        %4286 = vmatpush1.bf16.msra.mxu0 0
        %4287 = vmatprep.subr.bf16.mxu0 0
        %4288 = vmatpush1.bf16.msra.mxu0 0
        %4289 = vmatprep.subr.bf16.mxu0 0
        %4290 = vmatpush1.bf16.msra.mxu0 0
        %4291 = vmatprep.subr.bf16.mxu0 0
        %4292 = vmatpush1.bf16.msra.mxu0 0
        %4293 = vmatprep.subr.bf16.mxu0 0
        %4294 = vmatpush1.bf16.msra.mxu0 0
        %4295 = vmatprep.subr.bf16.mxu0 0
        %4296 = vmatpush1.bf16.msra.mxu0 0
        %4297 = vmatprep.subr.bf16.mxu0 0
        %4298 = vmatpush1.bf16.msra.mxu0 0
        %4299 = vmatprep.mubr.bf16.mxu0 0
        %4300 = vmatmul.mubr.bf16.gmra.mrb[0].mxu0 %v1482
        %v4301 = vpop.f32.mrb[0].mxu0
        %v4302 = vadd.f32 0.0, %v4301
        %v4303 = vpop.f32.mrb[0].mxu0
        %v4304 = vpop.f32.mrb[0].mxu0
        %v4305 = vadd.f32 0.0, %v4304
        %v4306 = vpop.f32.mrb[0].mxu0
        %4307 = vmatprep.mubr.bf16.mxu0 0
        %4308 = vmatmul.mubr.bf16.gmra.mrb[0].mxu0 %v1483
        %v4309 = vpop.f32.mrb[0].mxu0
        %v4310 = vadd.f32 0.0, %v4309
        %v4311 = vpop.f32.mrb[0].mxu0
        %v4312 = vpop.f32.mrb[0].mxu0
        %v4313 = vadd.f32 0.0, %v4312
        %v4314 = vpop.f32.mrb[0].mxu0
        %4315 = vmatprep.mubr.bf16.mxu0 0
        %4316 = vmatmul.mubr.bf16.gmra.mrb[0].mxu0 %v1484
        %v4317 = vpop.f32.mrb[0].mxu0
        %v4318 = vadd.f32 0.0, %v4317
        %v4319 = vpop.f32.mrb[0].mxu0
        %v4320 = vpop.f32.mrb[0].mxu0
        %v4321 = vadd.f32 0.0, %v4320
        %v4322 = vpop.f32.mrb[0].mxu0
        %4323 = vmatprep.mubr.bf16.mxu0 0
        %4324 = vmatmul.mubr.bf16.gmra.mrb[0].mxu0 %v1485
        %v4325 = vpop.f32.mrb[0].mxu0
        %v4326 = vadd.f32 0.0, %v4325
        %v4327 = vpop.f32.mrb[0].mxu0
        %v4328 = vpop.f32.mrb[0].mxu0
        %v4329 = vadd.f32 0.0, %v4328
        %v4330 = vpop.f32.mrb[0].mxu0
        %4331 = vmatprep.mubr.bf16.mxu0 0
        %4332 = vmatmul.mubr.bf16.gmra.mrb[0].mxu0 %v1486
        %v4333 = vpop.f32.mrb[0].mxu0
        %v4334 = vadd.f32 0.0, %v4333
        %v4335 = vpop.f32.mrb[0].mxu0
        %v4336 = vpop.f32.mrb[0].mxu0
        %v4337 = vadd.f32 0.0, %v4336
        %v4338 = vpop.f32.mrb[0].mxu0
        %4339 = vmatprep.mubr.bf16.mxu0 0
        %4340 = vmatmul.mubr.bf16.gmra.mrb[0].mxu0 %v1487
        %v4341 = vpop.f32.mrb[0].mxu0
        %v4342 = vadd.f32 0.0, %v4341
        %v4343 = vpop.f32.mrb[0].mxu0
        %v4344 = vpop.f32.mrb[0].mxu0
        %v4345 = vadd.f32 0.0, %v4344
        %v4346 = vpop.f32.mrb[0].mxu0
        %4347 = vmatprep.mubr.bf16.mxu0 0
        %4348 = vmatmul.mubr.bf16.gmra.mrb[0].mxu0 %v1488
        %v4349 = vpop.f32.mrb[0].mxu0
        %v4350 = vadd.f32 0.0, %v4349
        %v4351 = vpop.f32.mrb[0].mxu0
        %v4352 = vpop.f32.mrb[0].mxu0
        %v4353 = vadd.f32 0.0, %v4352
        %v4354 = vpop.f32.mrb[0].mxu0
        %4355 = vmatprep.mubr.bf16.mxu0 0
        %4356 = vmatmul.mubr.bf16.gmra.mrb[0].mxu0 %v1489
        %v4357 = vpop.f32.mrb[0].mxu0
        %v4358 = vadd.f32 0.0, %v4357
        %v4359 = vpop.f32.mrb[0].mxu0
        %v4360 = vpop.f32.mrb[0].mxu0
        %v4361 = vadd.f32 0.0, %v4360
        %v4362 = vpop.f32.mrb[0].mxu0
        %4363 = vdwg.mxu0
        %4364 = vmatprep.subr.bf16.mxu0 0
        %4365 = vmatpush1.bf16.msra.mxu0 %v4154
        %4366 = vmatprep.subr.bf16.mxu0 0
        %4367 = vmatpush1.bf16.msra.mxu0 %v4155
        %4368 = vmatprep.subr.bf16.mxu0 0
        %4369 = vmatpush1.bf16.msra.mxu0 %v4156
        %4370 = vmatprep.subr.bf16.mxu0 0
        %4371 = vmatpush1.bf16.msra.mxu0 %v4157
        %4372 = vmatprep.subr.bf16.mxu0 0
        %4373 = vmatpush1.bf16.msra.mxu0 %v4158
        %4374 = vmatprep.subr.bf16.mxu0 0
        %4375 = vmatpush1.bf16.msra.mxu0 %v4159
        %4376 = vmatprep.subr.bf16.mxu0 0
        %4377 = vmatpush1.bf16.msra.mxu0 %v4160
        %4378 = vmatprep.subr.bf16.mxu0 0
        %4379 = vmatpush1.bf16.msra.mxu0 %v4161
        %4380 = vmatprep.subr.bf16.mxu0 0
        %4381 = vmatpush1.bf16.msra.mxu0 0
        %4382 = vmatprep.subr.bf16.mxu0 0
        %4383 = vmatpush1.bf16.msra.mxu0 0
        %4384 = vmatprep.subr.bf16.mxu0 0
        %4385 = vmatpush1.bf16.msra.mxu0 0
        %4386 = vmatprep.subr.bf16.mxu0 0
        %4387 = vmatpush1.bf16.msra.mxu0 0
        %4388 = vmatprep.subr.bf16.mxu0 0
        %4389 = vmatpush1.bf16.msra.mxu0 0
        %4390 = vmatprep.subr.bf16.mxu0 0
        %4391 = vmatpush1.bf16.msra.mxu0 0
        %4392 = vmatprep.subr.bf16.mxu0 0
        %4393 = vmatpush1.bf16.msra.mxu0 0
        %4394 = vmatprep.subr.bf16.mxu0 0
        %4395 = vmatpush1.bf16.msra.mxu0 0
        %4396 = vmatprep.mubr.bf16.mxu0 0
        %4397 = vmatmul.mubr.bf16.gmra.mrb[0].mxu0 %v1644
        %v4398 = vpop.f32.mrb[0].mxu0
        %v4399 = vadd.f32 0.0, %v4398
        %v4400 = vpop.f32.mrb[0].mxu0
        %v4401 = vpop.f32.mrb[0].mxu0
        %v4402 = vadd.f32 0.0, %v4401
        %v4403 = vpop.f32.mrb[0].mxu0
        %4404 = vmatprep.mubr.bf16.mxu0 0
        %4405 = vmatmul.mubr.bf16.gmra.mrb[0].mxu0 %v1645
        %v4406 = vpop.f32.mrb[0].mxu0
        %v4407 = vadd.f32 0.0, %v4406
        %v4408 = vpop.f32.mrb[0].mxu0
        %v4409 = vpop.f32.mrb[0].mxu0
        %v4410 = vadd.f32 0.0, %v4409
        %v4411 = vpop.f32.mrb[0].mxu0
        %4412 = vmatprep.mubr.bf16.mxu0 0
        %4413 = vmatmul.mubr.bf16.gmra.mrb[0].mxu0 %v1646
        %v4414 = vpop.f32.mrb[0].mxu0
        %v4415 = vadd.f32 0.0, %v4414
        %v4416 = vpop.f32.mrb[0].mxu0
        %v4417 = vpop.f32.mrb[0].mxu0
        %v4418 = vadd.f32 0.0, %v4417
        %v4419 = vpop.f32.mrb[0].mxu0
        %4420 = vmatprep.mubr.bf16.mxu0 0
        %4421 = vmatmul.mubr.bf16.gmra.mrb[0].mxu0 %v1647
        %v4422 = vpop.f32.mrb[0].mxu0
        %v4423 = vadd.f32 0.0, %v4422
        %v4424 = vpop.f32.mrb[0].mxu0
        %v4425 = vpop.f32.mrb[0].mxu0
        %v4426 = vadd.f32 0.0, %v4425
        %v4427 = vpop.f32.mrb[0].mxu0
        %4428 = vmatprep.mubr.bf16.mxu0 0
        %4429 = vmatmul.mubr.bf16.gmra.mrb[0].mxu0 %v1648
        %v4430 = vpop.f32.mrb[0].mxu0
        %v4431 = vadd.f32 0.0, %v4430
        %v4432 = vpop.f32.mrb[0].mxu0
        %v4433 = vpop.f32.mrb[0].mxu0
        %v4434 = vadd.f32 0.0, %v4433
        %v4435 = vpop.f32.mrb[0].mxu0
        %4436 = vmatprep.mubr.bf16.mxu0 0
        %4437 = vmatmul.mubr.bf16.gmra.mrb[0].mxu0 %v1649
        %v4438 = vpop.f32.mrb[0].mxu0
        %v4439 = vadd.f32 0.0, %v4438
        %v4440 = vpop.f32.mrb[0].mxu0
        %v4441 = vpop.f32.mrb[0].mxu0
        %v4442 = vadd.f32 0.0, %v4441
        %v4443 = vpop.f32.mrb[0].mxu0
        %4444 = vmatprep.mubr.bf16.mxu0 0
        %4445 = vmatmul.mubr.bf16.gmra.mrb[0].mxu0 %v1650
        %v4446 = vpop.f32.mrb[0].mxu0
        %v4447 = vadd.f32 0.0, %v4446
        %v4448 = vpop.f32.mrb[0].mxu0
        %v4449 = vpop.f32.mrb[0].mxu0
        %v4450 = vadd.f32 0.0, %v4449
        %v4451 = vpop.f32.mrb[0].mxu0
        %4452 = vmatprep.mubr.bf16.mxu0 0
        %4453 = vmatmul.mubr.bf16.gmra.mrb[0].mxu0 %v1651
        %v4454 = vpop.f32.mrb[0].mxu0
        %v4455 = vadd.f32 0.0, %v4454
        %v4456 = vpop.f32.mrb[0].mxu0
        %v4457 = vpop.f32.mrb[0].mxu0
        %v4458 = vadd.f32 0.0, %v4457
        %v4459 = vpop.f32.mrb[0].mxu0
        %4460 = vdwg.mxu0
        %4461 = vmatprep.subr.bf16.mxu0 0
        %4462 = vmatpush1.bf16.msra.mxu0 %v4162
        %4463 = vmatprep.subr.bf16.mxu0 0
        %4464 = vmatpush1.bf16.msra.mxu0 %v4163
        %4465 = vmatprep.subr.bf16.mxu0 0
        %4466 = vmatpush1.bf16.msra.mxu0 %v4164
        %4467 = vmatprep.subr.bf16.mxu0 0
        %4468 = vmatpush1.bf16.msra.mxu0 %v4165
        %4469 = vmatprep.subr.bf16.mxu0 0
        %4470 = vmatpush1.bf16.msra.mxu0 %v4166
        %4471 = vmatprep.subr.bf16.mxu0 0
        %4472 = vmatpush1.bf16.msra.mxu0 %v4167
        %4473 = vmatprep.subr.bf16.mxu0 0
        %4474 = vmatpush1.bf16.msra.mxu0 %v4168
        %4475 = vmatprep.subr.bf16.mxu0 0
        %4476 = vmatpush1.bf16.msra.mxu0 %v4169
        %4477 = vmatprep.subr.bf16.mxu0 0
        %4478 = vmatpush1.bf16.msra.mxu0 0
        %4479 = vmatprep.subr.bf16.mxu0 0
        %4480 = vmatpush1.bf16.msra.mxu0 0
        %4481 = vmatprep.subr.bf16.mxu0 0
        %4482 = vmatpush1.bf16.msra.mxu0 0
        %4483 = vmatprep.subr.bf16.mxu0 0
        %4484 = vmatpush1.bf16.msra.mxu0 0
        %4485 = vmatprep.subr.bf16.mxu0 0
        %4486 = vmatpush1.bf16.msra.mxu0 0
        %4487 = vmatprep.subr.bf16.mxu0 0
        %4488 = vmatpush1.bf16.msra.mxu0 0
        %4489 = vmatprep.subr.bf16.mxu0 0
        %4490 = vmatpush1.bf16.msra.mxu0 0
        %4491 = vmatprep.subr.bf16.mxu0 0
        %4492 = vmatpush1.bf16.msra.mxu0 0
        %4493 = vmatprep.mubr.bf16.mxu0 0
        %4494 = vmatmul.mubr.bf16.gmra.mrb[0].mxu0 %v1806
        %v4495 = vpop.f32.mrb[0].mxu0
        %v4496 = vadd.f32 0.0, %v4495
        %v4497 = vpop.f32.mrb[0].mxu0
        %v4498 = vpop.f32.mrb[0].mxu0
        %v4499 = vadd.f32 0.0, %v4498
        %v4500 = vpop.f32.mrb[0].mxu0
        %4501 = vmatprep.mubr.bf16.mxu0 0
        %4502 = vmatmul.mubr.bf16.gmra.mrb[0].mxu0 %v1807
        %v4503 = vpop.f32.mrb[0].mxu0
        %v4504 = vadd.f32 0.0, %v4503
        %v4505 = vpop.f32.mrb[0].mxu0
        %v4506 = vpop.f32.mrb[0].mxu0
        %v4507 = vadd.f32 0.0, %v4506
        %v4508 = vpop.f32.mrb[0].mxu0
        %4509 = vmatprep.mubr.bf16.mxu0 0
        %4510 = vmatmul.mubr.bf16.gmra.mrb[0].mxu0 %v1808
        %v4511 = vpop.f32.mrb[0].mxu0
        %v4512 = vadd.f32 0.0, %v4511
        %v4513 = vpop.f32.mrb[0].mxu0
        %v4514 = vpop.f32.mrb[0].mxu0
        %v4515 = vadd.f32 0.0, %v4514
        %v4516 = vpop.f32.mrb[0].mxu0
        %4517 = vmatprep.mubr.bf16.mxu0 0
        %4518 = vmatmul.mubr.bf16.gmra.mrb[0].mxu0 %v1809
        %v4519 = vpop.f32.mrb[0].mxu0
        %v4520 = vadd.f32 0.0, %v4519
        %v4521 = vpop.f32.mrb[0].mxu0
        %v4522 = vpop.f32.mrb[0].mxu0
        %v4523 = vadd.f32 0.0, %v4522
        %v4524 = vpop.f32.mrb[0].mxu0
        %4525 = vmatprep.mubr.bf16.mxu0 0
        %4526 = vmatmul.mubr.bf16.gmra.mrb[0].mxu0 %v1810
        %v4527 = vpop.f32.mrb[0].mxu0
        %v4528 = vadd.f32 0.0, %v4527
        %v4529 = vpop.f32.mrb[0].mxu0
        %v4530 = vpop.f32.mrb[0].mxu0
        %v4531 = vadd.f32 0.0, %v4530
        %v4532 = vpop.f32.mrb[0].mxu0
        %4533 = vmatprep.mubr.bf16.mxu0 0
        %4534 = vmatmul.mubr.bf16.gmra.mrb[0].mxu0 %v1811
        %v4535 = vpop.f32.mrb[0].mxu0
        %v4536 = vadd.f32 0.0, %v4535
        %v4537 = vpop.f32.mrb[0].mxu0
        %v4538 = vpop.f32.mrb[0].mxu0
        %v4539 = vadd.f32 0.0, %v4538
        %v4540 = vpop.f32.mrb[0].mxu0
        %4541 = vmatprep.mubr.bf16.mxu0 0
        %4542 = vmatmul.mubr.bf16.gmra.mrb[0].mxu0 %v1812
        %v4543 = vpop.f32.mrb[0].mxu0
        %v4544 = vadd.f32 0.0, %v4543
        %v4545 = vpop.f32.mrb[0].mxu0
        %v4546 = vpop.f32.mrb[0].mxu0
        %v4547 = vadd.f32 0.0, %v4546
        %v4548 = vpop.f32.mrb[0].mxu0
        %4549 = vmatprep.mubr.bf16.mxu0 0
        %4550 = vmatmul.mubr.bf16.gmra.mrb[0].mxu0 %v1813
        %v4551 = vpop.f32.mrb[0].mxu0
        %v4552 = vadd.f32 0.0, %v4551
        %v4553 = vpop.f32.mrb[0].mxu0
        %v4554 = vpop.f32.mrb[0].mxu0
        %v4555 = vadd.f32 0.0, %v4554
        %v4556 = vpop.f32.mrb[0].mxu0
        %4557 = vdwg.mxu0
        %v4558 = vpack.c.bf16 %v4208, %v4205
        %v4559 = vpack.c.bf16 %v4216, %v4213
        %v4560 = vpack.c.bf16 %v4224, %v4221
        %v4561 = vpack.c.bf16 %v4232, %v4229
        %v4562 = vpack.c.bf16 %v4240, %v4237
        %v4563 = vpack.c.bf16 %v4248, %v4245
        %v4564 = vpack.c.bf16 %v4256, %v4253
        %v4565 = vpack.c.bf16 %v4264, %v4261
        %v4566 = vpack.c.bf16 %v4305, %v4302
        %v4567 = vpack.c.bf16 %v4313, %v4310
        %v4568 = vpack.c.bf16 %v4321, %v4318
        %v4569 = vpack.c.bf16 %v4329, %v4326
        %v4570 = vpack.c.bf16 %v4337, %v4334
        %v4571 = vpack.c.bf16 %v4345, %v4342
        %v4572 = vpack.c.bf16 %v4353, %v4350
        %v4573 = vpack.c.bf16 %v4361, %v4358
        %v4574 = vpack.c.bf16 %v4402, %v4399
        %v4575 = vpack.c.bf16 %v4410, %v4407
        %v4576 = vpack.c.bf16 %v4418, %v4415
        %v4577 = vpack.c.bf16 %v4426, %v4423
        %v4578 = vpack.c.bf16 %v4434, %v4431
        %v4579 = vpack.c.bf16 %v4442, %v4439
        %v4580 = vpack.c.bf16 %v4450, %v4447
        %v4581 = vpack.c.bf16 %v4458, %v4455
        %v4582 = vpack.c.bf16 %v4499, %v4496
        %v4583 = vpack.c.bf16 %v4507, %v4504
        %v4584 = vpack.c.bf16 %v4515, %v4512
        %v4585 = vpack.c.bf16 %v4523, %v4520
        %v4586 = vpack.c.bf16 %v4531, %v4528
        %v4587 = vpack.c.bf16 %v4539, %v4536
        %v4588 = vpack.c.bf16 %v4547, %v4544
        %v4589 = vpack.c.bf16 %v4555, %v4552
        %s4590 = scalar_lea.vmem [#allocation9], 32
        %v4591 = vld [vmem:[%s4590] sm:$0xf]
        %v4592 = vld [vmem:[%s4590 + $0x4] sm:$0xf]
        %v4593 = vld [vmem:[%s4590 + $0x8] sm:$0xf]
        %v4594 = vld [vmem:[%s4590 + $0xc] sm:$0xf]
        %s4595 = scalar_lea.vmem [#allocation10], 32
        %v4596 = vld [vmem:[%s4595] sm:$0xf]
        %v4597 = vld [vmem:[%s4595 + $0x4] sm:$0xf]
        %v4598 = vld [vmem:[%s4595 + $0x8] sm:$0xf]
        %v4599 = vld [vmem:[%s4595 + $0xc] sm:$0xf]
        %v4604 = vunpack.c.l.b16 %v4596
        %v4605 = vunpack.c.l.b16 %v4597
        %v4606 = vunpack.c.l.b16 %v4598
        %v4607 = vunpack.c.l.b16 %v4599
        %v4608 = vpack.c.b16 %v4605, %v4604
        %v4609 = vpack.c.b16 %v4607, %v4606
        %v4613 = vsel %vm1971, %v4138, 0
        %v4616 = vsel %vm1971, %v4139, 0
        %v4619 = vsel %vm1971, %v4140, 0
        %v4622 = vsel %vm1971, %v4141, 0
        %v4625 = vsel %vm1971, %v4142, 0
        %v4628 = vsel %vm1971, %v4143, 0
        %v4631 = vsel %vm1971, %v4144, 0
        %v4634 = vsel %vm1971, %v4145, 0
        %v4637 = vsel %vm1971, %v4146, 0
        %v4640 = vsel %vm1971, %v4147, 0
        %v4643 = vsel %vm1971, %v4148, 0
        %v4646 = vsel %vm1971, %v4149, 0
        %v4649 = vsel %vm1971, %v4150, 0
        %v4652 = vsel %vm1971, %v4151, 0
        %v4655 = vsel %vm1971, %v4152, 0
        %v4658 = vsel %vm1971, %v4153, 0
        %v4661 = vsel %vm1971, %v4154, 0
        %v4664 = vsel %vm1971, %v4155, 0
        %v4667 = vsel %vm1971, %v4156, 0
        %v4670 = vsel %vm1971, %v4157, 0
        %v4673 = vsel %vm1971, %v4158, 0
        %v4676 = vsel %vm1971, %v4159, 0
        %v4679 = vsel %vm1971, %v4160, 0
        %v4682 = vsel %vm1971, %v4161, 0
        %v4685 = vsel %vm1971, %v4162, 0
        %v4688 = vsel %vm1971, %v4163, 0
        %v4691 = vsel %vm1971, %v4164, 0
        %v4694 = vsel %vm1971, %v4165, 0
        %v4697 = vsel %vm1971, %v4166, 0
        %v4700 = vsel %vm1971, %v4167, 0
        %v4703 = vsel %vm1971, %v4168, 0
        %v4706 = vsel %vm1971, %v4169, 0
        %4708 = vmatprep.subr.bf16.mxu0 0
        %4709 = vmatpush1.bf16.msra.mxu0 %v4608
        %4710 = vmatprep.subr.bf16.mxu0 0
        %4711 = vmatpush1.bf16.msra.mxu0 %v4609
        %4712 = vmatprep.subr.bf16.mxu0 0
        %4713 = vmatpush1.bf16.msra.mxu0 0
        %4714 = vmatprep.subr.bf16.mxu0 0
        %4715 = vmatpush1.bf16.msra.mxu0 0
        %4716 = vmatprep.subr.bf16.mxu0 0
        %4717 = vmatpush1.bf16.msra.mxu0 0
        %4718 = vmatprep.subr.bf16.mxu0 0
        %4719 = vmatpush1.bf16.msra.mxu0 0
        %4720 = vmatprep.subr.bf16.mxu0 0
        %4721 = vmatpush1.bf16.msra.mxu0 0
        %4722 = vmatprep.subr.bf16.mxu0 0
        %4723 = vmatpush1.bf16.msra.mxu0 0
        %4724 = vmatprep.subr.bf16.mxu0 0
        %4725 = vmatpush1.bf16.msra.mxu0 0
        %4726 = vmatprep.subr.bf16.mxu0 0
        %4727 = vmatpush1.bf16.msra.mxu0 0
        %4728 = vmatprep.subr.bf16.mxu0 0
        %4729 = vmatpush1.bf16.msra.mxu0 0
        %4730 = vmatprep.subr.bf16.mxu0 0
        %4731 = vmatpush1.bf16.msra.mxu0 0
        %4732 = vmatprep.subr.bf16.mxu0 0
        %4733 = vmatpush1.bf16.msra.mxu0 0
        %4734 = vmatprep.subr.bf16.mxu0 0
        %4735 = vmatpush1.bf16.msra.mxu0 0
        %4736 = vmatprep.subr.bf16.mxu0 0
        %4737 = vmatpush1.bf16.msra.mxu0 0
        %4738 = vmatprep.subr.bf16.mxu0 0
        %4739 = vmatpush1.bf16.msra.mxu0 0
        %4740 = vmatprep.mubr.bf16.mxu0 0
        %4741 = vmatmul.mubr.bf16.gmra.mrb[0].mxu0 %v4613
        %v4742 = vpop.f32.mrb[0].mxu0
        %v4743 = vadd.f32 0.0, %v4742
        %v4744 = vpop.f32.mrb[0].mxu0
        %v4745 = vpop.f32.mrb[0].mxu0
        %v4746 = vadd.f32 0.0, %v4745
        %v4747 = vpop.f32.mrb[0].mxu0
        %4748 = vmatprep.mubr.bf16.mxu0 0
        %4749 = vmatmul.mubr.bf16.gmra.mrb[0].mxu0 %v4616
        %v4750 = vpop.f32.mrb[0].mxu0
        %v4751 = vadd.f32 0.0, %v4750
        %v4752 = vpop.f32.mrb[0].mxu0
        %v4753 = vpop.f32.mrb[0].mxu0
        %v4754 = vadd.f32 0.0, %v4753
        %v4755 = vpop.f32.mrb[0].mxu0
        %4756 = vmatprep.mubr.bf16.mxu0 0
        %4757 = vmatmul.mubr.bf16.gmra.mrb[0].mxu0 %v4619
        %v4758 = vpop.f32.mrb[0].mxu0
        %v4759 = vadd.f32 0.0, %v4758
        %v4760 = vpop.f32.mrb[0].mxu0
        %v4761 = vpop.f32.mrb[0].mxu0
        %v4762 = vadd.f32 0.0, %v4761
        %v4763 = vpop.f32.mrb[0].mxu0
        %4764 = vmatprep.mubr.bf16.mxu0 0
        %4765 = vmatmul.mubr.bf16.gmra.mrb[0].mxu0 %v4622
        %v4766 = vpop.f32.mrb[0].mxu0
        %v4767 = vadd.f32 0.0, %v4766
        %v4768 = vpop.f32.mrb[0].mxu0
        %v4769 = vpop.f32.mrb[0].mxu0
        %v4770 = vadd.f32 0.0, %v4769
        %v4771 = vpop.f32.mrb[0].mxu0
        %4772 = vmatprep.mubr.bf16.mxu0 0
        %4773 = vmatmul.mubr.bf16.gmra.mrb[0].mxu0 %v4625
        %v4774 = vpop.f32.mrb[0].mxu0
        %v4775 = vadd.f32 0.0, %v4774
        %v4776 = vpop.f32.mrb[0].mxu0
        %v4777 = vpop.f32.mrb[0].mxu0
        %v4778 = vadd.f32 0.0, %v4777
        %v4779 = vpop.f32.mrb[0].mxu0
        %4780 = vmatprep.mubr.bf16.mxu0 0
        %4781 = vmatmul.mubr.bf16.gmra.mrb[0].mxu0 %v4628
        %v4782 = vpop.f32.mrb[0].mxu0
        %v4783 = vadd.f32 0.0, %v4782
        %v4784 = vpop.f32.mrb[0].mxu0
        %v4785 = vpop.f32.mrb[0].mxu0
        %v4786 = vadd.f32 0.0, %v4785
        %v4787 = vpop.f32.mrb[0].mxu0
        %4788 = vmatprep.mubr.bf16.mxu0 0
        %4789 = vmatmul.mubr.bf16.gmra.mrb[0].mxu0 %v4631
        %v4790 = vpop.f32.mrb[0].mxu0
        %v4791 = vadd.f32 0.0, %v4790
        %v4792 = vpop.f32.mrb[0].mxu0
        %v4793 = vpop.f32.mrb[0].mxu0
        %v4794 = vadd.f32 0.0, %v4793
        %v4795 = vpop.f32.mrb[0].mxu0
        %4796 = vmatprep.mubr.bf16.mxu0 0
        %4797 = vmatmul.mubr.bf16.gmra.mrb[0].mxu0 %v4634
        %v4798 = vpop.f32.mrb[0].mxu0
        %v4799 = vadd.f32 0.0, %v4798
        %v4800 = vpop.f32.mrb[0].mxu0
        %v4801 = vpop.f32.mrb[0].mxu0
        %v4802 = vadd.f32 0.0, %v4801
        %v4803 = vpop.f32.mrb[0].mxu0
        %4804 = vmatprep.mubr.bf16.mxu0 0
        %4805 = vmatmul.mubr.bf16.gmra.mrb[0].mxu0 %v4637
        %v4806 = vpop.f32.mrb[0].mxu0
        %v4807 = vadd.f32 0.0, %v4806
        %v4808 = vpop.f32.mrb[0].mxu0
        %v4809 = vpop.f32.mrb[0].mxu0
        %v4810 = vadd.f32 0.0, %v4809
        %v4811 = vpop.f32.mrb[0].mxu0
        %4812 = vmatprep.mubr.bf16.mxu0 0
        %4813 = vmatmul.mubr.bf16.gmra.mrb[0].mxu0 %v4640
        %v4814 = vpop.f32.mrb[0].mxu0
        %v4815 = vadd.f32 0.0, %v4814
        %v4816 = vpop.f32.mrb[0].mxu0
        %v4817 = vpop.f32.mrb[0].mxu0
        %v4818 = vadd.f32 0.0, %v4817
        %v4819 = vpop.f32.mrb[0].mxu0
        %4820 = vmatprep.mubr.bf16.mxu0 0
        %4821 = vmatmul.mubr.bf16.gmra.mrb[0].mxu0 %v4643
        %v4822 = vpop.f32.mrb[0].mxu0
        %v4823 = vadd.f32 0.0, %v4822
        %v4824 = vpop.f32.mrb[0].mxu0
        %v4825 = vpop.f32.mrb[0].mxu0
        %v4826 = vadd.f32 0.0, %v4825
        %v4827 = vpop.f32.mrb[0].mxu0
        %4828 = vmatprep.mubr.bf16.mxu0 0
        %4829 = vmatmul.mubr.bf16.gmra.mrb[0].mxu0 %v4646
        %v4830 = vpop.f32.mrb[0].mxu0
        %v4831 = vadd.f32 0.0, %v4830
        %v4832 = vpop.f32.mrb[0].mxu0
        %v4833 = vpop.f32.mrb[0].mxu0
        %v4834 = vadd.f32 0.0, %v4833
        %v4835 = vpop.f32.mrb[0].mxu0
        %4836 = vmatprep.mubr.bf16.mxu0 0
        %4837 = vmatmul.mubr.bf16.gmra.mrb[0].mxu0 %v4649
        %v4838 = vpop.f32.mrb[0].mxu0
        %v4839 = vadd.f32 0.0, %v4838
        %v4840 = vpop.f32.mrb[0].mxu0
        %v4841 = vpop.f32.mrb[0].mxu0
        %v4842 = vadd.f32 0.0, %v4841
        %v4843 = vpop.f32.mrb[0].mxu0
        %4844 = vmatprep.mubr.bf16.mxu0 0
        %4845 = vmatmul.mubr.bf16.gmra.mrb[0].mxu0 %v4652
        %v4846 = vpop.f32.mrb[0].mxu0
        %v4847 = vadd.f32 0.0, %v4846
        %v4848 = vpop.f32.mrb[0].mxu0
        %v4849 = vpop.f32.mrb[0].mxu0
        %v4850 = vadd.f32 0.0, %v4849
        %v4851 = vpop.f32.mrb[0].mxu0
        %4852 = vmatprep.mubr.bf16.mxu0 0
        %4853 = vmatmul.mubr.bf16.gmra.mrb[0].mxu0 %v4655
        %v4854 = vpop.f32.mrb[0].mxu0
        %v4855 = vadd.f32 0.0, %v4854
        %v4856 = vpop.f32.mrb[0].mxu0
        %v4857 = vpop.f32.mrb[0].mxu0
        %v4858 = vadd.f32 0.0, %v4857
        %v4859 = vpop.f32.mrb[0].mxu0
        %4860 = vmatprep.mubr.bf16.mxu0 0
        %4861 = vmatmul.mubr.bf16.gmra.mrb[0].mxu0 %v4658
        %v4862 = vpop.f32.mrb[0].mxu0
        %v4863 = vadd.f32 0.0, %v4862
        %v4864 = vpop.f32.mrb[0].mxu0
        %v4865 = vpop.f32.mrb[0].mxu0
        %v4866 = vadd.f32 0.0, %v4865
        %v4867 = vpop.f32.mrb[0].mxu0
        %4868 = vmatprep.mubr.bf16.mxu0 0
        %4869 = vmatmul.mubr.bf16.gmra.mrb[0].mxu0 %v4661
        %v4870 = vpop.f32.mrb[0].mxu0
        %v4871 = vadd.f32 0.0, %v4870
        %v4872 = vpop.f32.mrb[0].mxu0
        %v4873 = vpop.f32.mrb[0].mxu0
        %v4874 = vadd.f32 0.0, %v4873
        %v4875 = vpop.f32.mrb[0].mxu0
        %4876 = vmatprep.mubr.bf16.mxu0 0
        %4877 = vmatmul.mubr.bf16.gmra.mrb[0].mxu0 %v4664
        %v4878 = vpop.f32.mrb[0].mxu0
        %v4879 = vadd.f32 0.0, %v4878
        %v4880 = vpop.f32.mrb[0].mxu0
        %v4881 = vpop.f32.mrb[0].mxu0
        %v4882 = vadd.f32 0.0, %v4881
        %v4883 = vpop.f32.mrb[0].mxu0
        %4884 = vmatprep.mubr.bf16.mxu0 0
        %4885 = vmatmul.mubr.bf16.gmra.mrb[0].mxu0 %v4667
        %v4886 = vpop.f32.mrb[0].mxu0
        %v4887 = vadd.f32 0.0, %v4886
        %v4888 = vpop.f32.mrb[0].mxu0
        %v4889 = vpop.f32.mrb[0].mxu0
        %v4890 = vadd.f32 0.0, %v4889
        %v4891 = vpop.f32.mrb[0].mxu0
        %4892 = vmatprep.mubr.bf16.mxu0 0
        %4893 = vmatmul.mubr.bf16.gmra.mrb[0].mxu0 %v4670
        %v4894 = vpop.f32.mrb[0].mxu0
        %v4895 = vadd.f32 0.0, %v4894
        %v4896 = vpop.f32.mrb[0].mxu0
        %v4897 = vpop.f32.mrb[0].mxu0
        %v4898 = vadd.f32 0.0, %v4897
        %v4899 = vpop.f32.mrb[0].mxu0
        %4900 = vmatprep.mubr.bf16.mxu0 0
        %4901 = vmatmul.mubr.bf16.gmra.mrb[0].mxu0 %v4673
        %v4902 = vpop.f32.mrb[0].mxu0
        %v4903 = vadd.f32 0.0, %v4902
        %v4904 = vpop.f32.mrb[0].mxu0
        %v4905 = vpop.f32.mrb[0].mxu0
        %v4906 = vadd.f32 0.0, %v4905
        %v4907 = vpop.f32.mrb[0].mxu0
        %4908 = vmatprep.mubr.bf16.mxu0 0
        %4909 = vmatmul.mubr.bf16.gmra.mrb[0].mxu0 %v4676
        %v4910 = vpop.f32.mrb[0].mxu0
        %v4911 = vadd.f32 0.0, %v4910
        %v4912 = vpop.f32.mrb[0].mxu0
        %v4913 = vpop.f32.mrb[0].mxu0
        %v4914 = vadd.f32 0.0, %v4913
        %v4915 = vpop.f32.mrb[0].mxu0
        %4916 = vmatprep.mubr.bf16.mxu0 0
        %4917 = vmatmul.mubr.bf16.gmra.mrb[0].mxu0 %v4679
        %v4918 = vpop.f32.mrb[0].mxu0
        %v4919 = vadd.f32 0.0, %v4918
        %v4920 = vpop.f32.mrb[0].mxu0
        %v4921 = vpop.f32.mrb[0].mxu0
        %v4922 = vadd.f32 0.0, %v4921
        %v4923 = vpop.f32.mrb[0].mxu0
        %4924 = vmatprep.mubr.bf16.mxu0 0
        %4925 = vmatmul.mubr.bf16.gmra.mrb[0].mxu0 %v4682
        %v4926 = vpop.f32.mrb[0].mxu0
        %v4927 = vadd.f32 0.0, %v4926
        %v4928 = vpop.f32.mrb[0].mxu0
        %v4929 = vpop.f32.mrb[0].mxu0
        %v4930 = vadd.f32 0.0, %v4929
        %v4931 = vpop.f32.mrb[0].mxu0
        %4932 = vmatprep.mubr.bf16.mxu0 0
        %4933 = vmatmul.mubr.bf16.gmra.mrb[0].mxu0 %v4685
        %v4934 = vpop.f32.mrb[0].mxu0
        %v4935 = vadd.f32 0.0, %v4934
        %v4936 = vpop.f32.mrb[0].mxu0
        %v4937 = vpop.f32.mrb[0].mxu0
        %v4938 = vadd.f32 0.0, %v4937
        %v4939 = vpop.f32.mrb[0].mxu0
        %4940 = vmatprep.mubr.bf16.mxu0 0
        %4941 = vmatmul.mubr.bf16.gmra.mrb[0].mxu0 %v4688
        %v4942 = vpop.f32.mrb[0].mxu0
        %v4943 = vadd.f32 0.0, %v4942
        %v4944 = vpop.f32.mrb[0].mxu0
        %v4945 = vpop.f32.mrb[0].mxu0
        %v4946 = vadd.f32 0.0, %v4945
        %v4947 = vpop.f32.mrb[0].mxu0
        %4948 = vmatprep.mubr.bf16.mxu0 0
        %4949 = vmatmul.mubr.bf16.gmra.mrb[0].mxu0 %v4691
        %v4950 = vpop.f32.mrb[0].mxu0
        %v4951 = vadd.f32 0.0, %v4950
        %v4952 = vpop.f32.mrb[0].mxu0
        %v4953 = vpop.f32.mrb[0].mxu0
        %v4954 = vadd.f32 0.0, %v4953
        %v4955 = vpop.f32.mrb[0].mxu0
        %4956 = vmatprep.mubr.bf16.mxu0 0
        %4957 = vmatmul.mubr.bf16.gmra.mrb[0].mxu0 %v4694
        %v4958 = vpop.f32.mrb[0].mxu0
        %v4959 = vadd.f32 0.0, %v4958
        %v4960 = vpop.f32.mrb[0].mxu0
        %v4961 = vpop.f32.mrb[0].mxu0
        %v4962 = vadd.f32 0.0, %v4961
        %v4963 = vpop.f32.mrb[0].mxu0
        %4964 = vmatprep.mubr.bf16.mxu0 0
        %4965 = vmatmul.mubr.bf16.gmra.mrb[0].mxu0 %v4697
        %v4966 = vpop.f32.mrb[0].mxu0
        %v4967 = vadd.f32 0.0, %v4966
        %v4968 = vpop.f32.mrb[0].mxu0
        %v4969 = vpop.f32.mrb[0].mxu0
        %v4970 = vadd.f32 0.0, %v4969
        %v4971 = vpop.f32.mrb[0].mxu0
        %4972 = vmatprep.mubr.bf16.mxu0 0
        %4973 = vmatmul.mubr.bf16.gmra.mrb[0].mxu0 %v4700
        %v4974 = vpop.f32.mrb[0].mxu0
        %v4975 = vadd.f32 0.0, %v4974
        %v4976 = vpop.f32.mrb[0].mxu0
        %v4977 = vpop.f32.mrb[0].mxu0
        %v4978 = vadd.f32 0.0, %v4977
        %v4979 = vpop.f32.mrb[0].mxu0
        %4980 = vmatprep.mubr.bf16.mxu0 0
        %4981 = vmatmul.mubr.bf16.gmra.mrb[0].mxu0 %v4703
        %v4982 = vpop.f32.mrb[0].mxu0
        %v4983 = vadd.f32 0.0, %v4982
        %v4984 = vpop.f32.mrb[0].mxu0
        %v4985 = vpop.f32.mrb[0].mxu0
        %v4986 = vadd.f32 0.0, %v4985
        %v4987 = vpop.f32.mrb[0].mxu0
        %4988 = vmatprep.mubr.bf16.mxu0 0
        %4989 = vmatmul.mubr.bf16.gmra.mrb[0].mxu0 %v4706
        %v4990 = vpop.f32.mrb[0].mxu0
        %v4991 = vadd.f32 0.0, %v4990
        %v4992 = vpop.f32.mrb[0].mxu0
        %v4993 = vpop.f32.mrb[0].mxu0
        %v4994 = vadd.f32 0.0, %v4993
        %v4995 = vpop.f32.mrb[0].mxu0
        %4996 = vdwg.mxu0
        %v5001 = vunpack.c.l.b16 %v4591
        %v5002 = vunpack.c.l.b16 %v4592
        %v5003 = vunpack.c.l.b16 %v4593
        %v5004 = vunpack.c.l.b16 %v4594
        %v5005 = vpack.c.b16 %v5002, %v5001
        %v5006 = vpack.c.b16 %v5004, %v5003
        %v5010 = vsel %vm1971, %v4558, 0
        %v5013 = vsel %vm1971, %v4559, 0
        %v5016 = vsel %vm1971, %v4560, 0
        %v5019 = vsel %vm1971, %v4561, 0
        %v5022 = vsel %vm1971, %v4562, 0
        %v5025 = vsel %vm1971, %v4563, 0
        %v5028 = vsel %vm1971, %v4564, 0
        %v5031 = vsel %vm1971, %v4565, 0
        %v5034 = vsel %vm1971, %v4566, 0
        %v5037 = vsel %vm1971, %v4567, 0
        %v5040 = vsel %vm1971, %v4568, 0
        %v5043 = vsel %vm1971, %v4569, 0
        %v5046 = vsel %vm1971, %v4570, 0
        %v5049 = vsel %vm1971, %v4571, 0
        %v5052 = vsel %vm1971, %v4572, 0
        %v5055 = vsel %vm1971, %v4573, 0
        %v5058 = vsel %vm1971, %v4574, 0
        %v5061 = vsel %vm1971, %v4575, 0
        %v5064 = vsel %vm1971, %v4576, 0
        %v5067 = vsel %vm1971, %v4577, 0
        %v5070 = vsel %vm1971, %v4578, 0
        %v5073 = vsel %vm1971, %v4579, 0
        %v5076 = vsel %vm1971, %v4580, 0
        %v5079 = vsel %vm1971, %v4581, 0
        %v5082 = vsel %vm1971, %v4582, 0
        %v5085 = vsel %vm1971, %v4583, 0
        %v5088 = vsel %vm1971, %v4584, 0
        %v5091 = vsel %vm1971, %v4585, 0
        %v5094 = vsel %vm1971, %v4586, 0
        %v5097 = vsel %vm1971, %v4587, 0
        %v5100 = vsel %vm1971, %v4588, 0
        %v5103 = vsel %vm1971, %v4589, 0
        %5105 = vmatprep.subr.bf16.mxu0 0
        %5106 = vmatpush1.bf16.msra.mxu0 %v5005
        %5107 = vmatprep.subr.bf16.mxu0 0
        %5108 = vmatpush1.bf16.msra.mxu0 %v5006
        %5109 = vmatprep.subr.bf16.mxu0 0
        %5110 = vmatpush1.bf16.msra.mxu0 0
        %5111 = vmatprep.subr.bf16.mxu0 0
        %5112 = vmatpush1.bf16.msra.mxu0 0
        %5113 = vmatprep.subr.bf16.mxu0 0
        %5114 = vmatpush1.bf16.msra.mxu0 0
        %5115 = vmatprep.subr.bf16.mxu0 0
        %5116 = vmatpush1.bf16.msra.mxu0 0
        %5117 = vmatprep.subr.bf16.mxu0 0
        %5118 = vmatpush1.bf16.msra.mxu0 0
        %5119 = vmatprep.subr.bf16.mxu0 0
        %5120 = vmatpush1.bf16.msra.mxu0 0
        %5121 = vmatprep.subr.bf16.mxu0 0
        %5122 = vmatpush1.bf16.msra.mxu0 0
        %5123 = vmatprep.subr.bf16.mxu0 0
        %5124 = vmatpush1.bf16.msra.mxu0 0
        %5125 = vmatprep.subr.bf16.mxu0 0
        %5126 = vmatpush1.bf16.msra.mxu0 0
        %5127 = vmatprep.subr.bf16.mxu0 0
        %5128 = vmatpush1.bf16.msra.mxu0 0
        %5129 = vmatprep.subr.bf16.mxu0 0
        %5130 = vmatpush1.bf16.msra.mxu0 0
        %5131 = vmatprep.subr.bf16.mxu0 0
        %5132 = vmatpush1.bf16.msra.mxu0 0
        %5133 = vmatprep.subr.bf16.mxu0 0
        %5134 = vmatpush1.bf16.msra.mxu0 0
        %5135 = vmatprep.subr.bf16.mxu0 0
        %5136 = vmatpush1.bf16.msra.mxu0 0
        %5137 = vmatprep.mubr.bf16.mxu0 0
        %5138 = vmatmul.mubr.bf16.gmra.mrb[0].mxu0 %v5010
        %v5139 = vpop.f32.mrb[0].mxu0
        %v5140 = vadd.f32 %v4743, %v5139
        %v5141 = vpop.f32.mrb[0].mxu0
        %v5142 = vpop.f32.mrb[0].mxu0
        %v5143 = vadd.f32 %v4746, %v5142
        %v5144 = vpop.f32.mrb[0].mxu0
        %5145 = vmatprep.mubr.bf16.mxu0 0
        %5146 = vmatmul.mubr.bf16.gmra.mrb[0].mxu0 %v5013
        %v5147 = vpop.f32.mrb[0].mxu0
        %v5148 = vadd.f32 %v4751, %v5147
        %v5149 = vpop.f32.mrb[0].mxu0
        %v5150 = vpop.f32.mrb[0].mxu0
        %v5151 = vadd.f32 %v4754, %v5150
        %v5152 = vpop.f32.mrb[0].mxu0
        %5153 = vmatprep.mubr.bf16.mxu0 0
        %5154 = vmatmul.mubr.bf16.gmra.mrb[0].mxu0 %v5016
        %v5155 = vpop.f32.mrb[0].mxu0
        %v5156 = vadd.f32 %v4759, %v5155
        %v5157 = vpop.f32.mrb[0].mxu0
        %v5158 = vpop.f32.mrb[0].mxu0
        %v5159 = vadd.f32 %v4762, %v5158
        %v5160 = vpop.f32.mrb[0].mxu0
        %5161 = vmatprep.mubr.bf16.mxu0 0
        %5162 = vmatmul.mubr.bf16.gmra.mrb[0].mxu0 %v5019
        %v5163 = vpop.f32.mrb[0].mxu0
        %v5164 = vadd.f32 %v4767, %v5163
        %v5165 = vpop.f32.mrb[0].mxu0
        %v5166 = vpop.f32.mrb[0].mxu0
        %v5167 = vadd.f32 %v4770, %v5166
        %v5168 = vpop.f32.mrb[0].mxu0
        %5169 = vmatprep.mubr.bf16.mxu0 0
        %5170 = vmatmul.mubr.bf16.gmra.mrb[0].mxu0 %v5022
        %v5171 = vpop.f32.mrb[0].mxu0
        %v5172 = vadd.f32 %v4775, %v5171
        %v5173 = vpop.f32.mrb[0].mxu0
        %v5174 = vpop.f32.mrb[0].mxu0
        %v5175 = vadd.f32 %v4778, %v5174
        %v5176 = vpop.f32.mrb[0].mxu0
        %5177 = vmatprep.mubr.bf16.mxu0 0
        %5178 = vmatmul.mubr.bf16.gmra.mrb[0].mxu0 %v5025
        %v5179 = vpop.f32.mrb[0].mxu0
        %v5180 = vadd.f32 %v4783, %v5179
        %v5181 = vpop.f32.mrb[0].mxu0
        %v5182 = vpop.f32.mrb[0].mxu0
        %v5183 = vadd.f32 %v4786, %v5182
        %v5184 = vpop.f32.mrb[0].mxu0
        %5185 = vmatprep.mubr.bf16.mxu0 0
        %5186 = vmatmul.mubr.bf16.gmra.mrb[0].mxu0 %v5028
        %v5187 = vpop.f32.mrb[0].mxu0
        %v5188 = vadd.f32 %v4791, %v5187
        %v5189 = vpop.f32.mrb[0].mxu0
        %v5190 = vpop.f32.mrb[0].mxu0
        %v5191 = vadd.f32 %v4794, %v5190
        %v5192 = vpop.f32.mrb[0].mxu0
        %5193 = vmatprep.mubr.bf16.mxu0 0
        %5194 = vmatmul.mubr.bf16.gmra.mrb[0].mxu0 %v5031
        %v5195 = vpop.f32.mrb[0].mxu0
        %v5196 = vadd.f32 %v4799, %v5195
        %v5197 = vpop.f32.mrb[0].mxu0
        %v5198 = vpop.f32.mrb[0].mxu0
        %v5199 = vadd.f32 %v4802, %v5198
        %v5200 = vpop.f32.mrb[0].mxu0
        %5201 = vmatprep.mubr.bf16.mxu0 0
        %5202 = vmatmul.mubr.bf16.gmra.mrb[0].mxu0 %v5034
        %v5203 = vpop.f32.mrb[0].mxu0
        %v5204 = vadd.f32 %v4807, %v5203
        %v5205 = vpop.f32.mrb[0].mxu0
        %v5206 = vpop.f32.mrb[0].mxu0
        %v5207 = vadd.f32 %v4810, %v5206
        %v5208 = vpop.f32.mrb[0].mxu0
        %5209 = vmatprep.mubr.bf16.mxu0 0
        %5210 = vmatmul.mubr.bf16.gmra.mrb[0].mxu0 %v5037
        %v5211 = vpop.f32.mrb[0].mxu0
        %v5212 = vadd.f32 %v4815, %v5211
        %v5213 = vpop.f32.mrb[0].mxu0
        %v5214 = vpop.f32.mrb[0].mxu0
        %v5215 = vadd.f32 %v4818, %v5214
        %v5216 = vpop.f32.mrb[0].mxu0
        %5217 = vmatprep.mubr.bf16.mxu0 0
        %5218 = vmatmul.mubr.bf16.gmra.mrb[0].mxu0 %v5040
        %v5219 = vpop.f32.mrb[0].mxu0
        %v5220 = vadd.f32 %v4823, %v5219
        %v5221 = vpop.f32.mrb[0].mxu0
        %v5222 = vpop.f32.mrb[0].mxu0
        %v5223 = vadd.f32 %v4826, %v5222
        %v5224 = vpop.f32.mrb[0].mxu0
        %5225 = vmatprep.mubr.bf16.mxu0 0
        %5226 = vmatmul.mubr.bf16.gmra.mrb[0].mxu0 %v5043
        %v5227 = vpop.f32.mrb[0].mxu0
        %v5228 = vadd.f32 %v4831, %v5227
        %v5229 = vpop.f32.mrb[0].mxu0
        %v5230 = vpop.f32.mrb[0].mxu0
        %v5231 = vadd.f32 %v4834, %v5230
        %v5232 = vpop.f32.mrb[0].mxu0
        %5233 = vmatprep.mubr.bf16.mxu0 0
        %5234 = vmatmul.mubr.bf16.gmra.mrb[0].mxu0 %v5046
        %v5235 = vpop.f32.mrb[0].mxu0
        %v5236 = vadd.f32 %v4839, %v5235
        %v5237 = vpop.f32.mrb[0].mxu0
        %v5238 = vpop.f32.mrb[0].mxu0
        %v5239 = vadd.f32 %v4842, %v5238
        %v5240 = vpop.f32.mrb[0].mxu0
        %5241 = vmatprep.mubr.bf16.mxu0 0
        %5242 = vmatmul.mubr.bf16.gmra.mrb[0].mxu0 %v5049
        %v5243 = vpop.f32.mrb[0].mxu0
        %v5244 = vadd.f32 %v4847, %v5243
        %v5245 = vpop.f32.mrb[0].mxu0
        %v5246 = vpop.f32.mrb[0].mxu0
        %v5247 = vadd.f32 %v4850, %v5246
        %v5248 = vpop.f32.mrb[0].mxu0
        %5249 = vmatprep.mubr.bf16.mxu0 0
        %5250 = vmatmul.mubr.bf16.gmra.mrb[0].mxu0 %v5052
        %v5251 = vpop.f32.mrb[0].mxu0
        %v5252 = vadd.f32 %v4855, %v5251
        %v5253 = vpop.f32.mrb[0].mxu0
        %v5254 = vpop.f32.mrb[0].mxu0
        %v5255 = vadd.f32 %v4858, %v5254
        %v5256 = vpop.f32.mrb[0].mxu0
        %5257 = vmatprep.mubr.bf16.mxu0 0
        %5258 = vmatmul.mubr.bf16.gmra.mrb[0].mxu0 %v5055
        %v5259 = vpop.f32.mrb[0].mxu0
        %v5260 = vadd.f32 %v4863, %v5259
        %v5261 = vpop.f32.mrb[0].mxu0
        %v5262 = vpop.f32.mrb[0].mxu0
        %v5263 = vadd.f32 %v4866, %v5262
        %v5264 = vpop.f32.mrb[0].mxu0
        %5265 = vmatprep.mubr.bf16.mxu0 0
        %5266 = vmatmul.mubr.bf16.gmra.mrb[0].mxu0 %v5058
        %v5267 = vpop.f32.mrb[0].mxu0
        %v5268 = vadd.f32 %v4871, %v5267
        %v5269 = vpop.f32.mrb[0].mxu0
        %v5270 = vpop.f32.mrb[0].mxu0
        %v5271 = vadd.f32 %v4874, %v5270
        %v5272 = vpop.f32.mrb[0].mxu0
        %5273 = vmatprep.mubr.bf16.mxu0 0
        %5274 = vmatmul.mubr.bf16.gmra.mrb[0].mxu0 %v5061
        %v5275 = vpop.f32.mrb[0].mxu0
        %v5276 = vadd.f32 %v4879, %v5275
        %v5277 = vpop.f32.mrb[0].mxu0
        %v5278 = vpop.f32.mrb[0].mxu0
        %v5279 = vadd.f32 %v4882, %v5278
        %v5280 = vpop.f32.mrb[0].mxu0
        %5281 = vmatprep.mubr.bf16.mxu0 0
        %5282 = vmatmul.mubr.bf16.gmra.mrb[0].mxu0 %v5064
        %v5283 = vpop.f32.mrb[0].mxu0
        %v5284 = vadd.f32 %v4887, %v5283
        %v5285 = vpop.f32.mrb[0].mxu0
        %v5286 = vpop.f32.mrb[0].mxu0
        %v5287 = vadd.f32 %v4890, %v5286
        %v5288 = vpop.f32.mrb[0].mxu0
        %5289 = vmatprep.mubr.bf16.mxu0 0
        %5290 = vmatmul.mubr.bf16.gmra.mrb[0].mxu0 %v5067
        %v5291 = vpop.f32.mrb[0].mxu0
        %v5292 = vadd.f32 %v4895, %v5291
        %v5293 = vpop.f32.mrb[0].mxu0
        %v5294 = vpop.f32.mrb[0].mxu0
        %v5295 = vadd.f32 %v4898, %v5294
        %v5296 = vpop.f32.mrb[0].mxu0
        %5297 = vmatprep.mubr.bf16.mxu0 0
        %5298 = vmatmul.mubr.bf16.gmra.mrb[0].mxu0 %v5070
        %v5299 = vpop.f32.mrb[0].mxu0
        %v5300 = vadd.f32 %v4903, %v5299
        %v5301 = vpop.f32.mrb[0].mxu0
        %v5302 = vpop.f32.mrb[0].mxu0
        %v5303 = vadd.f32 %v4906, %v5302
        %v5304 = vpop.f32.mrb[0].mxu0
        %5305 = vmatprep.mubr.bf16.mxu0 0
        %5306 = vmatmul.mubr.bf16.gmra.mrb[0].mxu0 %v5073
        %v5307 = vpop.f32.mrb[0].mxu0
        %v5308 = vadd.f32 %v4911, %v5307
        %v5309 = vpop.f32.mrb[0].mxu0
        %v5310 = vpop.f32.mrb[0].mxu0
        %v5311 = vadd.f32 %v4914, %v5310
        %v5312 = vpop.f32.mrb[0].mxu0
        %5313 = vmatprep.mubr.bf16.mxu0 0
        %5314 = vmatmul.mubr.bf16.gmra.mrb[0].mxu0 %v5076
        %v5315 = vpop.f32.mrb[0].mxu0
        %v5316 = vadd.f32 %v4919, %v5315
        %v5317 = vpop.f32.mrb[0].mxu0
        %v5318 = vpop.f32.mrb[0].mxu0
        %v5319 = vadd.f32 %v4922, %v5318
        %v5320 = vpop.f32.mrb[0].mxu0
        %5321 = vmatprep.mubr.bf16.mxu0 0
        %5322 = vmatmul.mubr.bf16.gmra.mrb[0].mxu0 %v5079
        %v5323 = vpop.f32.mrb[0].mxu0
        %v5324 = vadd.f32 %v4927, %v5323
        %v5325 = vpop.f32.mrb[0].mxu0
        %v5326 = vpop.f32.mrb[0].mxu0
        %v5327 = vadd.f32 %v4930, %v5326
        %v5328 = vpop.f32.mrb[0].mxu0
        %5329 = vmatprep.mubr.bf16.mxu0 0
        %5330 = vmatmul.mubr.bf16.gmra.mrb[0].mxu0 %v5082
        %v5331 = vpop.f32.mrb[0].mxu0
        %v5332 = vadd.f32 %v4935, %v5331
        %v5333 = vpop.f32.mrb[0].mxu0
        %v5334 = vpop.f32.mrb[0].mxu0
        %v5335 = vadd.f32 %v4938, %v5334
        %v5336 = vpop.f32.mrb[0].mxu0
        %5337 = vmatprep.mubr.bf16.mxu0 0
        %5338 = vmatmul.mubr.bf16.gmra.mrb[0].mxu0 %v5085
        %v5339 = vpop.f32.mrb[0].mxu0
        %v5340 = vadd.f32 %v4943, %v5339
        %v5341 = vpop.f32.mrb[0].mxu0
        %v5342 = vpop.f32.mrb[0].mxu0
        %v5343 = vadd.f32 %v4946, %v5342
        %v5344 = vpop.f32.mrb[0].mxu0
        %5345 = vmatprep.mubr.bf16.mxu0 0
        %5346 = vmatmul.mubr.bf16.gmra.mrb[0].mxu0 %v5088
        %v5347 = vpop.f32.mrb[0].mxu0
        %v5348 = vadd.f32 %v4951, %v5347
        %v5349 = vpop.f32.mrb[0].mxu0
        %v5350 = vpop.f32.mrb[0].mxu0
        %v5351 = vadd.f32 %v4954, %v5350
        %v5352 = vpop.f32.mrb[0].mxu0
        %5353 = vmatprep.mubr.bf16.mxu0 0
        %5354 = vmatmul.mubr.bf16.gmra.mrb[0].mxu0 %v5091
        %v5355 = vpop.f32.mrb[0].mxu0
        %v5356 = vadd.f32 %v4959, %v5355
        %v5357 = vpop.f32.mrb[0].mxu0
        %v5358 = vpop.f32.mrb[0].mxu0
        %v5359 = vadd.f32 %v4962, %v5358
        %v5360 = vpop.f32.mrb[0].mxu0
        %5361 = vmatprep.mubr.bf16.mxu0 0
        %5362 = vmatmul.mubr.bf16.gmra.mrb[0].mxu0 %v5094
        %v5363 = vpop.f32.mrb[0].mxu0
        %v5364 = vadd.f32 %v4967, %v5363
        %v5365 = vpop.f32.mrb[0].mxu0
        %v5366 = vpop.f32.mrb[0].mxu0
        %v5367 = vadd.f32 %v4970, %v5366
        %v5368 = vpop.f32.mrb[0].mxu0
        %5369 = vmatprep.mubr.bf16.mxu0 0
        %5370 = vmatmul.mubr.bf16.gmra.mrb[0].mxu0 %v5097
        %v5371 = vpop.f32.mrb[0].mxu0
        %v5372 = vadd.f32 %v4975, %v5371
        %v5373 = vpop.f32.mrb[0].mxu0
        %v5374 = vpop.f32.mrb[0].mxu0
        %v5375 = vadd.f32 %v4978, %v5374
        %v5376 = vpop.f32.mrb[0].mxu0
        %5377 = vmatprep.mubr.bf16.mxu0 0
        %5378 = vmatmul.mubr.bf16.gmra.mrb[0].mxu0 %v5100
        %v5379 = vpop.f32.mrb[0].mxu0
        %v5380 = vadd.f32 %v4983, %v5379
        %v5381 = vpop.f32.mrb[0].mxu0
        %v5382 = vpop.f32.mrb[0].mxu0
        %v5383 = vadd.f32 %v4986, %v5382
        %v5384 = vpop.f32.mrb[0].mxu0
        %5385 = vmatprep.mubr.bf16.mxu0 0
        %5386 = vmatmul.mubr.bf16.gmra.mrb[0].mxu0 %v5103
        %v5387 = vpop.f32.mrb[0].mxu0
        %v5388 = vadd.f32 %v4991, %v5387
        %v5389 = vpop.f32.mrb[0].mxu0
        %v5390 = vpop.f32.mrb[0].mxu0
        %v5391 = vadd.f32 %v4994, %v5390
        %v5392 = vpop.f32.mrb[0].mxu0
        %5393 = vdwg.mxu0
        %v5394 = vmax.f32 %v5140, 0.0
        %v5395 = vmax.f32 %v5143, 0.0
        %v5396 = vmax.f32 %v5148, 0.0
        %v5397 = vmax.f32 %v5151, 0.0
        %v5398 = vmax.f32 %v5156, 0.0
        %v5399 = vmax.f32 %v5159, 0.0
        %v5400 = vmax.f32 %v5164, 0.0
        %v5401 = vmax.f32 %v5167, 0.0
        %v5402 = vmax.f32 %v5172, 0.0
        %v5403 = vmax.f32 %v5175, 0.0
        %v5404 = vmax.f32 %v5180, 0.0
        %v5405 = vmax.f32 %v5183, 0.0
        %v5406 = vmax.f32 %v5188, 0.0
        %v5407 = vmax.f32 %v5191, 0.0
        %v5408 = vmax.f32 %v5196, 0.0
        %v5409 = vmax.f32 %v5199, 0.0
        %v5410 = vmax.f32 %v5204, 0.0
        %v5411 = vmax.f32 %v5207, 0.0
        %v5412 = vmax.f32 %v5212, 0.0
        %v5413 = vmax.f32 %v5215, 0.0
        %v5414 = vmax.f32 %v5220, 0.0
        %v5415 = vmax.f32 %v5223, 0.0
        %v5416 = vmax.f32 %v5228, 0.0
        %v5417 = vmax.f32 %v5231, 0.0
        %v5418 = vmax.f32 %v5236, 0.0
        %v5419 = vmax.f32 %v5239, 0.0
        %v5420 = vmax.f32 %v5244, 0.0
        %v5421 = vmax.f32 %v5247, 0.0
        %v5422 = vmax.f32 %v5252, 0.0
        %v5423 = vmax.f32 %v5255, 0.0
        %v5424 = vmax.f32 %v5260, 0.0
        %v5425 = vmax.f32 %v5263, 0.0
        %v5426 = vmax.f32 %v5268, 0.0
        %v5427 = vmax.f32 %v5271, 0.0
        %v5428 = vmax.f32 %v5276, 0.0
        %v5429 = vmax.f32 %v5279, 0.0
        %v5430 = vmax.f32 %v5284, 0.0
        %v5431 = vmax.f32 %v5287, 0.0
        %v5432 = vmax.f32 %v5292, 0.0
        %v5433 = vmax.f32 %v5295, 0.0
        %v5434 = vmax.f32 %v5300, 0.0
        %v5435 = vmax.f32 %v5303, 0.0
        %v5436 = vmax.f32 %v5308, 0.0
        %v5437 = vmax.f32 %v5311, 0.0
        %v5438 = vmax.f32 %v5316, 0.0
        %v5439 = vmax.f32 %v5319, 0.0
        %v5440 = vmax.f32 %v5324, 0.0
        %v5441 = vmax.f32 %v5327, 0.0
        %v5442 = vmax.f32 %v5332, 0.0
        %v5443 = vmax.f32 %v5335, 0.0
        %v5444 = vmax.f32 %v5340, 0.0
        %v5445 = vmax.f32 %v5343, 0.0
        %v5446 = vmax.f32 %v5348, 0.0
        %v5447 = vmax.f32 %v5351, 0.0
        %v5448 = vmax.f32 %v5356, 0.0
        %v5449 = vmax.f32 %v5359, 0.0
        %v5450 = vmax.f32 %v5364, 0.0
        %v5451 = vmax.f32 %v5367, 0.0
        %v5452 = vmax.f32 %v5372, 0.0
        %v5453 = vmax.f32 %v5375, 0.0
        %v5454 = vmax.f32 %v5380, 0.0
        %v5455 = vmax.f32 %v5383, 0.0
        %v5456 = vmax.f32 %v5388, 0.0
        %v5457 = vmax.f32 %v5391, 0.0
        %v5458 = vpack.c.bf16 %v5395, %v5394
        %v5459 = vpack.c.bf16 %v5397, %v5396
        %v5460 = vpack.c.bf16 %v5399, %v5398
        %v5461 = vpack.c.bf16 %v5401, %v5400
        %v5462 = vpack.c.bf16 %v5403, %v5402
        %v5463 = vpack.c.bf16 %v5405, %v5404
        %v5464 = vpack.c.bf16 %v5407, %v5406
        %v5465 = vpack.c.bf16 %v5409, %v5408
        %v5466 = vpack.c.bf16 %v5411, %v5410
        %v5467 = vpack.c.bf16 %v5413, %v5412
        %v5468 = vpack.c.bf16 %v5415, %v5414
        %v5469 = vpack.c.bf16 %v5417, %v5416
        %v5470 = vpack.c.bf16 %v5419, %v5418
        %v5471 = vpack.c.bf16 %v5421, %v5420
        %v5472 = vpack.c.bf16 %v5423, %v5422
        %v5473 = vpack.c.bf16 %v5425, %v5424
        %v5474 = vpack.c.bf16 %v5427, %v5426
        %v5475 = vpack.c.bf16 %v5429, %v5428
        %v5476 = vpack.c.bf16 %v5431, %v5430
        %v5477 = vpack.c.bf16 %v5433, %v5432
        %v5478 = vpack.c.bf16 %v5435, %v5434
        %v5479 = vpack.c.bf16 %v5437, %v5436
        %v5480 = vpack.c.bf16 %v5439, %v5438
        %v5481 = vpack.c.bf16 %v5441, %v5440
        %v5482 = vpack.c.bf16 %v5443, %v5442
        %v5483 = vpack.c.bf16 %v5445, %v5444
        %v5484 = vpack.c.bf16 %v5447, %v5446
        %v5485 = vpack.c.bf16 %v5449, %v5448
        %v5486 = vpack.c.bf16 %v5451, %v5450
        %v5487 = vpack.c.bf16 %v5453, %v5452
        %v5488 = vpack.c.bf16 %v5455, %v5454
        %v5489 = vpack.c.bf16 %v5457, %v5456
        %v5490 = vld [vmem:[%s468] sm:$0xff]
        %v5491 = vld [vmem:[%s468 + $0x8] sm:$0xff]
        %v5494 = vunpack.c.l.b16 %v5490
        %v5495 = vunpack.c.h.b16 %v5490
        %v5496 = vunpack.c.l.b16 %v5491
        %v5497 = vunpack.c.h.b16 %v5491
        %v5498 = vpack.c.b16 %v5494, %v5494
        %v5499 = vpack.c.b16 %v5495, %v5495
        %v5500 = vpack.c.b16 %v5496, %v5496
        %v5501 = vpack.c.b16 %v5497, %v5497
        %5506 = vmatprep.subr.bf16.mxu0 0
        %5507 = vmatpush1.bf16.msra.mxu0 %v5458
        %5508 = vmatprep.subr.bf16.mxu0 0
        %5509 = vmatpush1.bf16.msra.mxu0 %v5459
        %5510 = vmatprep.subr.bf16.mxu0 0
        %5511 = vmatpush1.bf16.msra.mxu0 %v5460
        %5512 = vmatprep.subr.bf16.mxu0 0
        %5513 = vmatpush1.bf16.msra.mxu0 %v5461
        %5514 = vmatprep.subr.bf16.mxu0 0
        %5515 = vmatpush1.bf16.msra.mxu0 %v5462
        %5516 = vmatprep.subr.bf16.mxu0 0
        %5517 = vmatpush1.bf16.msra.mxu0 %v5463
        %5518 = vmatprep.subr.bf16.mxu0 0
        %5519 = vmatpush1.bf16.msra.mxu0 %v5464
        %5520 = vmatprep.subr.bf16.mxu0 0
        %5521 = vmatpush1.bf16.msra.mxu0 %v5465
        %5522 = vmatprep.subr.bf16.mxu0 0
        %5523 = vmatpush1.bf16.msra.mxu0 %v5466
        %5524 = vmatprep.subr.bf16.mxu0 0
        %5525 = vmatpush1.bf16.msra.mxu0 %v5467
        %5526 = vmatprep.subr.bf16.mxu0 0
        %5527 = vmatpush1.bf16.msra.mxu0 %v5468
        %5528 = vmatprep.subr.bf16.mxu0 0
        %5529 = vmatpush1.bf16.msra.mxu0 %v5469
        %5530 = vmatprep.subr.bf16.mxu0 0
        %5531 = vmatpush1.bf16.msra.mxu0 %v5470
        %5532 = vmatprep.subr.bf16.mxu0 0
        %5533 = vmatpush1.bf16.msra.mxu0 %v5471
        %5534 = vmatprep.subr.bf16.mxu0 0
        %5535 = vmatpush1.bf16.msra.mxu0 %v5472
        %5536 = vmatprep.subr.bf16.mxu0 0
        %5537 = vmatpush1.bf16.msra.mxu0 %v5473
        %5538 = vmatprep.mubr.bf16.mxu0 %v5499
        %5539 = vmatmul.mubr.bf16.gmra.mrb[0].mxu0 %v5498
        %v5540 = vpop.f32.mrb[0].mxu0
        %v5541 = vadd.f32 0.0, %v5540
        %v5542 = vpop.f32.mrb[0].mxu0
        %v5543 = vpop.f32.mrb[0].mxu0
        %v5544 = vpop.f32.mrb[0].mxu0
        %5545 = vdwg.mxu0
        %5546 = vmatprep.subr.bf16.mxu0 0
        %5547 = vmatpush1.bf16.msra.mxu0 %v5474
        %5548 = vmatprep.subr.bf16.mxu0 0
        %5549 = vmatpush1.bf16.msra.mxu0 %v5475
        %5550 = vmatprep.subr.bf16.mxu0 0
        %5551 = vmatpush1.bf16.msra.mxu0 %v5476
        %5552 = vmatprep.subr.bf16.mxu0 0
        %5553 = vmatpush1.bf16.msra.mxu0 %v5477
        %5554 = vmatprep.subr.bf16.mxu0 0
        %5555 = vmatpush1.bf16.msra.mxu0 %v5478
        %5556 = vmatprep.subr.bf16.mxu0 0
        %5557 = vmatpush1.bf16.msra.mxu0 %v5479
        %5558 = vmatprep.subr.bf16.mxu0 0
        %5559 = vmatpush1.bf16.msra.mxu0 %v5480
        %5560 = vmatprep.subr.bf16.mxu0 0
        %5561 = vmatpush1.bf16.msra.mxu0 %v5481
        %5562 = vmatprep.subr.bf16.mxu0 0
        %5563 = vmatpush1.bf16.msra.mxu0 %v5482
        %5564 = vmatprep.subr.bf16.mxu0 0
        %5565 = vmatpush1.bf16.msra.mxu0 %v5483
        %5566 = vmatprep.subr.bf16.mxu0 0
        %5567 = vmatpush1.bf16.msra.mxu0 %v5484
        %5568 = vmatprep.subr.bf16.mxu0 0
        %5569 = vmatpush1.bf16.msra.mxu0 %v5485
        %5570 = vmatprep.subr.bf16.mxu0 0
        %5571 = vmatpush1.bf16.msra.mxu0 %v5486
        %5572 = vmatprep.subr.bf16.mxu0 0
        %5573 = vmatpush1.bf16.msra.mxu0 %v5487
        %5574 = vmatprep.subr.bf16.mxu0 0
        %5575 = vmatpush1.bf16.msra.mxu0 %v5488
        %5576 = vmatprep.subr.bf16.mxu0 0
        %5577 = vmatpush1.bf16.msra.mxu0 %v5489
        %5578 = vmatprep.mubr.bf16.mxu0 %v5501
        %5579 = vmatmul.mubr.bf16.gmra.mrb[0].mxu0 %v5500
        %v5580 = vpop.f32.mrb[0].mxu0
        %v5581 = vadd.f32 %v5541, %v5580
        %v5582 = vpop.f32.mrb[0].mxu0
        %v5583 = vpop.f32.mrb[0].mxu0
        %v5584 = vpop.f32.mrb[0].mxu0
        %5585 = vdwg.mxu0
        %v5586 = vpack.c.bf16 %v5581, %v5581
        %v5587 = vld [vmem:[%s8] sm:$0xf]
        %v5588 = vld [vmem:[%s8 + $0x4] sm:$0xf]
        %v5589 = vld [vmem:[%s8 + $0x8] sm:$0xf]
        %v5590 = vld [vmem:[%s8 + $0xc] sm:$0xf]
        %v5591 = vld [vmem:[%s459] sm:$0xf]
        %v5592 = vld [vmem:[%s459 + $0x4] sm:$0xf]
        %v5593 = vld [vmem:[%s459 + $0x8] sm:$0xf]
        %v5594 = vld [vmem:[%s459 + $0xc] sm:$0xf]
        %v5595 = vld [vmem:[%s459 + $0x10] sm:$0xf]
        %v5596 = vld [vmem:[%s459 + $0x14] sm:$0xf]
        %v5597 = vld [vmem:[%s459 + $0x18] sm:$0xf]
        %v5598 = vld [vmem:[%s459 + $0x1c] sm:$0xf]
        %v5599 = vld [vmem:[%s459 + $0x20] sm:$0xf]
        %v5600 = vld [vmem:[%s459 + $0x24] sm:$0xf]
        %v5601 = vld [vmem:[%s459 + $0x28] sm:$0xf]
        %v5602 = vld [vmem:[%s459 + $0x2c] sm:$0xf]
        %v5603 = vld [vmem:[%s459 + $0x30] sm:$0xf]
        %v5604 = vld [vmem:[%s459 + $0x34] sm:$0xf]
        %v5605 = vld [vmem:[%s459 + $0x38] sm:$0xf]
        %v5606 = vld [vmem:[%s459 + $0x3c] sm:$0xf]
        %v5623 = vunpack.c.l.b16 %v5591
        %v5624 = vunpack.c.l.b16 %v5592
        %v5625 = vunpack.c.l.b16 %v5593
        %v5626 = vunpack.c.l.b16 %v5594
        %v5627 = vunpack.c.l.b16 %v5595
        %v5628 = vunpack.c.l.b16 %v5596
        %v5629 = vunpack.c.l.b16 %v5597
        %v5630 = vunpack.c.l.b16 %v5598
        %v5631 = vunpack.c.l.b16 %v5599
        %v5632 = vunpack.c.l.b16 %v5600
        %v5633 = vunpack.c.l.b16 %v5601
        %v5634 = vunpack.c.l.b16 %v5602
        %v5635 = vunpack.c.l.b16 %v5603
        %v5636 = vunpack.c.l.b16 %v5604
        %v5637 = vunpack.c.l.b16 %v5605
        %v5638 = vunpack.c.l.b16 %v5606
        %v5639 = vpack.c.b16 %v5624, %v5623
        %v5640 = vpack.c.b16 %v5626, %v5625
        %v5641 = vpack.c.b16 %v5628, %v5627
        %v5642 = vpack.c.b16 %v5630, %v5629
        %v5643 = vpack.c.b16 %v5632, %v5631
        %v5644 = vpack.c.b16 %v5634, %v5633
        %v5645 = vpack.c.b16 %v5636, %v5635
        %v5646 = vpack.c.b16 %v5638, %v5637
        %5655 = vmatprep.subr.bf16.mxu0 0
        %5656 = vmatpush1.bf16.msra.mxu0 %v5458
        %5657 = vmatprep.subr.bf16.mxu0 0
        %5658 = vmatpush1.bf16.msra.mxu0 %v5459
        %5659 = vmatprep.subr.bf16.mxu0 0
        %5660 = vmatpush1.bf16.msra.mxu0 %v5460
        %5661 = vmatprep.subr.bf16.mxu0 0
        %5662 = vmatpush1.bf16.msra.mxu0 %v5461
        %5663 = vmatprep.subr.bf16.mxu0 0
        %5664 = vmatpush1.bf16.msra.mxu0 %v5462
        %5665 = vmatprep.subr.bf16.mxu0 0
        %5666 = vmatpush1.bf16.msra.mxu0 %v5463
        %5667 = vmatprep.subr.bf16.mxu0 0
        %5668 = vmatpush1.bf16.msra.mxu0 %v5464
        %5669 = vmatprep.subr.bf16.mxu0 0
        %5670 = vmatpush1.bf16.msra.mxu0 %v5465
        %5671 = vmatprep.subr.bf16.mxu0 0
        %5672 = vmatpush1.bf16.msra.mxu0 0
        %5673 = vmatprep.subr.bf16.mxu0 0
        %5674 = vmatpush1.bf16.msra.mxu0 0
        %5675 = vmatprep.subr.bf16.mxu0 0
        %5676 = vmatpush1.bf16.msra.mxu0 0
        %5677 = vmatprep.subr.bf16.mxu0 0
        %5678 = vmatpush1.bf16.msra.mxu0 0
        %5679 = vmatprep.subr.bf16.mxu0 0
        %5680 = vmatpush1.bf16.msra.mxu0 0
        %5681 = vmatprep.subr.bf16.mxu0 0
        %5682 = vmatpush1.bf16.msra.mxu0 0
        %5683 = vmatprep.subr.bf16.mxu0 0
        %5684 = vmatpush1.bf16.msra.mxu0 0
        %5685 = vmatprep.subr.bf16.mxu0 0
        %5686 = vmatpush1.bf16.msra.mxu0 0
        %5687 = vmatprep.mubr.bf16.mxu0 0
        %5688 = vmatmul.mubr.bf16.gmra.mrb[0].mxu0 %v5639
        %v5689 = vpop.f32.mrb[0].mxu0
        %v5690 = vadd.f32 0.0, %v5689
        %v5691 = vpop.f32.mrb[0].mxu0
        %v5692 = vpop.f32.mrb[0].mxu0
        %v5693 = vadd.f32 0.0, %v5692
        %v5694 = vpop.f32.mrb[0].mxu0
        %5695 = vmatprep.mubr.bf16.mxu0 0
        %5696 = vmatmul.mubr.bf16.gmra.mrb[0].mxu0 %v5640
        %v5697 = vpop.f32.mrb[0].mxu0
        %v5698 = vadd.f32 0.0, %v5697
        %v5699 = vpop.f32.mrb[0].mxu0
        %v5700 = vpop.f32.mrb[0].mxu0
        %v5701 = vadd.f32 0.0, %v5700
        %v5702 = vpop.f32.mrb[0].mxu0
        %5703 = vmatprep.mubr.bf16.mxu0 0
        %5704 = vmatmul.mubr.bf16.gmra.mrb[0].mxu0 %v5641
        %v5705 = vpop.f32.mrb[0].mxu0
        %v5706 = vadd.f32 0.0, %v5705
        %v5707 = vpop.f32.mrb[0].mxu0
        %v5708 = vpop.f32.mrb[0].mxu0
        %v5709 = vadd.f32 0.0, %v5708
        %v5710 = vpop.f32.mrb[0].mxu0
        %5711 = vmatprep.mubr.bf16.mxu0 0
        %5712 = vmatmul.mubr.bf16.gmra.mrb[0].mxu0 %v5642
        %v5713 = vpop.f32.mrb[0].mxu0
        %v5714 = vadd.f32 0.0, %v5713
        %v5715 = vpop.f32.mrb[0].mxu0
        %v5716 = vpop.f32.mrb[0].mxu0
        %v5717 = vadd.f32 0.0, %v5716
        %v5718 = vpop.f32.mrb[0].mxu0
        %5719 = vmatprep.mubr.bf16.mxu0 0
        %5720 = vmatmul.mubr.bf16.gmra.mrb[0].mxu0 %v5643
        %v5721 = vpop.f32.mrb[0].mxu0
        %v5722 = vadd.f32 0.0, %v5721
        %v5723 = vpop.f32.mrb[0].mxu0
        %v5724 = vpop.f32.mrb[0].mxu0
        %v5725 = vadd.f32 0.0, %v5724
        %v5726 = vpop.f32.mrb[0].mxu0
        %5727 = vmatprep.mubr.bf16.mxu0 0
        %5728 = vmatmul.mubr.bf16.gmra.mrb[0].mxu0 %v5644
        %v5729 = vpop.f32.mrb[0].mxu0
        %v5730 = vadd.f32 0.0, %v5729
        %v5731 = vpop.f32.mrb[0].mxu0
        %v5732 = vpop.f32.mrb[0].mxu0
        %v5733 = vadd.f32 0.0, %v5732
        %v5734 = vpop.f32.mrb[0].mxu0
        %5735 = vmatprep.mubr.bf16.mxu0 0
        %5736 = vmatmul.mubr.bf16.gmra.mrb[0].mxu0 %v5645
        %v5737 = vpop.f32.mrb[0].mxu0
        %v5738 = vadd.f32 0.0, %v5737
        %v5739 = vpop.f32.mrb[0].mxu0
        %v5740 = vpop.f32.mrb[0].mxu0
        %v5741 = vadd.f32 0.0, %v5740
        %v5742 = vpop.f32.mrb[0].mxu0
        %5743 = vmatprep.mubr.bf16.mxu0 0
        %5744 = vmatmul.mubr.bf16.gmra.mrb[0].mxu0 %v5646
        %v5745 = vpop.f32.mrb[0].mxu0
        %v5746 = vadd.f32 0.0, %v5745
        %v5747 = vpop.f32.mrb[0].mxu0
        %v5748 = vpop.f32.mrb[0].mxu0
        %v5749 = vadd.f32 0.0, %v5748
        %v5750 = vpop.f32.mrb[0].mxu0
        %5751 = vdwg.mxu0
        %s5752 = scalar_lea.vmem %s459, 64 [#allocation2]
        %v5753 = vld [vmem:[%s5752] sm:$0xf]
        %v5754 = vld [vmem:[%s5752 + $0x4] sm:$0xf]
        %v5755 = vld [vmem:[%s5752 + $0x8] sm:$0xf]
        %v5756 = vld [vmem:[%s5752 + $0xc] sm:$0xf]
        %v5757 = vld [vmem:[%s5752 + $0x10] sm:$0xf]
        %v5758 = vld [vmem:[%s5752 + $0x14] sm:$0xf]
        %v5759 = vld [vmem:[%s5752 + $0x18] sm:$0xf]
        %v5760 = vld [vmem:[%s5752 + $0x1c] sm:$0xf]
        %v5761 = vld [vmem:[%s5752 + $0x20] sm:$0xf]
        %v5762 = vld [vmem:[%s5752 + $0x24] sm:$0xf]
        %v5763 = vld [vmem:[%s5752 + $0x28] sm:$0xf]
        %v5764 = vld [vmem:[%s5752 + $0x2c] sm:$0xf]
        %v5765 = vld [vmem:[%s5752 + $0x30] sm:$0xf]
        %v5766 = vld [vmem:[%s5752 + $0x34] sm:$0xf]
        %v5767 = vld [vmem:[%s5752 + $0x38] sm:$0xf]
        %v5768 = vld [vmem:[%s5752 + $0x3c] sm:$0xf]
        %v5785 = vunpack.c.l.b16 %v5753
        %v5786 = vunpack.c.l.b16 %v5754
        %v5787 = vunpack.c.l.b16 %v5755
        %v5788 = vunpack.c.l.b16 %v5756
        %v5789 = vunpack.c.l.b16 %v5757
        %v5790 = vunpack.c.l.b16 %v5758
        %v5791 = vunpack.c.l.b16 %v5759
        %v5792 = vunpack.c.l.b16 %v5760
        %v5793 = vunpack.c.l.b16 %v5761
        %v5794 = vunpack.c.l.b16 %v5762
        %v5795 = vunpack.c.l.b16 %v5763
        %v5796 = vunpack.c.l.b16 %v5764
        %v5797 = vunpack.c.l.b16 %v5765
        %v5798 = vunpack.c.l.b16 %v5766
        %v5799 = vunpack.c.l.b16 %v5767
        %v5800 = vunpack.c.l.b16 %v5768
        %v5801 = vpack.c.b16 %v5786, %v5785
        %v5802 = vpack.c.b16 %v5788, %v5787
        %v5803 = vpack.c.b16 %v5790, %v5789
        %v5804 = vpack.c.b16 %v5792, %v5791
        %v5805 = vpack.c.b16 %v5794, %v5793
        %v5806 = vpack.c.b16 %v5796, %v5795
        %v5807 = vpack.c.b16 %v5798, %v5797
        %v5808 = vpack.c.b16 %v5800, %v5799
        %5817 = vmatprep.subr.bf16.mxu0 0
        %5818 = vmatpush1.bf16.msra.mxu0 %v5466
        %5819 = vmatprep.subr.bf16.mxu0 0
        %5820 = vmatpush1.bf16.msra.mxu0 %v5467
        %5821 = vmatprep.subr.bf16.mxu0 0
        %5822 = vmatpush1.bf16.msra.mxu0 %v5468
        %5823 = vmatprep.subr.bf16.mxu0 0
        %5824 = vmatpush1.bf16.msra.mxu0 %v5469
        %5825 = vmatprep.subr.bf16.mxu0 0
        %5826 = vmatpush1.bf16.msra.mxu0 %v5470
        %5827 = vmatprep.subr.bf16.mxu0 0
        %5828 = vmatpush1.bf16.msra.mxu0 %v5471
        %5829 = vmatprep.subr.bf16.mxu0 0
        %5830 = vmatpush1.bf16.msra.mxu0 %v5472
        %5831 = vmatprep.subr.bf16.mxu0 0
        %5832 = vmatpush1.bf16.msra.mxu0 %v5473
        %5833 = vmatprep.subr.bf16.mxu0 0
        %5834 = vmatpush1.bf16.msra.mxu0 0
        %5835 = vmatprep.subr.bf16.mxu0 0
        %5836 = vmatpush1.bf16.msra.mxu0 0
        %5837 = vmatprep.subr.bf16.mxu0 0
        %5838 = vmatpush1.bf16.msra.mxu0 0
        %5839 = vmatprep.subr.bf16.mxu0 0
        %5840 = vmatpush1.bf16.msra.mxu0 0
        %5841 = vmatprep.subr.bf16.mxu0 0
        %5842 = vmatpush1.bf16.msra.mxu0 0
        %5843 = vmatprep.subr.bf16.mxu0 0
        %5844 = vmatpush1.bf16.msra.mxu0 0
        %5845 = vmatprep.subr.bf16.mxu0 0
        %5846 = vmatpush1.bf16.msra.mxu0 0
        %5847 = vmatprep.subr.bf16.mxu0 0
        %5848 = vmatpush1.bf16.msra.mxu0 0
        %5849 = vmatprep.mubr.bf16.mxu0 0
        %5850 = vmatmul.mubr.bf16.gmra.mrb[0].mxu0 %v5801
        %v5851 = vpop.f32.mrb[0].mxu0
        %v5852 = vadd.f32 0.0, %v5851
        %v5853 = vpop.f32.mrb[0].mxu0
        %v5854 = vpop.f32.mrb[0].mxu0
        %v5855 = vadd.f32 0.0, %v5854
        %v5856 = vpop.f32.mrb[0].mxu0
        %5857 = vmatprep.mubr.bf16.mxu0 0
        %5858 = vmatmul.mubr.bf16.gmra.mrb[0].mxu0 %v5802
        %v5859 = vpop.f32.mrb[0].mxu0
        %v5860 = vadd.f32 0.0, %v5859
        %v5861 = vpop.f32.mrb[0].mxu0
        %v5862 = vpop.f32.mrb[0].mxu0
        %v5863 = vadd.f32 0.0, %v5862
        %v5864 = vpop.f32.mrb[0].mxu0
        %5865 = vmatprep.mubr.bf16.mxu0 0
        %5866 = vmatmul.mubr.bf16.gmra.mrb[0].mxu0 %v5803
        %v5867 = vpop.f32.mrb[0].mxu0
        %v5868 = vadd.f32 0.0, %v5867
        %v5869 = vpop.f32.mrb[0].mxu0
        %v5870 = vpop.f32.mrb[0].mxu0
        %v5871 = vadd.f32 0.0, %v5870
        %v5872 = vpop.f32.mrb[0].mxu0
        %5873 = vmatprep.mubr.bf16.mxu0 0
        %5874 = vmatmul.mubr.bf16.gmra.mrb[0].mxu0 %v5804
        %v5875 = vpop.f32.mrb[0].mxu0
        %v5876 = vadd.f32 0.0, %v5875
        %v5877 = vpop.f32.mrb[0].mxu0
        %v5878 = vpop.f32.mrb[0].mxu0
        %v5879 = vadd.f32 0.0, %v5878
        %v5880 = vpop.f32.mrb[0].mxu0
        %5881 = vmatprep.mubr.bf16.mxu0 0
        %5882 = vmatmul.mubr.bf16.gmra.mrb[0].mxu0 %v5805
        %v5883 = vpop.f32.mrb[0].mxu0
        %v5884 = vadd.f32 0.0, %v5883
        %v5885 = vpop.f32.mrb[0].mxu0
        %v5886 = vpop.f32.mrb[0].mxu0
        %v5887 = vadd.f32 0.0, %v5886
        %v5888 = vpop.f32.mrb[0].mxu0
        %5889 = vmatprep.mubr.bf16.mxu0 0
        %5890 = vmatmul.mubr.bf16.gmra.mrb[0].mxu0 %v5806
        %v5891 = vpop.f32.mrb[0].mxu0
        %v5892 = vadd.f32 0.0, %v5891
        %v5893 = vpop.f32.mrb[0].mxu0
        %v5894 = vpop.f32.mrb[0].mxu0
        %v5895 = vadd.f32 0.0, %v5894
        %v5896 = vpop.f32.mrb[0].mxu0
        %5897 = vmatprep.mubr.bf16.mxu0 0
        %5898 = vmatmul.mubr.bf16.gmra.mrb[0].mxu0 %v5807
        %v5899 = vpop.f32.mrb[0].mxu0
        %v5900 = vadd.f32 0.0, %v5899
        %v5901 = vpop.f32.mrb[0].mxu0
        %v5902 = vpop.f32.mrb[0].mxu0
        %v5903 = vadd.f32 0.0, %v5902
        %v5904 = vpop.f32.mrb[0].mxu0
        %5905 = vmatprep.mubr.bf16.mxu0 0
        %5906 = vmatmul.mubr.bf16.gmra.mrb[0].mxu0 %v5808
        %v5907 = vpop.f32.mrb[0].mxu0
        %v5908 = vadd.f32 0.0, %v5907
        %v5909 = vpop.f32.mrb[0].mxu0
        %v5910 = vpop.f32.mrb[0].mxu0
        %v5911 = vadd.f32 0.0, %v5910
        %v5912 = vpop.f32.mrb[0].mxu0
        %5913 = vdwg.mxu0
        %s5914 = scalar_lea.vmem %s459, 128 [#allocation2]
        %v5915 = vld [vmem:[%s5914] sm:$0xf]
        %v5916 = vld [vmem:[%s5914 + $0x4] sm:$0xf]
        %v5917 = vld [vmem:[%s5914 + $0x8] sm:$0xf]
        %v5918 = vld [vmem:[%s5914 + $0xc] sm:$0xf]
        %v5919 = vld [vmem:[%s5914 + $0x10] sm:$0xf]
        %v5920 = vld [vmem:[%s5914 + $0x14] sm:$0xf]
        %v5921 = vld [vmem:[%s5914 + $0x18] sm:$0xf]
        %v5922 = vld [vmem:[%s5914 + $0x1c] sm:$0xf]
        %v5923 = vld [vmem:[%s5914 + $0x20] sm:$0xf]
        %v5924 = vld [vmem:[%s5914 + $0x24] sm:$0xf]
        %v5925 = vld [vmem:[%s5914 + $0x28] sm:$0xf]
        %v5926 = vld [vmem:[%s5914 + $0x2c] sm:$0xf]
        %v5927 = vld [vmem:[%s5914 + $0x30] sm:$0xf]
        %v5928 = vld [vmem:[%s5914 + $0x34] sm:$0xf]
        %v5929 = vld [vmem:[%s5914 + $0x38] sm:$0xf]
        %v5930 = vld [vmem:[%s5914 + $0x3c] sm:$0xf]
        %v5947 = vunpack.c.l.b16 %v5915
        %v5948 = vunpack.c.l.b16 %v5916
        %v5949 = vunpack.c.l.b16 %v5917
        %v5950 = vunpack.c.l.b16 %v5918
        %v5951 = vunpack.c.l.b16 %v5919
        %v5952 = vunpack.c.l.b16 %v5920
        %v5953 = vunpack.c.l.b16 %v5921
        %v5954 = vunpack.c.l.b16 %v5922
        %v5955 = vunpack.c.l.b16 %v5923
        %v5956 = vunpack.c.l.b16 %v5924
        %v5957 = vunpack.c.l.b16 %v5925
        %v5958 = vunpack.c.l.b16 %v5926
        %v5959 = vunpack.c.l.b16 %v5927
        %v5960 = vunpack.c.l.b16 %v5928
        %v5961 = vunpack.c.l.b16 %v5929
        %v5962 = vunpack.c.l.b16 %v5930
        %v5963 = vpack.c.b16 %v5948, %v5947
        %v5964 = vpack.c.b16 %v5950, %v5949
        %v5965 = vpack.c.b16 %v5952, %v5951
        %v5966 = vpack.c.b16 %v5954, %v5953
        %v5967 = vpack.c.b16 %v5956, %v5955
        %v5968 = vpack.c.b16 %v5958, %v5957
        %v5969 = vpack.c.b16 %v5960, %v5959
        %v5970 = vpack.c.b16 %v5962, %v5961
        %5979 = vmatprep.subr.bf16.mxu0 0
        %5980 = vmatpush1.bf16.msra.mxu0 %v5474
        %5981 = vmatprep.subr.bf16.mxu0 0
        %5982 = vmatpush1.bf16.msra.mxu0 %v5475
        %5983 = vmatprep.subr.bf16.mxu0 0
        %5984 = vmatpush1.bf16.msra.mxu0 %v5476
        %5985 = vmatprep.subr.bf16.mxu0 0
        %5986 = vmatpush1.bf16.msra.mxu0 %v5477
        %5987 = vmatprep.subr.bf16.mxu0 0
        %5988 = vmatpush1.bf16.msra.mxu0 %v5478
        %5989 = vmatprep.subr.bf16.mxu0 0
        %5990 = vmatpush1.bf16.msra.mxu0 %v5479
        %5991 = vmatprep.subr.bf16.mxu0 0
        %5992 = vmatpush1.bf16.msra.mxu0 %v5480
        %5993 = vmatprep.subr.bf16.mxu0 0
        %5994 = vmatpush1.bf16.msra.mxu0 %v5481
        %5995 = vmatprep.subr.bf16.mxu0 0
        %5996 = vmatpush1.bf16.msra.mxu0 0
        %5997 = vmatprep.subr.bf16.mxu0 0
        %5998 = vmatpush1.bf16.msra.mxu0 0
        %5999 = vmatprep.subr.bf16.mxu0 0
        %6000 = vmatpush1.bf16.msra.mxu0 0
        %6001 = vmatprep.subr.bf16.mxu0 0
        %6002 = vmatpush1.bf16.msra.mxu0 0
        %6003 = vmatprep.subr.bf16.mxu0 0
        %6004 = vmatpush1.bf16.msra.mxu0 0
        %6005 = vmatprep.subr.bf16.mxu0 0
        %6006 = vmatpush1.bf16.msra.mxu0 0
        %6007 = vmatprep.subr.bf16.mxu0 0
        %6008 = vmatpush1.bf16.msra.mxu0 0
        %6009 = vmatprep.subr.bf16.mxu0 0
        %6010 = vmatpush1.bf16.msra.mxu0 0
        %6011 = vmatprep.mubr.bf16.mxu0 0
        %6012 = vmatmul.mubr.bf16.gmra.mrb[0].mxu0 %v5963
        %v6013 = vpop.f32.mrb[0].mxu0
        %v6014 = vadd.f32 0.0, %v6013
        %v6015 = vpop.f32.mrb[0].mxu0
        %v6016 = vpop.f32.mrb[0].mxu0
        %v6017 = vadd.f32 0.0, %v6016
        %v6018 = vpop.f32.mrb[0].mxu0
        %6019 = vmatprep.mubr.bf16.mxu0 0
        %6020 = vmatmul.mubr.bf16.gmra.mrb[0].mxu0 %v5964
        %v6021 = vpop.f32.mrb[0].mxu0
        %v6022 = vadd.f32 0.0, %v6021
        %v6023 = vpop.f32.mrb[0].mxu0
        %v6024 = vpop.f32.mrb[0].mxu0
        %v6025 = vadd.f32 0.0, %v6024
        %v6026 = vpop.f32.mrb[0].mxu0
        %6027 = vmatprep.mubr.bf16.mxu0 0
        %6028 = vmatmul.mubr.bf16.gmra.mrb[0].mxu0 %v5965
        %v6029 = vpop.f32.mrb[0].mxu0
        %v6030 = vadd.f32 0.0, %v6029
        %v6031 = vpop.f32.mrb[0].mxu0
        %v6032 = vpop.f32.mrb[0].mxu0
        %v6033 = vadd.f32 0.0, %v6032
        %v6034 = vpop.f32.mrb[0].mxu0
        %6035 = vmatprep.mubr.bf16.mxu0 0
        %6036 = vmatmul.mubr.bf16.gmra.mrb[0].mxu0 %v5966
        %v6037 = vpop.f32.mrb[0].mxu0
        %v6038 = vadd.f32 0.0, %v6037
        %v6039 = vpop.f32.mrb[0].mxu0
        %v6040 = vpop.f32.mrb[0].mxu0
        %v6041 = vadd.f32 0.0, %v6040
        %v6042 = vpop.f32.mrb[0].mxu0
        %6043 = vmatprep.mubr.bf16.mxu0 0
        %6044 = vmatmul.mubr.bf16.gmra.mrb[0].mxu0 %v5967
        %v6045 = vpop.f32.mrb[0].mxu0
        %v6046 = vadd.f32 0.0, %v6045
        %v6047 = vpop.f32.mrb[0].mxu0
        %v6048 = vpop.f32.mrb[0].mxu0
        %v6049 = vadd.f32 0.0, %v6048
        %v6050 = vpop.f32.mrb[0].mxu0
        %6051 = vmatprep.mubr.bf16.mxu0 0
        %6052 = vmatmul.mubr.bf16.gmra.mrb[0].mxu0 %v5968
        %v6053 = vpop.f32.mrb[0].mxu0
        %v6054 = vadd.f32 0.0, %v6053
        %v6055 = vpop.f32.mrb[0].mxu0
        %v6056 = vpop.f32.mrb[0].mxu0
        %v6057 = vadd.f32 0.0, %v6056
        %v6058 = vpop.f32.mrb[0].mxu0
        %6059 = vmatprep.mubr.bf16.mxu0 0
        %6060 = vmatmul.mubr.bf16.gmra.mrb[0].mxu0 %v5969
        %v6061 = vpop.f32.mrb[0].mxu0
        %v6062 = vadd.f32 0.0, %v6061
        %v6063 = vpop.f32.mrb[0].mxu0
        %v6064 = vpop.f32.mrb[0].mxu0
        %v6065 = vadd.f32 0.0, %v6064
        %v6066 = vpop.f32.mrb[0].mxu0
        %6067 = vmatprep.mubr.bf16.mxu0 0
        %6068 = vmatmul.mubr.bf16.gmra.mrb[0].mxu0 %v5970
        %v6069 = vpop.f32.mrb[0].mxu0
        %v6070 = vadd.f32 0.0, %v6069
        %v6071 = vpop.f32.mrb[0].mxu0
        %v6072 = vpop.f32.mrb[0].mxu0
        %v6073 = vadd.f32 0.0, %v6072
        %v6074 = vpop.f32.mrb[0].mxu0
        %6075 = vdwg.mxu0
        %s6076 = scalar_lea.vmem %s459, 192 [#allocation2]
        %v6077 = vld [vmem:[%s6076] sm:$0xf]
        %v6078 = vld [vmem:[%s6076 + $0x4] sm:$0xf]
        %v6079 = vld [vmem:[%s6076 + $0x8] sm:$0xf]
        %v6080 = vld [vmem:[%s6076 + $0xc] sm:$0xf]
        %v6081 = vld [vmem:[%s6076 + $0x10] sm:$0xf]
        %v6082 = vld [vmem:[%s6076 + $0x14] sm:$0xf]
        %v6083 = vld [vmem:[%s6076 + $0x18] sm:$0xf]
        %v6084 = vld [vmem:[%s6076 + $0x1c] sm:$0xf]
        %v6085 = vld [vmem:[%s6076 + $0x20] sm:$0xf]
        %v6086 = vld [vmem:[%s6076 + $0x24] sm:$0xf]
        %v6087 = vld [vmem:[%s6076 + $0x28] sm:$0xf]
        %v6088 = vld [vmem:[%s6076 + $0x2c] sm:$0xf]
        %v6089 = vld [vmem:[%s6076 + $0x30] sm:$0xf]
        %v6090 = vld [vmem:[%s6076 + $0x34] sm:$0xf]
        %v6091 = vld [vmem:[%s6076 + $0x38] sm:$0xf]
        %v6092 = vld [vmem:[%s6076 + $0x3c] sm:$0xf]
        %v6109 = vunpack.c.l.b16 %v6077
        %v6110 = vunpack.c.l.b16 %v6078
        %v6111 = vunpack.c.l.b16 %v6079
        %v6112 = vunpack.c.l.b16 %v6080
        %v6113 = vunpack.c.l.b16 %v6081
        %v6114 = vunpack.c.l.b16 %v6082
        %v6115 = vunpack.c.l.b16 %v6083
        %v6116 = vunpack.c.l.b16 %v6084
        %v6117 = vunpack.c.l.b16 %v6085
        %v6118 = vunpack.c.l.b16 %v6086
        %v6119 = vunpack.c.l.b16 %v6087
        %v6120 = vunpack.c.l.b16 %v6088
        %v6121 = vunpack.c.l.b16 %v6089
        %v6122 = vunpack.c.l.b16 %v6090
        %v6123 = vunpack.c.l.b16 %v6091
        %v6124 = vunpack.c.l.b16 %v6092
        %v6125 = vpack.c.b16 %v6110, %v6109
        %v6126 = vpack.c.b16 %v6112, %v6111
        %v6127 = vpack.c.b16 %v6114, %v6113
        %v6128 = vpack.c.b16 %v6116, %v6115
        %v6129 = vpack.c.b16 %v6118, %v6117
        %v6130 = vpack.c.b16 %v6120, %v6119
        %v6131 = vpack.c.b16 %v6122, %v6121
        %v6132 = vpack.c.b16 %v6124, %v6123
        %6141 = vmatprep.subr.bf16.mxu0 0
        %6142 = vmatpush1.bf16.msra.mxu0 %v5482
        %6143 = vmatprep.subr.bf16.mxu0 0
        %6144 = vmatpush1.bf16.msra.mxu0 %v5483
        %6145 = vmatprep.subr.bf16.mxu0 0
        %6146 = vmatpush1.bf16.msra.mxu0 %v5484
        %6147 = vmatprep.subr.bf16.mxu0 0
        %6148 = vmatpush1.bf16.msra.mxu0 %v5485
        %6149 = vmatprep.subr.bf16.mxu0 0
        %6150 = vmatpush1.bf16.msra.mxu0 %v5486
        %6151 = vmatprep.subr.bf16.mxu0 0
        %6152 = vmatpush1.bf16.msra.mxu0 %v5487
        %6153 = vmatprep.subr.bf16.mxu0 0
        %6154 = vmatpush1.bf16.msra.mxu0 %v5488
        %6155 = vmatprep.subr.bf16.mxu0 0
        %6156 = vmatpush1.bf16.msra.mxu0 %v5489
        %6157 = vmatprep.subr.bf16.mxu0 0
        %6158 = vmatpush1.bf16.msra.mxu0 0
        %6159 = vmatprep.subr.bf16.mxu0 0
        %6160 = vmatpush1.bf16.msra.mxu0 0
        %6161 = vmatprep.subr.bf16.mxu0 0
        %6162 = vmatpush1.bf16.msra.mxu0 0
        %6163 = vmatprep.subr.bf16.mxu0 0
        %6164 = vmatpush1.bf16.msra.mxu0 0
        %6165 = vmatprep.subr.bf16.mxu0 0
        %6166 = vmatpush1.bf16.msra.mxu0 0
        %6167 = vmatprep.subr.bf16.mxu0 0
        %6168 = vmatpush1.bf16.msra.mxu0 0
        %6169 = vmatprep.subr.bf16.mxu0 0
        %6170 = vmatpush1.bf16.msra.mxu0 0
        %6171 = vmatprep.subr.bf16.mxu0 0
        %6172 = vmatpush1.bf16.msra.mxu0 0
        %6173 = vmatprep.mubr.bf16.mxu0 0
        %6174 = vmatmul.mubr.bf16.gmra.mrb[0].mxu0 %v6125
        %v6175 = vpop.f32.mrb[0].mxu0
        %v6176 = vadd.f32 0.0, %v6175
        %v6177 = vpop.f32.mrb[0].mxu0
        %v6178 = vpop.f32.mrb[0].mxu0
        %v6179 = vadd.f32 0.0, %v6178
        %v6180 = vpop.f32.mrb[0].mxu0
        %6181 = vmatprep.mubr.bf16.mxu0 0
        %6182 = vmatmul.mubr.bf16.gmra.mrb[0].mxu0 %v6126
        %v6183 = vpop.f32.mrb[0].mxu0
        %v6184 = vadd.f32 0.0, %v6183
        %v6185 = vpop.f32.mrb[0].mxu0
        %v6186 = vpop.f32.mrb[0].mxu0
        %v6187 = vadd.f32 0.0, %v6186
        %v6188 = vpop.f32.mrb[0].mxu0
        %6189 = vmatprep.mubr.bf16.mxu0 0
        %6190 = vmatmul.mubr.bf16.gmra.mrb[0].mxu0 %v6127
        %v6191 = vpop.f32.mrb[0].mxu0
        %v6192 = vadd.f32 0.0, %v6191
        %v6193 = vpop.f32.mrb[0].mxu0
        %v6194 = vpop.f32.mrb[0].mxu0
        %v6195 = vadd.f32 0.0, %v6194
        %v6196 = vpop.f32.mrb[0].mxu0
        %6197 = vmatprep.mubr.bf16.mxu0 0
        %6198 = vmatmul.mubr.bf16.gmra.mrb[0].mxu0 %v6128
        %v6199 = vpop.f32.mrb[0].mxu0
        %v6200 = vadd.f32 0.0, %v6199
        %v6201 = vpop.f32.mrb[0].mxu0
        %v6202 = vpop.f32.mrb[0].mxu0
        %v6203 = vadd.f32 0.0, %v6202
        %v6204 = vpop.f32.mrb[0].mxu0
        %6205 = vmatprep.mubr.bf16.mxu0 0
        %6206 = vmatmul.mubr.bf16.gmra.mrb[0].mxu0 %v6129
        %v6207 = vpop.f32.mrb[0].mxu0
        %v6208 = vadd.f32 0.0, %v6207
        %v6209 = vpop.f32.mrb[0].mxu0
        %v6210 = vpop.f32.mrb[0].mxu0
        %v6211 = vadd.f32 0.0, %v6210
        %v6212 = vpop.f32.mrb[0].mxu0
        %6213 = vmatprep.mubr.bf16.mxu0 0
        %6214 = vmatmul.mubr.bf16.gmra.mrb[0].mxu0 %v6130
        %v6215 = vpop.f32.mrb[0].mxu0
        %v6216 = vadd.f32 0.0, %v6215
        %v6217 = vpop.f32.mrb[0].mxu0
        %v6218 = vpop.f32.mrb[0].mxu0
        %v6219 = vadd.f32 0.0, %v6218
        %v6220 = vpop.f32.mrb[0].mxu0
        %6221 = vmatprep.mubr.bf16.mxu0 0
        %6222 = vmatmul.mubr.bf16.gmra.mrb[0].mxu0 %v6131
        %v6223 = vpop.f32.mrb[0].mxu0
        %v6224 = vadd.f32 0.0, %v6223
        %v6225 = vpop.f32.mrb[0].mxu0
        %v6226 = vpop.f32.mrb[0].mxu0
        %v6227 = vadd.f32 0.0, %v6226
        %v6228 = vpop.f32.mrb[0].mxu0
        %6229 = vmatprep.mubr.bf16.mxu0 0
        %6230 = vmatmul.mubr.bf16.gmra.mrb[0].mxu0 %v6132
        %v6231 = vpop.f32.mrb[0].mxu0
        %v6232 = vadd.f32 0.0, %v6231
        %v6233 = vpop.f32.mrb[0].mxu0
        %v6234 = vpop.f32.mrb[0].mxu0
        %v6235 = vadd.f32 0.0, %v6234
        %v6236 = vpop.f32.mrb[0].mxu0
        %6237 = vdwg.mxu0
        %v6238 = vpack.c.bf16 %v5693, %v5690
        %v6239 = vpack.c.bf16 %v5701, %v5698
        %v6240 = vpack.c.bf16 %v5709, %v5706
        %v6241 = vpack.c.bf16 %v5717, %v5714
        %v6242 = vpack.c.bf16 %v5725, %v5722
        %v6243 = vpack.c.bf16 %v5733, %v5730
        %v6244 = vpack.c.bf16 %v5741, %v5738
        %v6245 = vpack.c.bf16 %v5749, %v5746
        %v6246 = vpack.c.bf16 %v5855, %v5852
        %v6247 = vpack.c.bf16 %v5863, %v5860
        %v6248 = vpack.c.bf16 %v5871, %v5868
        %v6249 = vpack.c.bf16 %v5879, %v5876
        %v6250 = vpack.c.bf16 %v5887, %v5884
        %v6251 = vpack.c.bf16 %v5895, %v5892
        %v6252 = vpack.c.bf16 %v5903, %v5900
        %v6253 = vpack.c.bf16 %v5911, %v5908
        %v6254 = vpack.c.bf16 %v6017, %v6014
        %v6255 = vpack.c.bf16 %v6025, %v6022
        %v6256 = vpack.c.bf16 %v6033, %v6030
        %v6257 = vpack.c.bf16 %v6041, %v6038
        %v6258 = vpack.c.bf16 %v6049, %v6046
        %v6259 = vpack.c.bf16 %v6057, %v6054
        %v6260 = vpack.c.bf16 %v6065, %v6062
        %v6261 = vpack.c.bf16 %v6073, %v6070
        %v6262 = vpack.c.bf16 %v6179, %v6176
        %v6263 = vpack.c.bf16 %v6187, %v6184
        %v6264 = vpack.c.bf16 %v6195, %v6192
        %v6265 = vpack.c.bf16 %v6203, %v6200
        %v6266 = vpack.c.bf16 %v6211, %v6208
        %v6267 = vpack.c.bf16 %v6219, %v6216
        %v6268 = vpack.c.bf16 %v6227, %v6224
        %v6269 = vpack.c.bf16 %v6235, %v6232
        %6270 = vmatprep.subr.bf16.mxu0 0
        %6271 = vmatpush1.bf16.msra.mxu0 %v6238
        %6272 = vmatprep.subr.bf16.mxu0 0
        %6273 = vmatpush1.bf16.msra.mxu0 %v6239
        %6274 = vmatprep.subr.bf16.mxu0 0
        %6275 = vmatpush1.bf16.msra.mxu0 %v6240
        %6276 = vmatprep.subr.bf16.mxu0 0
        %6277 = vmatpush1.bf16.msra.mxu0 %v6241
        %6278 = vmatprep.subr.bf16.mxu0 0
        %6279 = vmatpush1.bf16.msra.mxu0 %v6242
        %6280 = vmatprep.subr.bf16.mxu0 0
        %6281 = vmatpush1.bf16.msra.mxu0 %v6243
        %6282 = vmatprep.subr.bf16.mxu0 0
        %6283 = vmatpush1.bf16.msra.mxu0 %v6244
        %6284 = vmatprep.subr.bf16.mxu0 0
        %6285 = vmatpush1.bf16.msra.mxu0 %v6245
        %6286 = vmatprep.subr.bf16.mxu0 0
        %6287 = vmatpush1.bf16.msra.mxu0 %v6246
        %6288 = vmatprep.subr.bf16.mxu0 0
        %6289 = vmatpush1.bf16.msra.mxu0 %v6247
        %6290 = vmatprep.subr.bf16.mxu0 0
        %6291 = vmatpush1.bf16.msra.mxu0 %v6248
        %6292 = vmatprep.subr.bf16.mxu0 0
        %6293 = vmatpush1.bf16.msra.mxu0 %v6249
        %6294 = vmatprep.subr.bf16.mxu0 0
        %6295 = vmatpush1.bf16.msra.mxu0 %v6250
        %6296 = vmatprep.subr.bf16.mxu0 0
        %6297 = vmatpush1.bf16.msra.mxu0 %v6251
        %6298 = vmatprep.subr.bf16.mxu0 0
        %6299 = vmatpush1.bf16.msra.mxu0 %v6252
        %6300 = vmatprep.subr.bf16.mxu0 0
        %6301 = vmatpush1.bf16.msra.mxu0 %v6253
        %6302 = vmatprep.mubr.bf16.mxu0 %v5499
        %6303 = vmatmul.mubr.bf16.gmra.mrb[0].mxu0 %v5498
        %v6304 = vpop.f32.mrb[0].mxu0
        %v6305 = vadd.f32 0.0, %v6304
        %v6306 = vpop.f32.mrb[0].mxu0
        %v6307 = vpop.f32.mrb[0].mxu0
        %v6308 = vpop.f32.mrb[0].mxu0
        %6309 = vdwg.mxu0
        %6310 = vmatprep.subr.bf16.mxu0 0
        %6311 = vmatpush1.bf16.msra.mxu0 %v6254
        %6312 = vmatprep.subr.bf16.mxu0 0
        %6313 = vmatpush1.bf16.msra.mxu0 %v6255
        %6314 = vmatprep.subr.bf16.mxu0 0
        %6315 = vmatpush1.bf16.msra.mxu0 %v6256
        %6316 = vmatprep.subr.bf16.mxu0 0
        %6317 = vmatpush1.bf16.msra.mxu0 %v6257
        %6318 = vmatprep.subr.bf16.mxu0 0
        %6319 = vmatpush1.bf16.msra.mxu0 %v6258
        %6320 = vmatprep.subr.bf16.mxu0 0
        %6321 = vmatpush1.bf16.msra.mxu0 %v6259
        %6322 = vmatprep.subr.bf16.mxu0 0
        %6323 = vmatpush1.bf16.msra.mxu0 %v6260
        %6324 = vmatprep.subr.bf16.mxu0 0
        %6325 = vmatpush1.bf16.msra.mxu0 %v6261
        %6326 = vmatprep.subr.bf16.mxu0 0
        %6327 = vmatpush1.bf16.msra.mxu0 %v6262
        %6328 = vmatprep.subr.bf16.mxu0 0
        %6329 = vmatpush1.bf16.msra.mxu0 %v6263
        %6330 = vmatprep.subr.bf16.mxu0 0
        %6331 = vmatpush1.bf16.msra.mxu0 %v6264
        %6332 = vmatprep.subr.bf16.mxu0 0
        %6333 = vmatpush1.bf16.msra.mxu0 %v6265
        %6334 = vmatprep.subr.bf16.mxu0 0
        %6335 = vmatpush1.bf16.msra.mxu0 %v6266
        %6336 = vmatprep.subr.bf16.mxu0 0
        %6337 = vmatpush1.bf16.msra.mxu0 %v6267
        %6338 = vmatprep.subr.bf16.mxu0 0
        %6339 = vmatpush1.bf16.msra.mxu0 %v6268
        %6340 = vmatprep.subr.bf16.mxu0 0
        %6341 = vmatpush1.bf16.msra.mxu0 %v6269
        %6342 = vmatprep.mubr.bf16.mxu0 %v5501
        %6343 = vmatmul.mubr.bf16.gmra.mrb[0].mxu0 %v5500
        %v6344 = vpop.f32.mrb[0].mxu0
        %v6345 = vadd.f32 %v6305, %v6344
        %v6346 = vpop.f32.mrb[0].mxu0
        %v6347 = vpop.f32.mrb[0].mxu0
        %v6348 = vpop.f32.mrb[0].mxu0
        %6349 = vdwg.mxu0
        %v6350 = vpack.c.bf16 %v6345, %v6345
        %s6351 = scalar_lea.vmem %s8, 16
        %v6352 = vld [vmem:[%s6351] sm:$0xf]
        %v6353 = vld [vmem:[%s6351 + $0x4] sm:$0xf]
        %v6354 = vld [vmem:[%s6351 + $0x8] sm:$0xf]
        %v6355 = vld [vmem:[%s6351 + $0xc] sm:$0xf]
        %v6360 = vunpack.c.l.b16 %v6352
        %v6361 = vunpack.c.l.b16 %v6353
        %v6362 = vunpack.c.l.b16 %v6354
        %v6363 = vunpack.c.l.b16 %v6355
        %v6364 = vpack.c.b16 %v6361, %v6360
        %v6365 = vpack.c.b16 %v6363, %v6362
        %v6369 = vsel %vm1971, %v6350, 0
        %6371 = vmatprep.subr.bf16.mxu0 0
        %6372 = vmatpush1.bf16.msra.mxu0 %v6364
        %6373 = vmatprep.subr.bf16.mxu0 0
        %6374 = vmatpush1.bf16.msra.mxu0 %v6365
        %6375 = vmatprep.subr.bf16.mxu0 0
        %6376 = vmatpush1.bf16.msra.mxu0 0
        %6377 = vmatprep.subr.bf16.mxu0 0
        %6378 = vmatpush1.bf16.msra.mxu0 0
        %6379 = vmatprep.subr.bf16.mxu0 0
        %6380 = vmatpush1.bf16.msra.mxu0 0
        %6381 = vmatprep.subr.bf16.mxu0 0
        %6382 = vmatpush1.bf16.msra.mxu0 0
        %6383 = vmatprep.subr.bf16.mxu0 0
        %6384 = vmatpush1.bf16.msra.mxu0 0
        %6385 = vmatprep.subr.bf16.mxu0 0
        %6386 = vmatpush1.bf16.msra.mxu0 0
        %6387 = vmatprep.subr.bf16.mxu0 0
        %6388 = vmatpush1.bf16.msra.mxu0 0
        %6389 = vmatprep.subr.bf16.mxu0 0
        %6390 = vmatpush1.bf16.msra.mxu0 0
        %6391 = vmatprep.subr.bf16.mxu0 0
        %6392 = vmatpush1.bf16.msra.mxu0 0
        %6393 = vmatprep.subr.bf16.mxu0 0
        %6394 = vmatpush1.bf16.msra.mxu0 0
        %6395 = vmatprep.subr.bf16.mxu0 0
        %6396 = vmatpush1.bf16.msra.mxu0 0
        %6397 = vmatprep.subr.bf16.mxu0 0
        %6398 = vmatpush1.bf16.msra.mxu0 0
        %6399 = vmatprep.subr.bf16.mxu0 0
        %6400 = vmatpush1.bf16.msra.mxu0 0
        %6401 = vmatprep.subr.bf16.mxu0 0
        %6402 = vmatpush1.bf16.msra.mxu0 0
        %6403 = vmatprep.mubr.bf16.mxu0 0
        %6404 = vmatmul.mubr.bf16.gmra.mrb[0].mxu0 %v6369
        %v6405 = vpop.f32.mrb[0].mxu0
        %v6406 = vadd.f32 0.0, %v6405
        %v6407 = vpop.f32.mrb[0].mxu0
        %v6408 = vpop.f32.mrb[0].mxu0
        %v6409 = vpop.f32.mrb[0].mxu0
        %6410 = vdwg.mxu0
        %v6415 = vunpack.c.l.b16 %v5587
        %v6416 = vunpack.c.l.b16 %v5588
        %v6417 = vunpack.c.l.b16 %v5589
        %v6418 = vunpack.c.l.b16 %v5590
        %v6419 = vpack.c.b16 %v6416, %v6415
        %v6420 = vpack.c.b16 %v6418, %v6417
        %v6424 = vsel %vm1971, %v5586, 0
        %6426 = vmatprep.subr.bf16.mxu0 0
        %6427 = vmatpush1.bf16.msra.mxu0 %v6419
        %6428 = vmatprep.subr.bf16.mxu0 0
        %6429 = vmatpush1.bf16.msra.mxu0 %v6420
        %6430 = vmatprep.subr.bf16.mxu0 0
        %6431 = vmatpush1.bf16.msra.mxu0 0
        %6432 = vmatprep.subr.bf16.mxu0 0
        %6433 = vmatpush1.bf16.msra.mxu0 0
        %6434 = vmatprep.subr.bf16.mxu0 0
        %6435 = vmatpush1.bf16.msra.mxu0 0
        %6436 = vmatprep.subr.bf16.mxu0 0
        %6437 = vmatpush1.bf16.msra.mxu0 0
        %6438 = vmatprep.subr.bf16.mxu0 0
        %6439 = vmatpush1.bf16.msra.mxu0 0
        %6440 = vmatprep.subr.bf16.mxu0 0
        %6441 = vmatpush1.bf16.msra.mxu0 0
        %6442 = vmatprep.subr.bf16.mxu0 0
        %6443 = vmatpush1.bf16.msra.mxu0 0
        %6444 = vmatprep.subr.bf16.mxu0 0
        %6445 = vmatpush1.bf16.msra.mxu0 0
        %6446 = vmatprep.subr.bf16.mxu0 0
        %6447 = vmatpush1.bf16.msra.mxu0 0
        %6448 = vmatprep.subr.bf16.mxu0 0
        %6449 = vmatpush1.bf16.msra.mxu0 0
        %6450 = vmatprep.subr.bf16.mxu0 0
        %6451 = vmatpush1.bf16.msra.mxu0 0
        %6452 = vmatprep.subr.bf16.mxu0 0
        %6453 = vmatpush1.bf16.msra.mxu0 0
        %6454 = vmatprep.subr.bf16.mxu0 0
        %6455 = vmatpush1.bf16.msra.mxu0 0
        %6456 = vmatprep.subr.bf16.mxu0 0
        %6457 = vmatpush1.bf16.msra.mxu0 0
        %6458 = vmatprep.mubr.bf16.mxu0 0
        %6459 = vmatmul.mubr.bf16.gmra.mrb[0].mxu0 %v6424
        %v6460 = vpop.f32.mrb[0].mxu0
        %v6461 = vadd.f32 %v6406, %v6460
        %v6462 = vpop.f32.mrb[0].mxu0
        %v6463 = vpop.f32.mrb[0].mxu0
        %v6464 = vpop.f32.mrb[0].mxu0
        %6465 = vdwg.mxu0
        %6466 = vmatprep.subr.bf16.mxu0 0
        %6467 = vmatpush1.bf16.msra.mxu0 %v6238
        %6468 = vmatprep.subr.bf16.mxu0 0
        %6469 = vmatpush1.bf16.msra.mxu0 %v6239
        %6470 = vmatprep.subr.bf16.mxu0 0
        %6471 = vmatpush1.bf16.msra.mxu0 %v6240
        %6472 = vmatprep.subr.bf16.mxu0 0
        %6473 = vmatpush1.bf16.msra.mxu0 %v6241
        %6474 = vmatprep.subr.bf16.mxu0 0
        %6475 = vmatpush1.bf16.msra.mxu0 %v6242
        %6476 = vmatprep.subr.bf16.mxu0 0
        %6477 = vmatpush1.bf16.msra.mxu0 %v6243
        %6478 = vmatprep.subr.bf16.mxu0 0
        %6479 = vmatpush1.bf16.msra.mxu0 %v6244
        %6480 = vmatprep.subr.bf16.mxu0 0
        %6481 = vmatpush1.bf16.msra.mxu0 %v6245
        %6482 = vmatprep.subr.bf16.mxu0 0
        %6483 = vmatpush1.bf16.msra.mxu0 0
        %6484 = vmatprep.subr.bf16.mxu0 0
        %6485 = vmatpush1.bf16.msra.mxu0 0
        %6486 = vmatprep.subr.bf16.mxu0 0
        %6487 = vmatpush1.bf16.msra.mxu0 0
        %6488 = vmatprep.subr.bf16.mxu0 0
        %6489 = vmatpush1.bf16.msra.mxu0 0
        %6490 = vmatprep.subr.bf16.mxu0 0
        %6491 = vmatpush1.bf16.msra.mxu0 0
        %6492 = vmatprep.subr.bf16.mxu0 0
        %6493 = vmatpush1.bf16.msra.mxu0 0
        %6494 = vmatprep.subr.bf16.mxu0 0
        %6495 = vmatpush1.bf16.msra.mxu0 0
        %6496 = vmatprep.subr.bf16.mxu0 0
        %6497 = vmatpush1.bf16.msra.mxu0 0
        %6498 = vmatprep.mubr.bf16.mxu0 0
        %6499 = vmatmul.mubr.bf16.gmra.mrb[0].mxu0 %v5639
        %v6500 = vpop.f32.mrb[0].mxu0
        %v6501 = vadd.f32 0.0, %v6500
        %v6502 = vpop.f32.mrb[0].mxu0
        %v6503 = vpop.f32.mrb[0].mxu0
        %v6504 = vadd.f32 0.0, %v6503
        %v6505 = vpop.f32.mrb[0].mxu0
        %6506 = vmatprep.mubr.bf16.mxu0 0
        %6507 = vmatmul.mubr.bf16.gmra.mrb[0].mxu0 %v5640
        %v6508 = vpop.f32.mrb[0].mxu0
        %v6509 = vadd.f32 0.0, %v6508
        %v6510 = vpop.f32.mrb[0].mxu0
        %v6511 = vpop.f32.mrb[0].mxu0
        %v6512 = vadd.f32 0.0, %v6511
        %v6513 = vpop.f32.mrb[0].mxu0
        %6514 = vmatprep.mubr.bf16.mxu0 0
        %6515 = vmatmul.mubr.bf16.gmra.mrb[0].mxu0 %v5641
        %v6516 = vpop.f32.mrb[0].mxu0
        %v6517 = vadd.f32 0.0, %v6516
        %v6518 = vpop.f32.mrb[0].mxu0
        %v6519 = vpop.f32.mrb[0].mxu0
        %v6520 = vadd.f32 0.0, %v6519
        %v6521 = vpop.f32.mrb[0].mxu0
        %6522 = vmatprep.mubr.bf16.mxu0 0
        %6523 = vmatmul.mubr.bf16.gmra.mrb[0].mxu0 %v5642
        %v6524 = vpop.f32.mrb[0].mxu0
        %v6525 = vadd.f32 0.0, %v6524
        %v6526 = vpop.f32.mrb[0].mxu0
        %v6527 = vpop.f32.mrb[0].mxu0
        %v6528 = vadd.f32 0.0, %v6527
        %v6529 = vpop.f32.mrb[0].mxu0
        %6530 = vmatprep.mubr.bf16.mxu0 0
        %6531 = vmatmul.mubr.bf16.gmra.mrb[0].mxu0 %v5643
        %v6532 = vpop.f32.mrb[0].mxu0
        %v6533 = vadd.f32 0.0, %v6532
        %v6534 = vpop.f32.mrb[0].mxu0
        %v6535 = vpop.f32.mrb[0].mxu0
        %v6536 = vadd.f32 0.0, %v6535
        %v6537 = vpop.f32.mrb[0].mxu0
        %6538 = vmatprep.mubr.bf16.mxu0 0
        %6539 = vmatmul.mubr.bf16.gmra.mrb[0].mxu0 %v5644
        %v6540 = vpop.f32.mrb[0].mxu0
        %v6541 = vadd.f32 0.0, %v6540
        %v6542 = vpop.f32.mrb[0].mxu0
        %v6543 = vpop.f32.mrb[0].mxu0
        %v6544 = vadd.f32 0.0, %v6543
        %v6545 = vpop.f32.mrb[0].mxu0
        %6546 = vmatprep.mubr.bf16.mxu0 0
        %6547 = vmatmul.mubr.bf16.gmra.mrb[0].mxu0 %v5645
        %v6548 = vpop.f32.mrb[0].mxu0
        %v6549 = vadd.f32 0.0, %v6548
        %v6550 = vpop.f32.mrb[0].mxu0
        %v6551 = vpop.f32.mrb[0].mxu0
        %v6552 = vadd.f32 0.0, %v6551
        %v6553 = vpop.f32.mrb[0].mxu0
        %6554 = vmatprep.mubr.bf16.mxu0 0
        %6555 = vmatmul.mubr.bf16.gmra.mrb[0].mxu0 %v5646
        %v6556 = vpop.f32.mrb[0].mxu0
        %v6557 = vadd.f32 0.0, %v6556
        %v6558 = vpop.f32.mrb[0].mxu0
        %v6559 = vpop.f32.mrb[0].mxu0
        %v6560 = vadd.f32 0.0, %v6559
        %v6561 = vpop.f32.mrb[0].mxu0
        %6562 = vdwg.mxu0
        %6563 = vmatprep.subr.bf16.mxu0 0
        %6564 = vmatpush1.bf16.msra.mxu0 %v6246
        %6565 = vmatprep.subr.bf16.mxu0 0
        %6566 = vmatpush1.bf16.msra.mxu0 %v6247
        %6567 = vmatprep.subr.bf16.mxu0 0
        %6568 = vmatpush1.bf16.msra.mxu0 %v6248
        %6569 = vmatprep.subr.bf16.mxu0 0
        %6570 = vmatpush1.bf16.msra.mxu0 %v6249
        %6571 = vmatprep.subr.bf16.mxu0 0
        %6572 = vmatpush1.bf16.msra.mxu0 %v6250
        %6573 = vmatprep.subr.bf16.mxu0 0
        %6574 = vmatpush1.bf16.msra.mxu0 %v6251
        %6575 = vmatprep.subr.bf16.mxu0 0
        %6576 = vmatpush1.bf16.msra.mxu0 %v6252
        %6577 = vmatprep.subr.bf16.mxu0 0
        %6578 = vmatpush1.bf16.msra.mxu0 %v6253
        %6579 = vmatprep.subr.bf16.mxu0 0
        %6580 = vmatpush1.bf16.msra.mxu0 0
        %6581 = vmatprep.subr.bf16.mxu0 0
        %6582 = vmatpush1.bf16.msra.mxu0 0
        %6583 = vmatprep.subr.bf16.mxu0 0
        %6584 = vmatpush1.bf16.msra.mxu0 0
        %6585 = vmatprep.subr.bf16.mxu0 0
        %6586 = vmatpush1.bf16.msra.mxu0 0
        %6587 = vmatprep.subr.bf16.mxu0 0
        %6588 = vmatpush1.bf16.msra.mxu0 0
        %6589 = vmatprep.subr.bf16.mxu0 0
        %6590 = vmatpush1.bf16.msra.mxu0 0
        %6591 = vmatprep.subr.bf16.mxu0 0
        %6592 = vmatpush1.bf16.msra.mxu0 0
        %6593 = vmatprep.subr.bf16.mxu0 0
        %6594 = vmatpush1.bf16.msra.mxu0 0
        %6595 = vmatprep.mubr.bf16.mxu0 0
        %6596 = vmatmul.mubr.bf16.gmra.mrb[0].mxu0 %v5801
        %v6597 = vpop.f32.mrb[0].mxu0
        %v6598 = vadd.f32 0.0, %v6597
        %v6599 = vpop.f32.mrb[0].mxu0
        %v6600 = vpop.f32.mrb[0].mxu0
        %v6601 = vadd.f32 0.0, %v6600
        %v6602 = vpop.f32.mrb[0].mxu0
        %6603 = vmatprep.mubr.bf16.mxu0 0
        %6604 = vmatmul.mubr.bf16.gmra.mrb[0].mxu0 %v5802
        %v6605 = vpop.f32.mrb[0].mxu0
        %v6606 = vadd.f32 0.0, %v6605
        %v6607 = vpop.f32.mrb[0].mxu0
        %v6608 = vpop.f32.mrb[0].mxu0
        %v6609 = vadd.f32 0.0, %v6608
        %v6610 = vpop.f32.mrb[0].mxu0
        %6611 = vmatprep.mubr.bf16.mxu0 0
        %6612 = vmatmul.mubr.bf16.gmra.mrb[0].mxu0 %v5803
        %v6613 = vpop.f32.mrb[0].mxu0
        %v6614 = vadd.f32 0.0, %v6613
        %v6615 = vpop.f32.mrb[0].mxu0
        %v6616 = vpop.f32.mrb[0].mxu0
        %v6617 = vadd.f32 0.0, %v6616
        %v6618 = vpop.f32.mrb[0].mxu0
        %6619 = vmatprep.mubr.bf16.mxu0 0
        %6620 = vmatmul.mubr.bf16.gmra.mrb[0].mxu0 %v5804
        %v6621 = vpop.f32.mrb[0].mxu0
        %v6622 = vadd.f32 0.0, %v6621
        %v6623 = vpop.f32.mrb[0].mxu0
        %v6624 = vpop.f32.mrb[0].mxu0
        %v6625 = vadd.f32 0.0, %v6624
        %v6626 = vpop.f32.mrb[0].mxu0
        %6627 = vmatprep.mubr.bf16.mxu0 0
        %6628 = vmatmul.mubr.bf16.gmra.mrb[0].mxu0 %v5805
        %v6629 = vpop.f32.mrb[0].mxu0
        %v6630 = vadd.f32 0.0, %v6629
        %v6631 = vpop.f32.mrb[0].mxu0
        %v6632 = vpop.f32.mrb[0].mxu0
        %v6633 = vadd.f32 0.0, %v6632
        %v6634 = vpop.f32.mrb[0].mxu0
        %6635 = vmatprep.mubr.bf16.mxu0 0
        %6636 = vmatmul.mubr.bf16.gmra.mrb[0].mxu0 %v5806
        %v6637 = vpop.f32.mrb[0].mxu0
        %v6638 = vadd.f32 0.0, %v6637
        %v6639 = vpop.f32.mrb[0].mxu0
        %v6640 = vpop.f32.mrb[0].mxu0
        %v6641 = vadd.f32 0.0, %v6640
        %v6642 = vpop.f32.mrb[0].mxu0
        %6643 = vmatprep.mubr.bf16.mxu0 0
        %6644 = vmatmul.mubr.bf16.gmra.mrb[0].mxu0 %v5807
        %v6645 = vpop.f32.mrb[0].mxu0
        %v6646 = vadd.f32 0.0, %v6645
        %v6647 = vpop.f32.mrb[0].mxu0
        %v6648 = vpop.f32.mrb[0].mxu0
        %v6649 = vadd.f32 0.0, %v6648
        %v6650 = vpop.f32.mrb[0].mxu0
        %6651 = vmatprep.mubr.bf16.mxu0 0
        %6652 = vmatmul.mubr.bf16.gmra.mrb[0].mxu0 %v5808
        %v6653 = vpop.f32.mrb[0].mxu0
        %v6654 = vadd.f32 0.0, %v6653
        %v6655 = vpop.f32.mrb[0].mxu0
        %v6656 = vpop.f32.mrb[0].mxu0
        %v6657 = vadd.f32 0.0, %v6656
        %v6658 = vpop.f32.mrb[0].mxu0
        %6659 = vdwg.mxu0
        %6660 = vmatprep.subr.bf16.mxu0 0
        %6661 = vmatpush1.bf16.msra.mxu0 %v6254
        %6662 = vmatprep.subr.bf16.mxu0 0
        %6663 = vmatpush1.bf16.msra.mxu0 %v6255
        %6664 = vmatprep.subr.bf16.mxu0 0
        %6665 = vmatpush1.bf16.msra.mxu0 %v6256
        %6666 = vmatprep.subr.bf16.mxu0 0
        %6667 = vmatpush1.bf16.msra.mxu0 %v6257
        %6668 = vmatprep.subr.bf16.mxu0 0
        %6669 = vmatpush1.bf16.msra.mxu0 %v6258
        %6670 = vmatprep.subr.bf16.mxu0 0
        %6671 = vmatpush1.bf16.msra.mxu0 %v6259
        %6672 = vmatprep.subr.bf16.mxu0 0
        %6673 = vmatpush1.bf16.msra.mxu0 %v6260
        %6674 = vmatprep.subr.bf16.mxu0 0
        %6675 = vmatpush1.bf16.msra.mxu0 %v6261
        %6676 = vmatprep.subr.bf16.mxu0 0
        %6677 = vmatpush1.bf16.msra.mxu0 0
        %6678 = vmatprep.subr.bf16.mxu0 0
        %6679 = vmatpush1.bf16.msra.mxu0 0
        %6680 = vmatprep.subr.bf16.mxu0 0
        %6681 = vmatpush1.bf16.msra.mxu0 0
        %6682 = vmatprep.subr.bf16.mxu0 0
        %6683 = vmatpush1.bf16.msra.mxu0 0
        %6684 = vmatprep.subr.bf16.mxu0 0
        %6685 = vmatpush1.bf16.msra.mxu0 0
        %6686 = vmatprep.subr.bf16.mxu0 0
        %6687 = vmatpush1.bf16.msra.mxu0 0
        %6688 = vmatprep.subr.bf16.mxu0 0
        %6689 = vmatpush1.bf16.msra.mxu0 0
        %6690 = vmatprep.subr.bf16.mxu0 0
        %6691 = vmatpush1.bf16.msra.mxu0 0
        %6692 = vmatprep.mubr.bf16.mxu0 0
        %6693 = vmatmul.mubr.bf16.gmra.mrb[0].mxu0 %v5963
        %v6694 = vpop.f32.mrb[0].mxu0
        %v6695 = vadd.f32 0.0, %v6694
        %v6696 = vpop.f32.mrb[0].mxu0
        %v6697 = vpop.f32.mrb[0].mxu0
        %v6698 = vadd.f32 0.0, %v6697
        %v6699 = vpop.f32.mrb[0].mxu0
        %6700 = vmatprep.mubr.bf16.mxu0 0
        %6701 = vmatmul.mubr.bf16.gmra.mrb[0].mxu0 %v5964
        %v6702 = vpop.f32.mrb[0].mxu0
        %v6703 = vadd.f32 0.0, %v6702
        %v6704 = vpop.f32.mrb[0].mxu0
        %v6705 = vpop.f32.mrb[0].mxu0
        %v6706 = vadd.f32 0.0, %v6705
        %v6707 = vpop.f32.mrb[0].mxu0
        %6708 = vmatprep.mubr.bf16.mxu0 0
        %6709 = vmatmul.mubr.bf16.gmra.mrb[0].mxu0 %v5965
        %v6710 = vpop.f32.mrb[0].mxu0
        %v6711 = vadd.f32 0.0, %v6710
        %v6712 = vpop.f32.mrb[0].mxu0
        %v6713 = vpop.f32.mrb[0].mxu0
        %v6714 = vadd.f32 0.0, %v6713
        %v6715 = vpop.f32.mrb[0].mxu0
        %6716 = vmatprep.mubr.bf16.mxu0 0
        %6717 = vmatmul.mubr.bf16.gmra.mrb[0].mxu0 %v5966
        %v6718 = vpop.f32.mrb[0].mxu0
        %v6719 = vadd.f32 0.0, %v6718
        %v6720 = vpop.f32.mrb[0].mxu0
        %v6721 = vpop.f32.mrb[0].mxu0
        %v6722 = vadd.f32 0.0, %v6721
        %v6723 = vpop.f32.mrb[0].mxu0
        %6724 = vmatprep.mubr.bf16.mxu0 0
        %6725 = vmatmul.mubr.bf16.gmra.mrb[0].mxu0 %v5967
        %v6726 = vpop.f32.mrb[0].mxu0
        %v6727 = vadd.f32 0.0, %v6726
        %v6728 = vpop.f32.mrb[0].mxu0
        %v6729 = vpop.f32.mrb[0].mxu0
        %v6730 = vadd.f32 0.0, %v6729
        %v6731 = vpop.f32.mrb[0].mxu0
        %6732 = vmatprep.mubr.bf16.mxu0 0
        %6733 = vmatmul.mubr.bf16.gmra.mrb[0].mxu0 %v5968
        %v6734 = vpop.f32.mrb[0].mxu0
        %v6735 = vadd.f32 0.0, %v6734
        %v6736 = vpop.f32.mrb[0].mxu0
        %v6737 = vpop.f32.mrb[0].mxu0
        %v6738 = vadd.f32 0.0, %v6737
        %v6739 = vpop.f32.mrb[0].mxu0
        %6740 = vmatprep.mubr.bf16.mxu0 0
        %6741 = vmatmul.mubr.bf16.gmra.mrb[0].mxu0 %v5969
        %v6742 = vpop.f32.mrb[0].mxu0
        %v6743 = vadd.f32 0.0, %v6742
        %v6744 = vpop.f32.mrb[0].mxu0
        %v6745 = vpop.f32.mrb[0].mxu0
        %v6746 = vadd.f32 0.0, %v6745
        %v6747 = vpop.f32.mrb[0].mxu0
        %6748 = vmatprep.mubr.bf16.mxu0 0
        %6749 = vmatmul.mubr.bf16.gmra.mrb[0].mxu0 %v5970
        %v6750 = vpop.f32.mrb[0].mxu0
        %v6751 = vadd.f32 0.0, %v6750
        %v6752 = vpop.f32.mrb[0].mxu0
        %v6753 = vpop.f32.mrb[0].mxu0
        %v6754 = vadd.f32 0.0, %v6753
        %v6755 = vpop.f32.mrb[0].mxu0
        %6756 = vdwg.mxu0
        %6757 = vmatprep.subr.bf16.mxu0 0
        %6758 = vmatpush1.bf16.msra.mxu0 %v6262
        %6759 = vmatprep.subr.bf16.mxu0 0
        %6760 = vmatpush1.bf16.msra.mxu0 %v6263
        %6761 = vmatprep.subr.bf16.mxu0 0
        %6762 = vmatpush1.bf16.msra.mxu0 %v6264
        %6763 = vmatprep.subr.bf16.mxu0 0
        %6764 = vmatpush1.bf16.msra.mxu0 %v6265
        %6765 = vmatprep.subr.bf16.mxu0 0
        %6766 = vmatpush1.bf16.msra.mxu0 %v6266
        %6767 = vmatprep.subr.bf16.mxu0 0
        %6768 = vmatpush1.bf16.msra.mxu0 %v6267
        %6769 = vmatprep.subr.bf16.mxu0 0
        %6770 = vmatpush1.bf16.msra.mxu0 %v6268
        %6771 = vmatprep.subr.bf16.mxu0 0
        %6772 = vmatpush1.bf16.msra.mxu0 %v6269
        %6773 = vmatprep.subr.bf16.mxu0 0
        %6774 = vmatpush1.bf16.msra.mxu0 0
        %6775 = vmatprep.subr.bf16.mxu0 0
        %6776 = vmatpush1.bf16.msra.mxu0 0
        %6777 = vmatprep.subr.bf16.mxu0 0
        %6778 = vmatpush1.bf16.msra.mxu0 0
        %6779 = vmatprep.subr.bf16.mxu0 0
        %6780 = vmatpush1.bf16.msra.mxu0 0
        %6781 = vmatprep.subr.bf16.mxu0 0
        %6782 = vmatpush1.bf16.msra.mxu0 0
        %6783 = vmatprep.subr.bf16.mxu0 0
        %6784 = vmatpush1.bf16.msra.mxu0 0
        %6785 = vmatprep.subr.bf16.mxu0 0
        %6786 = vmatpush1.bf16.msra.mxu0 0
        %6787 = vmatprep.subr.bf16.mxu0 0
        %6788 = vmatpush1.bf16.msra.mxu0 0
        %6789 = vmatprep.mubr.bf16.mxu0 0
        %6790 = vmatmul.mubr.bf16.gmra.mrb[0].mxu0 %v6125
        %v6791 = vpop.f32.mrb[0].mxu0
        %v6792 = vadd.f32 0.0, %v6791
        %v6793 = vpop.f32.mrb[0].mxu0
        %v6794 = vpop.f32.mrb[0].mxu0
        %v6795 = vadd.f32 0.0, %v6794
        %v6796 = vpop.f32.mrb[0].mxu0
        %6797 = vmatprep.mubr.bf16.mxu0 0
        %6798 = vmatmul.mubr.bf16.gmra.mrb[0].mxu0 %v6126
        %v6799 = vpop.f32.mrb[0].mxu0
        %v6800 = vadd.f32 0.0, %v6799
        %v6801 = vpop.f32.mrb[0].mxu0
        %v6802 = vpop.f32.mrb[0].mxu0
        %v6803 = vadd.f32 0.0, %v6802
        %v6804 = vpop.f32.mrb[0].mxu0
        %6805 = vmatprep.mubr.bf16.mxu0 0
        %6806 = vmatmul.mubr.bf16.gmra.mrb[0].mxu0 %v6127
        %v6807 = vpop.f32.mrb[0].mxu0
        %v6808 = vadd.f32 0.0, %v6807
        %v6809 = vpop.f32.mrb[0].mxu0
        %v6810 = vpop.f32.mrb[0].mxu0
        %v6811 = vadd.f32 0.0, %v6810
        %v6812 = vpop.f32.mrb[0].mxu0
        %6813 = vmatprep.mubr.bf16.mxu0 0
        %6814 = vmatmul.mubr.bf16.gmra.mrb[0].mxu0 %v6128
        %v6815 = vpop.f32.mrb[0].mxu0
        %v6816 = vadd.f32 0.0, %v6815
        %v6817 = vpop.f32.mrb[0].mxu0
        %v6818 = vpop.f32.mrb[0].mxu0
        %v6819 = vadd.f32 0.0, %v6818
        %v6820 = vpop.f32.mrb[0].mxu0
        %6821 = vmatprep.mubr.bf16.mxu0 0
        %6822 = vmatmul.mubr.bf16.gmra.mrb[0].mxu0 %v6129
        %v6823 = vpop.f32.mrb[0].mxu0
        %v6824 = vadd.f32 0.0, %v6823
        %v6825 = vpop.f32.mrb[0].mxu0
        %v6826 = vpop.f32.mrb[0].mxu0
        %v6827 = vadd.f32 0.0, %v6826
        %v6828 = vpop.f32.mrb[0].mxu0
        %6829 = vmatprep.mubr.bf16.mxu0 0
        %6830 = vmatmul.mubr.bf16.gmra.mrb[0].mxu0 %v6130
        %v6831 = vpop.f32.mrb[0].mxu0
        %v6832 = vadd.f32 0.0, %v6831
        %v6833 = vpop.f32.mrb[0].mxu0
        %v6834 = vpop.f32.mrb[0].mxu0
        %v6835 = vadd.f32 0.0, %v6834
        %v6836 = vpop.f32.mrb[0].mxu0
        %6837 = vmatprep.mubr.bf16.mxu0 0
        %6838 = vmatmul.mubr.bf16.gmra.mrb[0].mxu0 %v6131
        %v6839 = vpop.f32.mrb[0].mxu0
        %v6840 = vadd.f32 0.0, %v6839
        %v6841 = vpop.f32.mrb[0].mxu0
        %v6842 = vpop.f32.mrb[0].mxu0
        %v6843 = vadd.f32 0.0, %v6842
        %v6844 = vpop.f32.mrb[0].mxu0
        %6845 = vmatprep.mubr.bf16.mxu0 0
        %6846 = vmatmul.mubr.bf16.gmra.mrb[0].mxu0 %v6132
        %v6847 = vpop.f32.mrb[0].mxu0
        %v6848 = vadd.f32 0.0, %v6847
        %v6849 = vpop.f32.mrb[0].mxu0
        %v6850 = vpop.f32.mrb[0].mxu0
        %v6851 = vadd.f32 0.0, %v6850
        %v6852 = vpop.f32.mrb[0].mxu0
        %6853 = vdwg.mxu0
        %v6854 = vpack.c.bf16 %v6504, %v6501
        %v6855 = vpack.c.bf16 %v6512, %v6509
        %v6856 = vpack.c.bf16 %v6520, %v6517
        %v6857 = vpack.c.bf16 %v6528, %v6525
        %v6858 = vpack.c.bf16 %v6536, %v6533
        %v6859 = vpack.c.bf16 %v6544, %v6541
        %v6860 = vpack.c.bf16 %v6552, %v6549
        %v6861 = vpack.c.bf16 %v6560, %v6557
        %v6862 = vpack.c.bf16 %v6601, %v6598
        %v6863 = vpack.c.bf16 %v6609, %v6606
        %v6864 = vpack.c.bf16 %v6617, %v6614
        %v6865 = vpack.c.bf16 %v6625, %v6622
        %v6866 = vpack.c.bf16 %v6633, %v6630
        %v6867 = vpack.c.bf16 %v6641, %v6638
        %v6868 = vpack.c.bf16 %v6649, %v6646
        %v6869 = vpack.c.bf16 %v6657, %v6654
        %v6870 = vpack.c.bf16 %v6698, %v6695
        %v6871 = vpack.c.bf16 %v6706, %v6703
        %v6872 = vpack.c.bf16 %v6714, %v6711
        %v6873 = vpack.c.bf16 %v6722, %v6719
        %v6874 = vpack.c.bf16 %v6730, %v6727
        %v6875 = vpack.c.bf16 %v6738, %v6735
        %v6876 = vpack.c.bf16 %v6746, %v6743
        %v6877 = vpack.c.bf16 %v6754, %v6751
        %v6878 = vpack.c.bf16 %v6795, %v6792
        %v6879 = vpack.c.bf16 %v6803, %v6800
        %v6880 = vpack.c.bf16 %v6811, %v6808
        %v6881 = vpack.c.bf16 %v6819, %v6816
        %v6882 = vpack.c.bf16 %v6827, %v6824
        %v6883 = vpack.c.bf16 %v6835, %v6832
        %v6884 = vpack.c.bf16 %v6843, %v6840
        %v6885 = vpack.c.bf16 %v6851, %v6848
        %6886 = vmatprep.subr.bf16.mxu0 0
        %6887 = vmatpush1.bf16.msra.mxu0 %v6854
        %6888 = vmatprep.subr.bf16.mxu0 0
        %6889 = vmatpush1.bf16.msra.mxu0 %v6855
        %6890 = vmatprep.subr.bf16.mxu0 0
        %6891 = vmatpush1.bf16.msra.mxu0 %v6856
        %6892 = vmatprep.subr.bf16.mxu0 0
        %6893 = vmatpush1.bf16.msra.mxu0 %v6857
        %6894 = vmatprep.subr.bf16.mxu0 0
        %6895 = vmatpush1.bf16.msra.mxu0 %v6858
        %6896 = vmatprep.subr.bf16.mxu0 0
        %6897 = vmatpush1.bf16.msra.mxu0 %v6859
        %6898 = vmatprep.subr.bf16.mxu0 0
        %6899 = vmatpush1.bf16.msra.mxu0 %v6860
        %6900 = vmatprep.subr.bf16.mxu0 0
        %6901 = vmatpush1.bf16.msra.mxu0 %v6861
        %6902 = vmatprep.subr.bf16.mxu0 0
        %6903 = vmatpush1.bf16.msra.mxu0 %v6862
        %6904 = vmatprep.subr.bf16.mxu0 0
        %6905 = vmatpush1.bf16.msra.mxu0 %v6863
        %6906 = vmatprep.subr.bf16.mxu0 0
        %6907 = vmatpush1.bf16.msra.mxu0 %v6864
        %6908 = vmatprep.subr.bf16.mxu0 0
        %6909 = vmatpush1.bf16.msra.mxu0 %v6865
        %6910 = vmatprep.subr.bf16.mxu0 0
        %6911 = vmatpush1.bf16.msra.mxu0 %v6866
        %6912 = vmatprep.subr.bf16.mxu0 0
        %6913 = vmatpush1.bf16.msra.mxu0 %v6867
        %6914 = vmatprep.subr.bf16.mxu0 0
        %6915 = vmatpush1.bf16.msra.mxu0 %v6868
        %6916 = vmatprep.subr.bf16.mxu0 0
        %6917 = vmatpush1.bf16.msra.mxu0 %v6869
        %6918 = vmatprep.mubr.bf16.mxu0 %v5499
        %6919 = vmatmul.mubr.bf16.gmra.mrb[0].mxu0 %v5498
        %v6920 = vpop.f32.mrb[0].mxu0
        %v6921 = vadd.f32 0.0, %v6920
        %v6922 = vpop.f32.mrb[0].mxu0
        %v6923 = vpop.f32.mrb[0].mxu0
        %v6924 = vpop.f32.mrb[0].mxu0
        %6925 = vdwg.mxu0
        %6926 = vmatprep.subr.bf16.mxu0 0
        %6927 = vmatpush1.bf16.msra.mxu0 %v6870
        %6928 = vmatprep.subr.bf16.mxu0 0
        %6929 = vmatpush1.bf16.msra.mxu0 %v6871
        %6930 = vmatprep.subr.bf16.mxu0 0
        %6931 = vmatpush1.bf16.msra.mxu0 %v6872
        %6932 = vmatprep.subr.bf16.mxu0 0
        %6933 = vmatpush1.bf16.msra.mxu0 %v6873
        %6934 = vmatprep.subr.bf16.mxu0 0
        %6935 = vmatpush1.bf16.msra.mxu0 %v6874
        %6936 = vmatprep.subr.bf16.mxu0 0
        %6937 = vmatpush1.bf16.msra.mxu0 %v6875
        %6938 = vmatprep.subr.bf16.mxu0 0
        %6939 = vmatpush1.bf16.msra.mxu0 %v6876
        %6940 = vmatprep.subr.bf16.mxu0 0
        %6941 = vmatpush1.bf16.msra.mxu0 %v6877
        %6942 = vmatprep.subr.bf16.mxu0 0
        %6943 = vmatpush1.bf16.msra.mxu0 %v6878
        %6944 = vmatprep.subr.bf16.mxu0 0
        %6945 = vmatpush1.bf16.msra.mxu0 %v6879
        %6946 = vmatprep.subr.bf16.mxu0 0
        %6947 = vmatpush1.bf16.msra.mxu0 %v6880
        %6948 = vmatprep.subr.bf16.mxu0 0
        %6949 = vmatpush1.bf16.msra.mxu0 %v6881
        %6950 = vmatprep.subr.bf16.mxu0 0
        %6951 = vmatpush1.bf16.msra.mxu0 %v6882
        %6952 = vmatprep.subr.bf16.mxu0 0
        %6953 = vmatpush1.bf16.msra.mxu0 %v6883
        %6954 = vmatprep.subr.bf16.mxu0 0
        %6955 = vmatpush1.bf16.msra.mxu0 %v6884
        %6956 = vmatprep.subr.bf16.mxu0 0
        %6957 = vmatpush1.bf16.msra.mxu0 %v6885
        %6958 = vmatprep.mubr.bf16.mxu0 %v5501
        %6959 = vmatmul.mubr.bf16.gmra.mrb[0].mxu0 %v5500
        %v6960 = vpop.f32.mrb[0].mxu0
        %v6961 = vadd.f32 %v6921, %v6960
        %v6962 = vpop.f32.mrb[0].mxu0
        %v6963 = vpop.f32.mrb[0].mxu0
        %v6964 = vpop.f32.mrb[0].mxu0
        %6965 = vdwg.mxu0
        %v6966 = vpack.c.bf16 %v6961, %v6961
        %s6967 = scalar_lea.vmem %s8, 32
        %v6968 = vld [vmem:[%s6967] sm:$0xf]
        %v6969 = vld [vmem:[%s6967 + $0x4] sm:$0xf]
        %v6970 = vld [vmem:[%s6967 + $0x8] sm:$0xf]
        %v6971 = vld [vmem:[%s6967 + $0xc] sm:$0xf]
        %v6976 = vunpack.c.l.b16 %v6968
        %v6977 = vunpack.c.l.b16 %v6969
        %v6978 = vunpack.c.l.b16 %v6970
        %v6979 = vunpack.c.l.b16 %v6971
        %v6980 = vpack.c.b16 %v6977, %v6976
        %v6981 = vpack.c.b16 %v6979, %v6978
        %v6985 = vsel %vm1971, %v6966, 0
        %6987 = vmatprep.subr.bf16.mxu0 0
        %6988 = vmatpush1.bf16.msra.mxu0 %v6980
        %6989 = vmatprep.subr.bf16.mxu0 0
        %6990 = vmatpush1.bf16.msra.mxu0 %v6981
        %6991 = vmatprep.subr.bf16.mxu0 0
        %6992 = vmatpush1.bf16.msra.mxu0 0
        %6993 = vmatprep.subr.bf16.mxu0 0
        %6994 = vmatpush1.bf16.msra.mxu0 0
        %6995 = vmatprep.subr.bf16.mxu0 0
        %6996 = vmatpush1.bf16.msra.mxu0 0
        %6997 = vmatprep.subr.bf16.mxu0 0
        %6998 = vmatpush1.bf16.msra.mxu0 0
        %6999 = vmatprep.subr.bf16.mxu0 0
        %7000 = vmatpush1.bf16.msra.mxu0 0
        %7001 = vmatprep.subr.bf16.mxu0 0
        %7002 = vmatpush1.bf16.msra.mxu0 0
        %7003 = vmatprep.subr.bf16.mxu0 0
        %7004 = vmatpush1.bf16.msra.mxu0 0
        %7005 = vmatprep.subr.bf16.mxu0 0
        %7006 = vmatpush1.bf16.msra.mxu0 0
        %7007 = vmatprep.subr.bf16.mxu0 0
        %7008 = vmatpush1.bf16.msra.mxu0 0
        %7009 = vmatprep.subr.bf16.mxu0 0
        %7010 = vmatpush1.bf16.msra.mxu0 0
        %7011 = vmatprep.subr.bf16.mxu0 0
        %7012 = vmatpush1.bf16.msra.mxu0 0
        %7013 = vmatprep.subr.bf16.mxu0 0
        %7014 = vmatpush1.bf16.msra.mxu0 0
        %7015 = vmatprep.subr.bf16.mxu0 0
        %7016 = vmatpush1.bf16.msra.mxu0 0
        %7017 = vmatprep.subr.bf16.mxu0 0
        %7018 = vmatpush1.bf16.msra.mxu0 0
        %7019 = vmatprep.mubr.bf16.mxu0 0
        %7020 = vmatmul.mubr.bf16.gmra.mrb[0].mxu0 %v6985
        %v7021 = vpop.f32.mrb[0].mxu0
        %v7022 = vadd.f32 0.0, %v7021
        %v7023 = vpop.f32.mrb[0].mxu0
        %v7024 = vpop.f32.mrb[0].mxu0
        %v7025 = vpop.f32.mrb[0].mxu0
        %7026 = vdwg.mxu0
        %v7027 = vadd.f32 %v6461, %v7022
        %7028 = vmatprep.subr.bf16.mxu0 0
        %7029 = vmatpush1.bf16.msra.mxu0 %v6854
        %7030 = vmatprep.subr.bf16.mxu0 0
        %7031 = vmatpush1.bf16.msra.mxu0 %v6855
        %7032 = vmatprep.subr.bf16.mxu0 0
        %7033 = vmatpush1.bf16.msra.mxu0 %v6856
        %7034 = vmatprep.subr.bf16.mxu0 0
        %7035 = vmatpush1.bf16.msra.mxu0 %v6857
        %7036 = vmatprep.subr.bf16.mxu0 0
        %7037 = vmatpush1.bf16.msra.mxu0 %v6858
        %7038 = vmatprep.subr.bf16.mxu0 0
        %7039 = vmatpush1.bf16.msra.mxu0 %v6859
        %7040 = vmatprep.subr.bf16.mxu0 0
        %7041 = vmatpush1.bf16.msra.mxu0 %v6860
        %7042 = vmatprep.subr.bf16.mxu0 0
        %7043 = vmatpush1.bf16.msra.mxu0 %v6861
        %7044 = vmatprep.subr.bf16.mxu0 0
        %7045 = vmatpush1.bf16.msra.mxu0 0
        %7046 = vmatprep.subr.bf16.mxu0 0
        %7047 = vmatpush1.bf16.msra.mxu0 0
        %7048 = vmatprep.subr.bf16.mxu0 0
        %7049 = vmatpush1.bf16.msra.mxu0 0
        %7050 = vmatprep.subr.bf16.mxu0 0
        %7051 = vmatpush1.bf16.msra.mxu0 0
        %7052 = vmatprep.subr.bf16.mxu0 0
        %7053 = vmatpush1.bf16.msra.mxu0 0
        %7054 = vmatprep.subr.bf16.mxu0 0
        %7055 = vmatpush1.bf16.msra.mxu0 0
        %7056 = vmatprep.subr.bf16.mxu0 0
        %7057 = vmatpush1.bf16.msra.mxu0 0
        %7058 = vmatprep.subr.bf16.mxu0 0
        %7059 = vmatpush1.bf16.msra.mxu0 0
        %7060 = vmatprep.mubr.bf16.mxu0 0
        %7061 = vmatmul.mubr.bf16.gmra.mrb[0].mxu0 %v5639
        %v7062 = vpop.f32.mrb[0].mxu0
        %v7063 = vadd.f32 0.0, %v7062
        %v7064 = vpop.f32.mrb[0].mxu0
        %v7065 = vpop.f32.mrb[0].mxu0
        %v7066 = vadd.f32 0.0, %v7065
        %v7067 = vpop.f32.mrb[0].mxu0
        %7068 = vmatprep.mubr.bf16.mxu0 0
        %7069 = vmatmul.mubr.bf16.gmra.mrb[0].mxu0 %v5640
        %v7070 = vpop.f32.mrb[0].mxu0
        %v7071 = vadd.f32 0.0, %v7070
        %v7072 = vpop.f32.mrb[0].mxu0
        %v7073 = vpop.f32.mrb[0].mxu0
        %v7074 = vadd.f32 0.0, %v7073
        %v7075 = vpop.f32.mrb[0].mxu0
        %7076 = vmatprep.mubr.bf16.mxu0 0
        %7077 = vmatmul.mubr.bf16.gmra.mrb[0].mxu0 %v5641
        %v7078 = vpop.f32.mrb[0].mxu0
        %v7079 = vadd.f32 0.0, %v7078
        %v7080 = vpop.f32.mrb[0].mxu0
        %v7081 = vpop.f32.mrb[0].mxu0
        %v7082 = vadd.f32 0.0, %v7081
        %v7083 = vpop.f32.mrb[0].mxu0
        %7084 = vmatprep.mubr.bf16.mxu0 0
        %7085 = vmatmul.mubr.bf16.gmra.mrb[0].mxu0 %v5642
        %v7086 = vpop.f32.mrb[0].mxu0
        %v7087 = vadd.f32 0.0, %v7086
        %v7088 = vpop.f32.mrb[0].mxu0
        %v7089 = vpop.f32.mrb[0].mxu0
        %v7090 = vadd.f32 0.0, %v7089
        %v7091 = vpop.f32.mrb[0].mxu0
        %7092 = vmatprep.mubr.bf16.mxu0 0
        %7093 = vmatmul.mubr.bf16.gmra.mrb[0].mxu0 %v5643
        %v7094 = vpop.f32.mrb[0].mxu0
        %v7095 = vadd.f32 0.0, %v7094
        %v7096 = vpop.f32.mrb[0].mxu0
        %v7097 = vpop.f32.mrb[0].mxu0
        %v7098 = vadd.f32 0.0, %v7097
        %v7099 = vpop.f32.mrb[0].mxu0
        %7100 = vmatprep.mubr.bf16.mxu0 0
        %7101 = vmatmul.mubr.bf16.gmra.mrb[0].mxu0 %v5644
        %v7102 = vpop.f32.mrb[0].mxu0
        %v7103 = vadd.f32 0.0, %v7102
        %v7104 = vpop.f32.mrb[0].mxu0
        %v7105 = vpop.f32.mrb[0].mxu0
        %v7106 = vadd.f32 0.0, %v7105
        %v7107 = vpop.f32.mrb[0].mxu0
        %7108 = vmatprep.mubr.bf16.mxu0 0
        %7109 = vmatmul.mubr.bf16.gmra.mrb[0].mxu0 %v5645
        %v7110 = vpop.f32.mrb[0].mxu0
        %v7111 = vadd.f32 0.0, %v7110
        %v7112 = vpop.f32.mrb[0].mxu0
        %v7113 = vpop.f32.mrb[0].mxu0
        %v7114 = vadd.f32 0.0, %v7113
        %v7115 = vpop.f32.mrb[0].mxu0
        %7116 = vmatprep.mubr.bf16.mxu0 0
        %7117 = vmatmul.mubr.bf16.gmra.mrb[0].mxu0 %v5646
        %v7118 = vpop.f32.mrb[0].mxu0
        %v7119 = vadd.f32 0.0, %v7118
        %v7120 = vpop.f32.mrb[0].mxu0
        %v7121 = vpop.f32.mrb[0].mxu0
        %v7122 = vadd.f32 0.0, %v7121
        %v7123 = vpop.f32.mrb[0].mxu0
        %7124 = vdwg.mxu0
        %7125 = vmatprep.subr.bf16.mxu0 0
        %7126 = vmatpush1.bf16.msra.mxu0 %v6862
        %7127 = vmatprep.subr.bf16.mxu0 0
        %7128 = vmatpush1.bf16.msra.mxu0 %v6863
        %7129 = vmatprep.subr.bf16.mxu0 0
        %7130 = vmatpush1.bf16.msra.mxu0 %v6864
        %7131 = vmatprep.subr.bf16.mxu0 0
        %7132 = vmatpush1.bf16.msra.mxu0 %v6865
        %7133 = vmatprep.subr.bf16.mxu0 0
        %7134 = vmatpush1.bf16.msra.mxu0 %v6866
        %7135 = vmatprep.subr.bf16.mxu0 0
        %7136 = vmatpush1.bf16.msra.mxu0 %v6867
        %7137 = vmatprep.subr.bf16.mxu0 0
        %7138 = vmatpush1.bf16.msra.mxu0 %v6868
        %7139 = vmatprep.subr.bf16.mxu0 0
        %7140 = vmatpush1.bf16.msra.mxu0 %v6869
        %7141 = vmatprep.subr.bf16.mxu0 0
        %7142 = vmatpush1.bf16.msra.mxu0 0
        %7143 = vmatprep.subr.bf16.mxu0 0
        %7144 = vmatpush1.bf16.msra.mxu0 0
        %7145 = vmatprep.subr.bf16.mxu0 0
        %7146 = vmatpush1.bf16.msra.mxu0 0
        %7147 = vmatprep.subr.bf16.mxu0 0
        %7148 = vmatpush1.bf16.msra.mxu0 0
        %7149 = vmatprep.subr.bf16.mxu0 0
        %7150 = vmatpush1.bf16.msra.mxu0 0
        %7151 = vmatprep.subr.bf16.mxu0 0
        %7152 = vmatpush1.bf16.msra.mxu0 0
        %7153 = vmatprep.subr.bf16.mxu0 0
        %7154 = vmatpush1.bf16.msra.mxu0 0
        %7155 = vmatprep.subr.bf16.mxu0 0
        %7156 = vmatpush1.bf16.msra.mxu0 0
        %7157 = vmatprep.mubr.bf16.mxu0 0
        %7158 = vmatmul.mubr.bf16.gmra.mrb[0].mxu0 %v5801
        %v7159 = vpop.f32.mrb[0].mxu0
        %v7160 = vadd.f32 0.0, %v7159
        %v7161 = vpop.f32.mrb[0].mxu0
        %v7162 = vpop.f32.mrb[0].mxu0
        %v7163 = vadd.f32 0.0, %v7162
        %v7164 = vpop.f32.mrb[0].mxu0
        %7165 = vmatprep.mubr.bf16.mxu0 0
        %7166 = vmatmul.mubr.bf16.gmra.mrb[0].mxu0 %v5802
        %v7167 = vpop.f32.mrb[0].mxu0
        %v7168 = vadd.f32 0.0, %v7167
        %v7169 = vpop.f32.mrb[0].mxu0
        %v7170 = vpop.f32.mrb[0].mxu0
        %v7171 = vadd.f32 0.0, %v7170
        %v7172 = vpop.f32.mrb[0].mxu0
        %7173 = vmatprep.mubr.bf16.mxu0 0
        %7174 = vmatmul.mubr.bf16.gmra.mrb[0].mxu0 %v5803
        %v7175 = vpop.f32.mrb[0].mxu0
        %v7176 = vadd.f32 0.0, %v7175
        %v7177 = vpop.f32.mrb[0].mxu0
        %v7178 = vpop.f32.mrb[0].mxu0
        %v7179 = vadd.f32 0.0, %v7178
        %v7180 = vpop.f32.mrb[0].mxu0
        %7181 = vmatprep.mubr.bf16.mxu0 0
        %7182 = vmatmul.mubr.bf16.gmra.mrb[0].mxu0 %v5804
        %v7183 = vpop.f32.mrb[0].mxu0
        %v7184 = vadd.f32 0.0, %v7183
        %v7185 = vpop.f32.mrb[0].mxu0
        %v7186 = vpop.f32.mrb[0].mxu0
        %v7187 = vadd.f32 0.0, %v7186
        %v7188 = vpop.f32.mrb[0].mxu0
        %7189 = vmatprep.mubr.bf16.mxu0 0
        %7190 = vmatmul.mubr.bf16.gmra.mrb[0].mxu0 %v5805
        %v7191 = vpop.f32.mrb[0].mxu0
        %v7192 = vadd.f32 0.0, %v7191
        %v7193 = vpop.f32.mrb[0].mxu0
        %v7194 = vpop.f32.mrb[0].mxu0
        %v7195 = vadd.f32 0.0, %v7194
        %v7196 = vpop.f32.mrb[0].mxu0
        %7197 = vmatprep.mubr.bf16.mxu0 0
        %7198 = vmatmul.mubr.bf16.gmra.mrb[0].mxu0 %v5806
        %v7199 = vpop.f32.mrb[0].mxu0
        %v7200 = vadd.f32 0.0, %v7199
        %v7201 = vpop.f32.mrb[0].mxu0
        %v7202 = vpop.f32.mrb[0].mxu0
        %v7203 = vadd.f32 0.0, %v7202
        %v7204 = vpop.f32.mrb[0].mxu0
        %7205 = vmatprep.mubr.bf16.mxu0 0
        %7206 = vmatmul.mubr.bf16.gmra.mrb[0].mxu0 %v5807
        %v7207 = vpop.f32.mrb[0].mxu0
        %v7208 = vadd.f32 0.0, %v7207
        %v7209 = vpop.f32.mrb[0].mxu0
        %v7210 = vpop.f32.mrb[0].mxu0
        %v7211 = vadd.f32 0.0, %v7210
        %v7212 = vpop.f32.mrb[0].mxu0
        %7213 = vmatprep.mubr.bf16.mxu0 0
        %7214 = vmatmul.mubr.bf16.gmra.mrb[0].mxu0 %v5808
        %v7215 = vpop.f32.mrb[0].mxu0
        %v7216 = vadd.f32 0.0, %v7215
        %v7217 = vpop.f32.mrb[0].mxu0
        %v7218 = vpop.f32.mrb[0].mxu0
        %v7219 = vadd.f32 0.0, %v7218
        %v7220 = vpop.f32.mrb[0].mxu0
        %7221 = vdwg.mxu0
        %7222 = vmatprep.subr.bf16.mxu0 0
        %7223 = vmatpush1.bf16.msra.mxu0 %v6870
        %7224 = vmatprep.subr.bf16.mxu0 0
        %7225 = vmatpush1.bf16.msra.mxu0 %v6871
        %7226 = vmatprep.subr.bf16.mxu0 0
        %7227 = vmatpush1.bf16.msra.mxu0 %v6872
        %7228 = vmatprep.subr.bf16.mxu0 0
        %7229 = vmatpush1.bf16.msra.mxu0 %v6873
        %7230 = vmatprep.subr.bf16.mxu0 0
        %7231 = vmatpush1.bf16.msra.mxu0 %v6874
        %7232 = vmatprep.subr.bf16.mxu0 0
        %7233 = vmatpush1.bf16.msra.mxu0 %v6875
        %7234 = vmatprep.subr.bf16.mxu0 0
        %7235 = vmatpush1.bf16.msra.mxu0 %v6876
        %7236 = vmatprep.subr.bf16.mxu0 0
        %7237 = vmatpush1.bf16.msra.mxu0 %v6877
        %7238 = vmatprep.subr.bf16.mxu0 0
        %7239 = vmatpush1.bf16.msra.mxu0 0
        %7240 = vmatprep.subr.bf16.mxu0 0
        %7241 = vmatpush1.bf16.msra.mxu0 0
        %7242 = vmatprep.subr.bf16.mxu0 0
        %7243 = vmatpush1.bf16.msra.mxu0 0
        %7244 = vmatprep.subr.bf16.mxu0 0
        %7245 = vmatpush1.bf16.msra.mxu0 0
        %7246 = vmatprep.subr.bf16.mxu0 0
        %7247 = vmatpush1.bf16.msra.mxu0 0
        %7248 = vmatprep.subr.bf16.mxu0 0
        %7249 = vmatpush1.bf16.msra.mxu0 0
        %7250 = vmatprep.subr.bf16.mxu0 0
        %7251 = vmatpush1.bf16.msra.mxu0 0
        %7252 = vmatprep.subr.bf16.mxu0 0
        %7253 = vmatpush1.bf16.msra.mxu0 0
        %7254 = vmatprep.mubr.bf16.mxu0 0
        %7255 = vmatmul.mubr.bf16.gmra.mrb[0].mxu0 %v5963
        %v7256 = vpop.f32.mrb[0].mxu0
        %v7257 = vadd.f32 0.0, %v7256
        %v7258 = vpop.f32.mrb[0].mxu0
        %v7259 = vpop.f32.mrb[0].mxu0
        %v7260 = vadd.f32 0.0, %v7259
        %v7261 = vpop.f32.mrb[0].mxu0
        %7262 = vmatprep.mubr.bf16.mxu0 0
        %7263 = vmatmul.mubr.bf16.gmra.mrb[0].mxu0 %v5964
        %v7264 = vpop.f32.mrb[0].mxu0
        %v7265 = vadd.f32 0.0, %v7264
        %v7266 = vpop.f32.mrb[0].mxu0
        %v7267 = vpop.f32.mrb[0].mxu0
        %v7268 = vadd.f32 0.0, %v7267
        %v7269 = vpop.f32.mrb[0].mxu0
        %7270 = vmatprep.mubr.bf16.mxu0 0
        %7271 = vmatmul.mubr.bf16.gmra.mrb[0].mxu0 %v5965
        %v7272 = vpop.f32.mrb[0].mxu0
        %v7273 = vadd.f32 0.0, %v7272
        %v7274 = vpop.f32.mrb[0].mxu0
        %v7275 = vpop.f32.mrb[0].mxu0
        %v7276 = vadd.f32 0.0, %v7275
        %v7277 = vpop.f32.mrb[0].mxu0
        %7278 = vmatprep.mubr.bf16.mxu0 0
        %7279 = vmatmul.mubr.bf16.gmra.mrb[0].mxu0 %v5966
        %v7280 = vpop.f32.mrb[0].mxu0
        %v7281 = vadd.f32 0.0, %v7280
        %v7282 = vpop.f32.mrb[0].mxu0
        %v7283 = vpop.f32.mrb[0].mxu0
        %v7284 = vadd.f32 0.0, %v7283
        %v7285 = vpop.f32.mrb[0].mxu0
        %7286 = vmatprep.mubr.bf16.mxu0 0
        %7287 = vmatmul.mubr.bf16.gmra.mrb[0].mxu0 %v5967
        %v7288 = vpop.f32.mrb[0].mxu0
        %v7289 = vadd.f32 0.0, %v7288
        %v7290 = vpop.f32.mrb[0].mxu0
        %v7291 = vpop.f32.mrb[0].mxu0
        %v7292 = vadd.f32 0.0, %v7291
        %v7293 = vpop.f32.mrb[0].mxu0
        %7294 = vmatprep.mubr.bf16.mxu0 0
        %7295 = vmatmul.mubr.bf16.gmra.mrb[0].mxu0 %v5968
        %v7296 = vpop.f32.mrb[0].mxu0
        %v7297 = vadd.f32 0.0, %v7296
        %v7298 = vpop.f32.mrb[0].mxu0
        %v7299 = vpop.f32.mrb[0].mxu0
        %v7300 = vadd.f32 0.0, %v7299
        %v7301 = vpop.f32.mrb[0].mxu0
        %7302 = vmatprep.mubr.bf16.mxu0 0
        %7303 = vmatmul.mubr.bf16.gmra.mrb[0].mxu0 %v5969
        %v7304 = vpop.f32.mrb[0].mxu0
        %v7305 = vadd.f32 0.0, %v7304
        %v7306 = vpop.f32.mrb[0].mxu0
        %v7307 = vpop.f32.mrb[0].mxu0
        %v7308 = vadd.f32 0.0, %v7307
        %v7309 = vpop.f32.mrb[0].mxu0
        %7310 = vmatprep.mubr.bf16.mxu0 0
        %7311 = vmatmul.mubr.bf16.gmra.mrb[0].mxu0 %v5970
        %v7312 = vpop.f32.mrb[0].mxu0
        %v7313 = vadd.f32 0.0, %v7312
        %v7314 = vpop.f32.mrb[0].mxu0
        %v7315 = vpop.f32.mrb[0].mxu0
        %v7316 = vadd.f32 0.0, %v7315
        %v7317 = vpop.f32.mrb[0].mxu0
        %7318 = vdwg.mxu0
        %7319 = vmatprep.subr.bf16.mxu0 0
        %7320 = vmatpush1.bf16.msra.mxu0 %v6878
        %7321 = vmatprep.subr.bf16.mxu0 0
        %7322 = vmatpush1.bf16.msra.mxu0 %v6879
        %7323 = vmatprep.subr.bf16.mxu0 0
        %7324 = vmatpush1.bf16.msra.mxu0 %v6880
        %7325 = vmatprep.subr.bf16.mxu0 0
        %7326 = vmatpush1.bf16.msra.mxu0 %v6881
        %7327 = vmatprep.subr.bf16.mxu0 0
        %7328 = vmatpush1.bf16.msra.mxu0 %v6882
        %7329 = vmatprep.subr.bf16.mxu0 0
        %7330 = vmatpush1.bf16.msra.mxu0 %v6883
        %7331 = vmatprep.subr.bf16.mxu0 0
        %7332 = vmatpush1.bf16.msra.mxu0 %v6884
        %7333 = vmatprep.subr.bf16.mxu0 0
        %7334 = vmatpush1.bf16.msra.mxu0 %v6885
        %7335 = vmatprep.subr.bf16.mxu0 0
        %7336 = vmatpush1.bf16.msra.mxu0 0
        %7337 = vmatprep.subr.bf16.mxu0 0
        %7338 = vmatpush1.bf16.msra.mxu0 0
        %7339 = vmatprep.subr.bf16.mxu0 0
        %7340 = vmatpush1.bf16.msra.mxu0 0
        %7341 = vmatprep.subr.bf16.mxu0 0
        %7342 = vmatpush1.bf16.msra.mxu0 0
        %7343 = vmatprep.subr.bf16.mxu0 0
        %7344 = vmatpush1.bf16.msra.mxu0 0
        %7345 = vmatprep.subr.bf16.mxu0 0
        %7346 = vmatpush1.bf16.msra.mxu0 0
        %7347 = vmatprep.subr.bf16.mxu0 0
        %7348 = vmatpush1.bf16.msra.mxu0 0
        %7349 = vmatprep.subr.bf16.mxu0 0
        %7350 = vmatpush1.bf16.msra.mxu0 0
        %7351 = vmatprep.mubr.bf16.mxu0 0
        %7352 = vmatmul.mubr.bf16.gmra.mrb[0].mxu0 %v6125
        %v7353 = vpop.f32.mrb[0].mxu0
        %v7354 = vadd.f32 0.0, %v7353
        %v7355 = vpop.f32.mrb[0].mxu0
        %v7356 = vpop.f32.mrb[0].mxu0
        %v7357 = vadd.f32 0.0, %v7356
        %v7358 = vpop.f32.mrb[0].mxu0
        %7359 = vmatprep.mubr.bf16.mxu0 0
        %7360 = vmatmul.mubr.bf16.gmra.mrb[0].mxu0 %v6126
        %v7361 = vpop.f32.mrb[0].mxu0
        %v7362 = vadd.f32 0.0, %v7361
        %v7363 = vpop.f32.mrb[0].mxu0
        %v7364 = vpop.f32.mrb[0].mxu0
        %v7365 = vadd.f32 0.0, %v7364
        %v7366 = vpop.f32.mrb[0].mxu0
        %7367 = vmatprep.mubr.bf16.mxu0 0
        %7368 = vmatmul.mubr.bf16.gmra.mrb[0].mxu0 %v6127
        %v7369 = vpop.f32.mrb[0].mxu0
        %v7370 = vadd.f32 0.0, %v7369
        %v7371 = vpop.f32.mrb[0].mxu0
        %v7372 = vpop.f32.mrb[0].mxu0
        %v7373 = vadd.f32 0.0, %v7372
        %v7374 = vpop.f32.mrb[0].mxu0
        %7375 = vmatprep.mubr.bf16.mxu0 0
        %7376 = vmatmul.mubr.bf16.gmra.mrb[0].mxu0 %v6128
        %v7377 = vpop.f32.mrb[0].mxu0
        %v7378 = vadd.f32 0.0, %v7377
        %v7379 = vpop.f32.mrb[0].mxu0
        %v7380 = vpop.f32.mrb[0].mxu0
        %v7381 = vadd.f32 0.0, %v7380
        %v7382 = vpop.f32.mrb[0].mxu0
        %7383 = vmatprep.mubr.bf16.mxu0 0
        %7384 = vmatmul.mubr.bf16.gmra.mrb[0].mxu0 %v6129
        %v7385 = vpop.f32.mrb[0].mxu0
        %v7386 = vadd.f32 0.0, %v7385
        %v7387 = vpop.f32.mrb[0].mxu0
        %v7388 = vpop.f32.mrb[0].mxu0
        %v7389 = vadd.f32 0.0, %v7388
        %v7390 = vpop.f32.mrb[0].mxu0
        %7391 = vmatprep.mubr.bf16.mxu0 0
        %7392 = vmatmul.mubr.bf16.gmra.mrb[0].mxu0 %v6130
        %v7393 = vpop.f32.mrb[0].mxu0
        %v7394 = vadd.f32 0.0, %v7393
        %v7395 = vpop.f32.mrb[0].mxu0
        %v7396 = vpop.f32.mrb[0].mxu0
        %v7397 = vadd.f32 0.0, %v7396
        %v7398 = vpop.f32.mrb[0].mxu0
        %7399 = vmatprep.mubr.bf16.mxu0 0
        %7400 = vmatmul.mubr.bf16.gmra.mrb[0].mxu0 %v6131
        %v7401 = vpop.f32.mrb[0].mxu0
        %v7402 = vadd.f32 0.0, %v7401
        %v7403 = vpop.f32.mrb[0].mxu0
        %v7404 = vpop.f32.mrb[0].mxu0
        %v7405 = vadd.f32 0.0, %v7404
        %v7406 = vpop.f32.mrb[0].mxu0
        %7407 = vmatprep.mubr.bf16.mxu0 0
        %7408 = vmatmul.mubr.bf16.gmra.mrb[0].mxu0 %v6132
        %v7409 = vpop.f32.mrb[0].mxu0
        %v7410 = vadd.f32 0.0, %v7409
        %v7411 = vpop.f32.mrb[0].mxu0
        %v7412 = vpop.f32.mrb[0].mxu0
        %v7413 = vadd.f32 0.0, %v7412
        %v7414 = vpop.f32.mrb[0].mxu0
        %7415 = vdwg.mxu0
        %v7416 = vpack.c.bf16 %v7066, %v7063
        %v7417 = vpack.c.bf16 %v7074, %v7071
        %v7418 = vpack.c.bf16 %v7082, %v7079
        %v7419 = vpack.c.bf16 %v7090, %v7087
        %v7420 = vpack.c.bf16 %v7098, %v7095
        %v7421 = vpack.c.bf16 %v7106, %v7103
        %v7422 = vpack.c.bf16 %v7114, %v7111
        %v7423 = vpack.c.bf16 %v7122, %v7119
        %v7424 = vpack.c.bf16 %v7163, %v7160
        %v7425 = vpack.c.bf16 %v7171, %v7168
        %v7426 = vpack.c.bf16 %v7179, %v7176
        %v7427 = vpack.c.bf16 %v7187, %v7184
        %v7428 = vpack.c.bf16 %v7195, %v7192
        %v7429 = vpack.c.bf16 %v7203, %v7200
        %v7430 = vpack.c.bf16 %v7211, %v7208
        %v7431 = vpack.c.bf16 %v7219, %v7216
        %v7432 = vpack.c.bf16 %v7260, %v7257
        %v7433 = vpack.c.bf16 %v7268, %v7265
        %v7434 = vpack.c.bf16 %v7276, %v7273
        %v7435 = vpack.c.bf16 %v7284, %v7281
        %v7436 = vpack.c.bf16 %v7292, %v7289
        %v7437 = vpack.c.bf16 %v7300, %v7297
        %v7438 = vpack.c.bf16 %v7308, %v7305
        %v7439 = vpack.c.bf16 %v7316, %v7313
        %v7440 = vpack.c.bf16 %v7357, %v7354
        %v7441 = vpack.c.bf16 %v7365, %v7362
        %v7442 = vpack.c.bf16 %v7373, %v7370
        %v7443 = vpack.c.bf16 %v7381, %v7378
        %v7444 = vpack.c.bf16 %v7389, %v7386
        %v7445 = vpack.c.bf16 %v7397, %v7394
        %v7446 = vpack.c.bf16 %v7405, %v7402
        %v7447 = vpack.c.bf16 %v7413, %v7410
        %7448 = vmatprep.subr.bf16.mxu0 0
        %7449 = vmatpush1.bf16.msra.mxu0 %v7416
        %7450 = vmatprep.subr.bf16.mxu0 0
        %7451 = vmatpush1.bf16.msra.mxu0 %v7417
        %7452 = vmatprep.subr.bf16.mxu0 0
        %7453 = vmatpush1.bf16.msra.mxu0 %v7418
        %7454 = vmatprep.subr.bf16.mxu0 0
        %7455 = vmatpush1.bf16.msra.mxu0 %v7419
        %7456 = vmatprep.subr.bf16.mxu0 0
        %7457 = vmatpush1.bf16.msra.mxu0 %v7420
        %7458 = vmatprep.subr.bf16.mxu0 0
        %7459 = vmatpush1.bf16.msra.mxu0 %v7421
        %7460 = vmatprep.subr.bf16.mxu0 0
        %7461 = vmatpush1.bf16.msra.mxu0 %v7422
        %7462 = vmatprep.subr.bf16.mxu0 0
        %7463 = vmatpush1.bf16.msra.mxu0 %v7423
        %7464 = vmatprep.subr.bf16.mxu0 0
        %7465 = vmatpush1.bf16.msra.mxu0 %v7424
        %7466 = vmatprep.subr.bf16.mxu0 0
        %7467 = vmatpush1.bf16.msra.mxu0 %v7425
        %7468 = vmatprep.subr.bf16.mxu0 0
        %7469 = vmatpush1.bf16.msra.mxu0 %v7426
        %7470 = vmatprep.subr.bf16.mxu0 0
        %7471 = vmatpush1.bf16.msra.mxu0 %v7427
        %7472 = vmatprep.subr.bf16.mxu0 0
        %7473 = vmatpush1.bf16.msra.mxu0 %v7428
        %7474 = vmatprep.subr.bf16.mxu0 0
        %7475 = vmatpush1.bf16.msra.mxu0 %v7429
        %7476 = vmatprep.subr.bf16.mxu0 0
        %7477 = vmatpush1.bf16.msra.mxu0 %v7430
        %7478 = vmatprep.subr.bf16.mxu0 0
        %7479 = vmatpush1.bf16.msra.mxu0 %v7431
        %7480 = vmatprep.mubr.bf16.mxu0 %v5499
        %7481 = vmatmul.mubr.bf16.gmra.mrb[0].mxu0 %v5498
        %v7482 = vpop.f32.mrb[0].mxu0
        %v7483 = vadd.f32 0.0, %v7482
        %v7484 = vpop.f32.mrb[0].mxu0
        %v7485 = vpop.f32.mrb[0].mxu0
        %v7486 = vpop.f32.mrb[0].mxu0
        %7487 = vdwg.mxu0
        %7488 = vmatprep.subr.bf16.mxu0 0
        %7489 = vmatpush1.bf16.msra.mxu0 %v7432
        %7490 = vmatprep.subr.bf16.mxu0 0
        %7491 = vmatpush1.bf16.msra.mxu0 %v7433
        %7492 = vmatprep.subr.bf16.mxu0 0
        %7493 = vmatpush1.bf16.msra.mxu0 %v7434
        %7494 = vmatprep.subr.bf16.mxu0 0
        %7495 = vmatpush1.bf16.msra.mxu0 %v7435
        %7496 = vmatprep.subr.bf16.mxu0 0
        %7497 = vmatpush1.bf16.msra.mxu0 %v7436
        %7498 = vmatprep.subr.bf16.mxu0 0
        %7499 = vmatpush1.bf16.msra.mxu0 %v7437
        %7500 = vmatprep.subr.bf16.mxu0 0
        %7501 = vmatpush1.bf16.msra.mxu0 %v7438
        %7502 = vmatprep.subr.bf16.mxu0 0
        %7503 = vmatpush1.bf16.msra.mxu0 %v7439
        %7504 = vmatprep.subr.bf16.mxu0 0
        %7505 = vmatpush1.bf16.msra.mxu0 %v7440
        %7506 = vmatprep.subr.bf16.mxu0 0
        %7507 = vmatpush1.bf16.msra.mxu0 %v7441
        %7508 = vmatprep.subr.bf16.mxu0 0
        %7509 = vmatpush1.bf16.msra.mxu0 %v7442
        %7510 = vmatprep.subr.bf16.mxu0 0
        %7511 = vmatpush1.bf16.msra.mxu0 %v7443
        %7512 = vmatprep.subr.bf16.mxu0 0
        %7513 = vmatpush1.bf16.msra.mxu0 %v7444
        %7514 = vmatprep.subr.bf16.mxu0 0
        %7515 = vmatpush1.bf16.msra.mxu0 %v7445
        %7516 = vmatprep.subr.bf16.mxu0 0
        %7517 = vmatpush1.bf16.msra.mxu0 %v7446
        %7518 = vmatprep.subr.bf16.mxu0 0
        %7519 = vmatpush1.bf16.msra.mxu0 %v7447
        %7520 = vmatprep.mubr.bf16.mxu0 %v5501
        %7521 = vmatmul.mubr.bf16.gmra.mrb[0].mxu0 %v5500
        %v7522 = vpop.f32.mrb[0].mxu0
        %v7523 = vadd.f32 %v7483, %v7522
        %v7524 = vpop.f32.mrb[0].mxu0
        %v7525 = vpop.f32.mrb[0].mxu0
        %v7526 = vpop.f32.mrb[0].mxu0
        %7527 = vdwg.mxu0
        %v7528 = vpack.c.bf16 %v7523, %v7523
        %s7529 = scalar_lea.vmem %s8, 48
        %v7530 = vld [vmem:[%s7529] sm:$0xf]
        %v7531 = vld [vmem:[%s7529 + $0x4] sm:$0xf]
        %v7532 = vld [vmem:[%s7529 + $0x8] sm:$0xf]
        %v7533 = vld [vmem:[%s7529 + $0xc] sm:$0xf]
        %v7538 = vunpack.c.l.b16 %v7530
        %v7539 = vunpack.c.l.b16 %v7531
        %v7540 = vunpack.c.l.b16 %v7532
        %v7541 = vunpack.c.l.b16 %v7533
        %v7542 = vpack.c.b16 %v7539, %v7538
        %v7543 = vpack.c.b16 %v7541, %v7540
        %v7547 = vsel %vm1971, %v7528, 0
        %7549 = vmatprep.subr.bf16.mxu0 0
        %7550 = vmatpush1.bf16.msra.mxu0 %v7542
        %7551 = vmatprep.subr.bf16.mxu0 0
        %7552 = vmatpush1.bf16.msra.mxu0 %v7543
        %7553 = vmatprep.subr.bf16.mxu0 0
        %7554 = vmatpush1.bf16.msra.mxu0 0
        %7555 = vmatprep.subr.bf16.mxu0 0
        %7556 = vmatpush1.bf16.msra.mxu0 0
        %7557 = vmatprep.subr.bf16.mxu0 0
        %7558 = vmatpush1.bf16.msra.mxu0 0
        %7559 = vmatprep.subr.bf16.mxu0 0
        %7560 = vmatpush1.bf16.msra.mxu0 0
        %7561 = vmatprep.subr.bf16.mxu0 0
        %7562 = vmatpush1.bf16.msra.mxu0 0
        %7563 = vmatprep.subr.bf16.mxu0 0
        %7564 = vmatpush1.bf16.msra.mxu0 0
        %7565 = vmatprep.subr.bf16.mxu0 0
        %7566 = vmatpush1.bf16.msra.mxu0 0
        %7567 = vmatprep.subr.bf16.mxu0 0
        %7568 = vmatpush1.bf16.msra.mxu0 0
        %7569 = vmatprep.subr.bf16.mxu0 0
        %7570 = vmatpush1.bf16.msra.mxu0 0
        %7571 = vmatprep.subr.bf16.mxu0 0
        %7572 = vmatpush1.bf16.msra.mxu0 0
        %7573 = vmatprep.subr.bf16.mxu0 0
        %7574 = vmatpush1.bf16.msra.mxu0 0
        %7575 = vmatprep.subr.bf16.mxu0 0
        %7576 = vmatpush1.bf16.msra.mxu0 0
        %7577 = vmatprep.subr.bf16.mxu0 0
        %7578 = vmatpush1.bf16.msra.mxu0 0
        %7579 = vmatprep.subr.bf16.mxu0 0
        %7580 = vmatpush1.bf16.msra.mxu0 0
        %7581 = vmatprep.mubr.bf16.mxu0 0
        %7582 = vmatmul.mubr.bf16.gmra.mrb[0].mxu0 %v7547
        %v7583 = vpop.f32.mrb[0].mxu0
        %v7584 = vadd.f32 0.0, %v7583
        %v7585 = vpop.f32.mrb[0].mxu0
        %v7586 = vpop.f32.mrb[0].mxu0
        %v7587 = vpop.f32.mrb[0].mxu0
        %7588 = vdwg.mxu0
        %v7589 = vadd.f32 %v7027, %v7584
        %v7590 = vld [vmem:[#allocation6] sm:$0x1]
        %v7592 = vlaneseq
        %v7593 = vshrl.u32 %v7592, 7
        %v7594 = vsub.s32 0, %v7593
        %v7595 = vrot.slane %v7590, %v7594
        %v7597 = vadd.f32 %v7595, %v7589
        %v7598 = vpack.c.bf16 %v7597, %v7597
        %v7599 = vld [vmem:[#allocation12] sm:$0xf]
        %v7600 = vld [vmem:[#allocation12 + $0x4] sm:$0xf]
        %v7601 = vld [vmem:[#allocation12 + $0x8] sm:$0xf]
        %v7602 = vld [vmem:[#allocation12 + $0xc] sm:$0xf]
        %v7607 = vunpack.c.l.b16 %v7599
        %v7608 = vunpack.c.l.b16 %v7600
        %v7609 = vunpack.c.l.b16 %v7601
        %v7610 = vunpack.c.l.b16 %v7602
        %v7611 = vpack.c.b16 %v7608, %v7607
        %v7612 = vpack.c.b16 %v7610, %v7609
        %v7616 = vsel %vm1971, %v7598, 0
        %7618 = vmatprep.subr.bf16.mxu0 0
        %7619 = vmatpush1.bf16.msra.mxu0 %v7611
        %7620 = vmatprep.subr.bf16.mxu0 0
        %7621 = vmatpush1.bf16.msra.mxu0 %v7612
        %7622 = vmatprep.subr.bf16.mxu0 0
        %7623 = vmatpush1.bf16.msra.mxu0 0
        %7624 = vmatprep.subr.bf16.mxu0 0
        %7625 = vmatpush1.bf16.msra.mxu0 0
        %7626 = vmatprep.subr.bf16.mxu0 0
        %7627 = vmatpush1.bf16.msra.mxu0 0
        %7628 = vmatprep.subr.bf16.mxu0 0
        %7629 = vmatpush1.bf16.msra.mxu0 0
        %7630 = vmatprep.subr.bf16.mxu0 0
        %7631 = vmatpush1.bf16.msra.mxu0 0
        %7632 = vmatprep.subr.bf16.mxu0 0
        %7633 = vmatpush1.bf16.msra.mxu0 0
        %7634 = vmatprep.subr.bf16.mxu0 0
        %7635 = vmatpush1.bf16.msra.mxu0 0
        %7636 = vmatprep.subr.bf16.mxu0 0
        %7637 = vmatpush1.bf16.msra.mxu0 0
        %7638 = vmatprep.subr.bf16.mxu0 0
        %7639 = vmatpush1.bf16.msra.mxu0 0
        %7640 = vmatprep.subr.bf16.mxu0 0
        %7641 = vmatpush1.bf16.msra.mxu0 0
        %7642 = vmatprep.subr.bf16.mxu0 0
        %7643 = vmatpush1.bf16.msra.mxu0 0
        %7644 = vmatprep.subr.bf16.mxu0 0
        %7645 = vmatpush1.bf16.msra.mxu0 0
        %7646 = vmatprep.subr.bf16.mxu0 0
        %7647 = vmatpush1.bf16.msra.mxu0 0
        %7648 = vmatprep.subr.bf16.mxu0 0
        %7649 = vmatpush1.bf16.msra.mxu0 0
        %7650 = vmatprep.mubr.bf16.mxu0 0
        %7651 = vmatmul.mubr.bf16.gmra.mrb[0].mxu0 %v7616
        %v7652 = vpop.f32.mrb[0].mxu0
        %v7653 = vadd.f32 0.0, %v7652
        %v7654 = vpop.f32.mrb[0].mxu0
        %v7655 = vpop.f32.mrb[0].mxu0
        %v7656 = vpop.f32.mrb[0].mxu0
        %7657 = vdwg.mxu0
        %v7658 = vmax.f32 %v7653, 0.0
        %v7659 = vadd.f32 %v7597, %v7658
        %v7660 = vpack.c.bf16 %v7659, %v7659
        %v7661 = vld [vmem:[%s10] sm:$0xf]
        %v7662 = vld [vmem:[%s10 + $0x4] sm:$0xf]
        %v7663 = vld [vmem:[%s10 + $0x8] sm:$0xf]
        %v7664 = vld [vmem:[%s10 + $0xc] sm:$0xf]
        %v7669 = vunpack.c.l.b16 %v7661
        %v7670 = vunpack.c.l.b16 %v7662
        %v7671 = vunpack.c.l.b16 %v7663
        %v7672 = vunpack.c.l.b16 %v7664
        %v7673 = vpack.c.b16 %v7670, %v7669
        %v7674 = vpack.c.b16 %v7672, %v7671
        %v7678 = vsel %vm1971, %v7660, 0
        %7680 = vmatprep.subr.bf16.mxu0 0
        %7681 = vmatpush1.bf16.msra.mxu0 %v7673
        %7682 = vmatprep.subr.bf16.mxu0 0
        %7683 = vmatpush1.bf16.msra.mxu0 %v7674
        %7684 = vmatprep.subr.bf16.mxu0 0
        %7685 = vmatpush1.bf16.msra.mxu0 0
        %7686 = vmatprep.subr.bf16.mxu0 0
        %7687 = vmatpush1.bf16.msra.mxu0 0
        %7688 = vmatprep.subr.bf16.mxu0 0
        %7689 = vmatpush1.bf16.msra.mxu0 0
        %7690 = vmatprep.subr.bf16.mxu0 0
        %7691 = vmatpush1.bf16.msra.mxu0 0
        %7692 = vmatprep.subr.bf16.mxu0 0
        %7693 = vmatpush1.bf16.msra.mxu0 0
        %7694 = vmatprep.subr.bf16.mxu0 0
        %7695 = vmatpush1.bf16.msra.mxu0 0
        %7696 = vmatprep.subr.bf16.mxu0 0
        %7697 = vmatpush1.bf16.msra.mxu0 0
        %7698 = vmatprep.subr.bf16.mxu0 0
        %7699 = vmatpush1.bf16.msra.mxu0 0
        %7700 = vmatprep.subr.bf16.mxu0 0
        %7701 = vmatpush1.bf16.msra.mxu0 0
        %7702 = vmatprep.subr.bf16.mxu0 0
        %7703 = vmatpush1.bf16.msra.mxu0 0
        %7704 = vmatprep.subr.bf16.mxu0 0
        %7705 = vmatpush1.bf16.msra.mxu0 0
        %7706 = vmatprep.subr.bf16.mxu0 0
        %7707 = vmatpush1.bf16.msra.mxu0 0
        %7708 = vmatprep.subr.bf16.mxu0 0
        %7709 = vmatpush1.bf16.msra.mxu0 0
        %7710 = vmatprep.subr.bf16.mxu0 0
        %7711 = vmatpush1.bf16.msra.mxu0 0
        %7712 = vmatprep.mubr.bf16.mxu0 0
        %7713 = vmatmul.mubr.bf16.gmra.mrb[0].mxu0 %v7678
        %v7714 = vpop.f32.mrb[0].mxu0
        %v7715 = vadd.f32 0.0, %v7714
        %v7716 = vpop.f32.mrb[0].mxu0
        %v7717 = vpop.f32.mrb[0].mxu0
        %v7718 = vpop.f32.mrb[0].mxu0
        %7719 = vdwg.mxu0
        %v7720 = vlaneseq
        %v7721 = vand.u32 %v7720, 127
        %vm7722 = vcmp.eq.s32.totalorder %v7721, 1
        %v7723 = vmax.f32 %v7715, 0.0
        %vm7724 = vcmp.ne.f32.partialorder %v7715, %v7715
        %v7725 = vadd.f32 %v7715, 0.0
        %v7726 = vand.u32 2147483647, %v7715
        %v7727 = vsub.f32 0.0, %v7726
        %v7728 = vmul.f32 %v7727, 1.442695
        %v7729 = vpow.pop %v7728
        %v7730 = vadd.f32 %v7729, 1.0
        %v7731 = vlog2.pop %v7730
        %v7732 = vmul.f32 %v7731, 0.6931472
        %v7733 = vmul.f32 -0.5, %v7729
        %v7734 = vadd.f32 %v7733, 1.0
        %v7735 = vmul.f32 %v7734, %v7729
        %v7736 = vand.u32 2147483647, %v7729
        %vm7737 = vcmp.lt.f32.partialorder %v7736, 0.0004427343
        %v7738 = vsel %vm7737, %v7735, %v7732
        %v7739 = vadd.f32 %v7723, %v7738
        %v7740 = vsel %vm7724, %v7725, %v7739
        %v7741 = vsel %vm7722, %v7740, %v7715
        %vm7742 = vcmask 15360
        %7743 = vst.msk [vmem:[%s559] sm:$0xff] %vm7742, %v7741
        %p7744 = scmp.lt.s32.totalorder %s30, 1
        %s7745 = scalar_select %p7744, %s30, 1
        %s7746 = smul.addr %s7745, 8
        %s7747 = scalar_lea.vmem %s11, %s7746
        // Predicated region
        $region93: #{tpu_custom_call.1} parent=63 // pred_check
          %p7748 = pneg %p299
        $region94: #{tpu_custom_call.1} parent=63 // pred_check_branch
          %7750 = sbr.rel (%p7748) target = $region96
        $region95: #{tpu_custom_call.1} parent=63 // pred_region
          _
        $region96: #{tpu_custom_call.1} parent=63 // pred_fallthru
          _
      $region64: #{tpu_custom_call.1} parent=5 // pred_fallthru
        _
      %p7751 = scmp.le.s32.totalorder 2, %s25
      // Predicated region
      $region97: #{tpu_custom_call.1} parent=5 // pred_check
        %p7752 = pneg %p7751
      $region98: #{tpu_custom_call.1} parent=5 // pred_check_branch
        %7754 = sbr.rel (%p7752) target = $region100
      $region99: #{tpu_custom_call.1} parent=5 // pred_region
        %s7755 = ssub.s32 %s25, 2
        // Predicated region
        $region101: #{tpu_custom_call.1} parent=99 // pred_check
          %p7756 = pneg %p305
        $region102: #{tpu_custom_call.1} parent=99 // pred_check_branch
          %7758 = sbr.rel (%p7756) target = $region104
        $region103: #{tpu_custom_call.1} parent=99 // pred_region
          %p7759 = scmp.lt.s32.totalorder %s31, 1
          %s7760 = scalar_select %p7759, %s31, 1
          %s7761 = smul.addr %s7760, 8
          %s7762 = scalar_lea.vmem %s11, %s7761
        $region104: #{tpu_custom_call.1} parent=99 // pred_fallthru
          _
      $region100: #{tpu_custom_call.1} parent=5 // pred_fallthru
        _
    $region6: #{tpu_custom_call.1} parent=1 // loop_footer
      %s29 = sadd.s32 1, %s25
    $region7: #{tpu_custom_call.1} parent=1 // loop_footer_branch
      %24 = sbr.rel target = $region3
    $region8: #{tpu_custom_call.1} parent=1 // loop_exit
      _
    %7763 = vsyncpa [#allocation3], 1
    %s7764 = scalar_lea.sflag [#allocation3], 1
    %7765 = vsyncpa %s7764, 1
    %7766 = vsyncpa [#allocation5], 1
    %s7767 = scalar_lea.sflag [#allocation5], 1
    %7768 = vsyncpa %s7767, 1
    %7769 = vsyncpa [#allocation8], 1
    %7770 = vsyncpa [#allocation11], 1

</llo_original>
